<compile_context>
chip_gen: v7x
topology: tpu7x:2x2x1
jax: 0.10.0
libtpu: 0.0.40
codegen_flags: <defaults>
</compile_context>

<pallas_src>
import functools

import jax
import jax.numpy as jnp
from jax.experimental import pallas as pl
from jax.experimental.pallas import tpu as pltpu


# Static conv configuration of EncTxt.enc: (Cin, Cout, (kh, kw), (sh, sw), (ph, pw))
ENC_CFGS = (
    (1,   32,  (4, 4), (2, 2), (1, 1)),
    (32,  64,  (4, 4), (2, 2), (1, 1)),
    (64,  128, (4, 4), (2, 2), (1, 1)),
    (128, 256, (1, 4), (1, 2), (0, 1)),
    (256, 512, (1, 4), (1, 2), (0, 1)),
)

_TM_CAP = 512   # review: per-grid-step overhead (~0.35us) dominates -> big M tiles
_TK_CAP = 2048  # full K for the conv layers; head keeps a K-grid of 4


def _tn_cap():
    """Generation-aware N-tile cap (v5e native 128x128 MXU; v6e/v7x 256x256)."""
    try:
        kind = jax.devices()[0].device_kind.lower()
    except Exception:
        return 256
    if "v5 lite" in kind or "v5e" in kind or "v5lite" in kind:
        return 128
    if "v6" in kind:
        return 512   # layer 5 (cout=512) becomes a single grid step
    return 256       # v7x & default: keep >=2 N-blocks so both TCs get work


def _pick_tile(dim, cap, quantum):
    """Largest tile <= cap that evenly divides `dim` (full dim when it fits)."""
    if dim <= cap:
        return dim
    t = (cap // quantum) * quantum
    while t >= quantum:
        if dim % t == 0:
            return t
        t -= quantum
    return dim  # fall back to a single full-dim block (always legal)


# ----------------------------------------------------------------------------
# Pallas kernels: matmul with fused bias + optional ReLU, f32 accumulation
# ----------------------------------------------------------------------------
def _mm_bias_act_kernel(a_ref, b_ref, bias_ref, o_ref, *, relu):
    """Single-K-step matmul: o = act(a @ b + bias).  No accumulator scratch."""
    out = jnp.dot(a_ref[...], b_ref[...], preferred_element_type=jnp.float32)
    out = out + bias_ref[...]                 # (tm, tn) + (1, tn) broadcast
    if relu:
        out = jnp.maximum(out, 0.0)
    o_ref[...] = out.astype(o_ref.dtype)


def _mm_bias_act_acc_kernel(a_ref, b_ref, bias_ref, o_ref, acc_ref, *, relu):
    """K-tiled matmul with f32 accumulator (used only when K-grid > 1)."""
    @pl.when(pl.program_id(2) == 0)
    def _():
        acc_ref[...] = jnp.zeros_like(acc_ref)

    acc_ref[...] += jnp.dot(a_ref[...], b_ref[...],
                            preferred_element_type=jnp.float32)

    @pl.when(pl.program_id(2) == pl.num_programs(2) - 1)
    def _():
        out = acc_ref[...] + bias_ref[...]
        if relu:
            out = jnp.maximum(out, 0.0)
        o_ref[...] = out.astype(o_ref.dtype)


def matmul_bias_act(a, b, bias, *, relu, out_dtype, tn_cap):
    """act(A @ B + bias) with A:(M,K), B:(K,N) bf16 weights, bias:(1,N) f32."""
    M, K = a.shape
    Kb, N = b.shape
    assert Kb == K and bias.shape == (1, N)

    a = a.astype(jnp.bfloat16)

    tm = _pick_tile(M, _TM_CAP, 8)
    tn = _pick_tile(N, tn_cap, 128)
    tk = _pick_tile(K, _TK_CAP, 128)
    k_steps = K // tk

    if k_steps == 1:
        # All 5 conv layers take this path: one dot, no scratch traffic.
        kernel = functools.partial(_mm_bias_act_kernel, relu=relu)
        return pl.pallas_call(
            kernel,
            out_shape=jax.ShapeDtypeStruct((M, N), out_dtype),
            grid_spec=pltpu.PrefetchScalarGridSpec(
                num_scalar_prefetch=0,
                grid=(M // tm, N // tn),
                in_specs=[
                    pl.BlockSpec((tm, K), lambda i, j: (i, 0)),
                    pl.BlockSpec((K, tn), lambda i, j: (0, j)),
                    pl.BlockSpec((1, tn), lambda i, j: (0, j)),
                ],
                out_specs=pl.BlockSpec((tm, tn), lambda i, j: (i, j)),
            ),
            compiler_params=pltpu.CompilerParams(
                dimension_semantics=("parallel", "parallel")),
        )(a, b, bias)

    # Head path (K=8192): keep tk=2048 / grid (.., .., 4) with f32 accumulator.
    kernel = functools.partial(_mm_bias_act_acc_kernel, relu=relu)
    return pl.pallas_call(
        kernel,
        out_shape=jax.ShapeDtypeStruct((M, N), out_dtype),
        grid_spec=pltpu.PrefetchScalarGridSpec(
            num_scalar_prefetch=0,
            grid=(M // tm, N // tn, k_steps),
            in_specs=[
                pl.BlockSpec((tm, tk), lambda i, j, k: (i, k)),
                pl.BlockSpec((tk, tn), lambda i, j, k: (k, j)),
                pl.BlockSpec((1, tn), lambda i, j, k: (0, j)),
            ],
            out_specs=pl.BlockSpec((tm, tn), lambda i, j, k: (i, j)),
            scratch_shapes=[pltpu.VMEM((tm, tn), jnp.float32)],
        ),
        compiler_params=pltpu.CompilerParams(
            dimension_semantics=("parallel", "parallel", "arbitrary")),
    )(a, b, bias)


# ----------------------------------------------------------------------------
# Glue: channels-last im2col (pure slicing, static shapes) + conv driver
# ----------------------------------------------------------------------------
def im2col_nhwc(x, kh, kw, sh, sw, ph, pw):
    """x: (B, H, W, C) -> (B*Hout*Wout, kh*kw*C); patch K-order is (dy, dx, c)."""
    B, H, W, C = x.shape
    Hout = (H + 2 * ph - kh) // sh + 1
    Wout = (W + 2 * pw - kw) // sw + 1
    if ph or pw:
        x = jnp.pad(x, ((0, 0), (ph, ph), (pw, pw), (0, 0)))
    cols = []
    for dy in range(kh):
        for dx in range(kw):
            cols.append(x[:, dy:dy + sh * Hout:sh, dx:dx + sw * Wout:sw, :])
    col = jnp.stack(cols, axis=3)                       # (B, Hout, Wout, kh*kw, C)
    col = col.reshape(B * Hout * Wout, kh * kw * C)
    return col, Hout, Wout


def conv2d_pallas(x, w_mat, bias, cout, ksize, stride, padding, *,
                  relu, out_dtype, tn_cap):
    """Channels-last Conv2d (PyTorch semantics) via im2col + Pallas matmul."""
    B = x.shape[0]
    kh, kw = ksize
    sh, sw = stride
    ph, pw = padding
    col, Hout, Wout = im2col_nhwc(x, kh, kw, sh, sw, ph, pw)
    out = matmul_bias_act(col, w_mat, bias, relu=relu, out_dtype=out_dtype,
                          tn_cap=tn_cap)
    return out.reshape(B, Hout, Wout, cout)


# ----------------------------------------------------------------------------
# Deterministic parameter construction (synthetic, matches module shapes)
# ----------------------------------------------------------------------------
def _to_matmul_weights(w, b):
    """PyTorch (Cout, Cin, kh, kw) -> ((kh*kw*Cin), Cout) bf16 (unpadded) and
    (1, Cout) f32 bias.  K-order is (dy, dx, cin) to match im2col above."""
    cout, cin, kh, kw = w.shape
    w_mat = w.transpose(2, 3, 1, 0).reshape(kh * kw * cin, cout)
    return w_mat.astype(jnp.bfloat16), b.reshape(1, cout).astype(jnp.float32)


def make_params(key, vocab_size, latent_dim, emb_dim=128):
    params = {}
    key, k = jax.random.split(key)
    emb_w = 0.05 * jax.random.normal(k, (vocab_size, emb_dim), jnp.float32)
    emb_w = emb_w.at[0].set(0.0)  # padding_idx=0
    params["emb"] = emb_w

    eps = 1e-5
    params["enc"] = []
    for (cin, cout, k_sz, _st, _pd) in ENC_CFGS:
        key, k1, k2, k3, k4, k5, k6 = jax.random.split(key, 7)
        w = 0.05 * jax.random.normal(k1, (cout, cin, *k_sz), jnp.float32)
        b = 0.05 * jax.random.normal(k2, (cout,), jnp.float32)
        gamma = 1.0 + 0.05 * jax.random.normal(k3, (cout,), jnp.float32)
        beta = 0.05 * jax.random.normal(k4, (cout,), jnp.float32)
        r_mean = 0.05 * jax.random.normal(k5, (cout,), jnp.float32)
        r_var = 1.0 + 0.1 * jax.random.uniform(k6, (cout,), jnp.float32)
        # Fold inference-mode BatchNorm into the conv.
        s = gamma / jnp.sqrt(r_var + eps)
        w_f = w * s[:, None, None, None]
        b_f = b * s + (beta - r_mean * s)
        w_p, b_p = _to_matmul_weights(w_f, b_f)
        params["enc"].append(dict(w=w_p, b=b_p))

    # enc_mu and enc_var fused along Cout (mu first, then log_var); unpadded.
    head_w, head_b = [], []
    for _ in range(2):
        key, k1, k2 = jax.random.split(key, 3)
        head_w.append(0.05 * jax.random.normal(k1, (latent_dim, 512, 4, 4), jnp.float32))
        head_b.append(0.05 * jax.random.normal(k2, (latent_dim,), jnp.float32))
    w_head = jnp.concatenate(head_w, axis=0)      # (2*latent, 512, 4, 4)
    b_head = jnp.concatenate(head_b, axis=0)      # (2*latent,)
    w_p, b_p = _to_matmul_weights(w_head, b_head)  # (8192, 2*latent), no padding
    params["head"] = dict(w=w_p, b=b_p)
    return params


# ----------------------------------------------------------------------------
# Forward pass (mirrors EncTxt.forward)
# ----------------------------------------------------------------------------
def enc_txt_forward(params, x_tokens, *, latent_dim, tn_cap):
    # x = self.emb(x.long()).unsqueeze(1)  -> kept channels-last: (B, S, E, 1)
    emb = jnp.take(params["emb"], x_tokens.astype(jnp.int32), axis=0)  # (B, S, E)
    x = emb[:, :, :, None]

    # x = self.enc(x): 5 x (Conv2d + BN(folded) + ReLU), one pallas_call each.
    for (cin, cout, ksz, st, pd), layer in zip(ENC_CFGS, params["enc"]):
        x = conv2d_pallas(x, layer["w"], layer["b"], cout, ksz, st, pd,
                          relu=True, out_dtype=jnp.bfloat16, tn_cap=tn_cap)

    # mu = self.enc_mu(x).squeeze(); log_var = self.enc_var(x).squeeze()
    # Both 4x4/stride-1 convs on a 4x4 map == one fused matmul over (B, 8192).
    B, H, W, C = x.shape
    flat = x.reshape(B, H * W * C)
    head = matmul_bias_act(flat, params["head"]["w"], params["head"]["b"],
                           relu=False, out_dtype=jnp.float32, tn_cap=tn_cap)
    mu = head[:, :latent_dim]
    log_var = head[:, latent_dim:]
    return jnp.squeeze(mu), jnp.squeeze(log_var)


if __name__ == "__main__":
    VOCAB = 64
    LATENT = 16
    EMB = 128
    B = 2
    SEQ = 32  # required so the conv stack ends at 4x4 (as in the CUB setup)

    key = jax.random.PRNGKey(0)
    key, kp, kx = jax.random.split(key, 3)
    params = make_params(kp, VOCAB, LATENT, EMB)
    x_tokens = jax.random.randint(kx, (B, SEQ), 0, VOCAB, dtype=jnp.int32)

    tn_cap = _tn_cap()  # static, resolved once outside jit
    fwd = jax.jit(functools.partial(enc_txt_forward, latent_dim=LATENT,
                                    tn_cap=tn_cap))
    mu, log_var = fwd(params, x_tokens)
    jax.block_until_ready((mu, log_var))
    assert mu.shape == (B, LATENT) and log_var.shape == (B, LATENT)
    assert bool(jnp.all(jnp.isfinite(mu))) and bool(jnp.all(jnp.isfinite(log_var)))
    print("KERNEL_OK")
</pallas_src>

<mosaic_0001>
module attributes {stable_mosaic.version = 11 : i64} {
  func.func @_mm_bias_act_kernel(%arg0: i32, %arg1: i32, %arg2: memref<512x16xbf16, #tpu.memory_space<vmem>>, %arg3: memref<16x32xbf16, #tpu.memory_space<vmem>>, %arg4: memref<1x32xf32, #tpu.memory_space<vmem>>, %arg5: memref<512x32xbf16, #tpu.memory_space<vmem>>) attributes {dimension_semantics = [#tpu.dimension_semantics<parallel>, #tpu.dimension_semantics<parallel>], iteration_bounds = array<i64: 4, 1>, scalar_prefetch = 0 : i64, scratch_operands = 0 : i64, tpu.core_type = #tpu.core_type<tc>, window_params = [{transform_indices = @transform_0, window_bounds = array<i64: 512, 16>}, {transform_indices = @transform_1, window_bounds = array<i64: 16, 32>}, {transform_indices = @transform_2, window_bounds = array<i64: 1, 32>}, {transform_indices = @transform_3, window_bounds = array<i64: 512, 32>}]} {
    %c0 = arith.constant 0 : index
    %c0_0 = arith.constant 0 : index
    %0 = vector.load %arg2[%c0, %c0_0] : memref<512x16xbf16, #tpu.memory_space<vmem>>, vector<512x16xbf16>
    %c0_1 = arith.constant 0 : index
    %c0_2 = arith.constant 0 : index
    %1 = vector.load %arg3[%c0_1, %c0_2] : memref<16x32xbf16, #tpu.memory_space<vmem>>, vector<16x32xbf16>
    %cst = arith.constant dense<0.000000e+00> : vector<512x32xf32>
    %2 = tpu.matmul %0, %1, %cst {dimension_numbers = #tpu.dot_dimension_numbers<[1], [0], [0], [1], [0, 0, 1, 1], [], []>} : vector<512x16xbf16>, vector<16x32xbf16>, vector<512x32xf32> -> vector<512x32xf32>
    %c0_3 = arith.constant 0 : index
    %c0_4 = arith.constant 0 : index
    %3 = vector.load %arg4[%c0_3, %c0_4] : memref<1x32xf32, #tpu.memory_space<vmem>>, vector<1x32xf32>
    %4 = vector.broadcast %3 : vector<1x32xf32> to vector<512x32xf32>
    %5 = arith.addf %2, %4 : vector<512x32xf32>
    %cst_5 = arith.constant 0.000000e+00 : f32
    %6 = vector.broadcast %cst_5 : f32 to vector<512x32xf32>
    %7 = arith.maximumf %5, %6 : vector<512x32xf32>
    %8 = arith.truncf %7 : vector<512x32xf32> to vector<512x32xbf16>
    %c0_6 = arith.constant 0 : index
    %c0_7 = arith.constant 0 : index
    %9 = vector.load %arg5[%c0_6, %c0_7] : memref<512x32xbf16, #tpu.memory_space<vmem>>, vector<512x32xbf16>
    tpu.vector_store %arg5[%c0_6, %c0_7], %8 {strides = array<i32>} : memref<512x32xbf16, #tpu.memory_space<vmem>>, vector<512x32xbf16>,
    return
  }
  func.func @transform_0(%arg0: i32, %arg1: i32) -> (i32, i32) {
    %c0_i32 = arith.constant 0 : i32
    %c0_i32_0 = arith.constant 0 : i32
    return %arg0, %c0_i32 : i32, i32
  }
  func.func @transform_1(%arg0: i32, %arg1: i32) -> (i32, i32) {
    %c0_i32 = arith.constant 0 : i32
    %c0_i32_0 = arith.constant 0 : i32
    return %c0_i32, %arg1 : i32, i32
  }
  func.func @transform_2(%arg0: i32, %arg1: i32) -> (i32, i32) {
    %c0_i32 = arith.constant 0 : i32
    %c0_i32_0 = arith.constant 0 : i32
    return %c0_i32, %arg1 : i32, i32
  }
  func.func @transform_3(%arg0: i32, %arg1: i32) -> (i32, i32) {
    %c0_i32 = arith.constant 0 : i32
    return %arg0, %arg1 : i32, i32
  }
}

module attributes {stable_mosaic.version = 11 : i64} {
  func.func @_mm_bias_act_kernel(%arg0: i32, %arg1: i32, %arg2: memref<512x512xbf16, #tpu.memory_space<vmem>>, %arg3: memref<512x64xbf16, #tpu.memory_space<vmem>>, %arg4: memref<1x64xf32, #tpu.memory_space<vmem>>, %arg5: memref<512x64xbf16, #tpu.memory_space<vmem>>) attributes {dimension_semantics = [#tpu.dimension_semantics<parallel>, #tpu.dimension_semantics<parallel>], iteration_bounds = array<i64: 1, 1>, scalar_prefetch = 0 : i64, scratch_operands = 0 : i64, tpu.core_type = #tpu.core_type<tc>, window_params = [{transform_indices = @transform_0, window_bounds = array<i64: 512, 512>}, {transform_indices = @transform_1, window_bounds = array<i64: 512, 64>}, {transform_indices = @transform_2, window_bounds = array<i64: 1, 64>}, {transform_indices = @transform_3, window_bounds = array<i64: 512, 64>}]} {
    %c0 = arith.constant 0 : index
    %c0_0 = arith.constant 0 : index
    %0 = vector.load %arg2[%c0, %c0_0] : memref<512x512xbf16, #tpu.memory_space<vmem>>, vector<512x512xbf16>
    %c0_1 = arith.constant 0 : index
    %c0_2 = arith.constant 0 : index
    %1 = vector.load %arg3[%c0_1, %c0_2] : memref<512x64xbf16, #tpu.memory_space<vmem>>, vector<512x64xbf16>
    %cst = arith.constant dense<0.000000e+00> : vector<512x64xf32>
    %2 = tpu.matmul %0, %1, %cst {dimension_numbers = #tpu.dot_dimension_numbers<[1], [0], [0], [1], [0, 0, 1, 1], [], []>} : vector<512x512xbf16>, vector<512x64xbf16>, vector<512x64xf32> -> vector<512x64xf32>
    %c0_3 = arith.constant 0 : index
    %c0_4 = arith.constant 0 : index
    %3 = vector.load %arg4[%c0_3, %c0_4] : memref<1x64xf32, #tpu.memory_space<vmem>>, vector<1x64xf32>
    %4 = vector.broadcast %3 : vector<1x64xf32> to vector<512x64xf32>
    %5 = arith.addf %2, %4 : vector<512x64xf32>
    %cst_5 = arith.constant 0.000000e+00 : f32
    %6 = vector.broadcast %cst_5 : f32 to vector<512x64xf32>
    %7 = arith.maximumf %5, %6 : vector<512x64xf32>
    %8 = arith.truncf %7 : vector<512x64xf32> to vector<512x64xbf16>
    %c0_6 = arith.constant 0 : index
    %c0_7 = arith.constant 0 : index
    %9 = vector.load %arg5[%c0_6, %c0_7] : memref<512x64xbf16, #tpu.memory_space<vmem>>, vector<512x64xbf16>
    tpu.vector_store %arg5[%c0_6, %c0_7], %8 {strides = array<i32>} : memref<512x64xbf16, #tpu.memory_space<vmem>>, vector<512x64xbf16>,
    return
  }
  func.func @transform_0(%arg0: i32, %arg1: i32) -> (i32, i32) {
    %c0_i32 = arith.constant 0 : i32
    %c0_i32_0 = arith.constant 0 : i32
    return %arg0, %c0_i32 : i32, i32
  }
  func.func @transform_1(%arg0: i32, %arg1: i32) -> (i32, i32) {
    %c0_i32 = arith.constant 0 : i32
    %c0_i32_0 = arith.constant 0 : i32
    return %c0_i32, %arg1 : i32, i32
  }
  func.func @transform_2(%arg0: i32, %arg1: i32) -> (i32, i32) {
    %c0_i32 = arith.constant 0 : i32
    %c0_i32_0 = arith.constant 0 : i32
    return %c0_i32, %arg1 : i32, i32
  }
  func.func @transform_3(%arg0: i32, %arg1: i32) -> (i32, i32) {
    %c0_i32 = arith.constant 0 : i32
    return %arg0, %arg1 : i32, i32
  }
}

module attributes {stable_mosaic.version = 11 : i64} {
  func.func @_mm_bias_act_kernel(%arg0: i32, %arg1: i32, %arg2: memref<128x1024xbf16, #tpu.memory_space<vmem>>, %arg3: memref<1024x128xbf16, #tpu.memory_space<vmem>>, %arg4: memref<1x128xf32, #tpu.memory_space<vmem>>, %arg5: memref<128x128xbf16, #tpu.memory_space<vmem>>) attributes {dimension_semantics = [#tpu.dimension_semantics<parallel>, #tpu.dimension_semantics<parallel>], iteration_bounds = array<i64: 1, 1>, scalar_prefetch = 0 : i64, scratch_operands = 0 : i64, tpu.core_type = #tpu.core_type<tc>, window_params = [{transform_indices = @transform_0, window_bounds = array<i64: 128, 1024>}, {transform_indices = @transform_1, window_bounds = array<i64: 1024, 128>}, {transform_indices = @transform_2, window_bounds = array<i64: 1, 128>}, {transform_indices = @transform_3, window_bounds = array<i64: 128, 128>}]} {
    %c0 = arith.constant 0 : index
    %c0_0 = arith.constant 0 : index
    %0 = vector.load %arg2[%c0, %c0_0] : memref<128x1024xbf16, #tpu.memory_space<vmem>>, vector<128x1024xbf16>
    %c0_1 = arith.constant 0 : index
    %c0_2 = arith.constant 0 : index
    %1 = vector.load %arg3[%c0_1, %c0_2] : memref<1024x128xbf16, #tpu.memory_space<vmem>>, vector<1024x128xbf16>
    %cst = arith.constant dense<0.000000e+00> : vector<128x128xf32>
    %2 = tpu.matmul %0, %1, %cst {dimension_numbers = #tpu.dot_dimension_numbers<[1], [0], [0], [1], [0, 0, 1, 1], [], []>} : vector<128x1024xbf16>, vector<1024x128xbf16>, vector<128x128xf32> -> vector<128x128xf32>
    %c0_3 = arith.constant 0 : index
    %c0_4 = arith.constant 0 : index
    %3 = vector.load %arg4[%c0_3, %c0_4] : memref<1x128xf32, #tpu.memory_space<vmem>>, vector<1x128xf32>
    %4 = vector.broadcast %3 : vector<1x128xf32> to vector<128x128xf32>
    %5 = arith.addf %2, %4 : vector<128x128xf32>
    %cst_5 = arith.constant 0.000000e+00 : f32
    %6 = vector.broadcast %cst_5 : f32 to vector<128x128xf32>
    %7 = arith.maximumf %5, %6 : vector<128x128xf32>
    %8 = arith.truncf %7 : vector<128x128xf32> to vector<128x128xbf16>
    %c0_6 = arith.constant 0 : index
    %c0_7 = arith.constant 0 : index
    %9 = vector.load %arg5[%c0_6, %c0_7] : memref<128x128xbf16, #tpu.memory_space<vmem>>, vector<128x128xbf16>
    tpu.vector_store %arg5[%c0_6, %c0_7], %8 {strides = array<i32>} : memref<128x128xbf16, #tpu.memory_space<vmem>>, vector<128x128xbf16>,
    return
  }
  func.func @transform_0(%arg0: i32, %arg1: i32) -> (i32, i32) {
    %c0_i32 = arith.constant 0 : i32
    %c0_i32_0 = arith.constant 0 : i32
    return %arg0, %c0_i32 : i32, i32
  }
  func.func @transform_1(%arg0: i32, %arg1: i32) -> (i32, i32) {
    %c0_i32 = arith.constant 0 : i32
    %c0_i32_0 = arith.constant 0 : i32
    return %c0_i32, %arg1 : i32, i32
  }
  func.func @transform_2(%arg0: i32, %arg1: i32) -> (i32, i32) {
    %c0_i32 = arith.constant 0 : i32
    %c0_i32_0 = arith.constant 0 : i32
    return %c0_i32, %arg1 : i32, i32
  }
  func.func @transform_3(%arg0: i32, %arg1: i32) -> (i32, i32) {
    %c0_i32 = arith.constant 0 : i32
    return %arg0, %arg1 : i32, i32
  }
}

module attributes {stable_mosaic.version = 11 : i64} {
  func.func @_mm_bias_act_kernel(%arg0: i32, %arg1: i32, %arg2: memref<64x512xbf16, #tpu.memory_space<vmem>>, %arg3: memref<512x256xbf16, #tpu.memory_space<vmem>>, %arg4: memref<1x256xf32, #tpu.memory_space<vmem>>, %arg5: memref<64x256xbf16, #tpu.memory_space<vmem>>) attributes {dimension_semantics = [#tpu.dimension_semantics<parallel>, #tpu.dimension_semantics<parallel>], iteration_bounds = array<i64: 1, 1>, scalar_prefetch = 0 : i64, scratch_operands = 0 : i64, tpu.core_type = #tpu.core_type<tc>, window_params = [{transform_indices = @transform_0, window_bounds = array<i64: 64, 512>}, {transform_indices = @transform_1, window_bounds = array<i64: 512, 256>}, {transform_indices = @transform_2, window_bounds = array<i64: 1, 256>}, {transform_indices = @transform_3, window_bounds = array<i64: 64, 256>}]} {
    %c0 = arith.constant 0 : index
    %c0_0 = arith.constant 0 : index
    %0 = vector.load %arg2[%c0, %c0_0] : memref<64x512xbf16, #tpu.memory_space<vmem>>, vector<64x512xbf16>
    %c0_1 = arith.constant 0 : index
    %c0_2 = arith.constant 0 : index
    %1 = vector.load %arg3[%c0_1, %c0_2] : memref<512x256xbf16, #tpu.memory_space<vmem>>, vector<512x256xbf16>
    %cst = arith.constant dense<0.000000e+00> : vector<64x256xf32>
    %2 = tpu.matmul %0, %1, %cst {dimension_numbers = #tpu.dot_dimension_numbers<[1], [0], [0], [1], [0, 0, 1, 1], [], []>} : vector<64x512xbf16>, vector<512x256xbf16>, vector<64x256xf32> -> vector<64x256xf32>
    %c0_3 = arith.constant 0 : index
    %c0_4 = arith.constant 0 : index
    %3 = vector.load %arg4[%c0_3, %c0_4] : memref<1x256xf32, #tpu.memory_space<vmem>>, vector<1x256xf32>
    %4 = vector.broadcast %3 : vector<1x256xf32> to vector<64x256xf32>
    %5 = arith.addf %2, %4 : vector<64x256xf32>
    %cst_5 = arith.constant 0.000000e+00 : f32
    %6 = vector.broadcast %cst_5 : f32 to vector<64x256xf32>
    %7 = arith.maximumf %5, %6 : vector<64x256xf32>
    %8 = arith.truncf %7 : vector<64x256xf32> to vector<64x256xbf16>
    %c0_6 = arith.constant 0 : index
    %c0_7 = arith.constant 0 : index
    %9 = vector.load %arg5[%c0_6, %c0_7] : memref<64x256xbf16, #tpu.memory_space<vmem>>, vector<64x256xbf16>
    tpu.vector_store %arg5[%c0_6, %c0_7], %8 {strides = array<i32>} : memref<64x256xbf16, #tpu.memory_space<vmem>>, vector<64x256xbf16>,
    return
  }
  func.func @transform_0(%arg0: i32, %arg1: i32) -> (i32, i32) {
    %c0_i32 = arith.constant 0 : i32
    %c0_i32_0 = arith.constant 0 : i32
    return %arg0, %c0_i32 : i32, i32
  }
  func.func @transform_1(%arg0: i32, %arg1: i32) -> (i32, i32) {
    %c0_i32 = arith.constant 0 : i32
    %c0_i32_0 = arith.constant 0 : i32
    return %c0_i32, %arg1 : i32, i32
  }
  func.func @transform_2(%arg0: i32, %arg1: i32) -> (i32, i32) {
    %c0_i32 = arith.constant 0 : i32
    %c0_i32_0 = arith.constant 0 : i32
    return %c0_i32, %arg1 : i32, i32
  }
  func.func @transform_3(%arg0: i32, %arg1: i32) -> (i32, i32) {
    %c0_i32 = arith.constant 0 : i32
    return %arg0, %arg1 : i32, i32
  }
}

module attributes {stable_mosaic.version = 11 : i64} {
  func.func @_mm_bias_act_kernel(%arg0: i32, %arg1: i32, %arg2: memref<32x1024xbf16, #tpu.memory_space<vmem>>, %arg3: memref<1024x256xbf16, #tpu.memory_space<vmem>>, %arg4: memref<1x256xf32, #tpu.memory_space<vmem>>, %arg5: memref<32x256xbf16, #tpu.memory_space<vmem>>) attributes {dimension_semantics = [#tpu.dimension_semantics<parallel>, #tpu.dimension_semantics<parallel>], iteration_bounds = array<i64: 1, 2>, scalar_prefetch = 0 : i64, scratch_operands = 0 : i64, tpu.core_type = #tpu.core_type<tc>, window_params = [{transform_indices = @transform_0, window_bounds = array<i64: 32, 1024>}, {transform_indices = @transform_1, window_bounds = array<i64: 1024, 256>}, {transform_indices = @transform_2, window_bounds = array<i64: 1, 256>}, {transform_indices = @transform_3, window_bounds = array<i64: 32, 256>}]} {
    %c0 = arith.constant 0 : index
    %c0_0 = arith.constant 0 : index
    %0 = vector.load %arg2[%c0, %c0_0] : memref<32x1024xbf16, #tpu.memory_space<vmem>>, vector<32x1024xbf16>
    %c0_1 = arith.constant 0 : index
    %c0_2 = arith.constant 0 : index
    %1 = vector.load %arg3[%c0_1, %c0_2] : memref<1024x256xbf16, #tpu.memory_space<vmem>>, vector<1024x256xbf16>
    %cst = arith.constant dense<0.000000e+00> : vector<32x256xf32>
    %2 = tpu.matmul %0, %1, %cst {dimension_numbers = #tpu.dot_dimension_numbers<[1], [0], [0], [1], [0, 0, 1, 1], [], []>} : vector<32x1024xbf16>, vector<1024x256xbf16>, vector<32x256xf32> -> vector<32x256xf32>
    %c0_3 = arith.constant 0 : index
    %c0_4 = arith.constant 0 : index
    %3 = vector.load %arg4[%c0_3, %c0_4] : memref<1x256xf32, #tpu.memory_space<vmem>>, vector<1x256xf32>
    %4 = vector.broadcast %3 : vector<1x256xf32> to vector<32x256xf32>
    %5 = arith.addf %2, %4 : vector<32x256xf32>
    %cst_5 = arith.constant 0.000000e+00 : f32
    %6 = vector.broadcast %cst_5 : f32 to vector<32x256xf32>
    %7 = arith.maximumf %5, %6 : vector<32x256xf32>
    %8 = arith.truncf %7 : vector<32x256xf32> to vector<32x256xbf16>
    %c0_6 = arith.constant 0 : index
    %c0_7 = arith.constant 0 : index
    %9 = vector.load %arg5[%c0_6, %c0_7] : memref<32x256xbf16, #tpu.memory_space<vmem>>, vector<32x256xbf16>
    tpu.vector_store %arg5[%c0_6, %c0_7], %8 {strides = array<i32>} : memref<32x256xbf16, #tpu.memory_space<vmem>>, vector<32x256xbf16>,
    return
  }
  func.func @transform_0(%arg0: i32, %arg1: i32) -> (i32, i32) {
    %c0_i32 = arith.constant 0 : i32
    %c0_i32_0 = arith.constant 0 : i32
    return %arg0, %c0_i32 : i32, i32
  }
  func.func @transform_1(%arg0: i32, %arg1: i32) -> (i32, i32) {
    %c0_i32 = arith.constant 0 : i32
    %c0_i32_0 = arith.constant 0 : i32
    return %c0_i32, %arg1 : i32, i32
  }
  func.func @transform_2(%arg0: i32, %arg1: i32) -> (i32, i32) {
    %c0_i32 = arith.constant 0 : i32
    %c0_i32_0 = arith.constant 0 : i32
    return %c0_i32, %arg1 : i32, i32
  }
  func.func @transform_3(%arg0: i32, %arg1: i32) -> (i32, i32) {
    %c0_i32 = arith.constant 0 : i32
    return %arg0, %arg1 : i32, i32
  }
}

module attributes {stable_mosaic.version = 11 : i64} {
  func.func @_mm_bias_act_acc_kernel(%arg0: i32, %arg1: i32, %arg2: i32, %arg3: memref<2x2048xbf16, #tpu.memory_space<vmem>>, %arg4: memref<2048x32xbf16, #tpu.memory_space<vmem>>, %arg5: memref<1x32xf32, #tpu.memory_space<vmem>>, %arg6: memref<2x32xf32, #tpu.memory_space<vmem>>, %arg7: memref<2x32xf32, #tpu.memory_space<vmem>>) attributes {dimension_semantics = [#tpu.dimension_semantics<parallel>, #tpu.dimension_semantics<parallel>, #tpu.dimension_semantics<arbitrary>], iteration_bounds = array<i64: 1, 1, 4>, scalar_prefetch = 0 : i64, scratch_operands = 1 : i64, tpu.core_type = #tpu.core_type<tc>, window_params = [{transform_indices = @transform_0, window_bounds = array<i64: 2, 2048>}, {transform_indices = @transform_1, window_bounds = array<i64: 2048, 32>}, {transform_indices = @transform_2, window_bounds = array<i64: 1, 32>}, {transform_indices = @transform_3, window_bounds = array<i64: 2, 32>}]} {
    %c0_i32 = arith.constant 0 : i32
    %0 = arith.cmpi eq, %arg2, %c0_i32 : i32
    %1 = arith.extui %0 : i1 to i32
    %c0_i32_0 = arith.constant 0 : i32
    %2 = arith.cmpi ne, %1, %c0_i32_0 : i32
    scf.if %2 {
      %cst_9 = arith.constant 0.000000e+00 : f32
      %12 = vector.broadcast %cst_9 : f32 to vector<2x32xf32>
      %c0_10 = arith.constant 0 : index
      %c0_11 = arith.constant 0 : index
      %13 = vector.load %arg7[%c0_10, %c0_11] : memref<2x32xf32, #tpu.memory_space<vmem>>, vector<2x32xf32>
      tpu.vector_store %arg7[%c0_10, %c0_11], %12 {strides = array<i32>} : memref<2x32xf32, #tpu.memory_space<vmem>>, vector<2x32xf32>,
    } else {
    }
    %c0 = arith.constant 0 : index
    %c0_1 = arith.constant 0 : index
    %3 = vector.load %arg7[%c0, %c0_1] : memref<2x32xf32, #tpu.memory_space<vmem>>, vector<2x32xf32>
    %c0_2 = arith.constant 0 : index
    %c0_3 = arith.constant 0 : index
    %4 = vector.load %arg3[%c0_2, %c0_3] : memref<2x2048xbf16, #tpu.memory_space<vmem>>, vector<2x2048xbf16>
    %c0_4 = arith.constant 0 : index
    %c0_5 = arith.constant 0 : index
    %5 = vector.load %arg4[%c0_4, %c0_5] : memref<2048x32xbf16, #tpu.memory_space<vmem>>, vector<2048x32xbf16>
    %cst = arith.constant dense<0.000000e+00> : vector<2x32xf32>
    %6 = tpu.matmul %4, %5, %cst {dimension_numbers = #tpu.dot_dimension_numbers<[1], [0], [0], [1], [0, 0, 1, 1], [], []>} : vector<2x2048xbf16>, vector<2048x32xbf16>, vector<2x32xf32> -> vector<2x32xf32>
    %7 = arith.addf %3, %6 : vector<2x32xf32>
    %c0_6 = arith.constant 0 : index
    %c0_7 = arith.constant 0 : index
    %8 = vector.load %arg7[%c0_6, %c0_7] : memref<2x32xf32, #tpu.memory_space<vmem>>, vector<2x32xf32>
    tpu.vector_store %arg7[%c0_6, %c0_7], %7 {strides = array<i32>} : memref<2x32xf32, #tpu.memory_space<vmem>>, vector<2x32xf32>,
    %c3_i32 = arith.constant 3 : i32
    %9 = arith.cmpi eq, %arg2, %c3_i32 : i32
    %10 = arith.extui %9 : i1 to i32
    %c0_i32_8 = arith.constant 0 : i32
    %11 = arith.cmpi ne, %10, %c0_i32_8 : i32
    scf.if %11 {
      %c0_9 = arith.constant 0 : index
      %c0_10 = arith.constant 0 : index
      %12 = vector.load %arg7[%c0_9, %c0_10] : memref<2x32xf32, #tpu.memory_space<vmem>>, vector<2x32xf32>
      %c0_11 = arith.constant 0 : index
      %c0_12 = arith.constant 0 : index
      %13 = vector.load %arg5[%c0_11, %c0_12] : memref<1x32xf32, #tpu.memory_space<vmem>>, vector<1x32xf32>
      %14 = vector.broadcast %13 : vector<1x32xf32> to vector<2x32xf32>
      %15 = arith.addf %12, %14 : vector<2x32xf32>
      %c0_13 = arith.constant 0 : index
      %c0_14 = arith.constant 0 : index
      %16 = vector.load %arg6[%c0_13, %c0_14] : memref<2x32xf32, #tpu.memory_space<vmem>>, vector<2x32xf32>
      tpu.vector_store %arg6[%c0_13, %c0_14], %15 {strides = array<i32>} : memref<2x32xf32, #tpu.memory_space<vmem>>, vector<2x32xf32>,
    } else {
    }
    return
  }
  func.func @transform_0(%arg0: i32, %arg1: i32, %arg2: i32) -> (i32, i32) {
    %c0_i32 = arith.constant 0 : i32
    return %arg0, %arg2 : i32, i32
  }
  func.func @transform_1(%arg0: i32, %arg1: i32, %arg2: i32) -> (i32, i32) {
    %c0_i32 = arith.constant 0 : i32
    return %arg2, %arg1 : i32, i32
  }
  func.func @transform_2(%arg0: i32, %arg1: i32, %arg2: i32) -> (i32, i32) {
    %c0_i32 = arith.constant 0 : i32
    %c0_i32_0 = arith.constant 0 : i32
    return %c0_i32, %arg1 : i32, i32
  }
  func.func @transform_3(%arg0: i32, %arg1: i32, %arg2: i32) -> (i32, i32) {
    %c0_i32 = arith.constant 0 : i32
    return %arg0, %arg1 : i32, i32
  }
}

</mosaic_0001>

<llo_original>
// kernel: enc_txt_forward.6
$region0: #{enc_txt_forward.6}
  #allocation0 [shape = 'u32[]', space=smem, size = 0x4, offset = 0x4, fixed_abs, tag = 'smem constant byte address 0x4 - core index']
  #allocation1 [shape = 'u32[144,128]{1,0:T(1,128)}', space=vmem, size = 0x12000, scoped, tag = 'internal scratch']
  %s0 = inlined_call_operand.vmem [shape: bf16[2048,16], index: 0, kind: input, shape index: {}]
  %s1 = inlined_call_operand.hbm [shape: bf16[16,32], index: 1, kind: input, shape index: {}]
  %s2 = inlined_call_operand.hbm [shape: f32[1,32], index: 2, kind: input, shape index: {}]
  %s3 = inlined_call_operand.vmem [shape: bf16[2048,32], index: 3, kind: output, shape index: {}]
  %s4 = sld [smem:[#allocation0]]
  $region53: #{enc_txt_forward.6} parent=0
    _
  %s6 = ssub.s32 1, %s4
  %s7 = scalar_select 0, %s6, %s4
  $region1: #{enc_txt_forward.6} parent=0
    #allocation2 [shape = 'u8[4096]{0}', space=vmem, size = 0x1000, scoped, tag = 'input window, operand 1, single buffered']
    #allocation3 [shape = 's32[2]{0}', space=sflag, size = 0x8, scoped, tag = 'scoped memory for enc_txt_forward.6']
    #allocation4 [shape = 'u8[512]{0}', space=vmem, size = 0x400, scoped, tag = 'input window, operand 2, single buffered']
    #allocation5 [shape = 's32[1]{0}', space=sflag, size = 0x4, scoped, tag = 'scoped memory for enc_txt_forward.6']
    %8 = vsyncpa [#allocation3], 0
    %9 = vsyncpa [#allocation5], 0
    loop: start=0, step=1, limit=6
    $region2: #{enc_txt_forward.6} parent=1 // loop_pre_header
      _
    $region3: #{enc_txt_forward.6} parent=1 // loop_header
      %s11 = sphi 0, %s15
      %p12 = scmp.ge.s32.totalorder %s11, 6
      %s18 = sphi 0, %s30
      %s19 = sphi 0, %s26
      %s20 = sphi 0, %s18
      %s21 = sphi 0, %s19
      %s22 = sphi 0, %s20
      %s23 = sphi 0, %s21
      %s33 = sphi 0, %s35
      %s36 = sphi 0, %s33
      %s37 = sphi 0, %s36
      %s53 = sphi 0, %s37
      %s59 = sphi 0, %s61
      %s62 = sphi 0, %s59
      %s63 = sphi 0, %s62
      %s79 = sphi 0, %s63
      %s85 = sphi 0, %s87
      %s88 = sphi 0, %s85
      %s89 = sphi 0, %s88
      %s105 = sphi 0, %s89
      %s113 = sphi 0, %s115
      %s116 = sphi 0, %s113
      %s117 = sphi 0, %s116
      %s133 = sphi 0, %s117
    $region4: #{enc_txt_forward.6} parent=1 // loop_header_branch
      %14 = sbr.rel (%p12) target = $region8
    $region5: #{enc_txt_forward.6} parent=1 // loop_body
      %s16 = ssub.s32 %s11, 1
      %s17 = ssub.s32 %s11, 2
      %s24 = sadd.s32 1, %s19
      %p25 = scmp.ge.s32.totalorder %s24, 1
      %s26 = scalar_select %p25, 0, %s24
      %s27 = sadd.s32 1, %s18
      %s28 = scalar_select %p25, %s27, %s18
      %p29 = scmp.ge.s32.totalorder %s28, 4
      %s30 = scalar_select %p29, 0, %s28
      %s31 = ssub.s32 %s18, %s30
      %p32 = scmp.eq.s32.totalorder %s31, 0
      %s34 = sadd.s32 %s33, 1
      %s35 = scalar_select %p32, %s33, %s34
      %p38 = pneg %p32
      %p39 = scmp.eq.s32.totalorder %s11, 3
      %p40 = por %p38, %p39
      %p41 = scmp.ne.s32.totalorder %s33, %s36
      %p42 = scmp.eq.s32.totalorder %s11, 0
      %p43 = por %p41, %p42
      %p44 = scmp.ne.s32.totalorder %s33, %s36
      %p45 = scmp.eq.s32.totalorder %s16, 3
      %p46 = por %p44, %p45
      %p47 = scmp.ne.s32.totalorder %s36, %s37
      %p48 = scmp.eq.s32.totalorder %s16, 0
      %p49 = por %p47, %p48
      %p50 = scmp.ne.s32.totalorder %s36, %s37
      %p51 = scmp.eq.s32.totalorder %s17, 3
      %p52 = por %p50, %p51
      %p54 = scmp.ne.s32.totalorder %s37, %s53
      %p55 = scmp.eq.s32.totalorder %s17, 0
      %p56 = por %p54, %p55
      %s57 = ssub.s32 %s19, %s26
      %p58 = scmp.eq.s32.totalorder %s57, 0
      %s60 = sadd.s32 %s59, 1
      %s61 = scalar_select %p58, %s59, %s60
      %p64 = pneg %p58
      %p65 = scmp.eq.s32.totalorder %s11, 3
      %p66 = por %p64, %p65
      %p67 = scmp.ne.s32.totalorder %s59, %s62
      %p68 = scmp.eq.s32.totalorder %s11, 0
      %p69 = por %p67, %p68
      %p70 = scmp.ne.s32.totalorder %s59, %s62
      %p71 = scmp.eq.s32.totalorder %s16, 3
      %p72 = por %p70, %p71
      %p73 = scmp.ne.s32.totalorder %s62, %s63
      %p74 = scmp.eq.s32.totalorder %s16, 0
      %p75 = por %p73, %p74
      %p76 = scmp.ne.s32.totalorder %s62, %s63
      %p77 = scmp.eq.s32.totalorder %s17, 3
      %p78 = por %p76, %p77
      %p80 = scmp.ne.s32.totalorder %s63, %s79
      %p81 = scmp.eq.s32.totalorder %s17, 0
      %p82 = por %p80, %p81
      %s83 = ssub.s32 %s19, %s26
      %p84 = scmp.eq.s32.totalorder %s83, 0
      %s86 = sadd.s32 %s85, 1
      %s87 = scalar_select %p84, %s85, %s86
      %p90 = pneg %p84
      %p91 = scmp.eq.s32.totalorder %s11, 3
      %p92 = por %p90, %p91
      %p93 = scmp.ne.s32.totalorder %s85, %s88
      %p94 = scmp.eq.s32.totalorder %s11, 0
      %p95 = por %p93, %p94
      %p96 = scmp.ne.s32.totalorder %s85, %s88
      %p97 = scmp.eq.s32.totalorder %s16, 3
      %p98 = por %p96, %p97
      %p99 = scmp.ne.s32.totalorder %s88, %s89
      %p100 = scmp.eq.s32.totalorder %s16, 0
      %p101 = por %p99, %p100
      %p102 = scmp.ne.s32.totalorder %s88, %s89
      %p103 = scmp.eq.s32.totalorder %s17, 3
      %p104 = por %p102, %p103
      %p106 = scmp.ne.s32.totalorder %s89, %s105
      %p107 = scmp.eq.s32.totalorder %s17, 0
      %p108 = por %p106, %p107
      %s109 = ssub.s32 %s18, %s30
      %s110 = ssub.s32 %s19, %s26
      %s111 = sor.u32 %s109, %s110
      %p112 = scmp.eq.s32.totalorder %s111, 0
      %s114 = sadd.s32 %s113, 1
      %s115 = scalar_select %p112, %s113, %s114
      %p118 = pneg %p112
      %p119 = scmp.eq.s32.totalorder %s11, 3
      %p120 = por %p118, %p119
      %p121 = scmp.ne.s32.totalorder %s113, %s116
      %p122 = scmp.eq.s32.totalorder %s11, 0
      %p123 = por %p121, %p122
      %p124 = scmp.ne.s32.totalorder %s113, %s116
      %p125 = scmp.eq.s32.totalorder %s16, 3
      %p126 = por %p124, %p125
      %p127 = scmp.ne.s32.totalorder %s116, %s117
      %p128 = scmp.eq.s32.totalorder %s16, 0
      %p129 = por %p127, %p128
      %p130 = scmp.ne.s32.totalorder %s116, %s117
      %p131 = scmp.eq.s32.totalorder %s17, 3
      %p132 = por %p130, %p131
      %p134 = scmp.ne.s32.totalorder %s117, %s133
      %p135 = scmp.eq.s32.totalorder %s17, 0
      %p136 = por %p134, %p135
      %p137 = scmp.le.s32.totalorder 1, %s11
      %p138 = scmp.lt.s32.totalorder %s11, 5
      %p139 = pnand %p137, %p138
      %p140 = pneg %p139
      // Predicated region
      $region9: #{enc_txt_forward.6} parent=5 // pred_check
        _
      $region10: #{enc_txt_forward.6} parent=5 // pred_check_branch
        %142 = sbr.rel (%p139) target = $region12
      $region11: #{enc_txt_forward.6} parent=5 // pred_region
        %s143 = ssub.s32 %s11, 1
        // Predicated region
        $region13: #{enc_txt_forward.6} parent=11 // pred_check
          %p144 = pneg %p75
        $region14: #{enc_txt_forward.6} parent=11 // pred_check_branch
          %146 = sbr.rel (%p144) target = $region16
        $region15: #{enc_txt_forward.6} parent=11 // pred_region
          %s148 = ssub.s32 128, 128
          %149 = vsyncadd [#allocation3], %s148
          %s150 = smul.addr %s21, 64
          %s151 = scalar_lea.hbm %s1, %s150
          %s152 = sshll.u32 [#allocation2], 4
          %s153 = int_to_ptr.vmem [resolvable:$true] %s152
          %158 = dma.hbm_to_vmem [thread:$0]  %s151, 128, %s153, [#allocation3], 64, 64, 4
        $region16: #{enc_txt_forward.6} parent=11 // pred_fallthru
          _
        // Predicated region
        $region17: #{enc_txt_forward.6} parent=11 // pred_check
          %p159 = pneg %p101
        $region18: #{enc_txt_forward.6} parent=11 // pred_check_branch
          %161 = sbr.rel (%p159) target = $region20
        $region19: #{enc_txt_forward.6} parent=11 // pred_region
          %s163 = ssub.s32 16, 16
          %164 = vsyncadd [#allocation5], %s163
          %s165 = smul.addr %s21, 16
          %s166 = scalar_lea.hbm %s2, %s165
          %s168 = sshll.u32 [#allocation4], 4
          %s169 = int_to_ptr.vmem [resolvable:$true] %s168
          %171 = dma.hbm_to_vmem [thread:$0]  %s166, 16, %s169, [#allocation5]
        $region20: #{enc_txt_forward.6} parent=11 // pred_fallthru
          _
      $region12: #{enc_txt_forward.6} parent=5 // pred_fallthru
        _
      %p172 = scmp.lt.s32.totalorder %s11, 4
      // Predicated region
      $region21: #{enc_txt_forward.6} parent=5 // pred_check
        %p173 = pneg %p172
      $region22: #{enc_txt_forward.6} parent=5 // pred_check_branch
        %175 = sbr.rel (%p173) target = $region24
      $region23: #{enc_txt_forward.6} parent=5 // pred_region
        // Predicated region
        $region25: #{enc_txt_forward.6} parent=23 // pred_check
          %p176 = pneg %p43
        $region26: #{enc_txt_forward.6} parent=23 // pred_check_branch
          %178 = sbr.rel (%p176) target = $region28
        $region27: #{enc_txt_forward.6} parent=23 // pred_region
          %s179 = smul.u32 64, %s18
          %p180 = scmp.lt.s32.totalorder %s179, 255
          %s181 = scalar_select %p180, %s179, 255
          %s182 = smul.addr %s181, 4
          %s183 = scalar_lea.vmem %s0, %s182
          %s184 = smul.u32 64, %s18
        $region28: #{enc_txt_forward.6} parent=23 // pred_fallthru
          _
      $region24: #{enc_txt_forward.6} parent=5 // pred_fallthru
        _
      %p185 = scmp.le.s32.totalorder 1, %s11
      %p186 = scmp.lt.s32.totalorder %s11, 5
      %p187 = pnand %p185, %p186
      %p188 = pneg %p187
      // Predicated region
      $region29: #{enc_txt_forward.6} parent=5 // pred_check
        _
      $region30: #{enc_txt_forward.6} parent=5 // pred_check_branch
        %190 = sbr.rel (%p187) target = $region32
      $region31: #{enc_txt_forward.6} parent=5 // pred_region
        %s191 = ssub.s32 %s11, 1
        // Predicated region
        $region33: #{enc_txt_forward.6} parent=31 // pred_check
          %p192 = pneg %p75
        $region34: #{enc_txt_forward.6} parent=31 // pred_check_branch
          %194 = sbr.rel (%p192) target = $region36
        $region35: #{enc_txt_forward.6} parent=31 // pred_region
          %195 = dma.done [#allocation3], 128
        $region36: #{enc_txt_forward.6} parent=31 // pred_fallthru
          _
        // Predicated region
        $region37: #{enc_txt_forward.6} parent=31 // pred_check
          %p196 = pneg %p101
        $region38: #{enc_txt_forward.6} parent=31 // pred_check_branch
          %198 = sbr.rel (%p196) target = $region40
        $region39: #{enc_txt_forward.6} parent=31 // pred_region
          %199 = dma.done [#allocation5], 16
        $region40: #{enc_txt_forward.6} parent=31 // pred_fallthru
          _
        %s200 = smul.u32 64, %s20
        %p201 = scmp.lt.s32.totalorder %s200, 255
        %s202 = scalar_select %p201, %s200, 255
        %s203 = smul.addr %s202, 4
        %s204 = scalar_lea.vmem %s0, %s203
        %p205 = pneg %p49
        %p206 = pneg %p46
        %p207 = pneg %p75
        %p208 = pneg %p72
        %p209 = pneg %p101
        %p210 = pneg %p98
        %p211 = pneg %p129
        %p212 = pneg %p126
        %s213 = smul.u32 64, %s20
        %p214 = scmp.lt.s32.totalorder %s213, 255
        %s215 = scalar_select %p214, %s213, 255
        %p216 = scmp.lt.s32.totalorder %s21, 0
        %s217 = scalar_select %p216, %s21, 0
        %s218 = sadd.s32 %s217, %s215
        %s219 = smul.addr %s218, 4
        %s220 = scalar_lea.vmem %s3, %s219
        %s221 = smul.u32 64, %s20
        %p222 = scmp.lt.s32.totalorder %s221, 255
        %s223 = scalar_select %p222, %s221, 255
        %s224 = smul.addr %s223, 4
        %s225 = scalar_lea.vmem %s0, %s224
        %s226 = smul.u32 64, %s20
        %s227 = smul.u32 64, %s20
        %p228 = scmp.lt.s32.totalorder %s227, 255
        %s229 = scalar_select %p228, %s227, 255
        %p230 = scmp.lt.s32.totalorder %s21, 0
        %s231 = scalar_select %p230, %s21, 0
        %s232 = sadd.s32 %s231, %s229
        %s233 = smul.addr %s232, 4
        %s234 = scalar_lea.vmem %s3, %s233
        %s235 = smul.u32 64, %s20
        %v237 = vld [vmem:[%s225] sm:$0xf]
        %v238 = vld [vmem:[%s225 + $0x4] sm:$0xf]
        %v239 = vld [vmem:[%s225 + $0x8] sm:$0xf]
        %v240 = vld [vmem:[%s225 + $0xc] sm:$0xf]
        %v241 = vld [vmem:[%s225 + $0x10] sm:$0xf]
        %v242 = vld [vmem:[%s225 + $0x14] sm:$0xf]
        %v243 = vld [vmem:[%s225 + $0x18] sm:$0xf]
        %v244 = vld [vmem:[%s225 + $0x1c] sm:$0xf]
        %v245 = vld [vmem:[%s225 + $0x20] sm:$0xf]
        %v246 = vld [vmem:[%s225 + $0x24] sm:$0xf]
        %v247 = vld [vmem:[%s225 + $0x28] sm:$0xf]
        %v248 = vld [vmem:[%s225 + $0x2c] sm:$0xf]
        %v249 = vld [vmem:[%s225 + $0x30] sm:$0xf]
        %v250 = vld [vmem:[%s225 + $0x34] sm:$0xf]
        %v251 = vld [vmem:[%s225 + $0x38] sm:$0xf]
        %v252 = vld [vmem:[%s225 + $0x3c] sm:$0xf]
        %v253 = vld [vmem:[%s225 + $0x40] sm:$0xf]
        %v254 = vld [vmem:[%s225 + $0x44] sm:$0xf]
        %v255 = vld [vmem:[%s225 + $0x48] sm:$0xf]
        %v256 = vld [vmem:[%s225 + $0x4c] sm:$0xf]
        %v257 = vld [vmem:[%s225 + $0x50] sm:$0xf]
        %v258 = vld [vmem:[%s225 + $0x54] sm:$0xf]
        %v259 = vld [vmem:[%s225 + $0x58] sm:$0xf]
        %v260 = vld [vmem:[%s225 + $0x5c] sm:$0xf]
        %v261 = vld [vmem:[%s225 + $0x60] sm:$0xf]
        %v262 = vld [vmem:[%s225 + $0x64] sm:$0xf]
        %v263 = vld [vmem:[%s225 + $0x68] sm:$0xf]
        %v264 = vld [vmem:[%s225 + $0x6c] sm:$0xf]
        %v265 = vld [vmem:[%s225 + $0x70] sm:$0xf]
        %v266 = vld [vmem:[%s225 + $0x74] sm:$0xf]
        %v267 = vld [vmem:[%s225 + $0x78] sm:$0xf]
        %v268 = vld [vmem:[%s225 + $0x7c] sm:$0xf]
        %v269 = vld [vmem:[%s225 + $0x80] sm:$0xf]
        %v270 = vld [vmem:[%s225 + $0x84] sm:$0xf]
        %v271 = vld [vmem:[%s225 + $0x88] sm:$0xf]
        %v272 = vld [vmem:[%s225 + $0x8c] sm:$0xf]
        %v273 = vld [vmem:[%s225 + $0x90] sm:$0xf]
        %v274 = vld [vmem:[%s225 + $0x94] sm:$0xf]
        %v275 = vld [vmem:[%s225 + $0x98] sm:$0xf]
        %v276 = vld [vmem:[%s225 + $0x9c] sm:$0xf]
        %v277 = vld [vmem:[%s225 + $0xa0] sm:$0xf]
        %v278 = vld [vmem:[%s225 + $0xa4] sm:$0xf]
        %v279 = vld [vmem:[%s225 + $0xa8] sm:$0xf]
        %v280 = vld [vmem:[%s225 + $0xac] sm:$0xf]
        %v281 = vld [vmem:[%s225 + $0xb0] sm:$0xf]
        %v282 = vld [vmem:[%s225 + $0xb4] sm:$0xf]
        %v283 = vld [vmem:[%s225 + $0xb8] sm:$0xf]
        %v284 = vld [vmem:[%s225 + $0xbc] sm:$0xf]
        %v285 = vld [vmem:[%s225 + $0xc0] sm:$0xf]
        %v286 = vld [vmem:[%s225 + $0xc4] sm:$0xf]
        %v287 = vld [vmem:[%s225 + $0xc8] sm:$0xf]
        %v288 = vld [vmem:[%s225 + $0xcc] sm:$0xf]
        %v289 = vld [vmem:[%s225 + $0xd0] sm:$0xf]
        %v290 = vld [vmem:[%s225 + $0xd4] sm:$0xf]
        %v291 = vld [vmem:[%s225 + $0xd8] sm:$0xf]
        %v292 = vld [vmem:[%s225 + $0xdc] sm:$0xf]
        %v293 = vld [vmem:[%s225 + $0xe0] sm:$0xf]
        %v294 = vld [vmem:[%s225 + $0xe4] sm:$0xf]
        %v295 = vld [vmem:[%s225 + $0xe8] sm:$0xf]
        %v296 = vld [vmem:[%s225 + $0xec] sm:$0xf]
        %v297 = vld [vmem:[%s225 + $0xf0] sm:$0xf]
        %v298 = vld [vmem:[%s225 + $0xf4] sm:$0xf]
        %v299 = vld [vmem:[%s225 + $0xf8] sm:$0xf]
        %v300 = vld [vmem:[%s225 + $0xfc] sm:$0xf]
        %v301 = vld [vmem:[#allocation2] sm:$0xf]
        %v302 = vld [vmem:[#allocation2 + $0x4] sm:$0xf]
        %v303 = vld [vmem:[#allocation4] sm:$0x1]
        %v305 = vlaneseq
        %v306 = vshrl.u32 %v305, 7
        %v307 = vsub.s32 0, %v306
        %v308 = vrot.slane %v303, %v307
        %v374 = vunpack.c.l.b16 %v237
        %v375 = vunpack.c.l.b16 %v238
        %v376 = vunpack.c.l.b16 %v239
        %v377 = vunpack.c.l.b16 %v240
        %v378 = vunpack.c.l.b16 %v241
        %v379 = vunpack.c.l.b16 %v242
        %v380 = vunpack.c.l.b16 %v243
        %v381 = vunpack.c.l.b16 %v244
        %v382 = vunpack.c.l.b16 %v245
        %v383 = vunpack.c.l.b16 %v246
        %v384 = vunpack.c.l.b16 %v247
        %v385 = vunpack.c.l.b16 %v248
        %v386 = vunpack.c.l.b16 %v249
        %v387 = vunpack.c.l.b16 %v250
        %v388 = vunpack.c.l.b16 %v251
        %v389 = vunpack.c.l.b16 %v252
        %v390 = vunpack.c.l.b16 %v253
        %v391 = vunpack.c.l.b16 %v254
        %v392 = vunpack.c.l.b16 %v255
        %v393 = vunpack.c.l.b16 %v256
        %v394 = vunpack.c.l.b16 %v257
        %v395 = vunpack.c.l.b16 %v258
        %v396 = vunpack.c.l.b16 %v259
        %v397 = vunpack.c.l.b16 %v260
        %v398 = vunpack.c.l.b16 %v261
        %v399 = vunpack.c.l.b16 %v262
        %v400 = vunpack.c.l.b16 %v263
        %v401 = vunpack.c.l.b16 %v264
        %v402 = vunpack.c.l.b16 %v265
        %v403 = vunpack.c.l.b16 %v266
        %v404 = vunpack.c.l.b16 %v267
        %v405 = vunpack.c.l.b16 %v268
        %v406 = vunpack.c.l.b16 %v269
        %v407 = vunpack.c.l.b16 %v270
        %v408 = vunpack.c.l.b16 %v271
        %v409 = vunpack.c.l.b16 %v272
        %v410 = vunpack.c.l.b16 %v273
        %v411 = vunpack.c.l.b16 %v274
        %v412 = vunpack.c.l.b16 %v275
        %v413 = vunpack.c.l.b16 %v276
        %v414 = vunpack.c.l.b16 %v277
        %v415 = vunpack.c.l.b16 %v278
        %v416 = vunpack.c.l.b16 %v279
        %v417 = vunpack.c.l.b16 %v280
        %v418 = vunpack.c.l.b16 %v281
        %v419 = vunpack.c.l.b16 %v282
        %v420 = vunpack.c.l.b16 %v283
        %v421 = vunpack.c.l.b16 %v284
        %v422 = vunpack.c.l.b16 %v285
        %v423 = vunpack.c.l.b16 %v286
        %v424 = vunpack.c.l.b16 %v287
        %v425 = vunpack.c.l.b16 %v288
        %v426 = vunpack.c.l.b16 %v289
        %v427 = vunpack.c.l.b16 %v290
        %v428 = vunpack.c.l.b16 %v291
        %v429 = vunpack.c.l.b16 %v292
        %v430 = vunpack.c.l.b16 %v293
        %v431 = vunpack.c.l.b16 %v294
        %v432 = vunpack.c.l.b16 %v295
        %v433 = vunpack.c.l.b16 %v296
        %v434 = vunpack.c.l.b16 %v297
        %v435 = vunpack.c.l.b16 %v298
        %v436 = vunpack.c.l.b16 %v299
        %v437 = vunpack.c.l.b16 %v300
        %v438 = vpack.c.b16 %v375, %v374
        %v439 = vpack.c.b16 %v377, %v376
        %v440 = vpack.c.b16 %v379, %v378
        %v441 = vpack.c.b16 %v381, %v380
        %v442 = vpack.c.b16 %v383, %v382
        %v443 = vpack.c.b16 %v385, %v384
        %v444 = vpack.c.b16 %v387, %v386
        %v445 = vpack.c.b16 %v389, %v388
        %v446 = vpack.c.b16 %v391, %v390
        %v447 = vpack.c.b16 %v393, %v392
        %v448 = vpack.c.b16 %v395, %v394
        %v449 = vpack.c.b16 %v397, %v396
        %v450 = vpack.c.b16 %v399, %v398
        %v451 = vpack.c.b16 %v401, %v400
        %v452 = vpack.c.b16 %v403, %v402
        %v453 = vpack.c.b16 %v405, %v404
        %v454 = vpack.c.b16 %v407, %v406
        %v455 = vpack.c.b16 %v409, %v408
        %v456 = vpack.c.b16 %v411, %v410
        %v457 = vpack.c.b16 %v413, %v412
        %v458 = vpack.c.b16 %v415, %v414
        %v459 = vpack.c.b16 %v417, %v416
        %v460 = vpack.c.b16 %v419, %v418
        %v461 = vpack.c.b16 %v421, %v420
        %v462 = vpack.c.b16 %v423, %v422
        %v463 = vpack.c.b16 %v425, %v424
        %v464 = vpack.c.b16 %v427, %v426
        %v465 = vpack.c.b16 %v429, %v428
        %v466 = vpack.c.b16 %v431, %v430
        %v467 = vpack.c.b16 %v433, %v432
        %v468 = vpack.c.b16 %v435, %v434
        %v469 = vpack.c.b16 %v437, %v436
        %v472 = vunpack.c.l.b16 %v301
        %v473 = vunpack.c.l.b16 %v302
        %v474 = vpack.c.b16 %v473, %v472
        %vm476 = vcmask 130048
        %v478 = vsel %vm476, %v438, 0
        %v481 = vsel %vm476, %v439, 0
        %v484 = vsel %vm476, %v440, 0
        %v487 = vsel %vm476, %v441, 0
        %v490 = vsel %vm476, %v442, 0
        %v493 = vsel %vm476, %v443, 0
        %v496 = vsel %vm476, %v444, 0
        %v499 = vsel %vm476, %v445, 0
        %v502 = vsel %vm476, %v446, 0
        %v505 = vsel %vm476, %v447, 0
        %v508 = vsel %vm476, %v448, 0
        %v511 = vsel %vm476, %v449, 0
        %v514 = vsel %vm476, %v450, 0
        %v517 = vsel %vm476, %v451, 0
        %v520 = vsel %vm476, %v452, 0
        %v523 = vsel %vm476, %v453, 0
        %v526 = vsel %vm476, %v454, 0
        %v529 = vsel %vm476, %v455, 0
        %v532 = vsel %vm476, %v456, 0
        %v535 = vsel %vm476, %v457, 0
        %v538 = vsel %vm476, %v458, 0
        %v541 = vsel %vm476, %v459, 0
        %v544 = vsel %vm476, %v460, 0
        %v547 = vsel %vm476, %v461, 0
        %v550 = vsel %vm476, %v462, 0
        %v553 = vsel %vm476, %v463, 0
        %v556 = vsel %vm476, %v464, 0
        %v559 = vsel %vm476, %v465, 0
        %v562 = vsel %vm476, %v466, 0
        %v565 = vsel %vm476, %v467, 0
        %v568 = vsel %vm476, %v468, 0
        %v571 = vsel %vm476, %v469, 0
        %573 = vmatprep.subr.bf16.mxu0 0
        %574 = vmatpush1.bf16.msra.mxu0 %v474
        %575 = vmatprep.subr.bf16.mxu0 0
        %576 = vmatpush1.bf16.msra.mxu0 0
        %577 = vmatprep.subr.bf16.mxu0 0
        %578 = vmatpush1.bf16.msra.mxu0 0
        %579 = vmatprep.subr.bf16.mxu0 0
        %580 = vmatpush1.bf16.msra.mxu0 0
        %581 = vmatprep.subr.bf16.mxu0 0
        %582 = vmatpush1.bf16.msra.mxu0 0
        %583 = vmatprep.subr.bf16.mxu0 0
        %584 = vmatpush1.bf16.msra.mxu0 0
        %585 = vmatprep.subr.bf16.mxu0 0
        %586 = vmatpush1.bf16.msra.mxu0 0
        %587 = vmatprep.subr.bf16.mxu0 0
        %588 = vmatpush1.bf16.msra.mxu0 0
        %589 = vmatprep.subr.bf16.mxu0 0
        %590 = vmatpush1.bf16.msra.mxu0 0
        %591 = vmatprep.subr.bf16.mxu0 0
        %592 = vmatpush1.bf16.msra.mxu0 0
        %593 = vmatprep.subr.bf16.mxu0 0
        %594 = vmatpush1.bf16.msra.mxu0 0
        %595 = vmatprep.subr.bf16.mxu0 0
        %596 = vmatpush1.bf16.msra.mxu0 0
        %597 = vmatprep.subr.bf16.mxu0 0
        %598 = vmatpush1.bf16.msra.mxu0 0
        %599 = vmatprep.subr.bf16.mxu0 0
        %600 = vmatpush1.bf16.msra.mxu0 0
        %601 = vmatprep.subr.bf16.mxu0 0
        %602 = vmatpush1.bf16.msra.mxu0 0
        %603 = vmatprep.subr.bf16.mxu0 0
        %604 = vmatpush1.bf16.msra.mxu0 0
        %605 = vmatprep.mubr.bf16.mxu0 0
        %606 = vmatmul.mubr.bf16.gmra.mrb[0].mxu0 %v478
        %v607 = vpop.f32.mrb[0].mxu0
        %v608 = vadd.f32 %v308, %v607
        %v609 = vpop.f32.mrb[0].mxu0
        %v610 = vpop.f32.mrb[0].mxu0
        %v611 = vadd.f32 %v308, %v610
        %v612 = vpop.f32.mrb[0].mxu0
        %613 = vmatprep.mubr.bf16.mxu0 0
        %614 = vmatmul.mubr.bf16.gmra.mrb[0].mxu0 %v481
        %v615 = vpop.f32.mrb[0].mxu0
        %v616 = vadd.f32 %v308, %v615
        %v617 = vpop.f32.mrb[0].mxu0
        %v618 = vpop.f32.mrb[0].mxu0
        %v619 = vadd.f32 %v308, %v618
        %v620 = vpop.f32.mrb[0].mxu0
        %621 = vmatprep.mubr.bf16.mxu0 0
        %622 = vmatmul.mubr.bf16.gmra.mrb[0].mxu0 %v484
        %v623 = vpop.f32.mrb[0].mxu0
        %v624 = vadd.f32 %v308, %v623
        %v625 = vpop.f32.mrb[0].mxu0
        %v626 = vpop.f32.mrb[0].mxu0
        %v627 = vadd.f32 %v308, %v626
        %v628 = vpop.f32.mrb[0].mxu0
        %629 = vmatprep.mubr.bf16.mxu0 0
        %630 = vmatmul.mubr.bf16.gmra.mrb[0].mxu0 %v487
        %v631 = vpop.f32.mrb[0].mxu0
        %v632 = vadd.f32 %v308, %v631
        %v633 = vpop.f32.mrb[0].mxu0
        %v634 = vpop.f32.mrb[0].mxu0
        %v635 = vadd.f32 %v308, %v634
        %v636 = vpop.f32.mrb[0].mxu0
        %637 = vmatprep.mubr.bf16.mxu0 0
        %638 = vmatmul.mubr.bf16.gmra.mrb[0].mxu0 %v490
        %v639 = vpop.f32.mrb[0].mxu0
        %v640 = vadd.f32 %v308, %v639
        %v641 = vpop.f32.mrb[0].mxu0
        %v642 = vpop.f32.mrb[0].mxu0
        %v643 = vadd.f32 %v308, %v642
        %v644 = vpop.f32.mrb[0].mxu0
        %645 = vmatprep.mubr.bf16.mxu0 0
        %646 = vmatmul.mubr.bf16.gmra.mrb[0].mxu0 %v493
        %v647 = vpop.f32.mrb[0].mxu0
        %v648 = vadd.f32 %v308, %v647
        %v649 = vpop.f32.mrb[0].mxu0
        %v650 = vpop.f32.mrb[0].mxu0
        %v651 = vadd.f32 %v308, %v650
        %v652 = vpop.f32.mrb[0].mxu0
        %653 = vmatprep.mubr.bf16.mxu0 0
        %654 = vmatmul.mubr.bf16.gmra.mrb[0].mxu0 %v496
        %v655 = vpop.f32.mrb[0].mxu0
        %v656 = vadd.f32 %v308, %v655
        %v657 = vpop.f32.mrb[0].mxu0
        %v658 = vpop.f32.mrb[0].mxu0
        %v659 = vadd.f32 %v308, %v658
        %v660 = vpop.f32.mrb[0].mxu0
        %661 = vmatprep.mubr.bf16.mxu0 0
        %662 = vmatmul.mubr.bf16.gmra.mrb[0].mxu0 %v499
        %v663 = vpop.f32.mrb[0].mxu0
        %v664 = vadd.f32 %v308, %v663
        %v665 = vpop.f32.mrb[0].mxu0
        %v666 = vpop.f32.mrb[0].mxu0
        %v667 = vadd.f32 %v308, %v666
        %v668 = vpop.f32.mrb[0].mxu0
        %669 = vmatprep.mubr.bf16.mxu0 0
        %670 = vmatmul.mubr.bf16.gmra.mrb[0].mxu0 %v502
        %v671 = vpop.f32.mrb[0].mxu0
        %v672 = vadd.f32 %v308, %v671
        %v673 = vpop.f32.mrb[0].mxu0
        %v674 = vpop.f32.mrb[0].mxu0
        %v675 = vadd.f32 %v308, %v674
        %v676 = vpop.f32.mrb[0].mxu0
        %677 = vmatprep.mubr.bf16.mxu0 0
        %678 = vmatmul.mubr.bf16.gmra.mrb[0].mxu0 %v505
        %v679 = vpop.f32.mrb[0].mxu0
        %v680 = vadd.f32 %v308, %v679
        %v681 = vpop.f32.mrb[0].mxu0
        %v682 = vpop.f32.mrb[0].mxu0
        %v683 = vadd.f32 %v308, %v682
        %v684 = vpop.f32.mrb[0].mxu0
        %685 = vmatprep.mubr.bf16.mxu0 0
        %686 = vmatmul.mubr.bf16.gmra.mrb[0].mxu0 %v508
        %v687 = vpop.f32.mrb[0].mxu0
        %v688 = vadd.f32 %v308, %v687
        %v689 = vpop.f32.mrb[0].mxu0
        %v690 = vpop.f32.mrb[0].mxu0
        %v691 = vadd.f32 %v308, %v690
        %v692 = vpop.f32.mrb[0].mxu0
        %693 = vmatprep.mubr.bf16.mxu0 0
        %694 = vmatmul.mubr.bf16.gmra.mrb[0].mxu0 %v511
        %v695 = vpop.f32.mrb[0].mxu0
        %v696 = vadd.f32 %v308, %v695
        %v697 = vpop.f32.mrb[0].mxu0
        %v698 = vpop.f32.mrb[0].mxu0
        %v699 = vadd.f32 %v308, %v698
        %v700 = vpop.f32.mrb[0].mxu0
        %701 = vmatprep.mubr.bf16.mxu0 0
        %702 = vmatmul.mubr.bf16.gmra.mrb[0].mxu0 %v514
        %v703 = vpop.f32.mrb[0].mxu0
        %v704 = vadd.f32 %v308, %v703
        %v705 = vpop.f32.mrb[0].mxu0
        %v706 = vpop.f32.mrb[0].mxu0
        %v707 = vadd.f32 %v308, %v706
        %v708 = vpop.f32.mrb[0].mxu0
        %709 = vmatprep.mubr.bf16.mxu0 0
        %710 = vmatmul.mubr.bf16.gmra.mrb[0].mxu0 %v517
        %v711 = vpop.f32.mrb[0].mxu0
        %v712 = vadd.f32 %v308, %v711
        %v713 = vpop.f32.mrb[0].mxu0
        %v714 = vpop.f32.mrb[0].mxu0
        %v715 = vadd.f32 %v308, %v714
        %v716 = vpop.f32.mrb[0].mxu0
        %717 = vmatprep.mubr.bf16.mxu0 0
        %718 = vmatmul.mubr.bf16.gmra.mrb[0].mxu0 %v520
        %v719 = vpop.f32.mrb[0].mxu0
        %v720 = vadd.f32 %v308, %v719
        %v721 = vpop.f32.mrb[0].mxu0
        %v722 = vpop.f32.mrb[0].mxu0
        %v723 = vadd.f32 %v308, %v722
        %v724 = vpop.f32.mrb[0].mxu0
        %725 = vmatprep.mubr.bf16.mxu0 0
        %726 = vmatmul.mubr.bf16.gmra.mrb[0].mxu0 %v523
        %v727 = vpop.f32.mrb[0].mxu0
        %v728 = vadd.f32 %v308, %v727
        %v729 = vpop.f32.mrb[0].mxu0
        %v730 = vpop.f32.mrb[0].mxu0
        %v731 = vadd.f32 %v308, %v730
        %v732 = vpop.f32.mrb[0].mxu0
        %733 = vmatprep.mubr.bf16.mxu0 0
        %734 = vmatmul.mubr.bf16.gmra.mrb[0].mxu0 %v526
        %v735 = vpop.f32.mrb[0].mxu0
        %v736 = vadd.f32 %v308, %v735
        %v737 = vpop.f32.mrb[0].mxu0
        %v738 = vpop.f32.mrb[0].mxu0
        %v739 = vadd.f32 %v308, %v738
        %v740 = vpop.f32.mrb[0].mxu0
        %741 = vmatprep.mubr.bf16.mxu0 0
        %742 = vmatmul.mubr.bf16.gmra.mrb[0].mxu0 %v529
        %v743 = vpop.f32.mrb[0].mxu0
        %v744 = vadd.f32 %v308, %v743
        %v745 = vpop.f32.mrb[0].mxu0
        %v746 = vpop.f32.mrb[0].mxu0
        %v747 = vadd.f32 %v308, %v746
        %v748 = vpop.f32.mrb[0].mxu0
        %749 = vmatprep.mubr.bf16.mxu0 0
        %750 = vmatmul.mubr.bf16.gmra.mrb[0].mxu0 %v532
        %v751 = vpop.f32.mrb[0].mxu0
        %v752 = vadd.f32 %v308, %v751
        %v753 = vpop.f32.mrb[0].mxu0
        %v754 = vpop.f32.mrb[0].mxu0
        %v755 = vadd.f32 %v308, %v754
        %v756 = vpop.f32.mrb[0].mxu0
        %757 = vmatprep.mubr.bf16.mxu0 0
        %758 = vmatmul.mubr.bf16.gmra.mrb[0].mxu0 %v535
        %v759 = vpop.f32.mrb[0].mxu0
        %v760 = vadd.f32 %v308, %v759
        %v761 = vpop.f32.mrb[0].mxu0
        %v762 = vpop.f32.mrb[0].mxu0
        %v763 = vadd.f32 %v308, %v762
        %v764 = vpop.f32.mrb[0].mxu0
        %765 = vmatprep.mubr.bf16.mxu0 0
        %766 = vmatmul.mubr.bf16.gmra.mrb[0].mxu0 %v538
        %v767 = vpop.f32.mrb[0].mxu0
        %v768 = vadd.f32 %v308, %v767
        %v769 = vpop.f32.mrb[0].mxu0
        %v770 = vpop.f32.mrb[0].mxu0
        %v771 = vadd.f32 %v308, %v770
        %v772 = vpop.f32.mrb[0].mxu0
        %773 = vmatprep.mubr.bf16.mxu0 0
        %774 = vmatmul.mubr.bf16.gmra.mrb[0].mxu0 %v541
        %v775 = vpop.f32.mrb[0].mxu0
        %v776 = vadd.f32 %v308, %v775
        %v777 = vpop.f32.mrb[0].mxu0
        %v778 = vpop.f32.mrb[0].mxu0
        %v779 = vadd.f32 %v308, %v778
        %v780 = vpop.f32.mrb[0].mxu0
        %781 = vmatprep.mubr.bf16.mxu0 0
        %782 = vmatmul.mubr.bf16.gmra.mrb[0].mxu0 %v544
        %v783 = vpop.f32.mrb[0].mxu0
        %v784 = vadd.f32 %v308, %v783
        %v785 = vpop.f32.mrb[0].mxu0
        %v786 = vpop.f32.mrb[0].mxu0
        %v787 = vadd.f32 %v308, %v786
        %v788 = vpop.f32.mrb[0].mxu0
        %789 = vmatprep.mubr.bf16.mxu0 0
        %790 = vmatmul.mubr.bf16.gmra.mrb[0].mxu0 %v547
        %v791 = vpop.f32.mrb[0].mxu0
        %v792 = vadd.f32 %v308, %v791
        %v793 = vpop.f32.mrb[0].mxu0
        %v794 = vpop.f32.mrb[0].mxu0
        %v795 = vadd.f32 %v308, %v794
        %v796 = vpop.f32.mrb[0].mxu0
        %797 = vmatprep.mubr.bf16.mxu0 0
        %798 = vmatmul.mubr.bf16.gmra.mrb[0].mxu0 %v550
        %v799 = vpop.f32.mrb[0].mxu0
        %v800 = vadd.f32 %v308, %v799
        %v801 = vpop.f32.mrb[0].mxu0
        %v802 = vpop.f32.mrb[0].mxu0
        %v803 = vadd.f32 %v308, %v802
        %v804 = vpop.f32.mrb[0].mxu0
        %805 = vmatprep.mubr.bf16.mxu0 0
        %806 = vmatmul.mubr.bf16.gmra.mrb[0].mxu0 %v553
        %v807 = vpop.f32.mrb[0].mxu0
        %v808 = vadd.f32 %v308, %v807
        %v809 = vpop.f32.mrb[0].mxu0
        %v810 = vpop.f32.mrb[0].mxu0
        %v811 = vadd.f32 %v308, %v810
        %v812 = vpop.f32.mrb[0].mxu0
        %813 = vmatprep.mubr.bf16.mxu0 0
        %814 = vmatmul.mubr.bf16.gmra.mrb[0].mxu0 %v556
        %v815 = vpop.f32.mrb[0].mxu0
        %v816 = vadd.f32 %v308, %v815
        %v817 = vpop.f32.mrb[0].mxu0
        %v818 = vpop.f32.mrb[0].mxu0
        %v819 = vadd.f32 %v308, %v818
        %v820 = vpop.f32.mrb[0].mxu0
        %821 = vmatprep.mubr.bf16.mxu0 0
        %822 = vmatmul.mubr.bf16.gmra.mrb[0].mxu0 %v559
        %v823 = vpop.f32.mrb[0].mxu0
        %v824 = vadd.f32 %v308, %v823
        %v825 = vpop.f32.mrb[0].mxu0
        %v826 = vpop.f32.mrb[0].mxu0
        %v827 = vadd.f32 %v308, %v826
        %v828 = vpop.f32.mrb[0].mxu0
        %829 = vmatprep.mubr.bf16.mxu0 0
        %830 = vmatmul.mubr.bf16.gmra.mrb[0].mxu0 %v562
        %v831 = vpop.f32.mrb[0].mxu0
        %v832 = vadd.f32 %v308, %v831
        %v833 = vpop.f32.mrb[0].mxu0
        %v834 = vpop.f32.mrb[0].mxu0
        %v835 = vadd.f32 %v308, %v834
        %v836 = vpop.f32.mrb[0].mxu0
        %837 = vmatprep.mubr.bf16.mxu0 0
        %838 = vmatmul.mubr.bf16.gmra.mrb[0].mxu0 %v565
        %v839 = vpop.f32.mrb[0].mxu0
        %v840 = vadd.f32 %v308, %v839
        %v841 = vpop.f32.mrb[0].mxu0
        %v842 = vpop.f32.mrb[0].mxu0
        %v843 = vadd.f32 %v308, %v842
        %v844 = vpop.f32.mrb[0].mxu0
        %845 = vmatprep.mubr.bf16.mxu0 0
        %846 = vmatmul.mubr.bf16.gmra.mrb[0].mxu0 %v568
        %v847 = vpop.f32.mrb[0].mxu0
        %v848 = vadd.f32 %v308, %v847
        %v849 = vpop.f32.mrb[0].mxu0
        %v850 = vpop.f32.mrb[0].mxu0
        %v851 = vadd.f32 %v308, %v850
        %v852 = vpop.f32.mrb[0].mxu0
        %853 = vmatprep.mubr.bf16.mxu0 0
        %854 = vmatmul.mubr.bf16.gmra.mrb[0].mxu0 %v571
        %v855 = vpop.f32.mrb[0].mxu0
        %v856 = vadd.f32 %v308, %v855
        %v857 = vpop.f32.mrb[0].mxu0
        %v858 = vpop.f32.mrb[0].mxu0
        %v859 = vadd.f32 %v308, %v858
        %v860 = vpop.f32.mrb[0].mxu0
        %861 = vdwg.mxu0
        %v862 = vmax.f32 %v608, 0.0
        %v863 = vmax.f32 %v611, 0.0
        %v864 = vmax.f32 %v616, 0.0
        %v865 = vmax.f32 %v619, 0.0
        %v866 = vmax.f32 %v624, 0.0
        %v867 = vmax.f32 %v627, 0.0
        %v868 = vmax.f32 %v632, 0.0
        %v869 = vmax.f32 %v635, 0.0
        %v870 = vmax.f32 %v640, 0.0
        %v871 = vmax.f32 %v643, 0.0
        %v872 = vmax.f32 %v648, 0.0
        %v873 = vmax.f32 %v651, 0.0
        %v874 = vmax.f32 %v656, 0.0
        %v875 = vmax.f32 %v659, 0.0
        %v876 = vmax.f32 %v664, 0.0
        %v877 = vmax.f32 %v667, 0.0
        %v878 = vmax.f32 %v672, 0.0
        %v879 = vmax.f32 %v675, 0.0
        %v880 = vmax.f32 %v680, 0.0
        %v881 = vmax.f32 %v683, 0.0
        %v882 = vmax.f32 %v688, 0.0
        %v883 = vmax.f32 %v691, 0.0
        %v884 = vmax.f32 %v696, 0.0
        %v885 = vmax.f32 %v699, 0.0
        %v886 = vmax.f32 %v704, 0.0
        %v887 = vmax.f32 %v707, 0.0
        %v888 = vmax.f32 %v712, 0.0
        %v889 = vmax.f32 %v715, 0.0
        %v890 = vmax.f32 %v720, 0.0
        %v891 = vmax.f32 %v723, 0.0
        %v892 = vmax.f32 %v728, 0.0
        %v893 = vmax.f32 %v731, 0.0
        %v894 = vmax.f32 %v736, 0.0
        %v895 = vmax.f32 %v739, 0.0
        %v896 = vmax.f32 %v744, 0.0
        %v897 = vmax.f32 %v747, 0.0
        %v898 = vmax.f32 %v752, 0.0
        %v899 = vmax.f32 %v755, 0.0
        %v900 = vmax.f32 %v760, 0.0
        %v901 = vmax.f32 %v763, 0.0
        %v902 = vmax.f32 %v768, 0.0
        %v903 = vmax.f32 %v771, 0.0
        %v904 = vmax.f32 %v776, 0.0
        %v905 = vmax.f32 %v779, 0.0
        %v906 = vmax.f32 %v784, 0.0
        %v907 = vmax.f32 %v787, 0.0
        %v908 = vmax.f32 %v792, 0.0
        %v909 = vmax.f32 %v795, 0.0
        %v910 = vmax.f32 %v800, 0.0
        %v911 = vmax.f32 %v803, 0.0
        %v912 = vmax.f32 %v808, 0.0
        %v913 = vmax.f32 %v811, 0.0
        %v914 = vmax.f32 %v816, 0.0
        %v915 = vmax.f32 %v819, 0.0
        %v916 = vmax.f32 %v824, 0.0
        %v917 = vmax.f32 %v827, 0.0
        %v918 = vmax.f32 %v832, 0.0
        %v919 = vmax.f32 %v835, 0.0
        %v920 = vmax.f32 %v840, 0.0
        %v921 = vmax.f32 %v843, 0.0
        %v922 = vmax.f32 %v848, 0.0
        %v923 = vmax.f32 %v851, 0.0
        %v924 = vmax.f32 %v856, 0.0
        %v925 = vmax.f32 %v859, 0.0
        %v926 = vpack.c.bf16 %v863, %v862
        %v927 = vpack.c.bf16 %v865, %v864
        %v928 = vpack.c.bf16 %v867, %v866
        %v929 = vpack.c.bf16 %v869, %v868
        %v930 = vpack.c.bf16 %v871, %v870
        %v931 = vpack.c.bf16 %v873, %v872
        %v932 = vpack.c.bf16 %v875, %v874
        %v933 = vpack.c.bf16 %v877, %v876
        %v934 = vpack.c.bf16 %v879, %v878
        %v935 = vpack.c.bf16 %v881, %v880
        %v936 = vpack.c.bf16 %v883, %v882
        %v937 = vpack.c.bf16 %v885, %v884
        %v938 = vpack.c.bf16 %v887, %v886
        %v939 = vpack.c.bf16 %v889, %v888
        %v940 = vpack.c.bf16 %v891, %v890
        %v941 = vpack.c.bf16 %v893, %v892
        %v942 = vpack.c.bf16 %v895, %v894
        %v943 = vpack.c.bf16 %v897, %v896
        %v944 = vpack.c.bf16 %v899, %v898
        %v945 = vpack.c.bf16 %v901, %v900
        %v946 = vpack.c.bf16 %v903, %v902
        %v947 = vpack.c.bf16 %v905, %v904
        %v948 = vpack.c.bf16 %v907, %v906
        %v949 = vpack.c.bf16 %v909, %v908
        %v950 = vpack.c.bf16 %v911, %v910
        %v951 = vpack.c.bf16 %v913, %v912
        %v952 = vpack.c.bf16 %v915, %v914
        %v953 = vpack.c.bf16 %v917, %v916
        %v954 = vpack.c.bf16 %v919, %v918
        %v955 = vpack.c.bf16 %v921, %v920
        %v956 = vpack.c.bf16 %v923, %v922
        %v957 = vpack.c.bf16 %v925, %v924
        %v990 = vunpack.c.l.b16 %v926
        %v991 = vunpack.c.h.b16 %v926
        %v992 = vunpack.c.l.b16 %v927
        %v993 = vunpack.c.h.b16 %v927
        %v994 = vunpack.c.l.b16 %v928
        %v995 = vunpack.c.h.b16 %v928
        %v996 = vunpack.c.l.b16 %v929
        %v997 = vunpack.c.h.b16 %v929
        %v998 = vunpack.c.l.b16 %v930
        %v999 = vunpack.c.h.b16 %v930
        %v1000 = vunpack.c.l.b16 %v931
        %v1001 = vunpack.c.h.b16 %v931
        %v1002 = vunpack.c.l.b16 %v932
        %v1003 = vunpack.c.h.b16 %v932
        %v1004 = vunpack.c.l.b16 %v933
        %v1005 = vunpack.c.h.b16 %v933
        %v1006 = vunpack.c.l.b16 %v934
        %v1007 = vunpack.c.h.b16 %v934
        %v1008 = vunpack.c.l.b16 %v935
        %v1009 = vunpack.c.h.b16 %v935
        %v1010 = vunpack.c.l.b16 %v936
        %v1011 = vunpack.c.h.b16 %v936
        %v1012 = vunpack.c.l.b16 %v937
        %v1013 = vunpack.c.h.b16 %v937
        %v1014 = vunpack.c.l.b16 %v938
        %v1015 = vunpack.c.h.b16 %v938
        %v1016 = vunpack.c.l.b16 %v939
        %v1017 = vunpack.c.h.b16 %v939
        %v1018 = vunpack.c.l.b16 %v940
        %v1019 = vunpack.c.h.b16 %v940
        %v1020 = vunpack.c.l.b16 %v941
        %v1021 = vunpack.c.h.b16 %v941
        %v1022 = vunpack.c.l.b16 %v942
        %v1023 = vunpack.c.h.b16 %v942
        %v1024 = vunpack.c.l.b16 %v943
        %v1025 = vunpack.c.h.b16 %v943
        %v1026 = vunpack.c.l.b16 %v944
        %v1027 = vunpack.c.h.b16 %v944
        %v1028 = vunpack.c.l.b16 %v945
        %v1029 = vunpack.c.h.b16 %v945
        %v1030 = vunpack.c.l.b16 %v946
        %v1031 = vunpack.c.h.b16 %v946
        %v1032 = vunpack.c.l.b16 %v947
        %v1033 = vunpack.c.h.b16 %v947
        %v1034 = vunpack.c.l.b16 %v948
        %v1035 = vunpack.c.h.b16 %v948
        %v1036 = vunpack.c.l.b16 %v949
        %v1037 = vunpack.c.h.b16 %v949
        %v1038 = vunpack.c.l.b16 %v950
        %v1039 = vunpack.c.h.b16 %v950
        %v1040 = vunpack.c.l.b16 %v951
        %v1041 = vunpack.c.h.b16 %v951
        %v1042 = vunpack.c.l.b16 %v952
        %v1043 = vunpack.c.h.b16 %v952
        %v1044 = vunpack.c.l.b16 %v953
        %v1045 = vunpack.c.h.b16 %v953
        %v1046 = vunpack.c.l.b16 %v954
        %v1047 = vunpack.c.h.b16 %v954
        %v1048 = vunpack.c.l.b16 %v955
        %v1049 = vunpack.c.h.b16 %v955
        %v1050 = vunpack.c.l.b16 %v956
        %v1051 = vunpack.c.h.b16 %v956
        %v1052 = vunpack.c.l.b16 %v957
        %v1053 = vunpack.c.h.b16 %v957
        %v1054 = vpack.c.b16 %v990, %v990
        %v1055 = vpack.c.b16 %v991, %v991
        %v1056 = vpack.c.b16 %v992, %v992
        %v1057 = vpack.c.b16 %v993, %v993
        %v1058 = vpack.c.b16 %v994, %v994
        %v1059 = vpack.c.b16 %v995, %v995
        %v1060 = vpack.c.b16 %v996, %v996
        %v1061 = vpack.c.b16 %v997, %v997
        %v1062 = vpack.c.b16 %v998, %v998
        %v1063 = vpack.c.b16 %v999, %v999
        %v1064 = vpack.c.b16 %v1000, %v1000
        %v1065 = vpack.c.b16 %v1001, %v1001
        %v1066 = vpack.c.b16 %v1002, %v1002
        %v1067 = vpack.c.b16 %v1003, %v1003
        %v1068 = vpack.c.b16 %v1004, %v1004
        %v1069 = vpack.c.b16 %v1005, %v1005
        %v1070 = vpack.c.b16 %v1006, %v1006
        %v1071 = vpack.c.b16 %v1007, %v1007
        %v1072 = vpack.c.b16 %v1008, %v1008
        %v1073 = vpack.c.b16 %v1009, %v1009
        %v1074 = vpack.c.b16 %v1010, %v1010
        %v1075 = vpack.c.b16 %v1011, %v1011
        %v1076 = vpack.c.b16 %v1012, %v1012
        %v1077 = vpack.c.b16 %v1013, %v1013
        %v1078 = vpack.c.b16 %v1014, %v1014
        %v1079 = vpack.c.b16 %v1015, %v1015
        %v1080 = vpack.c.b16 %v1016, %v1016
        %v1081 = vpack.c.b16 %v1017, %v1017
        %v1082 = vpack.c.b16 %v1018, %v1018
        %v1083 = vpack.c.b16 %v1019, %v1019
        %v1084 = vpack.c.b16 %v1020, %v1020
        %v1085 = vpack.c.b16 %v1021, %v1021
        %v1086 = vpack.c.b16 %v1022, %v1022
        %v1087 = vpack.c.b16 %v1023, %v1023
        %v1088 = vpack.c.b16 %v1024, %v1024
        %v1089 = vpack.c.b16 %v1025, %v1025
        %v1090 = vpack.c.b16 %v1026, %v1026
        %v1091 = vpack.c.b16 %v1027, %v1027
        %v1092 = vpack.c.b16 %v1028, %v1028
        %v1093 = vpack.c.b16 %v1029, %v1029
        %v1094 = vpack.c.b16 %v1030, %v1030
        %v1095 = vpack.c.b16 %v1031, %v1031
        %v1096 = vpack.c.b16 %v1032, %v1032
        %v1097 = vpack.c.b16 %v1033, %v1033
        %v1098 = vpack.c.b16 %v1034, %v1034
        %v1099 = vpack.c.b16 %v1035, %v1035
        %v1100 = vpack.c.b16 %v1036, %v1036
        %v1101 = vpack.c.b16 %v1037, %v1037
        %v1102 = vpack.c.b16 %v1038, %v1038
        %v1103 = vpack.c.b16 %v1039, %v1039
        %v1104 = vpack.c.b16 %v1040, %v1040
        %v1105 = vpack.c.b16 %v1041, %v1041
        %v1106 = vpack.c.b16 %v1042, %v1042
        %v1107 = vpack.c.b16 %v1043, %v1043
        %v1108 = vpack.c.b16 %v1044, %v1044
        %v1109 = vpack.c.b16 %v1045, %v1045
        %v1110 = vpack.c.b16 %v1046, %v1046
        %v1111 = vpack.c.b16 %v1047, %v1047
        %v1112 = vpack.c.b16 %v1048, %v1048
        %v1113 = vpack.c.b16 %v1049, %v1049
        %v1114 = vpack.c.b16 %v1050, %v1050
        %v1115 = vpack.c.b16 %v1051, %v1051
        %v1116 = vpack.c.b16 %v1052, %v1052
        %v1117 = vpack.c.b16 %v1053, %v1053
        %vm1182 = vcmask 257024
        %1183 = vst.msk [vmem:[%s234] sm:$0xf] %vm1182, %v1054
        %1184 = vst.msk [vmem:[%s234 + $0x4] sm:$0xf] %vm1182, %v1055
        %1185 = vst.msk [vmem:[%s234 + $0x8] sm:$0xf] %vm1182, %v1056
        %1186 = vst.msk [vmem:[%s234 + $0xc] sm:$0xf] %vm1182, %v1057
        %1187 = vst.msk [vmem:[%s234 + $0x10] sm:$0xf] %vm1182, %v1058
        %1188 = vst.msk [vmem:[%s234 + $0x14] sm:$0xf] %vm1182, %v1059
        %1189 = vst.msk [vmem:[%s234 + $0x18] sm:$0xf] %vm1182, %v1060
        %1190 = vst.msk [vmem:[%s234 + $0x1c] sm:$0xf] %vm1182, %v1061
        %1191 = vst.msk [vmem:[%s234 + $0x20] sm:$0xf] %vm1182, %v1062
        %1192 = vst.msk [vmem:[%s234 + $0x24] sm:$0xf] %vm1182, %v1063
        %1193 = vst.msk [vmem:[%s234 + $0x28] sm:$0xf] %vm1182, %v1064
        %1194 = vst.msk [vmem:[%s234 + $0x2c] sm:$0xf] %vm1182, %v1065
        %1195 = vst.msk [vmem:[%s234 + $0x30] sm:$0xf] %vm1182, %v1066
        %1196 = vst.msk [vmem:[%s234 + $0x34] sm:$0xf] %vm1182, %v1067
        %1197 = vst.msk [vmem:[%s234 + $0x38] sm:$0xf] %vm1182, %v1068
        %1198 = vst.msk [vmem:[%s234 + $0x3c] sm:$0xf] %vm1182, %v1069
        %1199 = vst.msk [vmem:[%s234 + $0x40] sm:$0xf] %vm1182, %v1070
        %1200 = vst.msk [vmem:[%s234 + $0x44] sm:$0xf] %vm1182, %v1071
        %1201 = vst.msk [vmem:[%s234 + $0x48] sm:$0xf] %vm1182, %v1072
        %1202 = vst.msk [vmem:[%s234 + $0x4c] sm:$0xf] %vm1182, %v1073
        %1203 = vst.msk [vmem:[%s234 + $0x50] sm:$0xf] %vm1182, %v1074
        %1204 = vst.msk [vmem:[%s234 + $0x54] sm:$0xf] %vm1182, %v1075
        %1205 = vst.msk [vmem:[%s234 + $0x58] sm:$0xf] %vm1182, %v1076
        %1206 = vst.msk [vmem:[%s234 + $0x5c] sm:$0xf] %vm1182, %v1077
        %1207 = vst.msk [vmem:[%s234 + $0x60] sm:$0xf] %vm1182, %v1078
        %1208 = vst.msk [vmem:[%s234 + $0x64] sm:$0xf] %vm1182, %v1079
        %1209 = vst.msk [vmem:[%s234 + $0x68] sm:$0xf] %vm1182, %v1080
        %1210 = vst.msk [vmem:[%s234 + $0x6c] sm:$0xf] %vm1182, %v1081
        %1211 = vst.msk [vmem:[%s234 + $0x70] sm:$0xf] %vm1182, %v1082
        %1212 = vst.msk [vmem:[%s234 + $0x74] sm:$0xf] %vm1182, %v1083
        %1213 = vst.msk [vmem:[%s234 + $0x78] sm:$0xf] %vm1182, %v1084
        %1214 = vst.msk [vmem:[%s234 + $0x7c] sm:$0xf] %vm1182, %v1085
        %1215 = vst.msk [vmem:[%s234 + $0x80] sm:$0xf] %vm1182, %v1086
        %1216 = vst.msk [vmem:[%s234 + $0x84] sm:$0xf] %vm1182, %v1087
        %1217 = vst.msk [vmem:[%s234 + $0x88] sm:$0xf] %vm1182, %v1088
        %1218 = vst.msk [vmem:[%s234 + $0x8c] sm:$0xf] %vm1182, %v1089
        %1219 = vst.msk [vmem:[%s234 + $0x90] sm:$0xf] %vm1182, %v1090
        %1220 = vst.msk [vmem:[%s234 + $0x94] sm:$0xf] %vm1182, %v1091
        %1221 = vst.msk [vmem:[%s234 + $0x98] sm:$0xf] %vm1182, %v1092
        %1222 = vst.msk [vmem:[%s234 + $0x9c] sm:$0xf] %vm1182, %v1093
        %1223 = vst.msk [vmem:[%s234 + $0xa0] sm:$0xf] %vm1182, %v1094
        %1224 = vst.msk [vmem:[%s234 + $0xa4] sm:$0xf] %vm1182, %v1095
        %1225 = vst.msk [vmem:[%s234 + $0xa8] sm:$0xf] %vm1182, %v1096
        %1226 = vst.msk [vmem:[%s234 + $0xac] sm:$0xf] %vm1182, %v1097
        %1227 = vst.msk [vmem:[%s234 + $0xb0] sm:$0xf] %vm1182, %v1098
        %1228 = vst.msk [vmem:[%s234 + $0xb4] sm:$0xf] %vm1182, %v1099
        %1229 = vst.msk [vmem:[%s234 + $0xb8] sm:$0xf] %vm1182, %v1100
        %1230 = vst.msk [vmem:[%s234 + $0xbc] sm:$0xf] %vm1182, %v1101
        %1231 = vst.msk [vmem:[%s234 + $0xc0] sm:$0xf] %vm1182, %v1102
        %1232 = vst.msk [vmem:[%s234 + $0xc4] sm:$0xf] %vm1182, %v1103
        %1233 = vst.msk [vmem:[%s234 + $0xc8] sm:$0xf] %vm1182, %v1104
        %1234 = vst.msk [vmem:[%s234 + $0xcc] sm:$0xf] %vm1182, %v1105
        %1235 = vst.msk [vmem:[%s234 + $0xd0] sm:$0xf] %vm1182, %v1106
        %1236 = vst.msk [vmem:[%s234 + $0xd4] sm:$0xf] %vm1182, %v1107
        %1237 = vst.msk [vmem:[%s234 + $0xd8] sm:$0xf] %vm1182, %v1108
        %1238 = vst.msk [vmem:[%s234 + $0xdc] sm:$0xf] %vm1182, %v1109
        %1239 = vst.msk [vmem:[%s234 + $0xe0] sm:$0xf] %vm1182, %v1110
        %1240 = vst.msk [vmem:[%s234 + $0xe4] sm:$0xf] %vm1182, %v1111
        %1241 = vst.msk [vmem:[%s234 + $0xe8] sm:$0xf] %vm1182, %v1112
        %1242 = vst.msk [vmem:[%s234 + $0xec] sm:$0xf] %vm1182, %v1113
        %1243 = vst.msk [vmem:[%s234 + $0xf0] sm:$0xf] %vm1182, %v1114
        %1244 = vst.msk [vmem:[%s234 + $0xf4] sm:$0xf] %vm1182, %v1115
        %1245 = vst.msk [vmem:[%s234 + $0xf8] sm:$0xf] %vm1182, %v1116
        %1246 = vst.msk [vmem:[%s234 + $0xfc] sm:$0xf] %vm1182, %v1117
        %s1247 = smul.u32 64, %s20
        %p1248 = scmp.lt.s32.totalorder %s1247, 255
        %s1249 = scalar_select %p1248, %s1247, 255
        %p1250 = scmp.lt.s32.totalorder %s21, 0
        %s1251 = scalar_select %p1250, %s21, 0
        %s1252 = sadd.s32 %s1251, %s1249
        %s1253 = smul.addr %s1252, 4
        %s1254 = scalar_lea.vmem %s3, %s1253
        // Predicated region
        $region41: #{enc_txt_forward.6} parent=31 // pred_check
          %p1255 = pneg %p126
        $region42: #{enc_txt_forward.6} parent=31 // pred_check_branch
          %1257 = sbr.rel (%p1255) target = $region44
        $region43: #{enc_txt_forward.6} parent=31 // pred_region
          %s1258 = smul.u32 64, %s20
        $region44: #{enc_txt_forward.6} parent=31 // pred_fallthru
          _
      $region32: #{enc_txt_forward.6} parent=5 // pred_fallthru
        _
      %p1259 = scmp.le.s32.totalorder 2, %s11
      // Predicated region
      $region45: #{enc_txt_forward.6} parent=5 // pred_check
        %p1260 = pneg %p1259
      $region46: #{enc_txt_forward.6} parent=5 // pred_check_branch
        %1262 = sbr.rel (%p1260) target = $region48
      $region47: #{enc_txt_forward.6} parent=5 // pred_region
        %s1263 = ssub.s32 %s11, 2
        // Predicated region
        $region49: #{enc_txt_forward.6} parent=47 // pred_check
          %p1264 = pneg %p132
        $region50: #{enc_txt_forward.6} parent=47 // pred_check_branch
          %1266 = sbr.rel (%p1264) target = $region52
        $region51: #{enc_txt_forward.6} parent=47 // pred_region
          %s1267 = smul.u32 64, %s22
          %p1268 = scmp.lt.s32.totalorder %s1267, 255
          %s1269 = scalar_select %p1268, %s1267, 255
          %p1270 = scmp.lt.s32.totalorder %s23, 0
          %s1271 = scalar_select %p1270, %s23, 0
          %s1272 = sadd.s32 %s1271, %s1269
          %s1273 = smul.addr %s1272, 4
          %s1274 = scalar_lea.vmem %s3, %s1273
        $region52: #{enc_txt_forward.6} parent=47 // pred_fallthru
          _
      $region48: #{enc_txt_forward.6} parent=5 // pred_fallthru
        _
    $region6: #{enc_txt_forward.6} parent=1 // loop_footer
      %s15 = sadd.s32 1, %s11
    $region7: #{enc_txt_forward.6} parent=1 // loop_footer_branch
      %10 = sbr.rel target = $region3
    $region8: #{enc_txt_forward.6} parent=1 // loop_exit
      _
    %1275 = vsyncpa [#allocation3], 1
    %s1276 = scalar_lea.sflag [#allocation3], 1
    %1277 = vsyncpa %s1276, 1
    %1278 = vsyncpa [#allocation5], 1

// kernel: enc_txt_forward.7
$region0: #{enc_txt_forward.7}
  #allocation0 [shape = 'u32[]', space=smem, size = 0x4, offset = 0x4, fixed_abs, tag = 'smem constant byte address 0x4 - core index']
  #allocation1 [shape = 'u32[144,128]{1,0:T(1,128)}', space=vmem, size = 0x12000, scoped, tag = 'internal scratch']
  %s0 = inlined_call_operand.vmem [shape: bf16[512,512], index: 0, kind: input, shape index: {}]
  %s1 = inlined_call_operand.vmem [shape: bf16[512,64], index: 1, kind: input, shape index: {}]
  %s2 = inlined_call_operand.vmem [shape: f32[1,64], index: 2, kind: input, shape index: {}]
  %s3 = inlined_call_operand.vmem [shape: bf16[512,64], index: 3, kind: output, shape index: {}]
  %s4 = sld [smem:[#allocation0]]
  $region22: #{enc_txt_forward.7} parent=0
    _
  %s6 = ssub.s32 1, %s4
  %s7 = scalar_select 0, %s6, %s4
  // Predicated region
  $region2: #{enc_txt_forward.7} parent=0 // pred_check
    _
  $region3: #{enc_txt_forward.7} parent=0 // pred_check_branch
    %9 = sbr.rel (0) target = $region5
  $region4: #{enc_txt_forward.7} parent=0 // pred_region
    _
  $region5: #{enc_txt_forward.7} parent=0 // pred_fallthru
    _
  // Predicated region
  $region6: #{enc_txt_forward.7} parent=0 // pred_check
    _
  $region7: #{enc_txt_forward.7} parent=0 // pred_check_branch
    %11 = sbr.rel (0) target = $region9
  $region8: #{enc_txt_forward.7} parent=0 // pred_region
    _
  $region9: #{enc_txt_forward.7} parent=0 // pred_fallthru
    _
  // Predicated region
  $region10: #{enc_txt_forward.7} parent=0 // pred_check
    _
  $region11: #{enc_txt_forward.7} parent=0 // pred_check_branch
    %13 = sbr.rel (0) target = $region13
  $region12: #{enc_txt_forward.7} parent=0 // pred_region
    _
  $region13: #{enc_txt_forward.7} parent=0 // pred_fallthru
    _
  %v15 = vld [vmem:[%s0] sm:$0xff]
  %v16 = vld [vmem:[%s0 + $0x8] sm:$0xff]
  %v17 = vld [vmem:[%s0 + $0x10] sm:$0xff]
  %v18 = vld [vmem:[%s0 + $0x18] sm:$0xff]
  %v19 = vld [vmem:[%s0 + $0x20] sm:$0xff]
  %v20 = vld [vmem:[%s0 + $0x28] sm:$0xff]
  %v21 = vld [vmem:[%s0 + $0x30] sm:$0xff]
  %v22 = vld [vmem:[%s0 + $0x38] sm:$0xff]
  %v23 = vld [vmem:[%s0 + $0x40] sm:$0xff]
  %v24 = vld [vmem:[%s0 + $0x48] sm:$0xff]
  %v25 = vld [vmem:[%s0 + $0x50] sm:$0xff]
  %v26 = vld [vmem:[%s0 + $0x58] sm:$0xff]
  %v27 = vld [vmem:[%s0 + $0x60] sm:$0xff]
  %v28 = vld [vmem:[%s0 + $0x68] sm:$0xff]
  %v29 = vld [vmem:[%s0 + $0x70] sm:$0xff]
  %v30 = vld [vmem:[%s0 + $0x78] sm:$0xff]
  %v31 = vld [vmem:[%s0 + $0x80] sm:$0xff]
  %v32 = vld [vmem:[%s0 + $0x88] sm:$0xff]
  %v33 = vld [vmem:[%s0 + $0x90] sm:$0xff]
  %v34 = vld [vmem:[%s0 + $0x98] sm:$0xff]
  %v35 = vld [vmem:[%s0 + $0xa0] sm:$0xff]
  %v36 = vld [vmem:[%s0 + $0xa8] sm:$0xff]
  %v37 = vld [vmem:[%s0 + $0xb0] sm:$0xff]
  %v38 = vld [vmem:[%s0 + $0xb8] sm:$0xff]
  %v39 = vld [vmem:[%s0 + $0xc0] sm:$0xff]
  %v40 = vld [vmem:[%s0 + $0xc8] sm:$0xff]
  %v41 = vld [vmem:[%s0 + $0xd0] sm:$0xff]
  %v42 = vld [vmem:[%s0 + $0xd8] sm:$0xff]
  %v43 = vld [vmem:[%s0 + $0xe0] sm:$0xff]
  %v44 = vld [vmem:[%s0 + $0xe8] sm:$0xff]
  %v45 = vld [vmem:[%s0 + $0xf0] sm:$0xff]
  %v46 = vld [vmem:[%s0 + $0xf8] sm:$0xff]
  %v47 = vld [vmem:[%s0 + $0x100] sm:$0xff]
  %v48 = vld [vmem:[%s0 + $0x108] sm:$0xff]
  %v49 = vld [vmem:[%s0 + $0x110] sm:$0xff]
  %v50 = vld [vmem:[%s0 + $0x118] sm:$0xff]
  %v51 = vld [vmem:[%s0 + $0x120] sm:$0xff]
  %v52 = vld [vmem:[%s0 + $0x128] sm:$0xff]
  %v53 = vld [vmem:[%s0 + $0x130] sm:$0xff]
  %v54 = vld [vmem:[%s0 + $0x138] sm:$0xff]
  %v55 = vld [vmem:[%s0 + $0x140] sm:$0xff]
  %v56 = vld [vmem:[%s0 + $0x148] sm:$0xff]
  %v57 = vld [vmem:[%s0 + $0x150] sm:$0xff]
  %v58 = vld [vmem:[%s0 + $0x158] sm:$0xff]
  %v59 = vld [vmem:[%s0 + $0x160] sm:$0xff]
  %v60 = vld [vmem:[%s0 + $0x168] sm:$0xff]
  %v61 = vld [vmem:[%s0 + $0x170] sm:$0xff]
  %v62 = vld [vmem:[%s0 + $0x178] sm:$0xff]
  %v63 = vld [vmem:[%s0 + $0x180] sm:$0xff]
  %v64 = vld [vmem:[%s0 + $0x188] sm:$0xff]
  %v65 = vld [vmem:[%s0 + $0x190] sm:$0xff]
  %v66 = vld [vmem:[%s0 + $0x198] sm:$0xff]
  %v67 = vld [vmem:[%s0 + $0x1a0] sm:$0xff]
  %v68 = vld [vmem:[%s0 + $0x1a8] sm:$0xff]
  %v69 = vld [vmem:[%s0 + $0x1b0] sm:$0xff]
  %v70 = vld [vmem:[%s0 + $0x1b8] sm:$0xff]
  %v71 = vld [vmem:[%s0 + $0x1c0] sm:$0xff]
  %v72 = vld [vmem:[%s0 + $0x1c8] sm:$0xff]
  %v73 = vld [vmem:[%s0 + $0x1d0] sm:$0xff]
  %v74 = vld [vmem:[%s0 + $0x1d8] sm:$0xff]
  %v75 = vld [vmem:[%s0 + $0x1e0] sm:$0xff]
  %v76 = vld [vmem:[%s0 + $0x1e8] sm:$0xff]
  %v77 = vld [vmem:[%s0 + $0x1f0] sm:$0xff]
  %v78 = vld [vmem:[%s0 + $0x1f8] sm:$0xff]
  %v79 = vld [vmem:[%s0 + $0x200] sm:$0xff]
  %v80 = vld [vmem:[%s0 + $0x208] sm:$0xff]
  %v81 = vld [vmem:[%s0 + $0x210] sm:$0xff]
  %v82 = vld [vmem:[%s0 + $0x218] sm:$0xff]
  %v83 = vld [vmem:[%s0 + $0x220] sm:$0xff]
  %v84 = vld [vmem:[%s0 + $0x228] sm:$0xff]
  %v85 = vld [vmem:[%s0 + $0x230] sm:$0xff]
  %v86 = vld [vmem:[%s0 + $0x238] sm:$0xff]
  %v87 = vld [vmem:[%s0 + $0x240] sm:$0xff]
  %v88 = vld [vmem:[%s0 + $0x248] sm:$0xff]
  %v89 = vld [vmem:[%s0 + $0x250] sm:$0xff]
  %v90 = vld [vmem:[%s0 + $0x258] sm:$0xff]
  %v91 = vld [vmem:[%s0 + $0x260] sm:$0xff]
  %v92 = vld [vmem:[%s0 + $0x268] sm:$0xff]
  %v93 = vld [vmem:[%s0 + $0x270] sm:$0xff]
  %v94 = vld [vmem:[%s0 + $0x278] sm:$0xff]
  %v95 = vld [vmem:[%s0 + $0x280] sm:$0xff]
  %v96 = vld [vmem:[%s0 + $0x288] sm:$0xff]
  %v97 = vld [vmem:[%s0 + $0x290] sm:$0xff]
  %v98 = vld [vmem:[%s0 + $0x298] sm:$0xff]
  %v99 = vld [vmem:[%s0 + $0x2a0] sm:$0xff]
  %v100 = vld [vmem:[%s0 + $0x2a8] sm:$0xff]
  %v101 = vld [vmem:[%s0 + $0x2b0] sm:$0xff]
  %v102 = vld [vmem:[%s0 + $0x2b8] sm:$0xff]
  %v103 = vld [vmem:[%s0 + $0x2c0] sm:$0xff]
  %v104 = vld [vmem:[%s0 + $0x2c8] sm:$0xff]
  %v105 = vld [vmem:[%s0 + $0x2d0] sm:$0xff]
  %v106 = vld [vmem:[%s0 + $0x2d8] sm:$0xff]
  %v107 = vld [vmem:[%s0 + $0x2e0] sm:$0xff]
  %v108 = vld [vmem:[%s0 + $0x2e8] sm:$0xff]
  %v109 = vld [vmem:[%s0 + $0x2f0] sm:$0xff]
  %v110 = vld [vmem:[%s0 + $0x2f8] sm:$0xff]
  %v111 = vld [vmem:[%s0 + $0x300] sm:$0xff]
  %v112 = vld [vmem:[%s0 + $0x308] sm:$0xff]
  %v113 = vld [vmem:[%s0 + $0x310] sm:$0xff]
  %v114 = vld [vmem:[%s0 + $0x318] sm:$0xff]
  %v115 = vld [vmem:[%s0 + $0x320] sm:$0xff]
  %v116 = vld [vmem:[%s0 + $0x328] sm:$0xff]
  %v117 = vld [vmem:[%s0 + $0x330] sm:$0xff]
  %v118 = vld [vmem:[%s0 + $0x338] sm:$0xff]
  %v119 = vld [vmem:[%s0 + $0x340] sm:$0xff]
  %v120 = vld [vmem:[%s0 + $0x348] sm:$0xff]
  %v121 = vld [vmem:[%s0 + $0x350] sm:$0xff]
  %v122 = vld [vmem:[%s0 + $0x358] sm:$0xff]
  %v123 = vld [vmem:[%s0 + $0x360] sm:$0xff]
  %v124 = vld [vmem:[%s0 + $0x368] sm:$0xff]
  %v125 = vld [vmem:[%s0 + $0x370] sm:$0xff]
  %v126 = vld [vmem:[%s0 + $0x378] sm:$0xff]
  %v127 = vld [vmem:[%s0 + $0x380] sm:$0xff]
  %v128 = vld [vmem:[%s0 + $0x388] sm:$0xff]
  %v129 = vld [vmem:[%s0 + $0x390] sm:$0xff]
  %v130 = vld [vmem:[%s0 + $0x398] sm:$0xff]
  %v131 = vld [vmem:[%s0 + $0x3a0] sm:$0xff]
  %v132 = vld [vmem:[%s0 + $0x3a8] sm:$0xff]
  %v133 = vld [vmem:[%s0 + $0x3b0] sm:$0xff]
  %v134 = vld [vmem:[%s0 + $0x3b8] sm:$0xff]
  %v135 = vld [vmem:[%s0 + $0x3c0] sm:$0xff]
  %v136 = vld [vmem:[%s0 + $0x3c8] sm:$0xff]
  %v137 = vld [vmem:[%s0 + $0x3d0] sm:$0xff]
  %v138 = vld [vmem:[%s0 + $0x3d8] sm:$0xff]
  %v139 = vld [vmem:[%s0 + $0x3e0] sm:$0xff]
  %v140 = vld [vmem:[%s0 + $0x3e8] sm:$0xff]
  %v141 = vld [vmem:[%s0 + $0x3f0] sm:$0xff]
  %v142 = vld [vmem:[%s0 + $0x3f8] sm:$0xff]
  %v143 = vld [vmem:[%s1] sm:$0xf]
  %v144 = vld [vmem:[%s1 + $0x4] sm:$0xf]
  %v145 = vld [vmem:[%s1 + $0x8] sm:$0xf]
  %v146 = vld [vmem:[%s1 + $0xc] sm:$0xf]
  %v147 = vld [vmem:[%s1 + $0x10] sm:$0xf]
  %v148 = vld [vmem:[%s1 + $0x14] sm:$0xf]
  %v149 = vld [vmem:[%s1 + $0x18] sm:$0xf]
  %v150 = vld [vmem:[%s1 + $0x1c] sm:$0xf]
  %v151 = vld [vmem:[%s1 + $0x20] sm:$0xf]
  %v152 = vld [vmem:[%s1 + $0x24] sm:$0xf]
  %v153 = vld [vmem:[%s1 + $0x28] sm:$0xf]
  %v154 = vld [vmem:[%s1 + $0x2c] sm:$0xf]
  %v155 = vld [vmem:[%s1 + $0x30] sm:$0xf]
  %v156 = vld [vmem:[%s1 + $0x34] sm:$0xf]
  %v157 = vld [vmem:[%s1 + $0x38] sm:$0xf]
  %v158 = vld [vmem:[%s1 + $0x3c] sm:$0xf]
  %v159 = vld [vmem:[%s1 + $0x40] sm:$0xf]
  %v160 = vld [vmem:[%s1 + $0x44] sm:$0xf]
  %v161 = vld [vmem:[%s1 + $0x48] sm:$0xf]
  %v162 = vld [vmem:[%s1 + $0x4c] sm:$0xf]
  %v163 = vld [vmem:[%s1 + $0x50] sm:$0xf]
  %v164 = vld [vmem:[%s1 + $0x54] sm:$0xf]
  %v165 = vld [vmem:[%s1 + $0x58] sm:$0xf]
  %v166 = vld [vmem:[%s1 + $0x5c] sm:$0xf]
  %v167 = vld [vmem:[%s1 + $0x60] sm:$0xf]
  %v168 = vld [vmem:[%s1 + $0x64] sm:$0xf]
  %v169 = vld [vmem:[%s1 + $0x68] sm:$0xf]
  %v170 = vld [vmem:[%s1 + $0x6c] sm:$0xf]
  %v171 = vld [vmem:[%s1 + $0x70] sm:$0xf]
  %v172 = vld [vmem:[%s1 + $0x74] sm:$0xf]
  %v173 = vld [vmem:[%s1 + $0x78] sm:$0xf]
  %v174 = vld [vmem:[%s1 + $0x7c] sm:$0xf]
  %v175 = vld [vmem:[%s1 + $0x80] sm:$0xf]
  %v176 = vld [vmem:[%s1 + $0x84] sm:$0xf]
  %v177 = vld [vmem:[%s1 + $0x88] sm:$0xf]
  %v178 = vld [vmem:[%s1 + $0x8c] sm:$0xf]
  %v179 = vld [vmem:[%s1 + $0x90] sm:$0xf]
  %v180 = vld [vmem:[%s1 + $0x94] sm:$0xf]
  %v181 = vld [vmem:[%s1 + $0x98] sm:$0xf]
  %v182 = vld [vmem:[%s1 + $0x9c] sm:$0xf]
  %v183 = vld [vmem:[%s1 + $0xa0] sm:$0xf]
  %v184 = vld [vmem:[%s1 + $0xa4] sm:$0xf]
  %v185 = vld [vmem:[%s1 + $0xa8] sm:$0xf]
  %v186 = vld [vmem:[%s1 + $0xac] sm:$0xf]
  %v187 = vld [vmem:[%s1 + $0xb0] sm:$0xf]
  %v188 = vld [vmem:[%s1 + $0xb4] sm:$0xf]
  %v189 = vld [vmem:[%s1 + $0xb8] sm:$0xf]
  %v190 = vld [vmem:[%s1 + $0xbc] sm:$0xf]
  %v191 = vld [vmem:[%s1 + $0xc0] sm:$0xf]
  %v192 = vld [vmem:[%s1 + $0xc4] sm:$0xf]
  %v193 = vld [vmem:[%s1 + $0xc8] sm:$0xf]
  %v194 = vld [vmem:[%s1 + $0xcc] sm:$0xf]
  %v195 = vld [vmem:[%s1 + $0xd0] sm:$0xf]
  %v196 = vld [vmem:[%s1 + $0xd4] sm:$0xf]
  %v197 = vld [vmem:[%s1 + $0xd8] sm:$0xf]
  %v198 = vld [vmem:[%s1 + $0xdc] sm:$0xf]
  %v199 = vld [vmem:[%s1 + $0xe0] sm:$0xf]
  %v200 = vld [vmem:[%s1 + $0xe4] sm:$0xf]
  %v201 = vld [vmem:[%s1 + $0xe8] sm:$0xf]
  %v202 = vld [vmem:[%s1 + $0xec] sm:$0xf]
  %v203 = vld [vmem:[%s1 + $0xf0] sm:$0xf]
  %v204 = vld [vmem:[%s1 + $0xf4] sm:$0xf]
  %v205 = vld [vmem:[%s1 + $0xf8] sm:$0xf]
  %v206 = vld [vmem:[%s1 + $0xfc] sm:$0xf]
  %v207 = vld [vmem:[%s2] sm:$0x1]
  %v209 = vlaneseq
  %v210 = vshrl.u32 %v209, 7
  %v211 = vsub.s32 0, %v210
  %v212 = vrot.slane %v207, %v211
  %v342 = vunpack.c.l.b16 %v15
  %v343 = vunpack.c.h.b16 %v15
  %v344 = vunpack.c.l.b16 %v16
  %v345 = vunpack.c.h.b16 %v16
  %v346 = vunpack.c.l.b16 %v17
  %v347 = vunpack.c.h.b16 %v17
  %v348 = vunpack.c.l.b16 %v18
  %v349 = vunpack.c.h.b16 %v18
  %v350 = vunpack.c.l.b16 %v19
  %v351 = vunpack.c.h.b16 %v19
  %v352 = vunpack.c.l.b16 %v20
  %v353 = vunpack.c.h.b16 %v20
  %v354 = vunpack.c.l.b16 %v21
  %v355 = vunpack.c.h.b16 %v21
  %v356 = vunpack.c.l.b16 %v22
  %v357 = vunpack.c.h.b16 %v22
  %v358 = vunpack.c.l.b16 %v23
  %v359 = vunpack.c.h.b16 %v23
  %v360 = vunpack.c.l.b16 %v24
  %v361 = vunpack.c.h.b16 %v24
  %v362 = vunpack.c.l.b16 %v25
  %v363 = vunpack.c.h.b16 %v25
  %v364 = vunpack.c.l.b16 %v26
  %v365 = vunpack.c.h.b16 %v26
  %v366 = vunpack.c.l.b16 %v27
  %v367 = vunpack.c.h.b16 %v27
  %v368 = vunpack.c.l.b16 %v28
  %v369 = vunpack.c.h.b16 %v28
  %v370 = vunpack.c.l.b16 %v29
  %v371 = vunpack.c.h.b16 %v29
  %v372 = vunpack.c.l.b16 %v30
  %v373 = vunpack.c.h.b16 %v30
  %v374 = vunpack.c.l.b16 %v31
  %v375 = vunpack.c.h.b16 %v31
  %v376 = vunpack.c.l.b16 %v32
  %v377 = vunpack.c.h.b16 %v32
  %v378 = vunpack.c.l.b16 %v33
  %v379 = vunpack.c.h.b16 %v33
  %v380 = vunpack.c.l.b16 %v34
  %v381 = vunpack.c.h.b16 %v34
  %v382 = vunpack.c.l.b16 %v35
  %v383 = vunpack.c.h.b16 %v35
  %v384 = vunpack.c.l.b16 %v36
  %v385 = vunpack.c.h.b16 %v36
  %v386 = vunpack.c.l.b16 %v37
  %v387 = vunpack.c.h.b16 %v37
  %v388 = vunpack.c.l.b16 %v38
  %v389 = vunpack.c.h.b16 %v38
  %v390 = vunpack.c.l.b16 %v39
  %v391 = vunpack.c.h.b16 %v39
  %v392 = vunpack.c.l.b16 %v40
  %v393 = vunpack.c.h.b16 %v40
  %v394 = vunpack.c.l.b16 %v41
  %v395 = vunpack.c.h.b16 %v41
  %v396 = vunpack.c.l.b16 %v42
  %v397 = vunpack.c.h.b16 %v42
  %v398 = vunpack.c.l.b16 %v43
  %v399 = vunpack.c.h.b16 %v43
  %v400 = vunpack.c.l.b16 %v44
  %v401 = vunpack.c.h.b16 %v44
  %v402 = vunpack.c.l.b16 %v45
  %v403 = vunpack.c.h.b16 %v45
  %v404 = vunpack.c.l.b16 %v46
  %v405 = vunpack.c.h.b16 %v46
  %v406 = vunpack.c.l.b16 %v47
  %v407 = vunpack.c.h.b16 %v47
  %v408 = vunpack.c.l.b16 %v48
  %v409 = vunpack.c.h.b16 %v48
  %v410 = vunpack.c.l.b16 %v49
  %v411 = vunpack.c.h.b16 %v49
  %v412 = vunpack.c.l.b16 %v50
  %v413 = vunpack.c.h.b16 %v50
  %v414 = vunpack.c.l.b16 %v51
  %v415 = vunpack.c.h.b16 %v51
  %v416 = vunpack.c.l.b16 %v52
  %v417 = vunpack.c.h.b16 %v52
  %v418 = vunpack.c.l.b16 %v53
  %v419 = vunpack.c.h.b16 %v53
  %v420 = vunpack.c.l.b16 %v54
  %v421 = vunpack.c.h.b16 %v54
  %v422 = vunpack.c.l.b16 %v55
  %v423 = vunpack.c.h.b16 %v55
  %v424 = vunpack.c.l.b16 %v56
  %v425 = vunpack.c.h.b16 %v56
  %v426 = vunpack.c.l.b16 %v57
  %v427 = vunpack.c.h.b16 %v57
  %v428 = vunpack.c.l.b16 %v58
  %v429 = vunpack.c.h.b16 %v58
  %v430 = vunpack.c.l.b16 %v59
  %v431 = vunpack.c.h.b16 %v59
  %v432 = vunpack.c.l.b16 %v60
  %v433 = vunpack.c.h.b16 %v60
  %v434 = vunpack.c.l.b16 %v61
  %v435 = vunpack.c.h.b16 %v61
  %v436 = vunpack.c.l.b16 %v62
  %v437 = vunpack.c.h.b16 %v62
  %v438 = vunpack.c.l.b16 %v63
  %v439 = vunpack.c.h.b16 %v63
  %v440 = vunpack.c.l.b16 %v64
  %v441 = vunpack.c.h.b16 %v64
  %v442 = vunpack.c.l.b16 %v65
  %v443 = vunpack.c.h.b16 %v65
  %v444 = vunpack.c.l.b16 %v66
  %v445 = vunpack.c.h.b16 %v66
  %v446 = vunpack.c.l.b16 %v67
  %v447 = vunpack.c.h.b16 %v67
  %v448 = vunpack.c.l.b16 %v68
  %v449 = vunpack.c.h.b16 %v68
  %v450 = vunpack.c.l.b16 %v69
  %v451 = vunpack.c.h.b16 %v69
  %v452 = vunpack.c.l.b16 %v70
  %v453 = vunpack.c.h.b16 %v70
  %v454 = vunpack.c.l.b16 %v71
  %v455 = vunpack.c.h.b16 %v71
  %v456 = vunpack.c.l.b16 %v72
  %v457 = vunpack.c.h.b16 %v72
  %v458 = vunpack.c.l.b16 %v73
  %v459 = vunpack.c.h.b16 %v73
  %v460 = vunpack.c.l.b16 %v74
  %v461 = vunpack.c.h.b16 %v74
  %v462 = vunpack.c.l.b16 %v75
  %v463 = vunpack.c.h.b16 %v75
  %v464 = vunpack.c.l.b16 %v76
  %v465 = vunpack.c.h.b16 %v76
  %v466 = vunpack.c.l.b16 %v77
  %v467 = vunpack.c.h.b16 %v77
  %v468 = vunpack.c.l.b16 %v78
  %v469 = vunpack.c.h.b16 %v78
  %v470 = vunpack.c.l.b16 %v79
  %v471 = vunpack.c.h.b16 %v79
  %v472 = vunpack.c.l.b16 %v80
  %v473 = vunpack.c.h.b16 %v80
  %v474 = vunpack.c.l.b16 %v81
  %v475 = vunpack.c.h.b16 %v81
  %v476 = vunpack.c.l.b16 %v82
  %v477 = vunpack.c.h.b16 %v82
  %v478 = vunpack.c.l.b16 %v83
  %v479 = vunpack.c.h.b16 %v83
  %v480 = vunpack.c.l.b16 %v84
  %v481 = vunpack.c.h.b16 %v84
  %v482 = vunpack.c.l.b16 %v85
  %v483 = vunpack.c.h.b16 %v85
  %v484 = vunpack.c.l.b16 %v86
  %v485 = vunpack.c.h.b16 %v86
  %v486 = vunpack.c.l.b16 %v87
  %v487 = vunpack.c.h.b16 %v87
  %v488 = vunpack.c.l.b16 %v88
  %v489 = vunpack.c.h.b16 %v88
  %v490 = vunpack.c.l.b16 %v89
  %v491 = vunpack.c.h.b16 %v89
  %v492 = vunpack.c.l.b16 %v90
  %v493 = vunpack.c.h.b16 %v90
  %v494 = vunpack.c.l.b16 %v91
  %v495 = vunpack.c.h.b16 %v91
  %v496 = vunpack.c.l.b16 %v92
  %v497 = vunpack.c.h.b16 %v92
  %v498 = vunpack.c.l.b16 %v93
  %v499 = vunpack.c.h.b16 %v93
  %v500 = vunpack.c.l.b16 %v94
  %v501 = vunpack.c.h.b16 %v94
  %v502 = vunpack.c.l.b16 %v95
  %v503 = vunpack.c.h.b16 %v95
  %v504 = vunpack.c.l.b16 %v96
  %v505 = vunpack.c.h.b16 %v96
  %v506 = vunpack.c.l.b16 %v97
  %v507 = vunpack.c.h.b16 %v97
  %v508 = vunpack.c.l.b16 %v98
  %v509 = vunpack.c.h.b16 %v98
  %v510 = vunpack.c.l.b16 %v99
  %v511 = vunpack.c.h.b16 %v99
  %v512 = vunpack.c.l.b16 %v100
  %v513 = vunpack.c.h.b16 %v100
  %v514 = vunpack.c.l.b16 %v101
  %v515 = vunpack.c.h.b16 %v101
  %v516 = vunpack.c.l.b16 %v102
  %v517 = vunpack.c.h.b16 %v102
  %v518 = vunpack.c.l.b16 %v103
  %v519 = vunpack.c.h.b16 %v103
  %v520 = vunpack.c.l.b16 %v104
  %v521 = vunpack.c.h.b16 %v104
  %v522 = vunpack.c.l.b16 %v105
  %v523 = vunpack.c.h.b16 %v105
  %v524 = vunpack.c.l.b16 %v106
  %v525 = vunpack.c.h.b16 %v106
  %v526 = vunpack.c.l.b16 %v107
  %v527 = vunpack.c.h.b16 %v107
  %v528 = vunpack.c.l.b16 %v108
  %v529 = vunpack.c.h.b16 %v108
  %v530 = vunpack.c.l.b16 %v109
  %v531 = vunpack.c.h.b16 %v109
  %v532 = vunpack.c.l.b16 %v110
  %v533 = vunpack.c.h.b16 %v110
  %v534 = vunpack.c.l.b16 %v111
  %v535 = vunpack.c.h.b16 %v111
  %v536 = vunpack.c.l.b16 %v112
  %v537 = vunpack.c.h.b16 %v112
  %v538 = vunpack.c.l.b16 %v113
  %v539 = vunpack.c.h.b16 %v113
  %v540 = vunpack.c.l.b16 %v114
  %v541 = vunpack.c.h.b16 %v114
  %v542 = vunpack.c.l.b16 %v115
  %v543 = vunpack.c.h.b16 %v115
  %v544 = vunpack.c.l.b16 %v116
  %v545 = vunpack.c.h.b16 %v116
  %v546 = vunpack.c.l.b16 %v117
  %v547 = vunpack.c.h.b16 %v117
  %v548 = vunpack.c.l.b16 %v118
  %v549 = vunpack.c.h.b16 %v118
  %v550 = vunpack.c.l.b16 %v119
  %v551 = vunpack.c.h.b16 %v119
  %v552 = vunpack.c.l.b16 %v120
  %v553 = vunpack.c.h.b16 %v120
  %v554 = vunpack.c.l.b16 %v121
  %v555 = vunpack.c.h.b16 %v121
  %v556 = vunpack.c.l.b16 %v122
  %v557 = vunpack.c.h.b16 %v122
  %v558 = vunpack.c.l.b16 %v123
  %v559 = vunpack.c.h.b16 %v123
  %v560 = vunpack.c.l.b16 %v124
  %v561 = vunpack.c.h.b16 %v124
  %v562 = vunpack.c.l.b16 %v125
  %v563 = vunpack.c.h.b16 %v125
  %v564 = vunpack.c.l.b16 %v126
  %v565 = vunpack.c.h.b16 %v126
  %v566 = vunpack.c.l.b16 %v127
  %v567 = vunpack.c.h.b16 %v127
  %v568 = vunpack.c.l.b16 %v128
  %v569 = vunpack.c.h.b16 %v128
  %v570 = vunpack.c.l.b16 %v129
  %v571 = vunpack.c.h.b16 %v129
  %v572 = vunpack.c.l.b16 %v130
  %v573 = vunpack.c.h.b16 %v130
  %v574 = vunpack.c.l.b16 %v131
  %v575 = vunpack.c.h.b16 %v131
  %v576 = vunpack.c.l.b16 %v132
  %v577 = vunpack.c.h.b16 %v132
  %v578 = vunpack.c.l.b16 %v133
  %v579 = vunpack.c.h.b16 %v133
  %v580 = vunpack.c.l.b16 %v134
  %v581 = vunpack.c.h.b16 %v134
  %v582 = vunpack.c.l.b16 %v135
  %v583 = vunpack.c.h.b16 %v135
  %v584 = vunpack.c.l.b16 %v136
  %v585 = vunpack.c.h.b16 %v136
  %v586 = vunpack.c.l.b16 %v137
  %v587 = vunpack.c.h.b16 %v137
  %v588 = vunpack.c.l.b16 %v138
  %v589 = vunpack.c.h.b16 %v138
  %v590 = vunpack.c.l.b16 %v139
  %v591 = vunpack.c.h.b16 %v139
  %v592 = vunpack.c.l.b16 %v140
  %v593 = vunpack.c.h.b16 %v140
  %v594 = vunpack.c.l.b16 %v141
  %v595 = vunpack.c.h.b16 %v141
  %v596 = vunpack.c.l.b16 %v142
  %v597 = vunpack.c.h.b16 %v142
  %v598 = vpack.c.b16 %v346, %v342
  %v599 = vpack.c.b16 %v347, %v343
  %v600 = vpack.c.b16 %v348, %v344
  %v601 = vpack.c.b16 %v349, %v345
  %v602 = vpack.c.b16 %v354, %v350
  %v603 = vpack.c.b16 %v355, %v351
  %v604 = vpack.c.b16 %v356, %v352
  %v605 = vpack.c.b16 %v357, %v353
  %v606 = vpack.c.b16 %v362, %v358
  %v607 = vpack.c.b16 %v363, %v359
  %v608 = vpack.c.b16 %v364, %v360
  %v609 = vpack.c.b16 %v365, %v361
  %v610 = vpack.c.b16 %v370, %v366
  %v611 = vpack.c.b16 %v371, %v367
  %v612 = vpack.c.b16 %v372, %v368
  %v613 = vpack.c.b16 %v373, %v369
  %v614 = vpack.c.b16 %v378, %v374
  %v615 = vpack.c.b16 %v379, %v375
  %v616 = vpack.c.b16 %v380, %v376
  %v617 = vpack.c.b16 %v381, %v377
  %v618 = vpack.c.b16 %v386, %v382
  %v619 = vpack.c.b16 %v387, %v383
  %v620 = vpack.c.b16 %v388, %v384
  %v621 = vpack.c.b16 %v389, %v385
  %v622 = vpack.c.b16 %v394, %v390
  %v623 = vpack.c.b16 %v395, %v391
  %v624 = vpack.c.b16 %v396, %v392
  %v625 = vpack.c.b16 %v397, %v393
  %v626 = vpack.c.b16 %v402, %v398
  %v627 = vpack.c.b16 %v403, %v399
  %v628 = vpack.c.b16 %v404, %v400
  %v629 = vpack.c.b16 %v405, %v401
  %v630 = vpack.c.b16 %v410, %v406
  %v631 = vpack.c.b16 %v411, %v407
  %v632 = vpack.c.b16 %v412, %v408
  %v633 = vpack.c.b16 %v413, %v409
  %v634 = vpack.c.b16 %v418, %v414
  %v635 = vpack.c.b16 %v419, %v415
  %v636 = vpack.c.b16 %v420, %v416
  %v637 = vpack.c.b16 %v421, %v417
  %v638 = vpack.c.b16 %v426, %v422
  %v639 = vpack.c.b16 %v427, %v423
  %v640 = vpack.c.b16 %v428, %v424
  %v641 = vpack.c.b16 %v429, %v425
  %v642 = vpack.c.b16 %v434, %v430
  %v643 = vpack.c.b16 %v435, %v431
  %v644 = vpack.c.b16 %v436, %v432
  %v645 = vpack.c.b16 %v437, %v433
  %v646 = vpack.c.b16 %v442, %v438
  %v647 = vpack.c.b16 %v443, %v439
  %v648 = vpack.c.b16 %v444, %v440
  %v649 = vpack.c.b16 %v445, %v441
  %v650 = vpack.c.b16 %v450, %v446
  %v651 = vpack.c.b16 %v451, %v447
  %v652 = vpack.c.b16 %v452, %v448
  %v653 = vpack.c.b16 %v453, %v449
  %v654 = vpack.c.b16 %v458, %v454
  %v655 = vpack.c.b16 %v459, %v455
  %v656 = vpack.c.b16 %v460, %v456
  %v657 = vpack.c.b16 %v461, %v457
  %v658 = vpack.c.b16 %v466, %v462
  %v659 = vpack.c.b16 %v467, %v463
  %v660 = vpack.c.b16 %v468, %v464
  %v661 = vpack.c.b16 %v469, %v465
  %v662 = vpack.c.b16 %v474, %v470
  %v663 = vpack.c.b16 %v475, %v471
  %v664 = vpack.c.b16 %v476, %v472
  %v665 = vpack.c.b16 %v477, %v473
  %v666 = vpack.c.b16 %v482, %v478
  %v667 = vpack.c.b16 %v483, %v479
  %v668 = vpack.c.b16 %v484, %v480
  %v669 = vpack.c.b16 %v485, %v481
  %v670 = vpack.c.b16 %v490, %v486
  %v671 = vpack.c.b16 %v491, %v487
  %v672 = vpack.c.b16 %v492, %v488
  %v673 = vpack.c.b16 %v493, %v489
  %v674 = vpack.c.b16 %v498, %v494
  %v675 = vpack.c.b16 %v499, %v495
  %v676 = vpack.c.b16 %v500, %v496
  %v677 = vpack.c.b16 %v501, %v497
  %v678 = vpack.c.b16 %v506, %v502
  %v679 = vpack.c.b16 %v507, %v503
  %v680 = vpack.c.b16 %v508, %v504
  %v681 = vpack.c.b16 %v509, %v505
  %v682 = vpack.c.b16 %v514, %v510
  %v683 = vpack.c.b16 %v515, %v511
  %v684 = vpack.c.b16 %v516, %v512
  %v685 = vpack.c.b16 %v517, %v513
  %v686 = vpack.c.b16 %v522, %v518
  %v687 = vpack.c.b16 %v523, %v519
  %v688 = vpack.c.b16 %v524, %v520
  %v689 = vpack.c.b16 %v525, %v521
  %v690 = vpack.c.b16 %v530, %v526
  %v691 = vpack.c.b16 %v531, %v527
  %v692 = vpack.c.b16 %v532, %v528
  %v693 = vpack.c.b16 %v533, %v529
  %v694 = vpack.c.b16 %v538, %v534
  %v695 = vpack.c.b16 %v539, %v535
  %v696 = vpack.c.b16 %v540, %v536
  %v697 = vpack.c.b16 %v541, %v537
  %v698 = vpack.c.b16 %v546, %v542
  %v699 = vpack.c.b16 %v547, %v543
  %v700 = vpack.c.b16 %v548, %v544
  %v701 = vpack.c.b16 %v549, %v545
  %v702 = vpack.c.b16 %v554, %v550
  %v703 = vpack.c.b16 %v555, %v551
  %v704 = vpack.c.b16 %v556, %v552
  %v705 = vpack.c.b16 %v557, %v553
  %v706 = vpack.c.b16 %v562, %v558
  %v707 = vpack.c.b16 %v563, %v559
  %v708 = vpack.c.b16 %v564, %v560
  %v709 = vpack.c.b16 %v565, %v561
  %v710 = vpack.c.b16 %v570, %v566
  %v711 = vpack.c.b16 %v571, %v567
  %v712 = vpack.c.b16 %v572, %v568
  %v713 = vpack.c.b16 %v573, %v569
  %v714 = vpack.c.b16 %v578, %v574
  %v715 = vpack.c.b16 %v579, %v575
  %v716 = vpack.c.b16 %v580, %v576
  %v717 = vpack.c.b16 %v581, %v577
  %v718 = vpack.c.b16 %v586, %v582
  %v719 = vpack.c.b16 %v587, %v583
  %v720 = vpack.c.b16 %v588, %v584
  %v721 = vpack.c.b16 %v589, %v585
  %v722 = vpack.c.b16 %v594, %v590
  %v723 = vpack.c.b16 %v595, %v591
  %v724 = vpack.c.b16 %v596, %v592
  %v725 = vpack.c.b16 %v597, %v593
  %v918 = vunpack.c.l.b16 %v143
  %v919 = vunpack.c.l.b16 %v144
  %v920 = vunpack.c.l.b16 %v145
  %v921 = vunpack.c.l.b16 %v146
  %v922 = vunpack.c.l.b16 %v147
  %v923 = vunpack.c.l.b16 %v148
  %v924 = vunpack.c.l.b16 %v149
  %v925 = vunpack.c.l.b16 %v150
  %v926 = vunpack.c.l.b16 %v151
  %v927 = vunpack.c.l.b16 %v152
  %v928 = vunpack.c.l.b16 %v153
  %v929 = vunpack.c.l.b16 %v154
  %v930 = vunpack.c.l.b16 %v155
  %v931 = vunpack.c.l.b16 %v156
  %v932 = vunpack.c.l.b16 %v157
  %v933 = vunpack.c.l.b16 %v158
  %v934 = vunpack.c.l.b16 %v159
  %v935 = vunpack.c.l.b16 %v160
  %v936 = vunpack.c.l.b16 %v161
  %v937 = vunpack.c.l.b16 %v162
  %v938 = vunpack.c.l.b16 %v163
  %v939 = vunpack.c.l.b16 %v164
  %v940 = vunpack.c.l.b16 %v165
  %v941 = vunpack.c.l.b16 %v166
  %v942 = vunpack.c.l.b16 %v167
  %v943 = vunpack.c.l.b16 %v168
  %v944 = vunpack.c.l.b16 %v169
  %v945 = vunpack.c.l.b16 %v170
  %v946 = vunpack.c.l.b16 %v171
  %v947 = vunpack.c.l.b16 %v172
  %v948 = vunpack.c.l.b16 %v173
  %v949 = vunpack.c.l.b16 %v174
  %v950 = vunpack.c.l.b16 %v175
  %v951 = vunpack.c.l.b16 %v176
  %v952 = vunpack.c.l.b16 %v177
  %v953 = vunpack.c.l.b16 %v178
  %v954 = vunpack.c.l.b16 %v179
  %v955 = vunpack.c.l.b16 %v180
  %v956 = vunpack.c.l.b16 %v181
  %v957 = vunpack.c.l.b16 %v182
  %v958 = vunpack.c.l.b16 %v183
  %v959 = vunpack.c.l.b16 %v184
  %v960 = vunpack.c.l.b16 %v185
  %v961 = vunpack.c.l.b16 %v186
  %v962 = vunpack.c.l.b16 %v187
  %v963 = vunpack.c.l.b16 %v188
  %v964 = vunpack.c.l.b16 %v189
  %v965 = vunpack.c.l.b16 %v190
  %v966 = vunpack.c.l.b16 %v191
  %v967 = vunpack.c.l.b16 %v192
  %v968 = vunpack.c.l.b16 %v193
  %v969 = vunpack.c.l.b16 %v194
  %v970 = vunpack.c.l.b16 %v195
  %v971 = vunpack.c.l.b16 %v196
  %v972 = vunpack.c.l.b16 %v197
  %v973 = vunpack.c.l.b16 %v198
  %v974 = vunpack.c.l.b16 %v199
  %v975 = vunpack.c.l.b16 %v200
  %v976 = vunpack.c.l.b16 %v201
  %v977 = vunpack.c.l.b16 %v202
  %v978 = vunpack.c.l.b16 %v203
  %v979 = vunpack.c.l.b16 %v204
  %v980 = vunpack.c.l.b16 %v205
  %v981 = vunpack.c.l.b16 %v206
  %v982 = vpack.c.b16 %v919, %v918
  %v983 = vpack.c.b16 %v921, %v920
  %v984 = vpack.c.b16 %v923, %v922
  %v985 = vpack.c.b16 %v925, %v924
  %v986 = vpack.c.b16 %v927, %v926
  %v987 = vpack.c.b16 %v929, %v928
  %v988 = vpack.c.b16 %v931, %v930
  %v989 = vpack.c.b16 %v933, %v932
  %v990 = vpack.c.b16 %v935, %v934
  %v991 = vpack.c.b16 %v937, %v936
  %v992 = vpack.c.b16 %v939, %v938
  %v993 = vpack.c.b16 %v941, %v940
  %v994 = vpack.c.b16 %v943, %v942
  %v995 = vpack.c.b16 %v945, %v944
  %v996 = vpack.c.b16 %v947, %v946
  %v997 = vpack.c.b16 %v949, %v948
  %v998 = vpack.c.b16 %v951, %v950
  %v999 = vpack.c.b16 %v953, %v952
  %v1000 = vpack.c.b16 %v955, %v954
  %v1001 = vpack.c.b16 %v957, %v956
  %v1002 = vpack.c.b16 %v959, %v958
  %v1003 = vpack.c.b16 %v961, %v960
  %v1004 = vpack.c.b16 %v963, %v962
  %v1005 = vpack.c.b16 %v965, %v964
  %v1006 = vpack.c.b16 %v967, %v966
  %v1007 = vpack.c.b16 %v969, %v968
  %v1008 = vpack.c.b16 %v971, %v970
  %v1009 = vpack.c.b16 %v973, %v972
  %v1010 = vpack.c.b16 %v975, %v974
  %v1011 = vpack.c.b16 %v977, %v976
  %v1012 = vpack.c.b16 %v979, %v978
  %v1013 = vpack.c.b16 %v981, %v980
  %1046 = vmatprep.subr.bf16.mxu0 0
  %1047 = vmatpush1.bf16.msra.mxu0 %v982
  %1048 = vmatprep.subr.bf16.mxu0 0
  %1049 = vmatpush1.bf16.msra.mxu0 %v983
  %1050 = vmatprep.subr.bf16.mxu0 0
  %1051 = vmatpush1.bf16.msra.mxu0 %v984
  %1052 = vmatprep.subr.bf16.mxu0 0
  %1053 = vmatpush1.bf16.msra.mxu0 %v985
  %1054 = vmatprep.subr.bf16.mxu0 0
  %1055 = vmatpush1.bf16.msra.mxu0 %v986
  %1056 = vmatprep.subr.bf16.mxu0 0
  %1057 = vmatpush1.bf16.msra.mxu0 %v987
  %1058 = vmatprep.subr.bf16.mxu0 0
  %1059 = vmatpush1.bf16.msra.mxu0 %v988
  %1060 = vmatprep.subr.bf16.mxu0 0
  %1061 = vmatpush1.bf16.msra.mxu0 %v989
  %1062 = vmatprep.subr.bf16.mxu0 0
  %1063 = vmatpush1.bf16.msra.mxu0 %v990
  %1064 = vmatprep.subr.bf16.mxu0 0
  %1065 = vmatpush1.bf16.msra.mxu0 %v991
  %1066 = vmatprep.subr.bf16.mxu0 0
  %1067 = vmatpush1.bf16.msra.mxu0 %v992
  %1068 = vmatprep.subr.bf16.mxu0 0
  %1069 = vmatpush1.bf16.msra.mxu0 %v993
  %1070 = vmatprep.subr.bf16.mxu0 0
  %1071 = vmatpush1.bf16.msra.mxu0 %v994
  %1072 = vmatprep.subr.bf16.mxu0 0
  %1073 = vmatpush1.bf16.msra.mxu0 %v995
  %1074 = vmatprep.subr.bf16.mxu0 0
  %1075 = vmatpush1.bf16.msra.mxu0 %v996
  %1076 = vmatprep.subr.bf16.mxu0 0
  %1077 = vmatpush1.bf16.msra.mxu0 %v997
  %1078 = vmatprep.mubr.bf16.mxu0 %v599
  %1079 = vmatmul.mubr.bf16.gmra.mrb[0].mxu0 %v598
  %v1080 = vpop.f32.mrb[0].mxu0
  %v1081 = vadd.f32 %v212, %v1080
  %v1082 = vpop.f32.mrb[0].mxu0
  %v1083 = vpop.f32.mrb[0].mxu0
  %v1084 = vadd.f32 %v212, %v1083
  %v1085 = vpop.f32.mrb[0].mxu0
  %1086 = vmatprep.mubr.bf16.mxu0 %v603
  %1087 = vmatmul.mubr.bf16.gmra.mrb[0].mxu0 %v602
  %v1088 = vpop.f32.mrb[0].mxu0
  %v1089 = vadd.f32 %v212, %v1088
  %v1090 = vpop.f32.mrb[0].mxu0
  %v1091 = vpop.f32.mrb[0].mxu0
  %v1092 = vadd.f32 %v212, %v1091
  %v1093 = vpop.f32.mrb[0].mxu0
  %1094 = vmatprep.mubr.bf16.mxu0 %v607
  %1095 = vmatmul.mubr.bf16.gmra.mrb[0].mxu0 %v606
  %v1096 = vpop.f32.mrb[0].mxu0
  %v1097 = vadd.f32 %v212, %v1096
  %v1098 = vpop.f32.mrb[0].mxu0
  %v1099 = vpop.f32.mrb[0].mxu0
  %v1100 = vadd.f32 %v212, %v1099
  %v1101 = vpop.f32.mrb[0].mxu0
  %1102 = vmatprep.mubr.bf16.mxu0 %v611
  %1103 = vmatmul.mubr.bf16.gmra.mrb[0].mxu0 %v610
  %v1104 = vpop.f32.mrb[0].mxu0
  %v1105 = vadd.f32 %v212, %v1104
  %v1106 = vpop.f32.mrb[0].mxu0
  %v1107 = vpop.f32.mrb[0].mxu0
  %v1108 = vadd.f32 %v212, %v1107
  %v1109 = vpop.f32.mrb[0].mxu0
  %1110 = vmatprep.mubr.bf16.mxu0 %v615
  %1111 = vmatmul.mubr.bf16.gmra.mrb[0].mxu0 %v614
  %v1112 = vpop.f32.mrb[0].mxu0
  %v1113 = vadd.f32 %v212, %v1112
  %v1114 = vpop.f32.mrb[0].mxu0
  %v1115 = vpop.f32.mrb[0].mxu0
  %v1116 = vadd.f32 %v212, %v1115
  %v1117 = vpop.f32.mrb[0].mxu0
  %1118 = vmatprep.mubr.bf16.mxu0 %v619
  %1119 = vmatmul.mubr.bf16.gmra.mrb[0].mxu0 %v618
  %v1120 = vpop.f32.mrb[0].mxu0
  %v1121 = vadd.f32 %v212, %v1120
  %v1122 = vpop.f32.mrb[0].mxu0
  %v1123 = vpop.f32.mrb[0].mxu0
  %v1124 = vadd.f32 %v212, %v1123
  %v1125 = vpop.f32.mrb[0].mxu0
  %1126 = vmatprep.mubr.bf16.mxu0 %v623
  %1127 = vmatmul.mubr.bf16.gmra.mrb[0].mxu0 %v622
  %v1128 = vpop.f32.mrb[0].mxu0
  %v1129 = vadd.f32 %v212, %v1128
  %v1130 = vpop.f32.mrb[0].mxu0
  %v1131 = vpop.f32.mrb[0].mxu0
  %v1132 = vadd.f32 %v212, %v1131
  %v1133 = vpop.f32.mrb[0].mxu0
  %1134 = vmatprep.mubr.bf16.mxu0 %v627
  %1135 = vmatmul.mubr.bf16.gmra.mrb[0].mxu0 %v626
  %v1136 = vpop.f32.mrb[0].mxu0
  %v1137 = vadd.f32 %v212, %v1136
  %v1138 = vpop.f32.mrb[0].mxu0
  %v1139 = vpop.f32.mrb[0].mxu0
  %v1140 = vadd.f32 %v212, %v1139
  %v1141 = vpop.f32.mrb[0].mxu0
  %1142 = vmatprep.mubr.bf16.mxu0 %v631
  %1143 = vmatmul.mubr.bf16.gmra.mrb[0].mxu0 %v630
  %v1144 = vpop.f32.mrb[0].mxu0
  %v1145 = vadd.f32 %v212, %v1144
  %v1146 = vpop.f32.mrb[0].mxu0
  %v1147 = vpop.f32.mrb[0].mxu0
  %v1148 = vadd.f32 %v212, %v1147
  %v1149 = vpop.f32.mrb[0].mxu0
  %1150 = vmatprep.mubr.bf16.mxu0 %v635
  %1151 = vmatmul.mubr.bf16.gmra.mrb[0].mxu0 %v634
  %v1152 = vpop.f32.mrb[0].mxu0
  %v1153 = vadd.f32 %v212, %v1152
  %v1154 = vpop.f32.mrb[0].mxu0
  %v1155 = vpop.f32.mrb[0].mxu0
  %v1156 = vadd.f32 %v212, %v1155
  %v1157 = vpop.f32.mrb[0].mxu0
  %1158 = vmatprep.mubr.bf16.mxu0 %v639
  %1159 = vmatmul.mubr.bf16.gmra.mrb[0].mxu0 %v638
  %v1160 = vpop.f32.mrb[0].mxu0
  %v1161 = vadd.f32 %v212, %v1160
  %v1162 = vpop.f32.mrb[0].mxu0
  %v1163 = vpop.f32.mrb[0].mxu0
  %v1164 = vadd.f32 %v212, %v1163
  %v1165 = vpop.f32.mrb[0].mxu0
  %1166 = vmatprep.mubr.bf16.mxu0 %v643
  %1167 = vmatmul.mubr.bf16.gmra.mrb[0].mxu0 %v642
  %v1168 = vpop.f32.mrb[0].mxu0
  %v1169 = vadd.f32 %v212, %v1168
  %v1170 = vpop.f32.mrb[0].mxu0
  %v1171 = vpop.f32.mrb[0].mxu0
  %v1172 = vadd.f32 %v212, %v1171
  %v1173 = vpop.f32.mrb[0].mxu0
  %1174 = vmatprep.mubr.bf16.mxu0 %v647
  %1175 = vmatmul.mubr.bf16.gmra.mrb[0].mxu0 %v646
  %v1176 = vpop.f32.mrb[0].mxu0
  %v1177 = vadd.f32 %v212, %v1176
  %v1178 = vpop.f32.mrb[0].mxu0
  %v1179 = vpop.f32.mrb[0].mxu0
  %v1180 = vadd.f32 %v212, %v1179
  %v1181 = vpop.f32.mrb[0].mxu0
  %1182 = vmatprep.mubr.bf16.mxu0 %v651
  %1183 = vmatmul.mubr.bf16.gmra.mrb[0].mxu0 %v650
  %v1184 = vpop.f32.mrb[0].mxu0
  %v1185 = vadd.f32 %v212, %v1184
  %v1186 = vpop.f32.mrb[0].mxu0
  %v1187 = vpop.f32.mrb[0].mxu0
  %v1188 = vadd.f32 %v212, %v1187
  %v1189 = vpop.f32.mrb[0].mxu0
  %1190 = vmatprep.mubr.bf16.mxu0 %v655
  %1191 = vmatmul.mubr.bf16.gmra.mrb[0].mxu0 %v654
  %v1192 = vpop.f32.mrb[0].mxu0
  %v1193 = vadd.f32 %v212, %v1192
  %v1194 = vpop.f32.mrb[0].mxu0
  %v1195 = vpop.f32.mrb[0].mxu0
  %v1196 = vadd.f32 %v212, %v1195
  %v1197 = vpop.f32.mrb[0].mxu0
  %1198 = vmatprep.mubr.bf16.mxu0 %v659
  %1199 = vmatmul.mubr.bf16.gmra.mrb[0].mxu0 %v658
  %v1200 = vpop.f32.mrb[0].mxu0
  %v1201 = vadd.f32 %v212, %v1200
  %v1202 = vpop.f32.mrb[0].mxu0
  %v1203 = vpop.f32.mrb[0].mxu0
  %v1204 = vadd.f32 %v212, %v1203
  %v1205 = vpop.f32.mrb[0].mxu0
  %1206 = vmatprep.mubr.bf16.mxu0 %v663
  %1207 = vmatmul.mubr.bf16.gmra.mrb[0].mxu0 %v662
  %v1208 = vpop.f32.mrb[0].mxu0
  %v1209 = vadd.f32 %v212, %v1208
  %v1210 = vpop.f32.mrb[0].mxu0
  %v1211 = vpop.f32.mrb[0].mxu0
  %v1212 = vadd.f32 %v212, %v1211
  %v1213 = vpop.f32.mrb[0].mxu0
  %1214 = vmatprep.mubr.bf16.mxu0 %v667
  %1215 = vmatmul.mubr.bf16.gmra.mrb[0].mxu0 %v666
  %v1216 = vpop.f32.mrb[0].mxu0
  %v1217 = vadd.f32 %v212, %v1216
  %v1218 = vpop.f32.mrb[0].mxu0
  %v1219 = vpop.f32.mrb[0].mxu0
  %v1220 = vadd.f32 %v212, %v1219
  %v1221 = vpop.f32.mrb[0].mxu0
  %1222 = vmatprep.mubr.bf16.mxu0 %v671
  %1223 = vmatmul.mubr.bf16.gmra.mrb[0].mxu0 %v670
  %v1224 = vpop.f32.mrb[0].mxu0
  %v1225 = vadd.f32 %v212, %v1224
  %v1226 = vpop.f32.mrb[0].mxu0
  %v1227 = vpop.f32.mrb[0].mxu0
  %v1228 = vadd.f32 %v212, %v1227
  %v1229 = vpop.f32.mrb[0].mxu0
  %1230 = vmatprep.mubr.bf16.mxu0 %v675
  %1231 = vmatmul.mubr.bf16.gmra.mrb[0].mxu0 %v674
  %v1232 = vpop.f32.mrb[0].mxu0
  %v1233 = vadd.f32 %v212, %v1232
  %v1234 = vpop.f32.mrb[0].mxu0
  %v1235 = vpop.f32.mrb[0].mxu0
  %v1236 = vadd.f32 %v212, %v1235
  %v1237 = vpop.f32.mrb[0].mxu0
  %1238 = vmatprep.mubr.bf16.mxu0 %v679
  %1239 = vmatmul.mubr.bf16.gmra.mrb[0].mxu0 %v678
  %v1240 = vpop.f32.mrb[0].mxu0
  %v1241 = vadd.f32 %v212, %v1240
  %v1242 = vpop.f32.mrb[0].mxu0
  %v1243 = vpop.f32.mrb[0].mxu0
  %v1244 = vadd.f32 %v212, %v1243
  %v1245 = vpop.f32.mrb[0].mxu0
  %1246 = vmatprep.mubr.bf16.mxu0 %v683
  %1247 = vmatmul.mubr.bf16.gmra.mrb[0].mxu0 %v682
  %v1248 = vpop.f32.mrb[0].mxu0
  %v1249 = vadd.f32 %v212, %v1248
  %v1250 = vpop.f32.mrb[0].mxu0
  %v1251 = vpop.f32.mrb[0].mxu0
  %v1252 = vadd.f32 %v212, %v1251
  %v1253 = vpop.f32.mrb[0].mxu0
  %1254 = vmatprep.mubr.bf16.mxu0 %v687
  %1255 = vmatmul.mubr.bf16.gmra.mrb[0].mxu0 %v686
  %v1256 = vpop.f32.mrb[0].mxu0
  %v1257 = vadd.f32 %v212, %v1256
  %v1258 = vpop.f32.mrb[0].mxu0
  %v1259 = vpop.f32.mrb[0].mxu0
  %v1260 = vadd.f32 %v212, %v1259
  %v1261 = vpop.f32.mrb[0].mxu0
  %1262 = vmatprep.mubr.bf16.mxu0 %v691
  %1263 = vmatmul.mubr.bf16.gmra.mrb[0].mxu0 %v690
  %v1264 = vpop.f32.mrb[0].mxu0
  %v1265 = vadd.f32 %v212, %v1264
  %v1266 = vpop.f32.mrb[0].mxu0
  %v1267 = vpop.f32.mrb[0].mxu0
  %v1268 = vadd.f32 %v212, %v1267
  %v1269 = vpop.f32.mrb[0].mxu0
  %1270 = vmatprep.mubr.bf16.mxu0 %v695
  %1271 = vmatmul.mubr.bf16.gmra.mrb[0].mxu0 %v694
  %v1272 = vpop.f32.mrb[0].mxu0
  %v1273 = vadd.f32 %v212, %v1272
  %v1274 = vpop.f32.mrb[0].mxu0
  %v1275 = vpop.f32.mrb[0].mxu0
  %v1276 = vadd.f32 %v212, %v1275
  %v1277 = vpop.f32.mrb[0].mxu0
  %1278 = vmatprep.mubr.bf16.mxu0 %v699
  %1279 = vmatmul.mubr.bf16.gmra.mrb[0].mxu0 %v698
  %v1280 = vpop.f32.mrb[0].mxu0
  %v1281 = vadd.f32 %v212, %v1280
  %v1282 = vpop.f32.mrb[0].mxu0
  %v1283 = vpop.f32.mrb[0].mxu0
  %v1284 = vadd.f32 %v212, %v1283
  %v1285 = vpop.f32.mrb[0].mxu0
  %1286 = vmatprep.mubr.bf16.mxu0 %v703
  %1287 = vmatmul.mubr.bf16.gmra.mrb[0].mxu0 %v702
  %v1288 = vpop.f32.mrb[0].mxu0
  %v1289 = vadd.f32 %v212, %v1288
  %v1290 = vpop.f32.mrb[0].mxu0
  %v1291 = vpop.f32.mrb[0].mxu0
  %v1292 = vadd.f32 %v212, %v1291
  %v1293 = vpop.f32.mrb[0].mxu0
  %1294 = vmatprep.mubr.bf16.mxu0 %v707
  %1295 = vmatmul.mubr.bf16.gmra.mrb[0].mxu0 %v706
  %v1296 = vpop.f32.mrb[0].mxu0
  %v1297 = vadd.f32 %v212, %v1296
  %v1298 = vpop.f32.mrb[0].mxu0
  %v1299 = vpop.f32.mrb[0].mxu0
  %v1300 = vadd.f32 %v212, %v1299
  %v1301 = vpop.f32.mrb[0].mxu0
  %1302 = vmatprep.mubr.bf16.mxu0 %v711
  %1303 = vmatmul.mubr.bf16.gmra.mrb[0].mxu0 %v710
  %v1304 = vpop.f32.mrb[0].mxu0
  %v1305 = vadd.f32 %v212, %v1304
  %v1306 = vpop.f32.mrb[0].mxu0
  %v1307 = vpop.f32.mrb[0].mxu0
  %v1308 = vadd.f32 %v212, %v1307
  %v1309 = vpop.f32.mrb[0].mxu0
  %1310 = vmatprep.mubr.bf16.mxu0 %v715
  %1311 = vmatmul.mubr.bf16.gmra.mrb[0].mxu0 %v714
  %v1312 = vpop.f32.mrb[0].mxu0
  %v1313 = vadd.f32 %v212, %v1312
  %v1314 = vpop.f32.mrb[0].mxu0
  %v1315 = vpop.f32.mrb[0].mxu0
  %v1316 = vadd.f32 %v212, %v1315
  %v1317 = vpop.f32.mrb[0].mxu0
  %1318 = vmatprep.mubr.bf16.mxu0 %v719
  %1319 = vmatmul.mubr.bf16.gmra.mrb[0].mxu0 %v718
  %v1320 = vpop.f32.mrb[0].mxu0
  %v1321 = vadd.f32 %v212, %v1320
  %v1322 = vpop.f32.mrb[0].mxu0
  %v1323 = vpop.f32.mrb[0].mxu0
  %v1324 = vadd.f32 %v212, %v1323
  %v1325 = vpop.f32.mrb[0].mxu0
  %1326 = vmatprep.mubr.bf16.mxu0 %v723
  %1327 = vmatmul.mubr.bf16.gmra.mrb[0].mxu0 %v722
  %v1328 = vpop.f32.mrb[0].mxu0
  %v1329 = vadd.f32 %v212, %v1328
  %v1330 = vpop.f32.mrb[0].mxu0
  %v1331 = vpop.f32.mrb[0].mxu0
  %v1332 = vadd.f32 %v212, %v1331
  %v1333 = vpop.f32.mrb[0].mxu0
  %1334 = vdwg.mxu0
  %1335 = vmatprep.subr.bf16.mxu0 0
  %1336 = vmatpush1.bf16.msra.mxu0 %v998
  %1337 = vmatprep.subr.bf16.mxu0 0
  %1338 = vmatpush1.bf16.msra.mxu0 %v999
  %1339 = vmatprep.subr.bf16.mxu0 0
  %1340 = vmatpush1.bf16.msra.mxu0 %v1000
  %1341 = vmatprep.subr.bf16.mxu0 0
  %1342 = vmatpush1.bf16.msra.mxu0 %v1001
  %1343 = vmatprep.subr.bf16.mxu0 0
  %1344 = vmatpush1.bf16.msra.mxu0 %v1002
  %1345 = vmatprep.subr.bf16.mxu0 0
  %1346 = vmatpush1.bf16.msra.mxu0 %v1003
  %1347 = vmatprep.subr.bf16.mxu0 0
  %1348 = vmatpush1.bf16.msra.mxu0 %v1004
  %1349 = vmatprep.subr.bf16.mxu0 0
  %1350 = vmatpush1.bf16.msra.mxu0 %v1005
  %1351 = vmatprep.subr.bf16.mxu0 0
  %1352 = vmatpush1.bf16.msra.mxu0 %v1006
  %1353 = vmatprep.subr.bf16.mxu0 0
  %1354 = vmatpush1.bf16.msra.mxu0 %v1007
  %1355 = vmatprep.subr.bf16.mxu0 0
  %1356 = vmatpush1.bf16.msra.mxu0 %v1008
  %1357 = vmatprep.subr.bf16.mxu0 0
  %1358 = vmatpush1.bf16.msra.mxu0 %v1009
  %1359 = vmatprep.subr.bf16.mxu0 0
  %1360 = vmatpush1.bf16.msra.mxu0 %v1010
  %1361 = vmatprep.subr.bf16.mxu0 0
  %1362 = vmatpush1.bf16.msra.mxu0 %v1011
  %1363 = vmatprep.subr.bf16.mxu0 0
  %1364 = vmatpush1.bf16.msra.mxu0 %v1012
  %1365 = vmatprep.subr.bf16.mxu0 0
  %1366 = vmatpush1.bf16.msra.mxu0 %v1013
  %1367 = vmatprep.mubr.bf16.mxu0 %v601
  %1368 = vmatmul.mubr.bf16.gmra.mrb[0].mxu0 %v600
  %v1369 = vpop.f32.mrb[0].mxu0
  %v1370 = vadd.f32 %v1081, %v1369
  %v1371 = vpop.f32.mrb[0].mxu0
  %v1372 = vpop.f32.mrb[0].mxu0
  %v1373 = vadd.f32 %v1084, %v1372
  %v1374 = vpop.f32.mrb[0].mxu0
  %1375 = vmatprep.mubr.bf16.mxu0 %v605
  %1376 = vmatmul.mubr.bf16.gmra.mrb[0].mxu0 %v604
  %v1377 = vpop.f32.mrb[0].mxu0
  %v1378 = vadd.f32 %v1089, %v1377
  %v1379 = vpop.f32.mrb[0].mxu0
  %v1380 = vpop.f32.mrb[0].mxu0
  %v1381 = vadd.f32 %v1092, %v1380
  %v1382 = vpop.f32.mrb[0].mxu0
  %1383 = vmatprep.mubr.bf16.mxu0 %v609
  %1384 = vmatmul.mubr.bf16.gmra.mrb[0].mxu0 %v608
  %v1385 = vpop.f32.mrb[0].mxu0
  %v1386 = vadd.f32 %v1097, %v1385
  %v1387 = vpop.f32.mrb[0].mxu0
  %v1388 = vpop.f32.mrb[0].mxu0
  %v1389 = vadd.f32 %v1100, %v1388
  %v1390 = vpop.f32.mrb[0].mxu0
  %1391 = vmatprep.mubr.bf16.mxu0 %v613
  %1392 = vmatmul.mubr.bf16.gmra.mrb[0].mxu0 %v612
  %v1393 = vpop.f32.mrb[0].mxu0
  %v1394 = vadd.f32 %v1105, %v1393
  %v1395 = vpop.f32.mrb[0].mxu0
  %v1396 = vpop.f32.mrb[0].mxu0
  %v1397 = vadd.f32 %v1108, %v1396
  %v1398 = vpop.f32.mrb[0].mxu0
  %1399 = vmatprep.mubr.bf16.mxu0 %v617
  %1400 = vmatmul.mubr.bf16.gmra.mrb[0].mxu0 %v616
  %v1401 = vpop.f32.mrb[0].mxu0
  %v1402 = vadd.f32 %v1113, %v1401
  %v1403 = vpop.f32.mrb[0].mxu0
  %v1404 = vpop.f32.mrb[0].mxu0
  %v1405 = vadd.f32 %v1116, %v1404
  %v1406 = vpop.f32.mrb[0].mxu0
  %1407 = vmatprep.mubr.bf16.mxu0 %v621
  %1408 = vmatmul.mubr.bf16.gmra.mrb[0].mxu0 %v620
  %v1409 = vpop.f32.mrb[0].mxu0
  %v1410 = vadd.f32 %v1121, %v1409
  %v1411 = vpop.f32.mrb[0].mxu0
  %v1412 = vpop.f32.mrb[0].mxu0
  %v1413 = vadd.f32 %v1124, %v1412
  %v1414 = vpop.f32.mrb[0].mxu0
  %1415 = vmatprep.mubr.bf16.mxu0 %v625
  %1416 = vmatmul.mubr.bf16.gmra.mrb[0].mxu0 %v624
  %v1417 = vpop.f32.mrb[0].mxu0
  %v1418 = vadd.f32 %v1129, %v1417
  %v1419 = vpop.f32.mrb[0].mxu0
  %v1420 = vpop.f32.mrb[0].mxu0
  %v1421 = vadd.f32 %v1132, %v1420
  %v1422 = vpop.f32.mrb[0].mxu0
  %1423 = vmatprep.mubr.bf16.mxu0 %v629
  %1424 = vmatmul.mubr.bf16.gmra.mrb[0].mxu0 %v628
  %v1425 = vpop.f32.mrb[0].mxu0
  %v1426 = vadd.f32 %v1137, %v1425
  %v1427 = vpop.f32.mrb[0].mxu0
  %v1428 = vpop.f32.mrb[0].mxu0
  %v1429 = vadd.f32 %v1140, %v1428
  %v1430 = vpop.f32.mrb[0].mxu0
  %1431 = vmatprep.mubr.bf16.mxu0 %v633
  %1432 = vmatmul.mubr.bf16.gmra.mrb[0].mxu0 %v632
  %v1433 = vpop.f32.mrb[0].mxu0
  %v1434 = vadd.f32 %v1145, %v1433
  %v1435 = vpop.f32.mrb[0].mxu0
  %v1436 = vpop.f32.mrb[0].mxu0
  %v1437 = vadd.f32 %v1148, %v1436
  %v1438 = vpop.f32.mrb[0].mxu0
  %1439 = vmatprep.mubr.bf16.mxu0 %v637
  %1440 = vmatmul.mubr.bf16.gmra.mrb[0].mxu0 %v636
  %v1441 = vpop.f32.mrb[0].mxu0
  %v1442 = vadd.f32 %v1153, %v1441
  %v1443 = vpop.f32.mrb[0].mxu0
  %v1444 = vpop.f32.mrb[0].mxu0
  %v1445 = vadd.f32 %v1156, %v1444
  %v1446 = vpop.f32.mrb[0].mxu0
  %1447 = vmatprep.mubr.bf16.mxu0 %v641
  %1448 = vmatmul.mubr.bf16.gmra.mrb[0].mxu0 %v640
  %v1449 = vpop.f32.mrb[0].mxu0
  %v1450 = vadd.f32 %v1161, %v1449
  %v1451 = vpop.f32.mrb[0].mxu0
  %v1452 = vpop.f32.mrb[0].mxu0
  %v1453 = vadd.f32 %v1164, %v1452
  %v1454 = vpop.f32.mrb[0].mxu0
  %1455 = vmatprep.mubr.bf16.mxu0 %v645
  %1456 = vmatmul.mubr.bf16.gmra.mrb[0].mxu0 %v644
  %v1457 = vpop.f32.mrb[0].mxu0
  %v1458 = vadd.f32 %v1169, %v1457
  %v1459 = vpop.f32.mrb[0].mxu0
  %v1460 = vpop.f32.mrb[0].mxu0
  %v1461 = vadd.f32 %v1172, %v1460
  %v1462 = vpop.f32.mrb[0].mxu0
  %1463 = vmatprep.mubr.bf16.mxu0 %v649
  %1464 = vmatmul.mubr.bf16.gmra.mrb[0].mxu0 %v648
  %v1465 = vpop.f32.mrb[0].mxu0
  %v1466 = vadd.f32 %v1177, %v1465
  %v1467 = vpop.f32.mrb[0].mxu0
  %v1468 = vpop.f32.mrb[0].mxu0
  %v1469 = vadd.f32 %v1180, %v1468
  %v1470 = vpop.f32.mrb[0].mxu0
  %1471 = vmatprep.mubr.bf16.mxu0 %v653
  %1472 = vmatmul.mubr.bf16.gmra.mrb[0].mxu0 %v652
  %v1473 = vpop.f32.mrb[0].mxu0
  %v1474 = vadd.f32 %v1185, %v1473
  %v1475 = vpop.f32.mrb[0].mxu0
  %v1476 = vpop.f32.mrb[0].mxu0
  %v1477 = vadd.f32 %v1188, %v1476
  %v1478 = vpop.f32.mrb[0].mxu0
  %1479 = vmatprep.mubr.bf16.mxu0 %v657
  %1480 = vmatmul.mubr.bf16.gmra.mrb[0].mxu0 %v656
  %v1481 = vpop.f32.mrb[0].mxu0
  %v1482 = vadd.f32 %v1193, %v1481
  %v1483 = vpop.f32.mrb[0].mxu0
  %v1484 = vpop.f32.mrb[0].mxu0
  %v1485 = vadd.f32 %v1196, %v1484
  %v1486 = vpop.f32.mrb[0].mxu0
  %1487 = vmatprep.mubr.bf16.mxu0 %v661
  %1488 = vmatmul.mubr.bf16.gmra.mrb[0].mxu0 %v660
  %v1489 = vpop.f32.mrb[0].mxu0
  %v1490 = vadd.f32 %v1201, %v1489
  %v1491 = vpop.f32.mrb[0].mxu0
  %v1492 = vpop.f32.mrb[0].mxu0
  %v1493 = vadd.f32 %v1204, %v1492
  %v1494 = vpop.f32.mrb[0].mxu0
  %1495 = vmatprep.mubr.bf16.mxu0 %v665
  %1496 = vmatmul.mubr.bf16.gmra.mrb[0].mxu0 %v664
  %v1497 = vpop.f32.mrb[0].mxu0
  %v1498 = vadd.f32 %v1209, %v1497
  %v1499 = vpop.f32.mrb[0].mxu0
  %v1500 = vpop.f32.mrb[0].mxu0
  %v1501 = vadd.f32 %v1212, %v1500
  %v1502 = vpop.f32.mrb[0].mxu0
  %1503 = vmatprep.mubr.bf16.mxu0 %v669
  %1504 = vmatmul.mubr.bf16.gmra.mrb[0].mxu0 %v668
  %v1505 = vpop.f32.mrb[0].mxu0
  %v1506 = vadd.f32 %v1217, %v1505
  %v1507 = vpop.f32.mrb[0].mxu0
  %v1508 = vpop.f32.mrb[0].mxu0
  %v1509 = vadd.f32 %v1220, %v1508
  %v1510 = vpop.f32.mrb[0].mxu0
  %1511 = vmatprep.mubr.bf16.mxu0 %v673
  %1512 = vmatmul.mubr.bf16.gmra.mrb[0].mxu0 %v672
  %v1513 = vpop.f32.mrb[0].mxu0
  %v1514 = vadd.f32 %v1225, %v1513
  %v1515 = vpop.f32.mrb[0].mxu0
  %v1516 = vpop.f32.mrb[0].mxu0
  %v1517 = vadd.f32 %v1228, %v1516
  %v1518 = vpop.f32.mrb[0].mxu0
  %1519 = vmatprep.mubr.bf16.mxu0 %v677
  %1520 = vmatmul.mubr.bf16.gmra.mrb[0].mxu0 %v676
  %v1521 = vpop.f32.mrb[0].mxu0
  %v1522 = vadd.f32 %v1233, %v1521
  %v1523 = vpop.f32.mrb[0].mxu0
  %v1524 = vpop.f32.mrb[0].mxu0
  %v1525 = vadd.f32 %v1236, %v1524
  %v1526 = vpop.f32.mrb[0].mxu0
  %1527 = vmatprep.mubr.bf16.mxu0 %v681
  %1528 = vmatmul.mubr.bf16.gmra.mrb[0].mxu0 %v680
  %v1529 = vpop.f32.mrb[0].mxu0
  %v1530 = vadd.f32 %v1241, %v1529
  %v1531 = vpop.f32.mrb[0].mxu0
  %v1532 = vpop.f32.mrb[0].mxu0
  %v1533 = vadd.f32 %v1244, %v1532
  %v1534 = vpop.f32.mrb[0].mxu0
  %1535 = vmatprep.mubr.bf16.mxu0 %v685
  %1536 = vmatmul.mubr.bf16.gmra.mrb[0].mxu0 %v684
  %v1537 = vpop.f32.mrb[0].mxu0
  %v1538 = vadd.f32 %v1249, %v1537
  %v1539 = vpop.f32.mrb[0].mxu0
  %v1540 = vpop.f32.mrb[0].mxu0
  %v1541 = vadd.f32 %v1252, %v1540
  %v1542 = vpop.f32.mrb[0].mxu0
  %1543 = vmatprep.mubr.bf16.mxu0 %v689
  %1544 = vmatmul.mubr.bf16.gmra.mrb[0].mxu0 %v688
  %v1545 = vpop.f32.mrb[0].mxu0
  %v1546 = vadd.f32 %v1257, %v1545
  %v1547 = vpop.f32.mrb[0].mxu0
  %v1548 = vpop.f32.mrb[0].mxu0
  %v1549 = vadd.f32 %v1260, %v1548
  %v1550 = vpop.f32.mrb[0].mxu0
  %1551 = vmatprep.mubr.bf16.mxu0 %v693
  %1552 = vmatmul.mubr.bf16.gmra.mrb[0].mxu0 %v692
  %v1553 = vpop.f32.mrb[0].mxu0
  %v1554 = vadd.f32 %v1265, %v1553
  %v1555 = vpop.f32.mrb[0].mxu0
  %v1556 = vpop.f32.mrb[0].mxu0
  %v1557 = vadd.f32 %v1268, %v1556
  %v1558 = vpop.f32.mrb[0].mxu0
  %1559 = vmatprep.mubr.bf16.mxu0 %v697
  %1560 = vmatmul.mubr.bf16.gmra.mrb[0].mxu0 %v696
  %v1561 = vpop.f32.mrb[0].mxu0
  %v1562 = vadd.f32 %v1273, %v1561
  %v1563 = vpop.f32.mrb[0].mxu0
  %v1564 = vpop.f32.mrb[0].mxu0
  %v1565 = vadd.f32 %v1276, %v1564
  %v1566 = vpop.f32.mrb[0].mxu0
  %1567 = vmatprep.mubr.bf16.mxu0 %v701
  %1568 = vmatmul.mubr.bf16.gmra.mrb[0].mxu0 %v700
  %v1569 = vpop.f32.mrb[0].mxu0
  %v1570 = vadd.f32 %v1281, %v1569
  %v1571 = vpop.f32.mrb[0].mxu0
  %v1572 = vpop.f32.mrb[0].mxu0
  %v1573 = vadd.f32 %v1284, %v1572
  %v1574 = vpop.f32.mrb[0].mxu0
  %1575 = vmatprep.mubr.bf16.mxu0 %v705
  %1576 = vmatmul.mubr.bf16.gmra.mrb[0].mxu0 %v704
  %v1577 = vpop.f32.mrb[0].mxu0
  %v1578 = vadd.f32 %v1289, %v1577
  %v1579 = vpop.f32.mrb[0].mxu0
  %v1580 = vpop.f32.mrb[0].mxu0
  %v1581 = vadd.f32 %v1292, %v1580
  %v1582 = vpop.f32.mrb[0].mxu0
  %1583 = vmatprep.mubr.bf16.mxu0 %v709
  %1584 = vmatmul.mubr.bf16.gmra.mrb[0].mxu0 %v708
  %v1585 = vpop.f32.mrb[0].mxu0
  %v1586 = vadd.f32 %v1297, %v1585
  %v1587 = vpop.f32.mrb[0].mxu0
  %v1588 = vpop.f32.mrb[0].mxu0
  %v1589 = vadd.f32 %v1300, %v1588
  %v1590 = vpop.f32.mrb[0].mxu0
  %1591 = vmatprep.mubr.bf16.mxu0 %v713
  %1592 = vmatmul.mubr.bf16.gmra.mrb[0].mxu0 %v712
  %v1593 = vpop.f32.mrb[0].mxu0
  %v1594 = vadd.f32 %v1305, %v1593
  %v1595 = vpop.f32.mrb[0].mxu0
  %v1596 = vpop.f32.mrb[0].mxu0
  %v1597 = vadd.f32 %v1308, %v1596
  %v1598 = vpop.f32.mrb[0].mxu0
  %1599 = vmatprep.mubr.bf16.mxu0 %v717
  %1600 = vmatmul.mubr.bf16.gmra.mrb[0].mxu0 %v716
  %v1601 = vpop.f32.mrb[0].mxu0
  %v1602 = vadd.f32 %v1313, %v1601
  %v1603 = vpop.f32.mrb[0].mxu0
  %v1604 = vpop.f32.mrb[0].mxu0
  %v1605 = vadd.f32 %v1316, %v1604
  %v1606 = vpop.f32.mrb[0].mxu0
  %1607 = vmatprep.mubr.bf16.mxu0 %v721
  %1608 = vmatmul.mubr.bf16.gmra.mrb[0].mxu0 %v720
  %v1609 = vpop.f32.mrb[0].mxu0
  %v1610 = vadd.f32 %v1321, %v1609
  %v1611 = vpop.f32.mrb[0].mxu0
  %v1612 = vpop.f32.mrb[0].mxu0
  %v1613 = vadd.f32 %v1324, %v1612
  %v1614 = vpop.f32.mrb[0].mxu0
  %1615 = vmatprep.mubr.bf16.mxu0 %v725
  %1616 = vmatmul.mubr.bf16.gmra.mrb[0].mxu0 %v724
  %v1617 = vpop.f32.mrb[0].mxu0
  %v1618 = vadd.f32 %v1329, %v1617
  %v1619 = vpop.f32.mrb[0].mxu0
  %v1620 = vpop.f32.mrb[0].mxu0
  %v1621 = vadd.f32 %v1332, %v1620
  %v1622 = vpop.f32.mrb[0].mxu0
  %1623 = vdwg.mxu0
  %v1624 = vmax.f32 %v1370, 0.0
  %v1625 = vmax.f32 %v1373, 0.0
  %v1626 = vmax.f32 %v1378, 0.0
  %v1627 = vmax.f32 %v1381, 0.0
  %v1628 = vmax.f32 %v1386, 0.0
  %v1629 = vmax.f32 %v1389, 0.0
  %v1630 = vmax.f32 %v1394, 0.0
  %v1631 = vmax.f32 %v1397, 0.0
  %v1632 = vmax.f32 %v1402, 0.0
  %v1633 = vmax.f32 %v1405, 0.0
  %v1634 = vmax.f32 %v1410, 0.0
  %v1635 = vmax.f32 %v1413, 0.0
  %v1636 = vmax.f32 %v1418, 0.0
  %v1637 = vmax.f32 %v1421, 0.0
  %v1638 = vmax.f32 %v1426, 0.0
  %v1639 = vmax.f32 %v1429, 0.0
  %v1640 = vmax.f32 %v1434, 0.0
  %v1641 = vmax.f32 %v1437, 0.0
  %v1642 = vmax.f32 %v1442, 0.0
  %v1643 = vmax.f32 %v1445, 0.0
  %v1644 = vmax.f32 %v1450, 0.0
  %v1645 = vmax.f32 %v1453, 0.0
  %v1646 = vmax.f32 %v1458, 0.0
  %v1647 = vmax.f32 %v1461, 0.0
  %v1648 = vmax.f32 %v1466, 0.0
  %v1649 = vmax.f32 %v1469, 0.0
  %v1650 = vmax.f32 %v1474, 0.0
  %v1651 = vmax.f32 %v1477, 0.0
  %v1652 = vmax.f32 %v1482, 0.0
  %v1653 = vmax.f32 %v1485, 0.0
  %v1654 = vmax.f32 %v1490, 0.0
  %v1655 = vmax.f32 %v1493, 0.0
  %v1656 = vmax.f32 %v1498, 0.0
  %v1657 = vmax.f32 %v1501, 0.0
  %v1658 = vmax.f32 %v1506, 0.0
  %v1659 = vmax.f32 %v1509, 0.0
  %v1660 = vmax.f32 %v1514, 0.0
  %v1661 = vmax.f32 %v1517, 0.0
  %v1662 = vmax.f32 %v1522, 0.0
  %v1663 = vmax.f32 %v1525, 0.0
  %v1664 = vmax.f32 %v1530, 0.0
  %v1665 = vmax.f32 %v1533, 0.0
  %v1666 = vmax.f32 %v1538, 0.0
  %v1667 = vmax.f32 %v1541, 0.0
  %v1668 = vmax.f32 %v1546, 0.0
  %v1669 = vmax.f32 %v1549, 0.0
  %v1670 = vmax.f32 %v1554, 0.0
  %v1671 = vmax.f32 %v1557, 0.0
  %v1672 = vmax.f32 %v1562, 0.0
  %v1673 = vmax.f32 %v1565, 0.0
  %v1674 = vmax.f32 %v1570, 0.0
  %v1675 = vmax.f32 %v1573, 0.0
  %v1676 = vmax.f32 %v1578, 0.0
  %v1677 = vmax.f32 %v1581, 0.0
  %v1678 = vmax.f32 %v1586, 0.0
  %v1679 = vmax.f32 %v1589, 0.0
  %v1680 = vmax.f32 %v1594, 0.0
  %v1681 = vmax.f32 %v1597, 0.0
  %v1682 = vmax.f32 %v1602, 0.0
  %v1683 = vmax.f32 %v1605, 0.0
  %v1684 = vmax.f32 %v1610, 0.0
  %v1685 = vmax.f32 %v1613, 0.0
  %v1686 = vmax.f32 %v1618, 0.0
  %v1687 = vmax.f32 %v1621, 0.0
  %v1688 = vpack.c.bf16 %v1625, %v1624
  %v1689 = vpack.c.bf16 %v1627, %v1626
  %v1690 = vpack.c.bf16 %v1629, %v1628
  %v1691 = vpack.c.bf16 %v1631, %v1630
  %v1692 = vpack.c.bf16 %v1633, %v1632
  %v1693 = vpack.c.bf16 %v1635, %v1634
  %v1694 = vpack.c.bf16 %v1637, %v1636
  %v1695 = vpack.c.bf16 %v1639, %v1638
  %v1696 = vpack.c.bf16 %v1641, %v1640
  %v1697 = vpack.c.bf16 %v1643, %v1642
  %v1698 = vpack.c.bf16 %v1645, %v1644
  %v1699 = vpack.c.bf16 %v1647, %v1646
  %v1700 = vpack.c.bf16 %v1649, %v1648
  %v1701 = vpack.c.bf16 %v1651, %v1650
  %v1702 = vpack.c.bf16 %v1653, %v1652
  %v1703 = vpack.c.bf16 %v1655, %v1654
  %v1704 = vpack.c.bf16 %v1657, %v1656
  %v1705 = vpack.c.bf16 %v1659, %v1658
  %v1706 = vpack.c.bf16 %v1661, %v1660
  %v1707 = vpack.c.bf16 %v1663, %v1662
  %v1708 = vpack.c.bf16 %v1665, %v1664
  %v1709 = vpack.c.bf16 %v1667, %v1666
  %v1710 = vpack.c.bf16 %v1669, %v1668
  %v1711 = vpack.c.bf16 %v1671, %v1670
  %v1712 = vpack.c.bf16 %v1673, %v1672
  %v1713 = vpack.c.bf16 %v1675, %v1674
  %v1714 = vpack.c.bf16 %v1677, %v1676
  %v1715 = vpack.c.bf16 %v1679, %v1678
  %v1716 = vpack.c.bf16 %v1681, %v1680
  %v1717 = vpack.c.bf16 %v1683, %v1682
  %v1718 = vpack.c.bf16 %v1685, %v1684
  %v1719 = vpack.c.bf16 %v1687, %v1686
  %v1752 = vunpack.c.l.b16 %v1688
  %v1753 = vunpack.c.h.b16 %v1688
  %v1754 = vunpack.c.l.b16 %v1689
  %v1755 = vunpack.c.h.b16 %v1689
  %v1756 = vunpack.c.l.b16 %v1690
  %v1757 = vunpack.c.h.b16 %v1690
  %v1758 = vunpack.c.l.b16 %v1691
  %v1759 = vunpack.c.h.b16 %v1691
  %v1760 = vunpack.c.l.b16 %v1692
  %v1761 = vunpack.c.h.b16 %v1692
  %v1762 = vunpack.c.l.b16 %v1693
  %v1763 = vunpack.c.h.b16 %v1693
  %v1764 = vunpack.c.l.b16 %v1694
  %v1765 = vunpack.c.h.b16 %v1694
  %v1766 = vunpack.c.l.b16 %v1695
  %v1767 = vunpack.c.h.b16 %v1695
  %v1768 = vunpack.c.l.b16 %v1696
  %v1769 = vunpack.c.h.b16 %v1696
  %v1770 = vunpack.c.l.b16 %v1697
  %v1771 = vunpack.c.h.b16 %v1697
  %v1772 = vunpack.c.l.b16 %v1698
  %v1773 = vunpack.c.h.b16 %v1698
  %v1774 = vunpack.c.l.b16 %v1699
  %v1775 = vunpack.c.h.b16 %v1699
  %v1776 = vunpack.c.l.b16 %v1700
  %v1777 = vunpack.c.h.b16 %v1700
  %v1778 = vunpack.c.l.b16 %v1701
  %v1779 = vunpack.c.h.b16 %v1701
  %v1780 = vunpack.c.l.b16 %v1702
  %v1781 = vunpack.c.h.b16 %v1702
  %v1782 = vunpack.c.l.b16 %v1703
  %v1783 = vunpack.c.h.b16 %v1703
  %v1784 = vunpack.c.l.b16 %v1704
  %v1785 = vunpack.c.h.b16 %v1704
  %v1786 = vunpack.c.l.b16 %v1705
  %v1787 = vunpack.c.h.b16 %v1705
  %v1788 = vunpack.c.l.b16 %v1706
  %v1789 = vunpack.c.h.b16 %v1706
  %v1790 = vunpack.c.l.b16 %v1707
  %v1791 = vunpack.c.h.b16 %v1707
  %v1792 = vunpack.c.l.b16 %v1708
  %v1793 = vunpack.c.h.b16 %v1708
  %v1794 = vunpack.c.l.b16 %v1709
  %v1795 = vunpack.c.h.b16 %v1709
  %v1796 = vunpack.c.l.b16 %v1710
  %v1797 = vunpack.c.h.b16 %v1710
  %v1798 = vunpack.c.l.b16 %v1711
  %v1799 = vunpack.c.h.b16 %v1711
  %v1800 = vunpack.c.l.b16 %v1712
  %v1801 = vunpack.c.h.b16 %v1712
  %v1802 = vunpack.c.l.b16 %v1713
  %v1803 = vunpack.c.h.b16 %v1713
  %v1804 = vunpack.c.l.b16 %v1714
  %v1805 = vunpack.c.h.b16 %v1714
  %v1806 = vunpack.c.l.b16 %v1715
  %v1807 = vunpack.c.h.b16 %v1715
  %v1808 = vunpack.c.l.b16 %v1716
  %v1809 = vunpack.c.h.b16 %v1716
  %v1810 = vunpack.c.l.b16 %v1717
  %v1811 = vunpack.c.h.b16 %v1717
  %v1812 = vunpack.c.l.b16 %v1718
  %v1813 = vunpack.c.h.b16 %v1718
  %v1814 = vunpack.c.l.b16 %v1719
  %v1815 = vunpack.c.h.b16 %v1719
  %v1816 = vpack.c.b16 %v1752, %v1752
  %v1817 = vpack.c.b16 %v1753, %v1753
  %v1818 = vpack.c.b16 %v1754, %v1754
  %v1819 = vpack.c.b16 %v1755, %v1755
  %v1820 = vpack.c.b16 %v1756, %v1756
  %v1821 = vpack.c.b16 %v1757, %v1757
  %v1822 = vpack.c.b16 %v1758, %v1758
  %v1823 = vpack.c.b16 %v1759, %v1759
  %v1824 = vpack.c.b16 %v1760, %v1760
  %v1825 = vpack.c.b16 %v1761, %v1761
  %v1826 = vpack.c.b16 %v1762, %v1762
  %v1827 = vpack.c.b16 %v1763, %v1763
  %v1828 = vpack.c.b16 %v1764, %v1764
  %v1829 = vpack.c.b16 %v1765, %v1765
  %v1830 = vpack.c.b16 %v1766, %v1766
  %v1831 = vpack.c.b16 %v1767, %v1767
  %v1832 = vpack.c.b16 %v1768, %v1768
  %v1833 = vpack.c.b16 %v1769, %v1769
  %v1834 = vpack.c.b16 %v1770, %v1770
  %v1835 = vpack.c.b16 %v1771, %v1771
  %v1836 = vpack.c.b16 %v1772, %v1772
  %v1837 = vpack.c.b16 %v1773, %v1773
  %v1838 = vpack.c.b16 %v1774, %v1774
  %v1839 = vpack.c.b16 %v1775, %v1775
  %v1840 = vpack.c.b16 %v1776, %v1776
  %v1841 = vpack.c.b16 %v1777, %v1777
  %v1842 = vpack.c.b16 %v1778, %v1778
  %v1843 = vpack.c.b16 %v1779, %v1779
  %v1844 = vpack.c.b16 %v1780, %v1780
  %v1845 = vpack.c.b16 %v1781, %v1781
  %v1846 = vpack.c.b16 %v1782, %v1782
  %v1847 = vpack.c.b16 %v1783, %v1783
  %v1848 = vpack.c.b16 %v1784, %v1784
  %v1849 = vpack.c.b16 %v1785, %v1785
  %v1850 = vpack.c.b16 %v1786, %v1786
  %v1851 = vpack.c.b16 %v1787, %v1787
  %v1852 = vpack.c.b16 %v1788, %v1788
  %v1853 = vpack.c.b16 %v1789, %v1789
  %v1854 = vpack.c.b16 %v1790, %v1790
  %v1855 = vpack.c.b16 %v1791, %v1791
  %v1856 = vpack.c.b16 %v1792, %v1792
  %v1857 = vpack.c.b16 %v1793, %v1793
  %v1858 = vpack.c.b16 %v1794, %v1794
  %v1859 = vpack.c.b16 %v1795, %v1795
  %v1860 = vpack.c.b16 %v1796, %v1796
  %v1861 = vpack.c.b16 %v1797, %v1797
  %v1862 = vpack.c.b16 %v1798, %v1798
  %v1863 = vpack.c.b16 %v1799, %v1799
  %v1864 = vpack.c.b16 %v1800, %v1800
  %v1865 = vpack.c.b16 %v1801, %v1801
  %v1866 = vpack.c.b16 %v1802, %v1802
  %v1867 = vpack.c.b16 %v1803, %v1803
  %v1868 = vpack.c.b16 %v1804, %v1804
  %v1869 = vpack.c.b16 %v1805, %v1805
  %v1870 = vpack.c.b16 %v1806, %v1806
  %v1871 = vpack.c.b16 %v1807, %v1807
  %v1872 = vpack.c.b16 %v1808, %v1808
  %v1873 = vpack.c.b16 %v1809, %v1809
  %v1874 = vpack.c.b16 %v1810, %v1810
  %v1875 = vpack.c.b16 %v1811, %v1811
  %v1876 = vpack.c.b16 %v1812, %v1812
  %v1877 = vpack.c.b16 %v1813, %v1813
  %v1878 = vpack.c.b16 %v1814, %v1814
  %v1879 = vpack.c.b16 %v1815, %v1815
  %vm1944 = vcmask 519168
  %1945 = vst.msk [vmem:[%s3] sm:$0xf] %vm1944, %v1816
  %1946 = vst.msk [vmem:[%s3 + $0x4] sm:$0xf] %vm1944, %v1817
  %1947 = vst.msk [vmem:[%s3 + $0x8] sm:$0xf] %vm1944, %v1818
  %1948 = vst.msk [vmem:[%s3 + $0xc] sm:$0xf] %vm1944, %v1819
  %1949 = vst.msk [vmem:[%s3 + $0x10] sm:$0xf] %vm1944, %v1820
  %1950 = vst.msk [vmem:[%s3 + $0x14] sm:$0xf] %vm1944, %v1821
  %1951 = vst.msk [vmem:[%s3 + $0x18] sm:$0xf] %vm1944, %v1822
  %1952 = vst.msk [vmem:[%s3 + $0x1c] sm:$0xf] %vm1944, %v1823
  %1953 = vst.msk [vmem:[%s3 + $0x20] sm:$0xf] %vm1944, %v1824
  %1954 = vst.msk [vmem:[%s3 + $0x24] sm:$0xf] %vm1944, %v1825
  %1955 = vst.msk [vmem:[%s3 + $0x28] sm:$0xf] %vm1944, %v1826
  %1956 = vst.msk [vmem:[%s3 + $0x2c] sm:$0xf] %vm1944, %v1827
  %1957 = vst.msk [vmem:[%s3 + $0x30] sm:$0xf] %vm1944, %v1828
  %1958 = vst.msk [vmem:[%s3 + $0x34] sm:$0xf] %vm1944, %v1829
  %1959 = vst.msk [vmem:[%s3 + $0x38] sm:$0xf] %vm1944, %v1830
  %1960 = vst.msk [vmem:[%s3 + $0x3c] sm:$0xf] %vm1944, %v1831
  %1961 = vst.msk [vmem:[%s3 + $0x40] sm:$0xf] %vm1944, %v1832
  %1962 = vst.msk [vmem:[%s3 + $0x44] sm:$0xf] %vm1944, %v1833
  %1963 = vst.msk [vmem:[%s3 + $0x48] sm:$0xf] %vm1944, %v1834
  %1964 = vst.msk [vmem:[%s3 + $0x4c] sm:$0xf] %vm1944, %v1835
  %1965 = vst.msk [vmem:[%s3 + $0x50] sm:$0xf] %vm1944, %v1836
  %1966 = vst.msk [vmem:[%s3 + $0x54] sm:$0xf] %vm1944, %v1837
  %1967 = vst.msk [vmem:[%s3 + $0x58] sm:$0xf] %vm1944, %v1838
  %1968 = vst.msk [vmem:[%s3 + $0x5c] sm:$0xf] %vm1944, %v1839
  %1969 = vst.msk [vmem:[%s3 + $0x60] sm:$0xf] %vm1944, %v1840
  %1970 = vst.msk [vmem:[%s3 + $0x64] sm:$0xf] %vm1944, %v1841
  %1971 = vst.msk [vmem:[%s3 + $0x68] sm:$0xf] %vm1944, %v1842
  %1972 = vst.msk [vmem:[%s3 + $0x6c] sm:$0xf] %vm1944, %v1843
  %1973 = vst.msk [vmem:[%s3 + $0x70] sm:$0xf] %vm1944, %v1844
  %1974 = vst.msk [vmem:[%s3 + $0x74] sm:$0xf] %vm1944, %v1845
  %1975 = vst.msk [vmem:[%s3 + $0x78] sm:$0xf] %vm1944, %v1846
  %1976 = vst.msk [vmem:[%s3 + $0x7c] sm:$0xf] %vm1944, %v1847
  %1977 = vst.msk [vmem:[%s3 + $0x80] sm:$0xf] %vm1944, %v1848
  %1978 = vst.msk [vmem:[%s3 + $0x84] sm:$0xf] %vm1944, %v1849
  %1979 = vst.msk [vmem:[%s3 + $0x88] sm:$0xf] %vm1944, %v1850
  %1980 = vst.msk [vmem:[%s3 + $0x8c] sm:$0xf] %vm1944, %v1851
  %1981 = vst.msk [vmem:[%s3 + $0x90] sm:$0xf] %vm1944, %v1852
  %1982 = vst.msk [vmem:[%s3 + $0x94] sm:$0xf] %vm1944, %v1853
  %1983 = vst.msk [vmem:[%s3 + $0x98] sm:$0xf] %vm1944, %v1854
  %1984 = vst.msk [vmem:[%s3 + $0x9c] sm:$0xf] %vm1944, %v1855
  %1985 = vst.msk [vmem:[%s3 + $0xa0] sm:$0xf] %vm1944, %v1856
  %1986 = vst.msk [vmem:[%s3 + $0xa4] sm:$0xf] %vm1944, %v1857
  %1987 = vst.msk [vmem:[%s3 + $0xa8] sm:$0xf] %vm1944, %v1858
  %1988 = vst.msk [vmem:[%s3 + $0xac] sm:$0xf] %vm1944, %v1859
  %1989 = vst.msk [vmem:[%s3 + $0xb0] sm:$0xf] %vm1944, %v1860
  %1990 = vst.msk [vmem:[%s3 + $0xb4] sm:$0xf] %vm1944, %v1861
  %1991 = vst.msk [vmem:[%s3 + $0xb8] sm:$0xf] %vm1944, %v1862
  %1992 = vst.msk [vmem:[%s3 + $0xbc] sm:$0xf] %vm1944, %v1863
  %1993 = vst.msk [vmem:[%s3 + $0xc0] sm:$0xf] %vm1944, %v1864
  %1994 = vst.msk [vmem:[%s3 + $0xc4] sm:$0xf] %vm1944, %v1865
  %1995 = vst.msk [vmem:[%s3 + $0xc8] sm:$0xf] %vm1944, %v1866
  %1996 = vst.msk [vmem:[%s3 + $0xcc] sm:$0xf] %vm1944, %v1867
  %1997 = vst.msk [vmem:[%s3 + $0xd0] sm:$0xf] %vm1944, %v1868
  %1998 = vst.msk [vmem:[%s3 + $0xd4] sm:$0xf] %vm1944, %v1869
  %1999 = vst.msk [vmem:[%s3 + $0xd8] sm:$0xf] %vm1944, %v1870
  %2000 = vst.msk [vmem:[%s3 + $0xdc] sm:$0xf] %vm1944, %v1871
  %2001 = vst.msk [vmem:[%s3 + $0xe0] sm:$0xf] %vm1944, %v1872
  %2002 = vst.msk [vmem:[%s3 + $0xe4] sm:$0xf] %vm1944, %v1873
  %2003 = vst.msk [vmem:[%s3 + $0xe8] sm:$0xf] %vm1944, %v1874
  %2004 = vst.msk [vmem:[%s3 + $0xec] sm:$0xf] %vm1944, %v1875
  %2005 = vst.msk [vmem:[%s3 + $0xf0] sm:$0xf] %vm1944, %v1876
  %2006 = vst.msk [vmem:[%s3 + $0xf4] sm:$0xf] %vm1944, %v1877
  %2007 = vst.msk [vmem:[%s3 + $0xf8] sm:$0xf] %vm1944, %v1878
  %2008 = vst.msk [vmem:[%s3 + $0xfc] sm:$0xf] %vm1944, %v1879
  // Predicated region
  $region14: #{enc_txt_forward.7} parent=0 // pred_check
    _
  $region15: #{enc_txt_forward.7} parent=0 // pred_check_branch
    %2010 = sbr.rel (0) target = $region17
  $region16: #{enc_txt_forward.7} parent=0 // pred_region
    _
  $region17: #{enc_txt_forward.7} parent=0 // pred_fallthru
    _
  // Predicated region
  $region18: #{enc_txt_forward.7} parent=0 // pred_check
    _
  $region19: #{enc_txt_forward.7} parent=0 // pred_check_branch
    %2012 = sbr.rel (0) target = $region21
  $region20: #{enc_txt_forward.7} parent=0 // pred_region
    _
  $region21: #{enc_txt_forward.7} parent=0 // pred_fallthru
    _

// kernel: enc_txt_forward.8
$region0: #{enc_txt_forward.8}
  #allocation0 [shape = 'u32[]', space=smem, size = 0x4, offset = 0x4, fixed_abs, tag = 'smem constant byte address 0x4 - core index']
  #allocation1 [shape = 'u32[144,128]{1,0:T(1,128)}', space=vmem, size = 0x12000, scoped, tag = 'internal scratch']
  %s0 = inlined_call_operand.vmem [shape: bf16[128,1024], index: 0, kind: input, shape index: {}]
  %s1 = inlined_call_operand.vmem [shape: bf16[1024,128], index: 1, kind: input, shape index: {}]
  %s2 = inlined_call_operand.vmem [shape: f32[1,128], index: 2, kind: input, shape index: {}]
  %s3 = inlined_call_operand.vmem [shape: bf16[128,128], index: 3, kind: output, shape index: {}]
  %s4 = sld [smem:[#allocation0]]
  $region22: #{enc_txt_forward.8} parent=0
    _
  %s6 = ssub.s32 1, %s4
  %s7 = scalar_select 0, %s6, %s4
  // Predicated region
  $region2: #{enc_txt_forward.8} parent=0 // pred_check
    _
  $region3: #{enc_txt_forward.8} parent=0 // pred_check_branch
    %9 = sbr.rel (0) target = $region5
  $region4: #{enc_txt_forward.8} parent=0 // pred_region
    _
  $region5: #{enc_txt_forward.8} parent=0 // pred_fallthru
    _
  // Predicated region
  $region6: #{enc_txt_forward.8} parent=0 // pred_check
    _
  $region7: #{enc_txt_forward.8} parent=0 // pred_check_branch
    %11 = sbr.rel (0) target = $region9
  $region8: #{enc_txt_forward.8} parent=0 // pred_region
    _
  $region9: #{enc_txt_forward.8} parent=0 // pred_fallthru
    _
  // Predicated region
  $region10: #{enc_txt_forward.8} parent=0 // pred_check
    _
  $region11: #{enc_txt_forward.8} parent=0 // pred_check_branch
    %13 = sbr.rel (0) target = $region13
  $region12: #{enc_txt_forward.8} parent=0 // pred_region
    _
  $region13: #{enc_txt_forward.8} parent=0 // pred_fallthru
    _
  %v15 = vld [vmem:[%s0] sm:$0xff]
  %v16 = vld [vmem:[%s0 + $0x8] sm:$0xff]
  %v17 = vld [vmem:[%s0 + $0x10] sm:$0xff]
  %v18 = vld [vmem:[%s0 + $0x18] sm:$0xff]
  %v19 = vld [vmem:[%s0 + $0x20] sm:$0xff]
  %v20 = vld [vmem:[%s0 + $0x28] sm:$0xff]
  %v21 = vld [vmem:[%s0 + $0x30] sm:$0xff]
  %v22 = vld [vmem:[%s0 + $0x38] sm:$0xff]
  %v23 = vld [vmem:[%s0 + $0x40] sm:$0xff]
  %v24 = vld [vmem:[%s0 + $0x48] sm:$0xff]
  %v25 = vld [vmem:[%s0 + $0x50] sm:$0xff]
  %v26 = vld [vmem:[%s0 + $0x58] sm:$0xff]
  %v27 = vld [vmem:[%s0 + $0x60] sm:$0xff]
  %v28 = vld [vmem:[%s0 + $0x68] sm:$0xff]
  %v29 = vld [vmem:[%s0 + $0x70] sm:$0xff]
  %v30 = vld [vmem:[%s0 + $0x78] sm:$0xff]
  %v31 = vld [vmem:[%s0 + $0x80] sm:$0xff]
  %v32 = vld [vmem:[%s0 + $0x88] sm:$0xff]
  %v33 = vld [vmem:[%s0 + $0x90] sm:$0xff]
  %v34 = vld [vmem:[%s0 + $0x98] sm:$0xff]
  %v35 = vld [vmem:[%s0 + $0xa0] sm:$0xff]
  %v36 = vld [vmem:[%s0 + $0xa8] sm:$0xff]
  %v37 = vld [vmem:[%s0 + $0xb0] sm:$0xff]
  %v38 = vld [vmem:[%s0 + $0xb8] sm:$0xff]
  %v39 = vld [vmem:[%s0 + $0xc0] sm:$0xff]
  %v40 = vld [vmem:[%s0 + $0xc8] sm:$0xff]
  %v41 = vld [vmem:[%s0 + $0xd0] sm:$0xff]
  %v42 = vld [vmem:[%s0 + $0xd8] sm:$0xff]
  %v43 = vld [vmem:[%s0 + $0xe0] sm:$0xff]
  %v44 = vld [vmem:[%s0 + $0xe8] sm:$0xff]
  %v45 = vld [vmem:[%s0 + $0xf0] sm:$0xff]
  %v46 = vld [vmem:[%s0 + $0xf8] sm:$0xff]
  %v47 = vld [vmem:[%s0 + $0x100] sm:$0xff]
  %v48 = vld [vmem:[%s0 + $0x108] sm:$0xff]
  %v49 = vld [vmem:[%s0 + $0x110] sm:$0xff]
  %v50 = vld [vmem:[%s0 + $0x118] sm:$0xff]
  %v51 = vld [vmem:[%s0 + $0x120] sm:$0xff]
  %v52 = vld [vmem:[%s0 + $0x128] sm:$0xff]
  %v53 = vld [vmem:[%s0 + $0x130] sm:$0xff]
  %v54 = vld [vmem:[%s0 + $0x138] sm:$0xff]
  %v55 = vld [vmem:[%s0 + $0x140] sm:$0xff]
  %v56 = vld [vmem:[%s0 + $0x148] sm:$0xff]
  %v57 = vld [vmem:[%s0 + $0x150] sm:$0xff]
  %v58 = vld [vmem:[%s0 + $0x158] sm:$0xff]
  %v59 = vld [vmem:[%s0 + $0x160] sm:$0xff]
  %v60 = vld [vmem:[%s0 + $0x168] sm:$0xff]
  %v61 = vld [vmem:[%s0 + $0x170] sm:$0xff]
  %v62 = vld [vmem:[%s0 + $0x178] sm:$0xff]
  %v63 = vld [vmem:[%s0 + $0x180] sm:$0xff]
  %v64 = vld [vmem:[%s0 + $0x188] sm:$0xff]
  %v65 = vld [vmem:[%s0 + $0x190] sm:$0xff]
  %v66 = vld [vmem:[%s0 + $0x198] sm:$0xff]
  %v67 = vld [vmem:[%s0 + $0x1a0] sm:$0xff]
  %v68 = vld [vmem:[%s0 + $0x1a8] sm:$0xff]
  %v69 = vld [vmem:[%s0 + $0x1b0] sm:$0xff]
  %v70 = vld [vmem:[%s0 + $0x1b8] sm:$0xff]
  %v71 = vld [vmem:[%s0 + $0x1c0] sm:$0xff]
  %v72 = vld [vmem:[%s0 + $0x1c8] sm:$0xff]
  %v73 = vld [vmem:[%s0 + $0x1d0] sm:$0xff]
  %v74 = vld [vmem:[%s0 + $0x1d8] sm:$0xff]
  %v75 = vld [vmem:[%s0 + $0x1e0] sm:$0xff]
  %v76 = vld [vmem:[%s0 + $0x1e8] sm:$0xff]
  %v77 = vld [vmem:[%s0 + $0x1f0] sm:$0xff]
  %v78 = vld [vmem:[%s0 + $0x1f8] sm:$0xff]
  %v79 = vld [vmem:[%s1] sm:$0xf]
  %v80 = vld [vmem:[%s1 + $0x4] sm:$0xf]
  %v81 = vld [vmem:[%s1 + $0x8] sm:$0xf]
  %v82 = vld [vmem:[%s1 + $0xc] sm:$0xf]
  %v83 = vld [vmem:[%s1 + $0x10] sm:$0xf]
  %v84 = vld [vmem:[%s1 + $0x14] sm:$0xf]
  %v85 = vld [vmem:[%s1 + $0x18] sm:$0xf]
  %v86 = vld [vmem:[%s1 + $0x1c] sm:$0xf]
  %v87 = vld [vmem:[%s1 + $0x20] sm:$0xf]
  %v88 = vld [vmem:[%s1 + $0x24] sm:$0xf]
  %v89 = vld [vmem:[%s1 + $0x28] sm:$0xf]
  %v90 = vld [vmem:[%s1 + $0x2c] sm:$0xf]
  %v91 = vld [vmem:[%s1 + $0x30] sm:$0xf]
  %v92 = vld [vmem:[%s1 + $0x34] sm:$0xf]
  %v93 = vld [vmem:[%s1 + $0x38] sm:$0xf]
  %v94 = vld [vmem:[%s1 + $0x3c] sm:$0xf]
  %v95 = vld [vmem:[%s1 + $0x40] sm:$0xf]
  %v96 = vld [vmem:[%s1 + $0x44] sm:$0xf]
  %v97 = vld [vmem:[%s1 + $0x48] sm:$0xf]
  %v98 = vld [vmem:[%s1 + $0x4c] sm:$0xf]
  %v99 = vld [vmem:[%s1 + $0x50] sm:$0xf]
  %v100 = vld [vmem:[%s1 + $0x54] sm:$0xf]
  %v101 = vld [vmem:[%s1 + $0x58] sm:$0xf]
  %v102 = vld [vmem:[%s1 + $0x5c] sm:$0xf]
  %v103 = vld [vmem:[%s1 + $0x60] sm:$0xf]
  %v104 = vld [vmem:[%s1 + $0x64] sm:$0xf]
  %v105 = vld [vmem:[%s1 + $0x68] sm:$0xf]
  %v106 = vld [vmem:[%s1 + $0x6c] sm:$0xf]
  %v107 = vld [vmem:[%s1 + $0x70] sm:$0xf]
  %v108 = vld [vmem:[%s1 + $0x74] sm:$0xf]
  %v109 = vld [vmem:[%s1 + $0x78] sm:$0xf]
  %v110 = vld [vmem:[%s1 + $0x7c] sm:$0xf]
  %v111 = vld [vmem:[%s1 + $0x80] sm:$0xf]
  %v112 = vld [vmem:[%s1 + $0x84] sm:$0xf]
  %v113 = vld [vmem:[%s1 + $0x88] sm:$0xf]
  %v114 = vld [vmem:[%s1 + $0x8c] sm:$0xf]
  %v115 = vld [vmem:[%s1 + $0x90] sm:$0xf]
  %v116 = vld [vmem:[%s1 + $0x94] sm:$0xf]
  %v117 = vld [vmem:[%s1 + $0x98] sm:$0xf]
  %v118 = vld [vmem:[%s1 + $0x9c] sm:$0xf]
  %v119 = vld [vmem:[%s1 + $0xa0] sm:$0xf]
  %v120 = vld [vmem:[%s1 + $0xa4] sm:$0xf]
  %v121 = vld [vmem:[%s1 + $0xa8] sm:$0xf]
  %v122 = vld [vmem:[%s1 + $0xac] sm:$0xf]
  %v123 = vld [vmem:[%s1 + $0xb0] sm:$0xf]
  %v124 = vld [vmem:[%s1 + $0xb4] sm:$0xf]
  %v125 = vld [vmem:[%s1 + $0xb8] sm:$0xf]
  %v126 = vld [vmem:[%s1 + $0xbc] sm:$0xf]
  %v127 = vld [vmem:[%s1 + $0xc0] sm:$0xf]
  %v128 = vld [vmem:[%s1 + $0xc4] sm:$0xf]
  %v129 = vld [vmem:[%s1 + $0xc8] sm:$0xf]
  %v130 = vld [vmem:[%s1 + $0xcc] sm:$0xf]
  %v131 = vld [vmem:[%s1 + $0xd0] sm:$0xf]
  %v132 = vld [vmem:[%s1 + $0xd4] sm:$0xf]
  %v133 = vld [vmem:[%s1 + $0xd8] sm:$0xf]
  %v134 = vld [vmem:[%s1 + $0xdc] sm:$0xf]
  %v135 = vld [vmem:[%s1 + $0xe0] sm:$0xf]
  %v136 = vld [vmem:[%s1 + $0xe4] sm:$0xf]
  %v137 = vld [vmem:[%s1 + $0xe8] sm:$0xf]
  %v138 = vld [vmem:[%s1 + $0xec] sm:$0xf]
  %v139 = vld [vmem:[%s1 + $0xf0] sm:$0xf]
  %v140 = vld [vmem:[%s1 + $0xf4] sm:$0xf]
  %v141 = vld [vmem:[%s1 + $0xf8] sm:$0xf]
  %v142 = vld [vmem:[%s1 + $0xfc] sm:$0xf]
  %v143 = vld [vmem:[%s1 + $0x100] sm:$0xf]
  %v144 = vld [vmem:[%s1 + $0x104] sm:$0xf]
  %v145 = vld [vmem:[%s1 + $0x108] sm:$0xf]
  %v146 = vld [vmem:[%s1 + $0x10c] sm:$0xf]
  %v147 = vld [vmem:[%s1 + $0x110] sm:$0xf]
  %v148 = vld [vmem:[%s1 + $0x114] sm:$0xf]
  %v149 = vld [vmem:[%s1 + $0x118] sm:$0xf]
  %v150 = vld [vmem:[%s1 + $0x11c] sm:$0xf]
  %v151 = vld [vmem:[%s1 + $0x120] sm:$0xf]
  %v152 = vld [vmem:[%s1 + $0x124] sm:$0xf]
  %v153 = vld [vmem:[%s1 + $0x128] sm:$0xf]
  %v154 = vld [vmem:[%s1 + $0x12c] sm:$0xf]
  %v155 = vld [vmem:[%s1 + $0x130] sm:$0xf]
  %v156 = vld [vmem:[%s1 + $0x134] sm:$0xf]
  %v157 = vld [vmem:[%s1 + $0x138] sm:$0xf]
  %v158 = vld [vmem:[%s1 + $0x13c] sm:$0xf]
  %v159 = vld [vmem:[%s1 + $0x140] sm:$0xf]
  %v160 = vld [vmem:[%s1 + $0x144] sm:$0xf]
  %v161 = vld [vmem:[%s1 + $0x148] sm:$0xf]
  %v162 = vld [vmem:[%s1 + $0x14c] sm:$0xf]
  %v163 = vld [vmem:[%s1 + $0x150] sm:$0xf]
  %v164 = vld [vmem:[%s1 + $0x154] sm:$0xf]
  %v165 = vld [vmem:[%s1 + $0x158] sm:$0xf]
  %v166 = vld [vmem:[%s1 + $0x15c] sm:$0xf]
  %v167 = vld [vmem:[%s1 + $0x160] sm:$0xf]
  %v168 = vld [vmem:[%s1 + $0x164] sm:$0xf]
  %v169 = vld [vmem:[%s1 + $0x168] sm:$0xf]
  %v170 = vld [vmem:[%s1 + $0x16c] sm:$0xf]
  %v171 = vld [vmem:[%s1 + $0x170] sm:$0xf]
  %v172 = vld [vmem:[%s1 + $0x174] sm:$0xf]
  %v173 = vld [vmem:[%s1 + $0x178] sm:$0xf]
  %v174 = vld [vmem:[%s1 + $0x17c] sm:$0xf]
  %v175 = vld [vmem:[%s1 + $0x180] sm:$0xf]
  %v176 = vld [vmem:[%s1 + $0x184] sm:$0xf]
  %v177 = vld [vmem:[%s1 + $0x188] sm:$0xf]
  %v178 = vld [vmem:[%s1 + $0x18c] sm:$0xf]
  %v179 = vld [vmem:[%s1 + $0x190] sm:$0xf]
  %v180 = vld [vmem:[%s1 + $0x194] sm:$0xf]
  %v181 = vld [vmem:[%s1 + $0x198] sm:$0xf]
  %v182 = vld [vmem:[%s1 + $0x19c] sm:$0xf]
  %v183 = vld [vmem:[%s1 + $0x1a0] sm:$0xf]
  %v184 = vld [vmem:[%s1 + $0x1a4] sm:$0xf]
  %v185 = vld [vmem:[%s1 + $0x1a8] sm:$0xf]
  %v186 = vld [vmem:[%s1 + $0x1ac] sm:$0xf]
  %v187 = vld [vmem:[%s1 + $0x1b0] sm:$0xf]
  %v188 = vld [vmem:[%s1 + $0x1b4] sm:$0xf]
  %v189 = vld [vmem:[%s1 + $0x1b8] sm:$0xf]
  %v190 = vld [vmem:[%s1 + $0x1bc] sm:$0xf]
  %v191 = vld [vmem:[%s1 + $0x1c0] sm:$0xf]
  %v192 = vld [vmem:[%s1 + $0x1c4] sm:$0xf]
  %v193 = vld [vmem:[%s1 + $0x1c8] sm:$0xf]
  %v194 = vld [vmem:[%s1 + $0x1cc] sm:$0xf]
  %v195 = vld [vmem:[%s1 + $0x1d0] sm:$0xf]
  %v196 = vld [vmem:[%s1 + $0x1d4] sm:$0xf]
  %v197 = vld [vmem:[%s1 + $0x1d8] sm:$0xf]
  %v198 = vld [vmem:[%s1 + $0x1dc] sm:$0xf]
  %v199 = vld [vmem:[%s1 + $0x1e0] sm:$0xf]
  %v200 = vld [vmem:[%s1 + $0x1e4] sm:$0xf]
  %v201 = vld [vmem:[%s1 + $0x1e8] sm:$0xf]
  %v202 = vld [vmem:[%s1 + $0x1ec] sm:$0xf]
  %v203 = vld [vmem:[%s1 + $0x1f0] sm:$0xf]
  %v204 = vld [vmem:[%s1 + $0x1f4] sm:$0xf]
  %v205 = vld [vmem:[%s1 + $0x1f8] sm:$0xf]
  %v206 = vld [vmem:[%s1 + $0x1fc] sm:$0xf]
  %v207 = vld [vmem:[%s2] sm:$0x1]
  %v209 = vlaneseq
  %v210 = vshrl.u32 %v209, 7
  %v211 = vsub.s32 0, %v210
  %v212 = vrot.slane %v207, %v211
  %v278 = vunpack.c.l.b16 %v15
  %v279 = vunpack.c.h.b16 %v15
  %v280 = vunpack.c.l.b16 %v16
  %v281 = vunpack.c.h.b16 %v16
  %v282 = vunpack.c.l.b16 %v17
  %v283 = vunpack.c.h.b16 %v17
  %v284 = vunpack.c.l.b16 %v18
  %v285 = vunpack.c.h.b16 %v18
  %v286 = vunpack.c.l.b16 %v19
  %v287 = vunpack.c.h.b16 %v19
  %v288 = vunpack.c.l.b16 %v20
  %v289 = vunpack.c.h.b16 %v20
  %v290 = vunpack.c.l.b16 %v21
  %v291 = vunpack.c.h.b16 %v21
  %v292 = vunpack.c.l.b16 %v22
  %v293 = vunpack.c.h.b16 %v22
  %v294 = vunpack.c.l.b16 %v23
  %v295 = vunpack.c.h.b16 %v23
  %v296 = vunpack.c.l.b16 %v24
  %v297 = vunpack.c.h.b16 %v24
  %v298 = vunpack.c.l.b16 %v25
  %v299 = vunpack.c.h.b16 %v25
  %v300 = vunpack.c.l.b16 %v26
  %v301 = vunpack.c.h.b16 %v26
  %v302 = vunpack.c.l.b16 %v27
  %v303 = vunpack.c.h.b16 %v27
  %v304 = vunpack.c.l.b16 %v28
  %v305 = vunpack.c.h.b16 %v28
  %v306 = vunpack.c.l.b16 %v29
  %v307 = vunpack.c.h.b16 %v29
  %v308 = vunpack.c.l.b16 %v30
  %v309 = vunpack.c.h.b16 %v30
  %v310 = vunpack.c.l.b16 %v31
  %v311 = vunpack.c.h.b16 %v31
  %v312 = vunpack.c.l.b16 %v32
  %v313 = vunpack.c.h.b16 %v32
  %v314 = vunpack.c.l.b16 %v33
  %v315 = vunpack.c.h.b16 %v33
  %v316 = vunpack.c.l.b16 %v34
  %v317 = vunpack.c.h.b16 %v34
  %v318 = vunpack.c.l.b16 %v35
  %v319 = vunpack.c.h.b16 %v35
  %v320 = vunpack.c.l.b16 %v36
  %v321 = vunpack.c.h.b16 %v36
  %v322 = vunpack.c.l.b16 %v37
  %v323 = vunpack.c.h.b16 %v37
  %v324 = vunpack.c.l.b16 %v38
  %v325 = vunpack.c.h.b16 %v38
  %v326 = vunpack.c.l.b16 %v39
  %v327 = vunpack.c.h.b16 %v39
  %v328 = vunpack.c.l.b16 %v40
  %v329 = vunpack.c.h.b16 %v40
  %v330 = vunpack.c.l.b16 %v41
  %v331 = vunpack.c.h.b16 %v41
  %v332 = vunpack.c.l.b16 %v42
  %v333 = vunpack.c.h.b16 %v42
  %v334 = vunpack.c.l.b16 %v43
  %v335 = vunpack.c.h.b16 %v43
  %v336 = vunpack.c.l.b16 %v44
  %v337 = vunpack.c.h.b16 %v44
  %v338 = vunpack.c.l.b16 %v45
  %v339 = vunpack.c.h.b16 %v45
  %v340 = vunpack.c.l.b16 %v46
  %v341 = vunpack.c.h.b16 %v46
  %v342 = vunpack.c.l.b16 %v47
  %v343 = vunpack.c.h.b16 %v47
  %v344 = vunpack.c.l.b16 %v48
  %v345 = vunpack.c.h.b16 %v48
  %v346 = vunpack.c.l.b16 %v49
  %v347 = vunpack.c.h.b16 %v49
  %v348 = vunpack.c.l.b16 %v50
  %v349 = vunpack.c.h.b16 %v50
  %v350 = vunpack.c.l.b16 %v51
  %v351 = vunpack.c.h.b16 %v51
  %v352 = vunpack.c.l.b16 %v52
  %v353 = vunpack.c.h.b16 %v52
  %v354 = vunpack.c.l.b16 %v53
  %v355 = vunpack.c.h.b16 %v53
  %v356 = vunpack.c.l.b16 %v54
  %v357 = vunpack.c.h.b16 %v54
  %v358 = vunpack.c.l.b16 %v55
  %v359 = vunpack.c.h.b16 %v55
  %v360 = vunpack.c.l.b16 %v56
  %v361 = vunpack.c.h.b16 %v56
  %v362 = vunpack.c.l.b16 %v57
  %v363 = vunpack.c.h.b16 %v57
  %v364 = vunpack.c.l.b16 %v58
  %v365 = vunpack.c.h.b16 %v58
  %v366 = vunpack.c.l.b16 %v59
  %v367 = vunpack.c.h.b16 %v59
  %v368 = vunpack.c.l.b16 %v60
  %v369 = vunpack.c.h.b16 %v60
  %v370 = vunpack.c.l.b16 %v61
  %v371 = vunpack.c.h.b16 %v61
  %v372 = vunpack.c.l.b16 %v62
  %v373 = vunpack.c.h.b16 %v62
  %v374 = vunpack.c.l.b16 %v63
  %v375 = vunpack.c.h.b16 %v63
  %v376 = vunpack.c.l.b16 %v64
  %v377 = vunpack.c.h.b16 %v64
  %v378 = vunpack.c.l.b16 %v65
  %v379 = vunpack.c.h.b16 %v65
  %v380 = vunpack.c.l.b16 %v66
  %v381 = vunpack.c.h.b16 %v66
  %v382 = vunpack.c.l.b16 %v67
  %v383 = vunpack.c.h.b16 %v67
  %v384 = vunpack.c.l.b16 %v68
  %v385 = vunpack.c.h.b16 %v68
  %v386 = vunpack.c.l.b16 %v69
  %v387 = vunpack.c.h.b16 %v69
  %v388 = vunpack.c.l.b16 %v70
  %v389 = vunpack.c.h.b16 %v70
  %v390 = vunpack.c.l.b16 %v71
  %v391 = vunpack.c.h.b16 %v71
  %v392 = vunpack.c.l.b16 %v72
  %v393 = vunpack.c.h.b16 %v72
  %v394 = vunpack.c.l.b16 %v73
  %v395 = vunpack.c.h.b16 %v73
  %v396 = vunpack.c.l.b16 %v74
  %v397 = vunpack.c.h.b16 %v74
  %v398 = vunpack.c.l.b16 %v75
  %v399 = vunpack.c.h.b16 %v75
  %v400 = vunpack.c.l.b16 %v76
  %v401 = vunpack.c.h.b16 %v76
  %v402 = vunpack.c.l.b16 %v77
  %v403 = vunpack.c.h.b16 %v77
  %v404 = vunpack.c.l.b16 %v78
  %v405 = vunpack.c.h.b16 %v78
  %v406 = vpack.c.b16 %v286, %v278
  %v407 = vpack.c.b16 %v287, %v279
  %v408 = vpack.c.b16 %v288, %v280
  %v409 = vpack.c.b16 %v289, %v281
  %v410 = vpack.c.b16 %v290, %v282
  %v411 = vpack.c.b16 %v291, %v283
  %v412 = vpack.c.b16 %v292, %v284
  %v413 = vpack.c.b16 %v293, %v285
  %v414 = vpack.c.b16 %v302, %v294
  %v415 = vpack.c.b16 %v303, %v295
  %v416 = vpack.c.b16 %v304, %v296
  %v417 = vpack.c.b16 %v305, %v297
  %v418 = vpack.c.b16 %v306, %v298
  %v419 = vpack.c.b16 %v307, %v299
  %v420 = vpack.c.b16 %v308, %v300
  %v421 = vpack.c.b16 %v309, %v301
  %v422 = vpack.c.b16 %v318, %v310
  %v423 = vpack.c.b16 %v319, %v311
  %v424 = vpack.c.b16 %v320, %v312
  %v425 = vpack.c.b16 %v321, %v313
  %v426 = vpack.c.b16 %v322, %v314
  %v427 = vpack.c.b16 %v323, %v315
  %v428 = vpack.c.b16 %v324, %v316
  %v429 = vpack.c.b16 %v325, %v317
  %v430 = vpack.c.b16 %v334, %v326
  %v431 = vpack.c.b16 %v335, %v327
  %v432 = vpack.c.b16 %v336, %v328
  %v433 = vpack.c.b16 %v337, %v329
  %v434 = vpack.c.b16 %v338, %v330
  %v435 = vpack.c.b16 %v339, %v331
  %v436 = vpack.c.b16 %v340, %v332
  %v437 = vpack.c.b16 %v341, %v333
  %v438 = vpack.c.b16 %v350, %v342
  %v439 = vpack.c.b16 %v351, %v343
  %v440 = vpack.c.b16 %v352, %v344
  %v441 = vpack.c.b16 %v353, %v345
  %v442 = vpack.c.b16 %v354, %v346
  %v443 = vpack.c.b16 %v355, %v347
  %v444 = vpack.c.b16 %v356, %v348
  %v445 = vpack.c.b16 %v357, %v349
  %v446 = vpack.c.b16 %v366, %v358
  %v447 = vpack.c.b16 %v367, %v359
  %v448 = vpack.c.b16 %v368, %v360
  %v449 = vpack.c.b16 %v369, %v361
  %v450 = vpack.c.b16 %v370, %v362
  %v451 = vpack.c.b16 %v371, %v363
  %v452 = vpack.c.b16 %v372, %v364
  %v453 = vpack.c.b16 %v373, %v365
  %v454 = vpack.c.b16 %v382, %v374
  %v455 = vpack.c.b16 %v383, %v375
  %v456 = vpack.c.b16 %v384, %v376
  %v457 = vpack.c.b16 %v385, %v377
  %v458 = vpack.c.b16 %v386, %v378
  %v459 = vpack.c.b16 %v387, %v379
  %v460 = vpack.c.b16 %v388, %v380
  %v461 = vpack.c.b16 %v389, %v381
  %v462 = vpack.c.b16 %v398, %v390
  %v463 = vpack.c.b16 %v399, %v391
  %v464 = vpack.c.b16 %v400, %v392
  %v465 = vpack.c.b16 %v401, %v393
  %v466 = vpack.c.b16 %v402, %v394
  %v467 = vpack.c.b16 %v403, %v395
  %v468 = vpack.c.b16 %v404, %v396
  %v469 = vpack.c.b16 %v405, %v397
  %v662 = vunpack.c.l.b16 %v79
  %v663 = vunpack.c.l.b16 %v80
  %v664 = vunpack.c.l.b16 %v81
  %v665 = vunpack.c.l.b16 %v82
  %v666 = vunpack.c.l.b16 %v83
  %v667 = vunpack.c.l.b16 %v84
  %v668 = vunpack.c.l.b16 %v85
  %v669 = vunpack.c.l.b16 %v86
  %v670 = vunpack.c.l.b16 %v87
  %v671 = vunpack.c.l.b16 %v88
  %v672 = vunpack.c.l.b16 %v89
  %v673 = vunpack.c.l.b16 %v90
  %v674 = vunpack.c.l.b16 %v91
  %v675 = vunpack.c.l.b16 %v92
  %v676 = vunpack.c.l.b16 %v93
  %v677 = vunpack.c.l.b16 %v94
  %v678 = vunpack.c.l.b16 %v95
  %v679 = vunpack.c.l.b16 %v96
  %v680 = vunpack.c.l.b16 %v97
  %v681 = vunpack.c.l.b16 %v98
  %v682 = vunpack.c.l.b16 %v99
  %v683 = vunpack.c.l.b16 %v100
  %v684 = vunpack.c.l.b16 %v101
  %v685 = vunpack.c.l.b16 %v102
  %v686 = vunpack.c.l.b16 %v103
  %v687 = vunpack.c.l.b16 %v104
  %v688 = vunpack.c.l.b16 %v105
  %v689 = vunpack.c.l.b16 %v106
  %v690 = vunpack.c.l.b16 %v107
  %v691 = vunpack.c.l.b16 %v108
  %v692 = vunpack.c.l.b16 %v109
  %v693 = vunpack.c.l.b16 %v110
  %v694 = vunpack.c.l.b16 %v111
  %v695 = vunpack.c.l.b16 %v112
  %v696 = vunpack.c.l.b16 %v113
  %v697 = vunpack.c.l.b16 %v114
  %v698 = vunpack.c.l.b16 %v115
  %v699 = vunpack.c.l.b16 %v116
  %v700 = vunpack.c.l.b16 %v117
  %v701 = vunpack.c.l.b16 %v118
  %v702 = vunpack.c.l.b16 %v119
  %v703 = vunpack.c.l.b16 %v120
  %v704 = vunpack.c.l.b16 %v121
  %v705 = vunpack.c.l.b16 %v122
  %v706 = vunpack.c.l.b16 %v123
  %v707 = vunpack.c.l.b16 %v124
  %v708 = vunpack.c.l.b16 %v125
  %v709 = vunpack.c.l.b16 %v126
  %v710 = vunpack.c.l.b16 %v127
  %v711 = vunpack.c.l.b16 %v128
  %v712 = vunpack.c.l.b16 %v129
  %v713 = vunpack.c.l.b16 %v130
  %v714 = vunpack.c.l.b16 %v131
  %v715 = vunpack.c.l.b16 %v132
  %v716 = vunpack.c.l.b16 %v133
  %v717 = vunpack.c.l.b16 %v134
  %v718 = vunpack.c.l.b16 %v135
  %v719 = vunpack.c.l.b16 %v136
  %v720 = vunpack.c.l.b16 %v137
  %v721 = vunpack.c.l.b16 %v138
  %v722 = vunpack.c.l.b16 %v139
  %v723 = vunpack.c.l.b16 %v140
  %v724 = vunpack.c.l.b16 %v141
  %v725 = vunpack.c.l.b16 %v142
  %v726 = vunpack.c.l.b16 %v143
  %v727 = vunpack.c.l.b16 %v144
  %v728 = vunpack.c.l.b16 %v145
  %v729 = vunpack.c.l.b16 %v146
  %v730 = vunpack.c.l.b16 %v147
  %v731 = vunpack.c.l.b16 %v148
  %v732 = vunpack.c.l.b16 %v149
  %v733 = vunpack.c.l.b16 %v150
  %v734 = vunpack.c.l.b16 %v151
  %v735 = vunpack.c.l.b16 %v152
  %v736 = vunpack.c.l.b16 %v153
  %v737 = vunpack.c.l.b16 %v154
  %v738 = vunpack.c.l.b16 %v155
  %v739 = vunpack.c.l.b16 %v156
  %v740 = vunpack.c.l.b16 %v157
  %v741 = vunpack.c.l.b16 %v158
  %v742 = vunpack.c.l.b16 %v159
  %v743 = vunpack.c.l.b16 %v160
  %v744 = vunpack.c.l.b16 %v161
  %v745 = vunpack.c.l.b16 %v162
  %v746 = vunpack.c.l.b16 %v163
  %v747 = vunpack.c.l.b16 %v164
  %v748 = vunpack.c.l.b16 %v165
  %v749 = vunpack.c.l.b16 %v166
  %v750 = vunpack.c.l.b16 %v167
  %v751 = vunpack.c.l.b16 %v168
  %v752 = vunpack.c.l.b16 %v169
  %v753 = vunpack.c.l.b16 %v170
  %v754 = vunpack.c.l.b16 %v171
  %v755 = vunpack.c.l.b16 %v172
  %v756 = vunpack.c.l.b16 %v173
  %v757 = vunpack.c.l.b16 %v174
  %v758 = vunpack.c.l.b16 %v175
  %v759 = vunpack.c.l.b16 %v176
  %v760 = vunpack.c.l.b16 %v177
  %v761 = vunpack.c.l.b16 %v178
  %v762 = vunpack.c.l.b16 %v179
  %v763 = vunpack.c.l.b16 %v180
  %v764 = vunpack.c.l.b16 %v181
  %v765 = vunpack.c.l.b16 %v182
  %v766 = vunpack.c.l.b16 %v183
  %v767 = vunpack.c.l.b16 %v184
  %v768 = vunpack.c.l.b16 %v185
  %v769 = vunpack.c.l.b16 %v186
  %v770 = vunpack.c.l.b16 %v187
  %v771 = vunpack.c.l.b16 %v188
  %v772 = vunpack.c.l.b16 %v189
  %v773 = vunpack.c.l.b16 %v190
  %v774 = vunpack.c.l.b16 %v191
  %v775 = vunpack.c.l.b16 %v192
  %v776 = vunpack.c.l.b16 %v193
  %v777 = vunpack.c.l.b16 %v194
  %v778 = vunpack.c.l.b16 %v195
  %v779 = vunpack.c.l.b16 %v196
  %v780 = vunpack.c.l.b16 %v197
  %v781 = vunpack.c.l.b16 %v198
  %v782 = vunpack.c.l.b16 %v199
  %v783 = vunpack.c.l.b16 %v200
  %v784 = vunpack.c.l.b16 %v201
  %v785 = vunpack.c.l.b16 %v202
  %v786 = vunpack.c.l.b16 %v203
  %v787 = vunpack.c.l.b16 %v204
  %v788 = vunpack.c.l.b16 %v205
  %v789 = vunpack.c.l.b16 %v206
  %v790 = vpack.c.b16 %v663, %v662
  %v791 = vpack.c.b16 %v665, %v664
  %v792 = vpack.c.b16 %v667, %v666
  %v793 = vpack.c.b16 %v669, %v668
  %v794 = vpack.c.b16 %v671, %v670
  %v795 = vpack.c.b16 %v673, %v672
  %v796 = vpack.c.b16 %v675, %v674
  %v797 = vpack.c.b16 %v677, %v676
  %v798 = vpack.c.b16 %v679, %v678
  %v799 = vpack.c.b16 %v681, %v680
  %v800 = vpack.c.b16 %v683, %v682
  %v801 = vpack.c.b16 %v685, %v684
  %v802 = vpack.c.b16 %v687, %v686
  %v803 = vpack.c.b16 %v689, %v688
  %v804 = vpack.c.b16 %v691, %v690
  %v805 = vpack.c.b16 %v693, %v692
  %v806 = vpack.c.b16 %v695, %v694
  %v807 = vpack.c.b16 %v697, %v696
  %v808 = vpack.c.b16 %v699, %v698
  %v809 = vpack.c.b16 %v701, %v700
  %v810 = vpack.c.b16 %v703, %v702
  %v811 = vpack.c.b16 %v705, %v704
  %v812 = vpack.c.b16 %v707, %v706
  %v813 = vpack.c.b16 %v709, %v708
  %v814 = vpack.c.b16 %v711, %v710
  %v815 = vpack.c.b16 %v713, %v712
  %v816 = vpack.c.b16 %v715, %v714
  %v817 = vpack.c.b16 %v717, %v716
  %v818 = vpack.c.b16 %v719, %v718
  %v819 = vpack.c.b16 %v721, %v720
  %v820 = vpack.c.b16 %v723, %v722
  %v821 = vpack.c.b16 %v725, %v724
  %v822 = vpack.c.b16 %v727, %v726
  %v823 = vpack.c.b16 %v729, %v728
  %v824 = vpack.c.b16 %v731, %v730
  %v825 = vpack.c.b16 %v733, %v732
  %v826 = vpack.c.b16 %v735, %v734
  %v827 = vpack.c.b16 %v737, %v736
  %v828 = vpack.c.b16 %v739, %v738
  %v829 = vpack.c.b16 %v741, %v740
  %v830 = vpack.c.b16 %v743, %v742
  %v831 = vpack.c.b16 %v745, %v744
  %v832 = vpack.c.b16 %v747, %v746
  %v833 = vpack.c.b16 %v749, %v748
  %v834 = vpack.c.b16 %v751, %v750
  %v835 = vpack.c.b16 %v753, %v752
  %v836 = vpack.c.b16 %v755, %v754
  %v837 = vpack.c.b16 %v757, %v756
  %v838 = vpack.c.b16 %v759, %v758
  %v839 = vpack.c.b16 %v761, %v760
  %v840 = vpack.c.b16 %v763, %v762
  %v841 = vpack.c.b16 %v765, %v764
  %v842 = vpack.c.b16 %v767, %v766
  %v843 = vpack.c.b16 %v769, %v768
  %v844 = vpack.c.b16 %v771, %v770
  %v845 = vpack.c.b16 %v773, %v772
  %v846 = vpack.c.b16 %v775, %v774
  %v847 = vpack.c.b16 %v777, %v776
  %v848 = vpack.c.b16 %v779, %v778
  %v849 = vpack.c.b16 %v781, %v780
  %v850 = vpack.c.b16 %v783, %v782
  %v851 = vpack.c.b16 %v785, %v784
  %v852 = vpack.c.b16 %v787, %v786
  %v853 = vpack.c.b16 %v789, %v788
  %918 = vmatprep.subr.bf16.mxu0 0
  %919 = vmatpush1.bf16.msra.mxu0 %v790
  %920 = vmatprep.subr.bf16.mxu0 0
  %921 = vmatpush1.bf16.msra.mxu0 %v791
  %922 = vmatprep.subr.bf16.mxu0 0
  %923 = vmatpush1.bf16.msra.mxu0 %v792
  %924 = vmatprep.subr.bf16.mxu0 0
  %925 = vmatpush1.bf16.msra.mxu0 %v793
  %926 = vmatprep.subr.bf16.mxu0 0
  %927 = vmatpush1.bf16.msra.mxu0 %v794
  %928 = vmatprep.subr.bf16.mxu0 0
  %929 = vmatpush1.bf16.msra.mxu0 %v795
  %930 = vmatprep.subr.bf16.mxu0 0
  %931 = vmatpush1.bf16.msra.mxu0 %v796
  %932 = vmatprep.subr.bf16.mxu0 0
  %933 = vmatpush1.bf16.msra.mxu0 %v797
  %934 = vmatprep.subr.bf16.mxu0 0
  %935 = vmatpush1.bf16.msra.mxu0 %v798
  %936 = vmatprep.subr.bf16.mxu0 0
  %937 = vmatpush1.bf16.msra.mxu0 %v799
  %938 = vmatprep.subr.bf16.mxu0 0
  %939 = vmatpush1.bf16.msra.mxu0 %v800
  %940 = vmatprep.subr.bf16.mxu0 0
  %941 = vmatpush1.bf16.msra.mxu0 %v801
  %942 = vmatprep.subr.bf16.mxu0 0
  %943 = vmatpush1.bf16.msra.mxu0 %v802
  %944 = vmatprep.subr.bf16.mxu0 0
  %945 = vmatpush1.bf16.msra.mxu0 %v803
  %946 = vmatprep.subr.bf16.mxu0 0
  %947 = vmatpush1.bf16.msra.mxu0 %v804
  %948 = vmatprep.subr.bf16.mxu0 0
  %949 = vmatpush1.bf16.msra.mxu0 %v805
  %950 = vmatprep.mubr.bf16.mxu0 %v407
  %951 = vmatmul.mubr.bf16.gmra.mrb[0].mxu0 %v406
  %v952 = vpop.f32.mrb[0].mxu0
  %v953 = vadd.f32 %v212, %v952
  %v954 = vpop.f32.mrb[0].mxu0
  %v955 = vpop.f32.mrb[0].mxu0
  %v956 = vadd.f32 %v212, %v955
  %v957 = vpop.f32.mrb[0].mxu0
  %958 = vmatprep.mubr.bf16.mxu0 %v415
  %959 = vmatmul.mubr.bf16.gmra.mrb[0].mxu0 %v414
  %v960 = vpop.f32.mrb[0].mxu0
  %v961 = vadd.f32 %v212, %v960
  %v962 = vpop.f32.mrb[0].mxu0
  %v963 = vpop.f32.mrb[0].mxu0
  %v964 = vadd.f32 %v212, %v963
  %v965 = vpop.f32.mrb[0].mxu0
  %966 = vmatprep.mubr.bf16.mxu0 %v423
  %967 = vmatmul.mubr.bf16.gmra.mrb[0].mxu0 %v422
  %v968 = vpop.f32.mrb[0].mxu0
  %v969 = vadd.f32 %v212, %v968
  %v970 = vpop.f32.mrb[0].mxu0
  %v971 = vpop.f32.mrb[0].mxu0
  %v972 = vadd.f32 %v212, %v971
  %v973 = vpop.f32.mrb[0].mxu0
  %974 = vmatprep.mubr.bf16.mxu0 %v431
  %975 = vmatmul.mubr.bf16.gmra.mrb[0].mxu0 %v430
  %v976 = vpop.f32.mrb[0].mxu0
  %v977 = vadd.f32 %v212, %v976
  %v978 = vpop.f32.mrb[0].mxu0
  %v979 = vpop.f32.mrb[0].mxu0
  %v980 = vadd.f32 %v212, %v979
  %v981 = vpop.f32.mrb[0].mxu0
  %982 = vmatprep.mubr.bf16.mxu0 %v439
  %983 = vmatmul.mubr.bf16.gmra.mrb[0].mxu0 %v438
  %v984 = vpop.f32.mrb[0].mxu0
  %v985 = vadd.f32 %v212, %v984
  %v986 = vpop.f32.mrb[0].mxu0
  %v987 = vpop.f32.mrb[0].mxu0
  %v988 = vadd.f32 %v212, %v987
  %v989 = vpop.f32.mrb[0].mxu0
  %990 = vmatprep.mubr.bf16.mxu0 %v447
  %991 = vmatmul.mubr.bf16.gmra.mrb[0].mxu0 %v446
  %v992 = vpop.f32.mrb[0].mxu0
  %v993 = vadd.f32 %v212, %v992
  %v994 = vpop.f32.mrb[0].mxu0
  %v995 = vpop.f32.mrb[0].mxu0
  %v996 = vadd.f32 %v212, %v995
  %v997 = vpop.f32.mrb[0].mxu0
  %998 = vmatprep.mubr.bf16.mxu0 %v455
  %999 = vmatmul.mubr.bf16.gmra.mrb[0].mxu0 %v454
  %v1000 = vpop.f32.mrb[0].mxu0
  %v1001 = vadd.f32 %v212, %v1000
  %v1002 = vpop.f32.mrb[0].mxu0
  %v1003 = vpop.f32.mrb[0].mxu0
  %v1004 = vadd.f32 %v212, %v1003
  %v1005 = vpop.f32.mrb[0].mxu0
  %1006 = vmatprep.mubr.bf16.mxu0 %v463
  %1007 = vmatmul.mubr.bf16.gmra.mrb[0].mxu0 %v462
  %v1008 = vpop.f32.mrb[0].mxu0
  %v1009 = vadd.f32 %v212, %v1008
  %v1010 = vpop.f32.mrb[0].mxu0
  %v1011 = vpop.f32.mrb[0].mxu0
  %v1012 = vadd.f32 %v212, %v1011
  %v1013 = vpop.f32.mrb[0].mxu0
  %1014 = vdwg.mxu0
  %1015 = vmatprep.subr.bf16.mxu0 0
  %1016 = vmatpush1.bf16.msra.mxu0 %v806
  %1017 = vmatprep.subr.bf16.mxu0 0
  %1018 = vmatpush1.bf16.msra.mxu0 %v807
  %1019 = vmatprep.subr.bf16.mxu0 0
  %1020 = vmatpush1.bf16.msra.mxu0 %v808
  %1021 = vmatprep.subr.bf16.mxu0 0
  %1022 = vmatpush1.bf16.msra.mxu0 %v809
  %1023 = vmatprep.subr.bf16.mxu0 0
  %1024 = vmatpush1.bf16.msra.mxu0 %v810
  %1025 = vmatprep.subr.bf16.mxu0 0
  %1026 = vmatpush1.bf16.msra.mxu0 %v811
  %1027 = vmatprep.subr.bf16.mxu0 0
  %1028 = vmatpush1.bf16.msra.mxu0 %v812
  %1029 = vmatprep.subr.bf16.mxu0 0
  %1030 = vmatpush1.bf16.msra.mxu0 %v813
  %1031 = vmatprep.subr.bf16.mxu0 0
  %1032 = vmatpush1.bf16.msra.mxu0 %v814
  %1033 = vmatprep.subr.bf16.mxu0 0
  %1034 = vmatpush1.bf16.msra.mxu0 %v815
  %1035 = vmatprep.subr.bf16.mxu0 0
  %1036 = vmatpush1.bf16.msra.mxu0 %v816
  %1037 = vmatprep.subr.bf16.mxu0 0
  %1038 = vmatpush1.bf16.msra.mxu0 %v817
  %1039 = vmatprep.subr.bf16.mxu0 0
  %1040 = vmatpush1.bf16.msra.mxu0 %v818
  %1041 = vmatprep.subr.bf16.mxu0 0
  %1042 = vmatpush1.bf16.msra.mxu0 %v819
  %1043 = vmatprep.subr.bf16.mxu0 0
  %1044 = vmatpush1.bf16.msra.mxu0 %v820
  %1045 = vmatprep.subr.bf16.mxu0 0
  %1046 = vmatpush1.bf16.msra.mxu0 %v821
  %1047 = vmatprep.mubr.bf16.mxu0 %v409
  %1048 = vmatmul.mubr.bf16.gmra.mrb[0].mxu0 %v408
  %v1049 = vpop.f32.mrb[0].mxu0
  %v1050 = vadd.f32 %v953, %v1049
  %v1051 = vpop.f32.mrb[0].mxu0
  %v1052 = vpop.f32.mrb[0].mxu0
  %v1053 = vadd.f32 %v956, %v1052
  %v1054 = vpop.f32.mrb[0].mxu0
  %1055 = vmatprep.mubr.bf16.mxu0 %v417
  %1056 = vmatmul.mubr.bf16.gmra.mrb[0].mxu0 %v416
  %v1057 = vpop.f32.mrb[0].mxu0
  %v1058 = vadd.f32 %v961, %v1057
  %v1059 = vpop.f32.mrb[0].mxu0
  %v1060 = vpop.f32.mrb[0].mxu0
  %v1061 = vadd.f32 %v964, %v1060
  %v1062 = vpop.f32.mrb[0].mxu0
  %1063 = vmatprep.mubr.bf16.mxu0 %v425
  %1064 = vmatmul.mubr.bf16.gmra.mrb[0].mxu0 %v424
  %v1065 = vpop.f32.mrb[0].mxu0
  %v1066 = vadd.f32 %v969, %v1065
  %v1067 = vpop.f32.mrb[0].mxu0
  %v1068 = vpop.f32.mrb[0].mxu0
  %v1069 = vadd.f32 %v972, %v1068
  %v1070 = vpop.f32.mrb[0].mxu0
  %1071 = vmatprep.mubr.bf16.mxu0 %v433
  %1072 = vmatmul.mubr.bf16.gmra.mrb[0].mxu0 %v432
  %v1073 = vpop.f32.mrb[0].mxu0
  %v1074 = vadd.f32 %v977, %v1073
  %v1075 = vpop.f32.mrb[0].mxu0
  %v1076 = vpop.f32.mrb[0].mxu0
  %v1077 = vadd.f32 %v980, %v1076
  %v1078 = vpop.f32.mrb[0].mxu0
  %1079 = vmatprep.mubr.bf16.mxu0 %v441
  %1080 = vmatmul.mubr.bf16.gmra.mrb[0].mxu0 %v440
  %v1081 = vpop.f32.mrb[0].mxu0
  %v1082 = vadd.f32 %v985, %v1081
  %v1083 = vpop.f32.mrb[0].mxu0
  %v1084 = vpop.f32.mrb[0].mxu0
  %v1085 = vadd.f32 %v988, %v1084
  %v1086 = vpop.f32.mrb[0].mxu0
  %1087 = vmatprep.mubr.bf16.mxu0 %v449
  %1088 = vmatmul.mubr.bf16.gmra.mrb[0].mxu0 %v448
  %v1089 = vpop.f32.mrb[0].mxu0
  %v1090 = vadd.f32 %v993, %v1089
  %v1091 = vpop.f32.mrb[0].mxu0
  %v1092 = vpop.f32.mrb[0].mxu0
  %v1093 = vadd.f32 %v996, %v1092
  %v1094 = vpop.f32.mrb[0].mxu0
  %1095 = vmatprep.mubr.bf16.mxu0 %v457
  %1096 = vmatmul.mubr.bf16.gmra.mrb[0].mxu0 %v456
  %v1097 = vpop.f32.mrb[0].mxu0
  %v1098 = vadd.f32 %v1001, %v1097
  %v1099 = vpop.f32.mrb[0].mxu0
  %v1100 = vpop.f32.mrb[0].mxu0
  %v1101 = vadd.f32 %v1004, %v1100
  %v1102 = vpop.f32.mrb[0].mxu0
  %1103 = vmatprep.mubr.bf16.mxu0 %v465
  %1104 = vmatmul.mubr.bf16.gmra.mrb[0].mxu0 %v464
  %v1105 = vpop.f32.mrb[0].mxu0
  %v1106 = vadd.f32 %v1009, %v1105
  %v1107 = vpop.f32.mrb[0].mxu0
  %v1108 = vpop.f32.mrb[0].mxu0
  %v1109 = vadd.f32 %v1012, %v1108
  %v1110 = vpop.f32.mrb[0].mxu0
  %1111 = vdwg.mxu0
  %1112 = vmatprep.subr.bf16.mxu0 0
  %1113 = vmatpush1.bf16.msra.mxu0 %v822
  %1114 = vmatprep.subr.bf16.mxu0 0
  %1115 = vmatpush1.bf16.msra.mxu0 %v823
  %1116 = vmatprep.subr.bf16.mxu0 0
  %1117 = vmatpush1.bf16.msra.mxu0 %v824
  %1118 = vmatprep.subr.bf16.mxu0 0
  %1119 = vmatpush1.bf16.msra.mxu0 %v825
  %1120 = vmatprep.subr.bf16.mxu0 0
  %1121 = vmatpush1.bf16.msra.mxu0 %v826
  %1122 = vmatprep.subr.bf16.mxu0 0
  %1123 = vmatpush1.bf16.msra.mxu0 %v827
  %1124 = vmatprep.subr.bf16.mxu0 0
  %1125 = vmatpush1.bf16.msra.mxu0 %v828
  %1126 = vmatprep.subr.bf16.mxu0 0
  %1127 = vmatpush1.bf16.msra.mxu0 %v829
  %1128 = vmatprep.subr.bf16.mxu0 0
  %1129 = vmatpush1.bf16.msra.mxu0 %v830
  %1130 = vmatprep.subr.bf16.mxu0 0
  %1131 = vmatpush1.bf16.msra.mxu0 %v831
  %1132 = vmatprep.subr.bf16.mxu0 0
  %1133 = vmatpush1.bf16.msra.mxu0 %v832
  %1134 = vmatprep.subr.bf16.mxu0 0
  %1135 = vmatpush1.bf16.msra.mxu0 %v833
  %1136 = vmatprep.subr.bf16.mxu0 0
  %1137 = vmatpush1.bf16.msra.mxu0 %v834
  %1138 = vmatprep.subr.bf16.mxu0 0
  %1139 = vmatpush1.bf16.msra.mxu0 %v835
  %1140 = vmatprep.subr.bf16.mxu0 0
  %1141 = vmatpush1.bf16.msra.mxu0 %v836
  %1142 = vmatprep.subr.bf16.mxu0 0
  %1143 = vmatpush1.bf16.msra.mxu0 %v837
  %1144 = vmatprep.mubr.bf16.mxu0 %v411
  %1145 = vmatmul.mubr.bf16.gmra.mrb[0].mxu0 %v410
  %v1146 = vpop.f32.mrb[0].mxu0
  %v1147 = vadd.f32 %v1050, %v1146
  %v1148 = vpop.f32.mrb[0].mxu0
  %v1149 = vpop.f32.mrb[0].mxu0
  %v1150 = vadd.f32 %v1053, %v1149
  %v1151 = vpop.f32.mrb[0].mxu0
  %1152 = vmatprep.mubr.bf16.mxu0 %v419
  %1153 = vmatmul.mubr.bf16.gmra.mrb[0].mxu0 %v418
  %v1154 = vpop.f32.mrb[0].mxu0
  %v1155 = vadd.f32 %v1058, %v1154
  %v1156 = vpop.f32.mrb[0].mxu0
  %v1157 = vpop.f32.mrb[0].mxu0
  %v1158 = vadd.f32 %v1061, %v1157
  %v1159 = vpop.f32.mrb[0].mxu0
  %1160 = vmatprep.mubr.bf16.mxu0 %v427
  %1161 = vmatmul.mubr.bf16.gmra.mrb[0].mxu0 %v426
  %v1162 = vpop.f32.mrb[0].mxu0
  %v1163 = vadd.f32 %v1066, %v1162
  %v1164 = vpop.f32.mrb[0].mxu0
  %v1165 = vpop.f32.mrb[0].mxu0
  %v1166 = vadd.f32 %v1069, %v1165
  %v1167 = vpop.f32.mrb[0].mxu0
  %1168 = vmatprep.mubr.bf16.mxu0 %v435
  %1169 = vmatmul.mubr.bf16.gmra.mrb[0].mxu0 %v434
  %v1170 = vpop.f32.mrb[0].mxu0
  %v1171 = vadd.f32 %v1074, %v1170
  %v1172 = vpop.f32.mrb[0].mxu0
  %v1173 = vpop.f32.mrb[0].mxu0
  %v1174 = vadd.f32 %v1077, %v1173
  %v1175 = vpop.f32.mrb[0].mxu0
  %1176 = vmatprep.mubr.bf16.mxu0 %v443
  %1177 = vmatmul.mubr.bf16.gmra.mrb[0].mxu0 %v442
  %v1178 = vpop.f32.mrb[0].mxu0
  %v1179 = vadd.f32 %v1082, %v1178
  %v1180 = vpop.f32.mrb[0].mxu0
  %v1181 = vpop.f32.mrb[0].mxu0
  %v1182 = vadd.f32 %v1085, %v1181
  %v1183 = vpop.f32.mrb[0].mxu0
  %1184 = vmatprep.mubr.bf16.mxu0 %v451
  %1185 = vmatmul.mubr.bf16.gmra.mrb[0].mxu0 %v450
  %v1186 = vpop.f32.mrb[0].mxu0
  %v1187 = vadd.f32 %v1090, %v1186
  %v1188 = vpop.f32.mrb[0].mxu0
  %v1189 = vpop.f32.mrb[0].mxu0
  %v1190 = vadd.f32 %v1093, %v1189
  %v1191 = vpop.f32.mrb[0].mxu0
  %1192 = vmatprep.mubr.bf16.mxu0 %v459
  %1193 = vmatmul.mubr.bf16.gmra.mrb[0].mxu0 %v458
  %v1194 = vpop.f32.mrb[0].mxu0
  %v1195 = vadd.f32 %v1098, %v1194
  %v1196 = vpop.f32.mrb[0].mxu0
  %v1197 = vpop.f32.mrb[0].mxu0
  %v1198 = vadd.f32 %v1101, %v1197
  %v1199 = vpop.f32.mrb[0].mxu0
  %1200 = vmatprep.mubr.bf16.mxu0 %v467
  %1201 = vmatmul.mubr.bf16.gmra.mrb[0].mxu0 %v466
  %v1202 = vpop.f32.mrb[0].mxu0
  %v1203 = vadd.f32 %v1106, %v1202
  %v1204 = vpop.f32.mrb[0].mxu0
  %v1205 = vpop.f32.mrb[0].mxu0
  %v1206 = vadd.f32 %v1109, %v1205
  %v1207 = vpop.f32.mrb[0].mxu0
  %1208 = vdwg.mxu0
  %1209 = vmatprep.subr.bf16.mxu0 0
  %1210 = vmatpush1.bf16.msra.mxu0 %v838
  %1211 = vmatprep.subr.bf16.mxu0 0
  %1212 = vmatpush1.bf16.msra.mxu0 %v839
  %1213 = vmatprep.subr.bf16.mxu0 0
  %1214 = vmatpush1.bf16.msra.mxu0 %v840
  %1215 = vmatprep.subr.bf16.mxu0 0
  %1216 = vmatpush1.bf16.msra.mxu0 %v841
  %1217 = vmatprep.subr.bf16.mxu0 0
  %1218 = vmatpush1.bf16.msra.mxu0 %v842
  %1219 = vmatprep.subr.bf16.mxu0 0
  %1220 = vmatpush1.bf16.msra.mxu0 %v843
  %1221 = vmatprep.subr.bf16.mxu0 0
  %1222 = vmatpush1.bf16.msra.mxu0 %v844
  %1223 = vmatprep.subr.bf16.mxu0 0
  %1224 = vmatpush1.bf16.msra.mxu0 %v845
  %1225 = vmatprep.subr.bf16.mxu0 0
  %1226 = vmatpush1.bf16.msra.mxu0 %v846
  %1227 = vmatprep.subr.bf16.mxu0 0
  %1228 = vmatpush1.bf16.msra.mxu0 %v847
  %1229 = vmatprep.subr.bf16.mxu0 0
  %1230 = vmatpush1.bf16.msra.mxu0 %v848
  %1231 = vmatprep.subr.bf16.mxu0 0
  %1232 = vmatpush1.bf16.msra.mxu0 %v849
  %1233 = vmatprep.subr.bf16.mxu0 0
  %1234 = vmatpush1.bf16.msra.mxu0 %v850
  %1235 = vmatprep.subr.bf16.mxu0 0
  %1236 = vmatpush1.bf16.msra.mxu0 %v851
  %1237 = vmatprep.subr.bf16.mxu0 0
  %1238 = vmatpush1.bf16.msra.mxu0 %v852
  %1239 = vmatprep.subr.bf16.mxu0 0
  %1240 = vmatpush1.bf16.msra.mxu0 %v853
  %1241 = vmatprep.mubr.bf16.mxu0 %v413
  %1242 = vmatmul.mubr.bf16.gmra.mrb[0].mxu0 %v412
  %v1243 = vpop.f32.mrb[0].mxu0
  %v1244 = vadd.f32 %v1147, %v1243
  %v1245 = vpop.f32.mrb[0].mxu0
  %v1246 = vpop.f32.mrb[0].mxu0
  %v1247 = vadd.f32 %v1150, %v1246
  %v1248 = vpop.f32.mrb[0].mxu0
  %1249 = vmatprep.mubr.bf16.mxu0 %v421
  %1250 = vmatmul.mubr.bf16.gmra.mrb[0].mxu0 %v420
  %v1251 = vpop.f32.mrb[0].mxu0
  %v1252 = vadd.f32 %v1155, %v1251
  %v1253 = vpop.f32.mrb[0].mxu0
  %v1254 = vpop.f32.mrb[0].mxu0
  %v1255 = vadd.f32 %v1158, %v1254
  %v1256 = vpop.f32.mrb[0].mxu0
  %1257 = vmatprep.mubr.bf16.mxu0 %v429
  %1258 = vmatmul.mubr.bf16.gmra.mrb[0].mxu0 %v428
  %v1259 = vpop.f32.mrb[0].mxu0
  %v1260 = vadd.f32 %v1163, %v1259
  %v1261 = vpop.f32.mrb[0].mxu0
  %v1262 = vpop.f32.mrb[0].mxu0
  %v1263 = vadd.f32 %v1166, %v1262
  %v1264 = vpop.f32.mrb[0].mxu0
  %1265 = vmatprep.mubr.bf16.mxu0 %v437
  %1266 = vmatmul.mubr.bf16.gmra.mrb[0].mxu0 %v436
  %v1267 = vpop.f32.mrb[0].mxu0
  %v1268 = vadd.f32 %v1171, %v1267
  %v1269 = vpop.f32.mrb[0].mxu0
  %v1270 = vpop.f32.mrb[0].mxu0
  %v1271 = vadd.f32 %v1174, %v1270
  %v1272 = vpop.f32.mrb[0].mxu0
  %1273 = vmatprep.mubr.bf16.mxu0 %v445
  %1274 = vmatmul.mubr.bf16.gmra.mrb[0].mxu0 %v444
  %v1275 = vpop.f32.mrb[0].mxu0
  %v1276 = vadd.f32 %v1179, %v1275
  %v1277 = vpop.f32.mrb[0].mxu0
  %v1278 = vpop.f32.mrb[0].mxu0
  %v1279 = vadd.f32 %v1182, %v1278
  %v1280 = vpop.f32.mrb[0].mxu0
  %1281 = vmatprep.mubr.bf16.mxu0 %v453
  %1282 = vmatmul.mubr.bf16.gmra.mrb[0].mxu0 %v452
  %v1283 = vpop.f32.mrb[0].mxu0
  %v1284 = vadd.f32 %v1187, %v1283
  %v1285 = vpop.f32.mrb[0].mxu0
  %v1286 = vpop.f32.mrb[0].mxu0
  %v1287 = vadd.f32 %v1190, %v1286
  %v1288 = vpop.f32.mrb[0].mxu0
  %1289 = vmatprep.mubr.bf16.mxu0 %v461
  %1290 = vmatmul.mubr.bf16.gmra.mrb[0].mxu0 %v460
  %v1291 = vpop.f32.mrb[0].mxu0
  %v1292 = vadd.f32 %v1195, %v1291
  %v1293 = vpop.f32.mrb[0].mxu0
  %v1294 = vpop.f32.mrb[0].mxu0
  %v1295 = vadd.f32 %v1198, %v1294
  %v1296 = vpop.f32.mrb[0].mxu0
  %1297 = vmatprep.mubr.bf16.mxu0 %v469
  %1298 = vmatmul.mubr.bf16.gmra.mrb[0].mxu0 %v468
  %v1299 = vpop.f32.mrb[0].mxu0
  %v1300 = vadd.f32 %v1203, %v1299
  %v1301 = vpop.f32.mrb[0].mxu0
  %v1302 = vpop.f32.mrb[0].mxu0
  %v1303 = vadd.f32 %v1206, %v1302
  %v1304 = vpop.f32.mrb[0].mxu0
  %1305 = vdwg.mxu0
  %v1306 = vmax.f32 %v1244, 0.0
  %v1307 = vmax.f32 %v1247, 0.0
  %v1308 = vmax.f32 %v1252, 0.0
  %v1309 = vmax.f32 %v1255, 0.0
  %v1310 = vmax.f32 %v1260, 0.0
  %v1311 = vmax.f32 %v1263, 0.0
  %v1312 = vmax.f32 %v1268, 0.0
  %v1313 = vmax.f32 %v1271, 0.0
  %v1314 = vmax.f32 %v1276, 0.0
  %v1315 = vmax.f32 %v1279, 0.0
  %v1316 = vmax.f32 %v1284, 0.0
  %v1317 = vmax.f32 %v1287, 0.0
  %v1318 = vmax.f32 %v1292, 0.0
  %v1319 = vmax.f32 %v1295, 0.0
  %v1320 = vmax.f32 %v1300, 0.0
  %v1321 = vmax.f32 %v1303, 0.0
  %v1322 = vpack.c.bf16 %v1307, %v1306
  %v1323 = vpack.c.bf16 %v1309, %v1308
  %v1324 = vpack.c.bf16 %v1311, %v1310
  %v1325 = vpack.c.bf16 %v1313, %v1312
  %v1326 = vpack.c.bf16 %v1315, %v1314
  %v1327 = vpack.c.bf16 %v1317, %v1316
  %v1328 = vpack.c.bf16 %v1319, %v1318
  %v1329 = vpack.c.bf16 %v1321, %v1320
  %v1338 = vunpack.c.l.b16 %v1322
  %v1339 = vunpack.c.h.b16 %v1322
  %v1340 = vunpack.c.l.b16 %v1323
  %v1341 = vunpack.c.h.b16 %v1323
  %v1342 = vunpack.c.l.b16 %v1324
  %v1343 = vunpack.c.h.b16 %v1324
  %v1344 = vunpack.c.l.b16 %v1325
  %v1345 = vunpack.c.h.b16 %v1325
  %v1346 = vunpack.c.l.b16 %v1326
  %v1347 = vunpack.c.h.b16 %v1326
  %v1348 = vunpack.c.l.b16 %v1327
  %v1349 = vunpack.c.h.b16 %v1327
  %v1350 = vunpack.c.l.b16 %v1328
  %v1351 = vunpack.c.h.b16 %v1328
  %v1352 = vunpack.c.l.b16 %v1329
  %v1353 = vunpack.c.h.b16 %v1329
  %v1354 = vpack.c.b16 %v1338, %v1338
  %v1355 = vpack.c.b16 %v1339, %v1339
  %v1356 = vpack.c.b16 %v1340, %v1340
  %v1357 = vpack.c.b16 %v1341, %v1341
  %v1358 = vpack.c.b16 %v1342, %v1342
  %v1359 = vpack.c.b16 %v1343, %v1343
  %v1360 = vpack.c.b16 %v1344, %v1344
  %v1361 = vpack.c.b16 %v1345, %v1345
  %v1362 = vpack.c.b16 %v1346, %v1346
  %v1363 = vpack.c.b16 %v1347, %v1347
  %v1364 = vpack.c.b16 %v1348, %v1348
  %v1365 = vpack.c.b16 %v1349, %v1349
  %v1366 = vpack.c.b16 %v1350, %v1350
  %v1367 = vpack.c.b16 %v1351, %v1351
  %v1368 = vpack.c.b16 %v1352, %v1352
  %v1369 = vpack.c.b16 %v1353, %v1353
  %1386 = vst [vmem:[%s3] sm:$0xf] %v1354
  %1387 = vst [vmem:[%s3 + $0x4] sm:$0xf] %v1355
  %1388 = vst [vmem:[%s3 + $0x8] sm:$0xf] %v1356
  %1389 = vst [vmem:[%s3 + $0xc] sm:$0xf] %v1357
  %1390 = vst [vmem:[%s3 + $0x10] sm:$0xf] %v1358
  %1391 = vst [vmem:[%s3 + $0x14] sm:$0xf] %v1359
  %1392 = vst [vmem:[%s3 + $0x18] sm:$0xf] %v1360
  %1393 = vst [vmem:[%s3 + $0x1c] sm:$0xf] %v1361
  %1394 = vst [vmem:[%s3 + $0x20] sm:$0xf] %v1362
  %1395 = vst [vmem:[%s3 + $0x24] sm:$0xf] %v1363
  %1396 = vst [vmem:[%s3 + $0x28] sm:$0xf] %v1364
  %1397 = vst [vmem:[%s3 + $0x2c] sm:$0xf] %v1365
  %1398 = vst [vmem:[%s3 + $0x30] sm:$0xf] %v1366
  %1399 = vst [vmem:[%s3 + $0x34] sm:$0xf] %v1367
  %1400 = vst [vmem:[%s3 + $0x38] sm:$0xf] %v1368
  %1401 = vst [vmem:[%s3 + $0x3c] sm:$0xf] %v1369
  // Predicated region
  $region14: #{enc_txt_forward.8} parent=0 // pred_check
    _
  $region15: #{enc_txt_forward.8} parent=0 // pred_check_branch
    %1403 = sbr.rel (0) target = $region17
  $region16: #{enc_txt_forward.8} parent=0 // pred_region
    _
  $region17: #{enc_txt_forward.8} parent=0 // pred_fallthru
    _
  // Predicated region
  $region18: #{enc_txt_forward.8} parent=0 // pred_check
    _
  $region19: #{enc_txt_forward.8} parent=0 // pred_check_branch
    %1405 = sbr.rel (0) target = $region21
  $region20: #{enc_txt_forward.8} parent=0 // pred_region
    _
  $region21: #{enc_txt_forward.8} parent=0 // pred_fallthru
    _

// kernel: enc_txt_forward.9
$region0: #{enc_txt_forward.9}
  #allocation0 [shape = 'u32[]', space=smem, size = 0x4, offset = 0x4, fixed_abs, tag = 'smem constant byte address 0x4 - core index']
  #allocation1 [shape = 'u32[144,128]{1,0:T(1,128)}', space=vmem, size = 0x12000, scoped, tag = 'internal scratch']
  %s0 = inlined_call_operand.vmem [shape: bf16[64,512], index: 0, kind: input, shape index: {}]
  %s1 = inlined_call_operand.vmem [shape: bf16[512,256], index: 1, kind: input, shape index: {}]
  %s2 = inlined_call_operand.vmem [shape: f32[1,256], index: 2, kind: input, shape index: {}]
  %s3 = inlined_call_operand.vmem [shape: bf16[64,256], index: 3, kind: output, shape index: {}]
  %s4 = sld [smem:[#allocation0]]
  $region22: #{enc_txt_forward.9} parent=0
    _
  %s6 = ssub.s32 1, %s4
  %s7 = scalar_select 0, %s6, %s4
  // Predicated region
  $region2: #{enc_txt_forward.9} parent=0 // pred_check
    _
  $region3: #{enc_txt_forward.9} parent=0 // pred_check_branch
    %9 = sbr.rel (0) target = $region5
  $region4: #{enc_txt_forward.9} parent=0 // pred_region
    _
  $region5: #{enc_txt_forward.9} parent=0 // pred_fallthru
    _
  // Predicated region
  $region6: #{enc_txt_forward.9} parent=0 // pred_check
    _
  $region7: #{enc_txt_forward.9} parent=0 // pred_check_branch
    %11 = sbr.rel (0) target = $region9
  $region8: #{enc_txt_forward.9} parent=0 // pred_region
    _
  $region9: #{enc_txt_forward.9} parent=0 // pred_fallthru
    _
  // Predicated region
  $region10: #{enc_txt_forward.9} parent=0 // pred_check
    _
  $region11: #{enc_txt_forward.9} parent=0 // pred_check_branch
    %13 = sbr.rel (0) target = $region13
  $region12: #{enc_txt_forward.9} parent=0 // pred_region
    _
  $region13: #{enc_txt_forward.9} parent=0 // pred_fallthru
    _
  %v14 = vld [vmem:[%s0] sm:$0xff]
  %v15 = vld [vmem:[%s0 + $0x8] sm:$0xff]
  %v16 = vld [vmem:[%s0 + $0x10] sm:$0xff]
  %v17 = vld [vmem:[%s0 + $0x18] sm:$0xff]
  %v18 = vld [vmem:[%s0 + $0x20] sm:$0xff]
  %v19 = vld [vmem:[%s0 + $0x28] sm:$0xff]
  %v20 = vld [vmem:[%s0 + $0x30] sm:$0xff]
  %v21 = vld [vmem:[%s0 + $0x38] sm:$0xff]
  %v22 = vld [vmem:[%s0 + $0x40] sm:$0xff]
  %v23 = vld [vmem:[%s0 + $0x48] sm:$0xff]
  %v24 = vld [vmem:[%s0 + $0x50] sm:$0xff]
  %v25 = vld [vmem:[%s0 + $0x58] sm:$0xff]
  %v26 = vld [vmem:[%s0 + $0x60] sm:$0xff]
  %v27 = vld [vmem:[%s0 + $0x68] sm:$0xff]
  %v28 = vld [vmem:[%s0 + $0x70] sm:$0xff]
  %v29 = vld [vmem:[%s0 + $0x78] sm:$0xff]
  %v30 = vld [vmem:[%s1] sm:$0xff]
  %v31 = vld [vmem:[%s1 + $0x8] sm:$0xff]
  %v32 = vld [vmem:[%s1 + $0x10] sm:$0xff]
  %v33 = vld [vmem:[%s1 + $0x18] sm:$0xff]
  %v34 = vld [vmem:[%s1 + $0x20] sm:$0xff]
  %v35 = vld [vmem:[%s1 + $0x28] sm:$0xff]
  %v36 = vld [vmem:[%s1 + $0x30] sm:$0xff]
  %v37 = vld [vmem:[%s1 + $0x38] sm:$0xff]
  %v38 = vld [vmem:[%s1 + $0x40] sm:$0xff]
  %v39 = vld [vmem:[%s1 + $0x48] sm:$0xff]
  %v40 = vld [vmem:[%s1 + $0x50] sm:$0xff]
  %v41 = vld [vmem:[%s1 + $0x58] sm:$0xff]
  %v42 = vld [vmem:[%s1 + $0x60] sm:$0xff]
  %v43 = vld [vmem:[%s1 + $0x68] sm:$0xff]
  %v44 = vld [vmem:[%s1 + $0x70] sm:$0xff]
  %v45 = vld [vmem:[%s1 + $0x78] sm:$0xff]
  %v46 = vld [vmem:[%s1 + $0x80] sm:$0xff]
  %v47 = vld [vmem:[%s1 + $0x88] sm:$0xff]
  %v48 = vld [vmem:[%s1 + $0x90] sm:$0xff]
  %v49 = vld [vmem:[%s1 + $0x98] sm:$0xff]
  %v50 = vld [vmem:[%s1 + $0xa0] sm:$0xff]
  %v51 = vld [vmem:[%s1 + $0xa8] sm:$0xff]
  %v52 = vld [vmem:[%s1 + $0xb0] sm:$0xff]
  %v53 = vld [vmem:[%s1 + $0xb8] sm:$0xff]
  %v54 = vld [vmem:[%s1 + $0xc0] sm:$0xff]
  %v55 = vld [vmem:[%s1 + $0xc8] sm:$0xff]
  %v56 = vld [vmem:[%s1 + $0xd0] sm:$0xff]
  %v57 = vld [vmem:[%s1 + $0xd8] sm:$0xff]
  %v58 = vld [vmem:[%s1 + $0xe0] sm:$0xff]
  %v59 = vld [vmem:[%s1 + $0xe8] sm:$0xff]
  %v60 = vld [vmem:[%s1 + $0xf0] sm:$0xff]
  %v61 = vld [vmem:[%s1 + $0xf8] sm:$0xff]
  %v62 = vld [vmem:[%s1 + $0x100] sm:$0xff]
  %v63 = vld [vmem:[%s1 + $0x108] sm:$0xff]
  %v64 = vld [vmem:[%s1 + $0x110] sm:$0xff]
  %v65 = vld [vmem:[%s1 + $0x118] sm:$0xff]
  %v66 = vld [vmem:[%s1 + $0x120] sm:$0xff]
  %v67 = vld [vmem:[%s1 + $0x128] sm:$0xff]
  %v68 = vld [vmem:[%s1 + $0x130] sm:$0xff]
  %v69 = vld [vmem:[%s1 + $0x138] sm:$0xff]
  %v70 = vld [vmem:[%s1 + $0x140] sm:$0xff]
  %v71 = vld [vmem:[%s1 + $0x148] sm:$0xff]
  %v72 = vld [vmem:[%s1 + $0x150] sm:$0xff]
  %v73 = vld [vmem:[%s1 + $0x158] sm:$0xff]
  %v74 = vld [vmem:[%s1 + $0x160] sm:$0xff]
  %v75 = vld [vmem:[%s1 + $0x168] sm:$0xff]
  %v76 = vld [vmem:[%s1 + $0x170] sm:$0xff]
  %v77 = vld [vmem:[%s1 + $0x178] sm:$0xff]
  %v78 = vld [vmem:[%s1 + $0x180] sm:$0xff]
  %v79 = vld [vmem:[%s1 + $0x188] sm:$0xff]
  %v80 = vld [vmem:[%s1 + $0x190] sm:$0xff]
  %v81 = vld [vmem:[%s1 + $0x198] sm:$0xff]
  %v82 = vld [vmem:[%s1 + $0x1a0] sm:$0xff]
  %v83 = vld [vmem:[%s1 + $0x1a8] sm:$0xff]
  %v84 = vld [vmem:[%s1 + $0x1b0] sm:$0xff]
  %v85 = vld [vmem:[%s1 + $0x1b8] sm:$0xff]
  %v86 = vld [vmem:[%s1 + $0x1c0] sm:$0xff]
  %v87 = vld [vmem:[%s1 + $0x1c8] sm:$0xff]
  %v88 = vld [vmem:[%s1 + $0x1d0] sm:$0xff]
  %v89 = vld [vmem:[%s1 + $0x1d8] sm:$0xff]
  %v90 = vld [vmem:[%s1 + $0x1e0] sm:$0xff]
  %v91 = vld [vmem:[%s1 + $0x1e8] sm:$0xff]
  %v92 = vld [vmem:[%s1 + $0x1f0] sm:$0xff]
  %v93 = vld [vmem:[%s1 + $0x1f8] sm:$0xff]
  %v94 = vld [vmem:[%s2] sm:$0x3]
  %v96 = vlaneseq
  %v97 = vshrl.u32 %v96, 7
  %v98 = vsub.s32 0, %v97
  %v99 = vrot.slane %v94, %v98
  %v100 = vlaneseq
  %v101 = vshrl.u32 %v100, 7
  %v102 = vsub.s32 1, %v101
  %v103 = vrot.slane %v94, %v102
  %v122 = vunpack.c.l.b16 %v14
  %v123 = vunpack.c.h.b16 %v14
  %v124 = vunpack.c.l.b16 %v15
  %v125 = vunpack.c.h.b16 %v15
  %v126 = vunpack.c.l.b16 %v16
  %v127 = vunpack.c.h.b16 %v16
  %v128 = vunpack.c.l.b16 %v17
  %v129 = vunpack.c.h.b16 %v17
  %v130 = vunpack.c.l.b16 %v18
  %v131 = vunpack.c.h.b16 %v18
  %v132 = vunpack.c.l.b16 %v19
  %v133 = vunpack.c.h.b16 %v19
  %v134 = vunpack.c.l.b16 %v20
  %v135 = vunpack.c.h.b16 %v20
  %v136 = vunpack.c.l.b16 %v21
  %v137 = vunpack.c.h.b16 %v21
  %v138 = vunpack.c.l.b16 %v22
  %v139 = vunpack.c.h.b16 %v22
  %v140 = vunpack.c.l.b16 %v23
  %v141 = vunpack.c.h.b16 %v23
  %v142 = vunpack.c.l.b16 %v24
  %v143 = vunpack.c.h.b16 %v24
  %v144 = vunpack.c.l.b16 %v25
  %v145 = vunpack.c.h.b16 %v25
  %v146 = vunpack.c.l.b16 %v26
  %v147 = vunpack.c.h.b16 %v26
  %v148 = vunpack.c.l.b16 %v27
  %v149 = vunpack.c.h.b16 %v27
  %v150 = vunpack.c.l.b16 %v28
  %v151 = vunpack.c.h.b16 %v28
  %v152 = vunpack.c.l.b16 %v29
  %v153 = vunpack.c.h.b16 %v29
  %v154 = vpack.c.b16 %v126, %v122
  %v155 = vpack.c.b16 %v127, %v123
  %v156 = vpack.c.b16 %v128, %v124
  %v157 = vpack.c.b16 %v129, %v125
  %v158 = vpack.c.b16 %v134, %v130
  %v159 = vpack.c.b16 %v135, %v131
  %v160 = vpack.c.b16 %v136, %v132
  %v161 = vpack.c.b16 %v137, %v133
  %v162 = vpack.c.b16 %v142, %v138
  %v163 = vpack.c.b16 %v143, %v139
  %v164 = vpack.c.b16 %v144, %v140
  %v165 = vpack.c.b16 %v145, %v141
  %v166 = vpack.c.b16 %v150, %v146
  %v167 = vpack.c.b16 %v151, %v147
  %v168 = vpack.c.b16 %v152, %v148
  %v169 = vpack.c.b16 %v153, %v149
  %v250 = vunpack.c.l.b16 %v30
  %v251 = vunpack.c.h.b16 %v30
  %v252 = vunpack.c.l.b16 %v31
  %v253 = vunpack.c.h.b16 %v31
  %v254 = vunpack.c.l.b16 %v32
  %v255 = vunpack.c.h.b16 %v32
  %v256 = vunpack.c.l.b16 %v33
  %v257 = vunpack.c.h.b16 %v33
  %v258 = vunpack.c.l.b16 %v34
  %v259 = vunpack.c.h.b16 %v34
  %v260 = vunpack.c.l.b16 %v35
  %v261 = vunpack.c.h.b16 %v35
  %v262 = vunpack.c.l.b16 %v36
  %v263 = vunpack.c.h.b16 %v36
  %v264 = vunpack.c.l.b16 %v37
  %v265 = vunpack.c.h.b16 %v37
  %v266 = vunpack.c.l.b16 %v38
  %v267 = vunpack.c.h.b16 %v38
  %v268 = vunpack.c.l.b16 %v39
  %v269 = vunpack.c.h.b16 %v39
  %v270 = vunpack.c.l.b16 %v40
  %v271 = vunpack.c.h.b16 %v40
  %v272 = vunpack.c.l.b16 %v41
  %v273 = vunpack.c.h.b16 %v41
  %v274 = vunpack.c.l.b16 %v42
  %v275 = vunpack.c.h.b16 %v42
  %v276 = vunpack.c.l.b16 %v43
  %v277 = vunpack.c.h.b16 %v43
  %v278 = vunpack.c.l.b16 %v44
  %v279 = vunpack.c.h.b16 %v44
  %v280 = vunpack.c.l.b16 %v45
  %v281 = vunpack.c.h.b16 %v45
  %v282 = vunpack.c.l.b16 %v46
  %v283 = vunpack.c.h.b16 %v46
  %v284 = vunpack.c.l.b16 %v47
  %v285 = vunpack.c.h.b16 %v47
  %v286 = vunpack.c.l.b16 %v48
  %v287 = vunpack.c.h.b16 %v48
  %v288 = vunpack.c.l.b16 %v49
  %v289 = vunpack.c.h.b16 %v49
  %v290 = vunpack.c.l.b16 %v50
  %v291 = vunpack.c.h.b16 %v50
  %v292 = vunpack.c.l.b16 %v51
  %v293 = vunpack.c.h.b16 %v51
  %v294 = vunpack.c.l.b16 %v52
  %v295 = vunpack.c.h.b16 %v52
  %v296 = vunpack.c.l.b16 %v53
  %v297 = vunpack.c.h.b16 %v53
  %v298 = vunpack.c.l.b16 %v54
  %v299 = vunpack.c.h.b16 %v54
  %v300 = vunpack.c.l.b16 %v55
  %v301 = vunpack.c.h.b16 %v55
  %v302 = vunpack.c.l.b16 %v56
  %v303 = vunpack.c.h.b16 %v56
  %v304 = vunpack.c.l.b16 %v57
  %v305 = vunpack.c.h.b16 %v57
  %v306 = vunpack.c.l.b16 %v58
  %v307 = vunpack.c.h.b16 %v58
  %v308 = vunpack.c.l.b16 %v59
  %v309 = vunpack.c.h.b16 %v59
  %v310 = vunpack.c.l.b16 %v60
  %v311 = vunpack.c.h.b16 %v60
  %v312 = vunpack.c.l.b16 %v61
  %v313 = vunpack.c.h.b16 %v61
  %v314 = vunpack.c.l.b16 %v62
  %v315 = vunpack.c.h.b16 %v62
  %v316 = vunpack.c.l.b16 %v63
  %v317 = vunpack.c.h.b16 %v63
  %v318 = vunpack.c.l.b16 %v64
  %v319 = vunpack.c.h.b16 %v64
  %v320 = vunpack.c.l.b16 %v65
  %v321 = vunpack.c.h.b16 %v65
  %v322 = vunpack.c.l.b16 %v66
  %v323 = vunpack.c.h.b16 %v66
  %v324 = vunpack.c.l.b16 %v67
  %v325 = vunpack.c.h.b16 %v67
  %v326 = vunpack.c.l.b16 %v68
  %v327 = vunpack.c.h.b16 %v68
  %v328 = vunpack.c.l.b16 %v69
  %v329 = vunpack.c.h.b16 %v69
  %v330 = vunpack.c.l.b16 %v70
  %v331 = vunpack.c.h.b16 %v70
  %v332 = vunpack.c.l.b16 %v71
  %v333 = vunpack.c.h.b16 %v71
  %v334 = vunpack.c.l.b16 %v72
  %v335 = vunpack.c.h.b16 %v72
  %v336 = vunpack.c.l.b16 %v73
  %v337 = vunpack.c.h.b16 %v73
  %v338 = vunpack.c.l.b16 %v74
  %v339 = vunpack.c.h.b16 %v74
  %v340 = vunpack.c.l.b16 %v75
  %v341 = vunpack.c.h.b16 %v75
  %v342 = vunpack.c.l.b16 %v76
  %v343 = vunpack.c.h.b16 %v76
  %v344 = vunpack.c.l.b16 %v77
  %v345 = vunpack.c.h.b16 %v77
  %v346 = vunpack.c.l.b16 %v78
  %v347 = vunpack.c.h.b16 %v78
  %v348 = vunpack.c.l.b16 %v79
  %v349 = vunpack.c.h.b16 %v79
  %v350 = vunpack.c.l.b16 %v80
  %v351 = vunpack.c.h.b16 %v80
  %v352 = vunpack.c.l.b16 %v81
  %v353 = vunpack.c.h.b16 %v81
  %v354 = vunpack.c.l.b16 %v82
  %v355 = vunpack.c.h.b16 %v82
  %v356 = vunpack.c.l.b16 %v83
  %v357 = vunpack.c.h.b16 %v83
  %v358 = vunpack.c.l.b16 %v84
  %v359 = vunpack.c.h.b16 %v84
  %v360 = vunpack.c.l.b16 %v85
  %v361 = vunpack.c.h.b16 %v85
  %v362 = vunpack.c.l.b16 %v86
  %v363 = vunpack.c.h.b16 %v86
  %v364 = vunpack.c.l.b16 %v87
  %v365 = vunpack.c.h.b16 %v87
  %v366 = vunpack.c.l.b16 %v88
  %v367 = vunpack.c.h.b16 %v88
  %v368 = vunpack.c.l.b16 %v89
  %v369 = vunpack.c.h.b16 %v89
  %v370 = vunpack.c.l.b16 %v90
  %v371 = vunpack.c.h.b16 %v90
  %v372 = vunpack.c.l.b16 %v91
  %v373 = vunpack.c.h.b16 %v91
  %v374 = vunpack.c.l.b16 %v92
  %v375 = vunpack.c.h.b16 %v92
  %v376 = vunpack.c.l.b16 %v93
  %v377 = vunpack.c.h.b16 %v93
  %v378 = vpack.c.b16 %v252, %v250
  %v379 = vpack.c.b16 %v253, %v251
  %v380 = vpack.c.b16 %v256, %v254
  %v381 = vpack.c.b16 %v257, %v255
  %v382 = vpack.c.b16 %v260, %v258
  %v383 = vpack.c.b16 %v261, %v259
  %v384 = vpack.c.b16 %v264, %v262
  %v385 = vpack.c.b16 %v265, %v263
  %v386 = vpack.c.b16 %v268, %v266
  %v387 = vpack.c.b16 %v269, %v267
  %v388 = vpack.c.b16 %v272, %v270
  %v389 = vpack.c.b16 %v273, %v271
  %v390 = vpack.c.b16 %v276, %v274
  %v391 = vpack.c.b16 %v277, %v275
  %v392 = vpack.c.b16 %v280, %v278
  %v393 = vpack.c.b16 %v281, %v279
  %v394 = vpack.c.b16 %v284, %v282
  %v395 = vpack.c.b16 %v285, %v283
  %v396 = vpack.c.b16 %v288, %v286
  %v397 = vpack.c.b16 %v289, %v287
  %v398 = vpack.c.b16 %v292, %v290
  %v399 = vpack.c.b16 %v293, %v291
  %v400 = vpack.c.b16 %v296, %v294
  %v401 = vpack.c.b16 %v297, %v295
  %v402 = vpack.c.b16 %v300, %v298
  %v403 = vpack.c.b16 %v301, %v299
  %v404 = vpack.c.b16 %v304, %v302
  %v405 = vpack.c.b16 %v305, %v303
  %v406 = vpack.c.b16 %v308, %v306
  %v407 = vpack.c.b16 %v309, %v307
  %v408 = vpack.c.b16 %v312, %v310
  %v409 = vpack.c.b16 %v313, %v311
  %v410 = vpack.c.b16 %v316, %v314
  %v411 = vpack.c.b16 %v317, %v315
  %v412 = vpack.c.b16 %v320, %v318
  %v413 = vpack.c.b16 %v321, %v319
  %v414 = vpack.c.b16 %v324, %v322
  %v415 = vpack.c.b16 %v325, %v323
  %v416 = vpack.c.b16 %v328, %v326
  %v417 = vpack.c.b16 %v329, %v327
  %v418 = vpack.c.b16 %v332, %v330
  %v419 = vpack.c.b16 %v333, %v331
  %v420 = vpack.c.b16 %v336, %v334
  %v421 = vpack.c.b16 %v337, %v335
  %v422 = vpack.c.b16 %v340, %v338
  %v423 = vpack.c.b16 %v341, %v339
  %v424 = vpack.c.b16 %v344, %v342
  %v425 = vpack.c.b16 %v345, %v343
  %v426 = vpack.c.b16 %v348, %v346
  %v427 = vpack.c.b16 %v349, %v347
  %v428 = vpack.c.b16 %v352, %v350
  %v429 = vpack.c.b16 %v353, %v351
  %v430 = vpack.c.b16 %v356, %v354
  %v431 = vpack.c.b16 %v357, %v355
  %v432 = vpack.c.b16 %v360, %v358
  %v433 = vpack.c.b16 %v361, %v359
  %v434 = vpack.c.b16 %v364, %v362
  %v435 = vpack.c.b16 %v365, %v363
  %v436 = vpack.c.b16 %v368, %v366
  %v437 = vpack.c.b16 %v369, %v367
  %v438 = vpack.c.b16 %v372, %v370
  %v439 = vpack.c.b16 %v373, %v371
  %v440 = vpack.c.b16 %v376, %v374
  %v441 = vpack.c.b16 %v377, %v375
  %506 = vmatprep.subr.bf16.mxu0 %v379
  %507 = vmatpush1.bf16.msra.mxu0 %v378
  %508 = vmatprep.subr.bf16.mxu0 %v381
  %509 = vmatpush1.bf16.msra.mxu0 %v380
  %510 = vmatprep.subr.bf16.mxu0 %v383
  %511 = vmatpush1.bf16.msra.mxu0 %v382
  %512 = vmatprep.subr.bf16.mxu0 %v385
  %513 = vmatpush1.bf16.msra.mxu0 %v384
  %514 = vmatprep.subr.bf16.mxu0 %v387
  %515 = vmatpush1.bf16.msra.mxu0 %v386
  %516 = vmatprep.subr.bf16.mxu0 %v389
  %517 = vmatpush1.bf16.msra.mxu0 %v388
  %518 = vmatprep.subr.bf16.mxu0 %v391
  %519 = vmatpush1.bf16.msra.mxu0 %v390
  %520 = vmatprep.subr.bf16.mxu0 %v393
  %521 = vmatpush1.bf16.msra.mxu0 %v392
  %522 = vmatprep.subr.bf16.mxu0 %v395
  %523 = vmatpush1.bf16.msra.mxu0 %v394
  %524 = vmatprep.subr.bf16.mxu0 %v397
  %525 = vmatpush1.bf16.msra.mxu0 %v396
  %526 = vmatprep.subr.bf16.mxu0 %v399
  %527 = vmatpush1.bf16.msra.mxu0 %v398
  %528 = vmatprep.subr.bf16.mxu0 %v401
  %529 = vmatpush1.bf16.msra.mxu0 %v400
  %530 = vmatprep.subr.bf16.mxu0 %v403
  %531 = vmatpush1.bf16.msra.mxu0 %v402
  %532 = vmatprep.subr.bf16.mxu0 %v405
  %533 = vmatpush1.bf16.msra.mxu0 %v404
  %534 = vmatprep.subr.bf16.mxu0 %v407
  %535 = vmatpush1.bf16.msra.mxu0 %v406
  %536 = vmatprep.subr.bf16.mxu0 %v409
  %537 = vmatpush1.bf16.msra.mxu0 %v408
  %538 = vmatprep.mubr.bf16.mxu0 %v155
  %539 = vmatmul.mubr.bf16.gmra.mrb[0].mxu0 %v154
  %v540 = vpop.f32.mrb[0].mxu0
  %v541 = vadd.f32 %v99, %v540
  %v542 = vpop.f32.mrb[0].mxu0
  %v543 = vadd.f32 %v103, %v542
  %v544 = vpop.f32.mrb[0].mxu0
  %v545 = vadd.f32 %v99, %v544
  %v546 = vpop.f32.mrb[0].mxu0
  %v547 = vadd.f32 %v103, %v546
  %548 = vmatprep.mubr.bf16.mxu0 %v159
  %549 = vmatmul.mubr.bf16.gmra.mrb[0].mxu0 %v158
  %v550 = vpop.f32.mrb[0].mxu0
  %v551 = vadd.f32 %v99, %v550
  %v552 = vpop.f32.mrb[0].mxu0
  %v553 = vadd.f32 %v103, %v552
  %v554 = vpop.f32.mrb[0].mxu0
  %v555 = vadd.f32 %v99, %v554
  %v556 = vpop.f32.mrb[0].mxu0
  %v557 = vadd.f32 %v103, %v556
  %558 = vmatprep.mubr.bf16.mxu0 %v163
  %559 = vmatmul.mubr.bf16.gmra.mrb[0].mxu0 %v162
  %v560 = vpop.f32.mrb[0].mxu0
  %v561 = vadd.f32 %v99, %v560
  %v562 = vpop.f32.mrb[0].mxu0
  %v563 = vadd.f32 %v103, %v562
  %v564 = vpop.f32.mrb[0].mxu0
  %v565 = vadd.f32 %v99, %v564
  %v566 = vpop.f32.mrb[0].mxu0
  %v567 = vadd.f32 %v103, %v566
  %568 = vmatprep.mubr.bf16.mxu0 %v167
  %569 = vmatmul.mubr.bf16.gmra.mrb[0].mxu0 %v166
  %v570 = vpop.f32.mrb[0].mxu0
  %v571 = vadd.f32 %v99, %v570
  %v572 = vpop.f32.mrb[0].mxu0
  %v573 = vadd.f32 %v103, %v572
  %v574 = vpop.f32.mrb[0].mxu0
  %v575 = vadd.f32 %v99, %v574
  %v576 = vpop.f32.mrb[0].mxu0
  %v577 = vadd.f32 %v103, %v576
  %578 = vdwg.mxu0
  %579 = vmatprep.subr.bf16.mxu0 %v411
  %580 = vmatpush1.bf16.msra.mxu0 %v410
  %581 = vmatprep.subr.bf16.mxu0 %v413
  %582 = vmatpush1.bf16.msra.mxu0 %v412
  %583 = vmatprep.subr.bf16.mxu0 %v415
  %584 = vmatpush1.bf16.msra.mxu0 %v414
  %585 = vmatprep.subr.bf16.mxu0 %v417
  %586 = vmatpush1.bf16.msra.mxu0 %v416
  %587 = vmatprep.subr.bf16.mxu0 %v419
  %588 = vmatpush1.bf16.msra.mxu0 %v418
  %589 = vmatprep.subr.bf16.mxu0 %v421
  %590 = vmatpush1.bf16.msra.mxu0 %v420
  %591 = vmatprep.subr.bf16.mxu0 %v423
  %592 = vmatpush1.bf16.msra.mxu0 %v422
  %593 = vmatprep.subr.bf16.mxu0 %v425
  %594 = vmatpush1.bf16.msra.mxu0 %v424
  %595 = vmatprep.subr.bf16.mxu0 %v427
  %596 = vmatpush1.bf16.msra.mxu0 %v426
  %597 = vmatprep.subr.bf16.mxu0 %v429
  %598 = vmatpush1.bf16.msra.mxu0 %v428
  %599 = vmatprep.subr.bf16.mxu0 %v431
  %600 = vmatpush1.bf16.msra.mxu0 %v430
  %601 = vmatprep.subr.bf16.mxu0 %v433
  %602 = vmatpush1.bf16.msra.mxu0 %v432
  %603 = vmatprep.subr.bf16.mxu0 %v435
  %604 = vmatpush1.bf16.msra.mxu0 %v434
  %605 = vmatprep.subr.bf16.mxu0 %v437
  %606 = vmatpush1.bf16.msra.mxu0 %v436
  %607 = vmatprep.subr.bf16.mxu0 %v439
  %608 = vmatpush1.bf16.msra.mxu0 %v438
  %609 = vmatprep.subr.bf16.mxu0 %v441
  %610 = vmatpush1.bf16.msra.mxu0 %v440
  %611 = vmatprep.mubr.bf16.mxu0 %v157
  %612 = vmatmul.mubr.bf16.gmra.mrb[0].mxu0 %v156
  %v613 = vpop.f32.mrb[0].mxu0
  %v614 = vadd.f32 %v541, %v613
  %v615 = vpop.f32.mrb[0].mxu0
  %v616 = vadd.f32 %v543, %v615
  %v617 = vpop.f32.mrb[0].mxu0
  %v618 = vadd.f32 %v545, %v617
  %v619 = vpop.f32.mrb[0].mxu0
  %v620 = vadd.f32 %v547, %v619
  %621 = vmatprep.mubr.bf16.mxu0 %v161
  %622 = vmatmul.mubr.bf16.gmra.mrb[0].mxu0 %v160
  %v623 = vpop.f32.mrb[0].mxu0
  %v624 = vadd.f32 %v551, %v623
  %v625 = vpop.f32.mrb[0].mxu0
  %v626 = vadd.f32 %v553, %v625
  %v627 = vpop.f32.mrb[0].mxu0
  %v628 = vadd.f32 %v555, %v627
  %v629 = vpop.f32.mrb[0].mxu0
  %v630 = vadd.f32 %v557, %v629
  %631 = vmatprep.mubr.bf16.mxu0 %v165
  %632 = vmatmul.mubr.bf16.gmra.mrb[0].mxu0 %v164
  %v633 = vpop.f32.mrb[0].mxu0
  %v634 = vadd.f32 %v561, %v633
  %v635 = vpop.f32.mrb[0].mxu0
  %v636 = vadd.f32 %v563, %v635
  %v637 = vpop.f32.mrb[0].mxu0
  %v638 = vadd.f32 %v565, %v637
  %v639 = vpop.f32.mrb[0].mxu0
  %v640 = vadd.f32 %v567, %v639
  %641 = vmatprep.mubr.bf16.mxu0 %v169
  %642 = vmatmul.mubr.bf16.gmra.mrb[0].mxu0 %v168
  %v643 = vpop.f32.mrb[0].mxu0
  %v644 = vadd.f32 %v571, %v643
  %v645 = vpop.f32.mrb[0].mxu0
  %v646 = vadd.f32 %v573, %v645
  %v647 = vpop.f32.mrb[0].mxu0
  %v648 = vadd.f32 %v575, %v647
  %v649 = vpop.f32.mrb[0].mxu0
  %v650 = vadd.f32 %v577, %v649
  %651 = vdwg.mxu0
  %v652 = vmax.f32 %v614, 0.0
  %v653 = vmax.f32 %v616, 0.0
  %v654 = vmax.f32 %v618, 0.0
  %v655 = vmax.f32 %v620, 0.0
  %v656 = vmax.f32 %v624, 0.0
  %v657 = vmax.f32 %v626, 0.0
  %v658 = vmax.f32 %v628, 0.0
  %v659 = vmax.f32 %v630, 0.0
  %v660 = vmax.f32 %v634, 0.0
  %v661 = vmax.f32 %v636, 0.0
  %v662 = vmax.f32 %v638, 0.0
  %v663 = vmax.f32 %v640, 0.0
  %v664 = vmax.f32 %v644, 0.0
  %v665 = vmax.f32 %v646, 0.0
  %v666 = vmax.f32 %v648, 0.0
  %v667 = vmax.f32 %v650, 0.0
  %v668 = vpack.c.bf16 %v654, %v652
  %v669 = vpack.c.bf16 %v655, %v653
  %v670 = vpack.c.bf16 %v658, %v656
  %v671 = vpack.c.bf16 %v659, %v657
  %v672 = vpack.c.bf16 %v662, %v660
  %v673 = vpack.c.bf16 %v663, %v661
  %v674 = vpack.c.bf16 %v666, %v664
  %v675 = vpack.c.bf16 %v667, %v665
  %v684 = vunpack.c.l.b16 %v668
  %v685 = vunpack.c.l.b16 %v669
  %v686 = vunpack.c.h.b16 %v668
  %v687 = vunpack.c.h.b16 %v669
  %v688 = vunpack.c.l.b16 %v670
  %v689 = vunpack.c.l.b16 %v671
  %v690 = vunpack.c.h.b16 %v670
  %v691 = vunpack.c.h.b16 %v671
  %v692 = vunpack.c.l.b16 %v672
  %v693 = vunpack.c.l.b16 %v673
  %v694 = vunpack.c.h.b16 %v672
  %v695 = vunpack.c.h.b16 %v673
  %v696 = vunpack.c.l.b16 %v674
  %v697 = vunpack.c.l.b16 %v675
  %v698 = vunpack.c.h.b16 %v674
  %v699 = vunpack.c.h.b16 %v675
  %v700 = vpack.c.b16 %v685, %v684
  %v701 = vpack.c.b16 %v687, %v686
  %v702 = vpack.c.b16 %v689, %v688
  %v703 = vpack.c.b16 %v691, %v690
  %v704 = vpack.c.b16 %v693, %v692
  %v705 = vpack.c.b16 %v695, %v694
  %v706 = vpack.c.b16 %v697, %v696
  %v707 = vpack.c.b16 %v699, %v698
  %716 = vst [vmem:[%s3] sm:$0xff] %v700
  %717 = vst [vmem:[%s3 + $0x8] sm:$0xff] %v701
  %718 = vst [vmem:[%s3 + $0x10] sm:$0xff] %v702
  %719 = vst [vmem:[%s3 + $0x18] sm:$0xff] %v703
  %720 = vst [vmem:[%s3 + $0x20] sm:$0xff] %v704
  %721 = vst [vmem:[%s3 + $0x28] sm:$0xff] %v705
  %722 = vst [vmem:[%s3 + $0x30] sm:$0xff] %v706
  %723 = vst [vmem:[%s3 + $0x38] sm:$0xff] %v707
  // Predicated region
  $region14: #{enc_txt_forward.9} parent=0 // pred_check
    _
  $region15: #{enc_txt_forward.9} parent=0 // pred_check_branch
    %725 = sbr.rel (0) target = $region17
  $region16: #{enc_txt_forward.9} parent=0 // pred_region
    _
  $region17: #{enc_txt_forward.9} parent=0 // pred_fallthru
    _
  // Predicated region
  $region18: #{enc_txt_forward.9} parent=0 // pred_check
    _
  $region19: #{enc_txt_forward.9} parent=0 // pred_check_branch
    %727 = sbr.rel (0) target = $region21
  $region20: #{enc_txt_forward.9} parent=0 // pred_region
    _
  $region21: #{enc_txt_forward.9} parent=0 // pred_fallthru
    _

// kernel: enc_txt_forward.10
$region0: #{enc_txt_forward.10}
  #allocation0 [shape = 'u32[]', space=smem, size = 0x4, offset = 0x4, fixed_abs, tag = 'smem constant byte address 0x4 - core index']
  #allocation1 [shape = 'u32[144,128]{1,0:T(1,128)}', space=vmem, size = 0x12000, scoped, tag = 'internal scratch']
  %s0 = inlined_call_operand.vmem [shape: bf16[32,1024], index: 0, kind: input, shape index: {}]
  %s1 = inlined_call_operand.vmem [shape: bf16[1024,512], index: 1, kind: input, shape index: {}]
  %s2 = inlined_call_operand.vmem [shape: f32[1,512], index: 2, kind: input, shape index: {}]
  %s3 = inlined_call_operand.vmem [shape: bf16[32,512], index: 3, kind: output, shape index: {}]
  %s4 = sld [smem:[#allocation0]]
  $region117: #{enc_txt_forward.10} parent=0
    _
  %s6 = ssub.s32 1, %s4
  %s7 = scalar_select 0, %s6, %s4
  $region1: #{enc_txt_forward.10} parent=0
    #allocation2 [shape = 'u8[1048576]{0}', space=vmem, size = 0x100000, scoped, tag = 'input window, operand 1']
    #allocation3 [shape = 'u8[32768]{0}', space=vmem, size = 0x8000, scoped, tag = 'output window, operand 0']
    loop: start=0, step=1, limit=4
    $region2: #{enc_txt_forward.10} parent=1 // loop_pre_header
      _
    $region3: #{enc_txt_forward.10} parent=1 // loop_header
      %s9 = sphi 0, %s13
      %p10 = scmp.ge.s32.totalorder %s9, 4
      %s16 = sphi 0, %s28
      %s17 = sphi 0, %s24
      %s18 = sphi 0, %s16
      %s19 = sphi 0, %s17
      %s20 = sphi 0, %s18
      %s21 = sphi 0, %s19
      %s31 = sphi 0, %s33
      %s34 = sphi 0, %s31
      %s35 = sphi 0, %s34
      %s51 = sphi 0, %s35
      %s57 = sphi 0, %s59
      %s60 = sphi 0, %s57
      %s61 = sphi 0, %s60
      %s77 = sphi 0, %s61
      %s83 = sphi 0, %s85
      %s86 = sphi 0, %s83
      %s87 = sphi 0, %s86
      %s103 = sphi 0, %s87
      %s111 = sphi 0, %s113
      %s114 = sphi 0, %s111
      %s115 = sphi 0, %s114
      %s131 = sphi 0, %s115
    $region4: #{enc_txt_forward.10} parent=1 // loop_header_branch
      %12 = sbr.rel (%p10) target = $region8
    $region5: #{enc_txt_forward.10} parent=1 // loop_body
      %s14 = ssub.s32 %s9, 1
      %s15 = ssub.s32 %s9, 2
      %s22 = sadd.s32 1, %s17
      %p23 = scmp.ge.s32.totalorder %s22, 2
      %s24 = scalar_select %p23, 0, %s22
      %s25 = sadd.s32 1, %s16
      %s26 = scalar_select %p23, %s25, %s16
      %p27 = scmp.ge.s32.totalorder %s26, 1
      %s28 = scalar_select %p27, 0, %s26
      %s29 = ssub.s32 %s16, %s28
      %p30 = scmp.eq.s32.totalorder %s29, 0
      %s32 = sadd.s32 %s31, 1
      %s33 = scalar_select %p30, %s31, %s32
      %p36 = pneg %p30
      %p37 = scmp.eq.s32.totalorder %s9, 1
      %p38 = por %p36, %p37
      %p39 = scmp.ne.s32.totalorder %s31, %s34
      %p40 = scmp.eq.s32.totalorder %s9, 0
      %p41 = por %p39, %p40
      %p42 = scmp.ne.s32.totalorder %s31, %s34
      %p43 = scmp.eq.s32.totalorder %s14, 1
      %p44 = por %p42, %p43
      %p45 = scmp.ne.s32.totalorder %s34, %s35
      %p46 = scmp.eq.s32.totalorder %s14, 0
      %p47 = por %p45, %p46
      %p48 = scmp.ne.s32.totalorder %s34, %s35
      %p49 = scmp.eq.s32.totalorder %s15, 1
      %p50 = por %p48, %p49
      %p52 = scmp.ne.s32.totalorder %s35, %s51
      %p53 = scmp.eq.s32.totalorder %s15, 0
      %p54 = por %p52, %p53
      %s55 = ssub.s32 %s17, %s24
      %p56 = scmp.eq.s32.totalorder %s55, 0
      %s58 = sadd.s32 %s57, 1
      %s59 = scalar_select %p56, %s57, %s58
      %p62 = pneg %p56
      %p63 = scmp.eq.s32.totalorder %s9, 1
      %p64 = por %p62, %p63
      %p65 = scmp.ne.s32.totalorder %s57, %s60
      %p66 = scmp.eq.s32.totalorder %s9, 0
      %p67 = por %p65, %p66
      %p68 = scmp.ne.s32.totalorder %s57, %s60
      %p69 = scmp.eq.s32.totalorder %s14, 1
      %p70 = por %p68, %p69
      %p71 = scmp.ne.s32.totalorder %s60, %s61
      %p72 = scmp.eq.s32.totalorder %s14, 0
      %p73 = por %p71, %p72
      %p74 = scmp.ne.s32.totalorder %s60, %s61
      %p75 = scmp.eq.s32.totalorder %s15, 1
      %p76 = por %p74, %p75
      %p78 = scmp.ne.s32.totalorder %s61, %s77
      %p79 = scmp.eq.s32.totalorder %s15, 0
      %p80 = por %p78, %p79
      %s81 = ssub.s32 %s17, %s24
      %p82 = scmp.eq.s32.totalorder %s81, 0
      %s84 = sadd.s32 %s83, 1
      %s85 = scalar_select %p82, %s83, %s84
      %p88 = pneg %p82
      %p89 = scmp.eq.s32.totalorder %s9, 1
      %p90 = por %p88, %p89
      %p91 = scmp.ne.s32.totalorder %s83, %s86
      %p92 = scmp.eq.s32.totalorder %s9, 0
      %p93 = por %p91, %p92
      %p94 = scmp.ne.s32.totalorder %s83, %s86
      %p95 = scmp.eq.s32.totalorder %s14, 1
      %p96 = por %p94, %p95
      %p97 = scmp.ne.s32.totalorder %s86, %s87
      %p98 = scmp.eq.s32.totalorder %s14, 0
      %p99 = por %p97, %p98
      %p100 = scmp.ne.s32.totalorder %s86, %s87
      %p101 = scmp.eq.s32.totalorder %s15, 1
      %p102 = por %p100, %p101
      %p104 = scmp.ne.s32.totalorder %s87, %s103
      %p105 = scmp.eq.s32.totalorder %s15, 0
      %p106 = por %p104, %p105
      %s107 = ssub.s32 %s16, %s28
      %s108 = ssub.s32 %s17, %s24
      %s109 = sor.u32 %s107, %s108
      %p110 = scmp.eq.s32.totalorder %s109, 0
      %s112 = sadd.s32 %s111, 1
      %s113 = scalar_select %p110, %s111, %s112
      %p116 = pneg %p110
      %p117 = scmp.eq.s32.totalorder %s9, 1
      %p118 = por %p116, %p117
      %p119 = scmp.ne.s32.totalorder %s111, %s114
      %p120 = scmp.eq.s32.totalorder %s9, 0
      %p121 = por %p119, %p120
      %p122 = scmp.ne.s32.totalorder %s111, %s114
      %p123 = scmp.eq.s32.totalorder %s14, 1
      %p124 = por %p122, %p123
      %p125 = scmp.ne.s32.totalorder %s114, %s115
      %p126 = scmp.eq.s32.totalorder %s14, 0
      %p127 = por %p125, %p126
      %p128 = scmp.ne.s32.totalorder %s114, %s115
      %p129 = scmp.eq.s32.totalorder %s15, 1
      %p130 = por %p128, %p129
      %p132 = scmp.ne.s32.totalorder %s115, %s131
      %p133 = scmp.eq.s32.totalorder %s15, 0
      %p134 = por %p132, %p133
      %p135 = scmp.le.s32.totalorder 1, %s9
      %p136 = scmp.lt.s32.totalorder %s9, 3
      %p137 = pnand %p135, %p136
      %p138 = pneg %p137
      // Predicated region
      $region9: #{enc_txt_forward.10} parent=5 // pred_check
        _
      $region10: #{enc_txt_forward.10} parent=5 // pred_check_branch
        %140 = sbr.rel (%p137) target = $region12
      $region11: #{enc_txt_forward.10} parent=5 // pred_region
        %s141 = ssub.s32 %s9, 1
        // Predicated region
        $region13: #{enc_txt_forward.10} parent=11 // pred_check
          %p142 = pneg %p47
        $region14: #{enc_txt_forward.10} parent=11 // pred_check_branch
          %144 = sbr.rel (%p142) target = $region16
        $region15: #{enc_txt_forward.10} parent=11 // pred_region
          %s145 = smul.u32 4, %s18
          %p146 = scmp.lt.s32.totalorder %s145, 3
          %s147 = scalar_select %p146, %s145, 3
          %s148 = smul.addr %s147, 8
          %s149 = smul.addr %s148, 4
          %s150 = scalar_lea.vmem %s0, %s149
          %s151 = smul.u32 4, %s18
        $region16: #{enc_txt_forward.10} parent=11 // pred_fallthru
          _
      $region12: #{enc_txt_forward.10} parent=5 // pred_fallthru
        _
      %p152 = scmp.lt.s32.totalorder %s9, 2
      // Predicated region
      $region17: #{enc_txt_forward.10} parent=5 // pred_check
        %p153 = pneg %p152
      $region18: #{enc_txt_forward.10} parent=5 // pred_check_branch
        %155 = sbr.rel (%p153) target = $region20
      $region19: #{enc_txt_forward.10} parent=5 // pred_region
        // Predicated region
        $region21: #{enc_txt_forward.10} parent=19 // pred_check
          %p156 = pneg %p67
        $region22: #{enc_txt_forward.10} parent=19 // pred_check_branch
          %158 = sbr.rel (%p156) target = $region24
        $region23: #{enc_txt_forward.10} parent=19 // pred_region
          %s159 = sand.u32 %s57, 1
          %s160 = sand.u32 %s57, 1
          %s161 = smul.addr %s160, 1024
          %s162 = scalar_lea.vmem [#allocation2], %s161
          %s163 = smul.u32 2, %s17
          %s164 = smul.addr %s163, 4
          %s165 = scalar_lea.vmem %s1, %s164
          // Predicated region
          $region25: #{enc_txt_forward.10} parent=23 // pred_check
            _
          $region26: #{enc_txt_forward.10} parent=23 // pred_check_branch
            %167 = sbr.rel (0) target = $region28
          $region27: #{enc_txt_forward.10} parent=23 // pred_region
            // Predicated region
            $region29: #{enc_txt_forward.10} parent=27 // pred_check
              _
            $region30: #{enc_txt_forward.10} parent=27 // pred_check_branch
              %169 = sbr.rel (0) target = $region32
            $region31: #{enc_txt_forward.10} parent=27 // pred_region
              // Predicated region
              $region44: #{enc_txt_forward.10} parent=31 // pred_check
                _
              $region45: #{enc_txt_forward.10} parent=31 // pred_check_branch
                %438 = sbr.rel (0) target = $region47
              $region46: #{enc_txt_forward.10} parent=31 // pred_region
                loop: start=0, step=1, limit=1
                $region48: #{enc_txt_forward.10} parent=46 // loop_pre_header
                  _
                $region49: #{enc_txt_forward.10} parent=46 // loop_header
                  %s440 = sphi 0, %s444
                  %p441 = scmp.ge.s32.totalorder %s440, 1
                  %s445 = sphi %s165, %s165
                  %s446 = sphi %s162, %s162
                $region50: #{enc_txt_forward.10} parent=46 // loop_header_branch
                  %443 = sbr.rel (%p441) target = $region54
                $region51: #{enc_txt_forward.10} parent=46 // loop_body
                  %v447 = vld [vmem:[%s445] sm:$0xff]
                  %448 = vst [vmem:[%s446] sm:$0xff] %v447
                  %v449 = vld [vmem:[%s445 + $0x10] sm:$0xff]
                  %450 = vst [vmem:[%s446 + $0x8] sm:$0xff] %v449
                  %v451 = vld [vmem:[%s445 + $0x20] sm:$0xff]
                  %452 = vst [vmem:[%s446 + $0x10] sm:$0xff] %v451
                  %v453 = vld [vmem:[%s445 + $0x30] sm:$0xff]
                  %454 = vst [vmem:[%s446 + $0x18] sm:$0xff] %v453
                  %v455 = vld [vmem:[%s445 + $0x40] sm:$0xff]
                  %456 = vst [vmem:[%s446 + $0x20] sm:$0xff] %v455
                  %v457 = vld [vmem:[%s445 + $0x50] sm:$0xff]
                  %458 = vst [vmem:[%s446 + $0x28] sm:$0xff] %v457
                  %v459 = vld [vmem:[%s445 + $0x60] sm:$0xff]
                  %460 = vst [vmem:[%s446 + $0x30] sm:$0xff] %v459
                  %v461 = vld [vmem:[%s445 + $0x70] sm:$0xff]
                  %462 = vst [vmem:[%s446 + $0x38] sm:$0xff] %v461
                  %v463 = vld [vmem:[%s445 + $0x80] sm:$0xff]
                  %464 = vst [vmem:[%s446 + $0x40] sm:$0xff] %v463
                  %v465 = vld [vmem:[%s445 + $0x90] sm:$0xff]
                  %466 = vst [vmem:[%s446 + $0x48] sm:$0xff] %v465
                  %v467 = vld [vmem:[%s445 + $0xa0] sm:$0xff]
                  %468 = vst [vmem:[%s446 + $0x50] sm:$0xff] %v467
                  %v469 = vld [vmem:[%s445 + $0xb0] sm:$0xff]
                  %470 = vst [vmem:[%s446 + $0x58] sm:$0xff] %v469
                  %v471 = vld [vmem:[%s445 + $0xc0] sm:$0xff]
                  %472 = vst [vmem:[%s446 + $0x60] sm:$0xff] %v471
                  %v473 = vld [vmem:[%s445 + $0xd0] sm:$0xff]
                  %474 = vst [vmem:[%s446 + $0x68] sm:$0xff] %v473
                  %v475 = vld [vmem:[%s445 + $0xe0] sm:$0xff]
                  %476 = vst [vmem:[%s446 + $0x70] sm:$0xff] %v475
                  %v477 = vld [vmem:[%s445 + $0xf0] sm:$0xff]
                  %478 = vst [vmem:[%s446 + $0x78] sm:$0xff] %v477
                  %v479 = vld [vmem:[%s445 + $0x100] sm:$0xff]
                  %480 = vst [vmem:[%s446 + $0x80] sm:$0xff] %v479
                  %v481 = vld [vmem:[%s445 + $0x110] sm:$0xff]
                  %482 = vst [vmem:[%s446 + $0x88] sm:$0xff] %v481
                  %v483 = vld [vmem:[%s445 + $0x120] sm:$0xff]
                  %484 = vst [vmem:[%s446 + $0x90] sm:$0xff] %v483
                  %v485 = vld [vmem:[%s445 + $0x130] sm:$0xff]
                  %486 = vst [vmem:[%s446 + $0x98] sm:$0xff] %v485
                  %v487 = vld [vmem:[%s445 + $0x140] sm:$0xff]
                  %488 = vst [vmem:[%s446 + $0xa0] sm:$0xff] %v487
                  %v489 = vld [vmem:[%s445 + $0x150] sm:$0xff]
                  %490 = vst [vmem:[%s446 + $0xa8] sm:$0xff] %v489
                  %v491 = vld [vmem:[%s445 + $0x160] sm:$0xff]
                  %492 = vst [vmem:[%s446 + $0xb0] sm:$0xff] %v491
                  %v493 = vld [vmem:[%s445 + $0x170] sm:$0xff]
                  %494 = vst [vmem:[%s446 + $0xb8] sm:$0xff] %v493
                  %v495 = vld [vmem:[%s445 + $0x180] sm:$0xff]
                  %496 = vst [vmem:[%s446 + $0xc0] sm:$0xff] %v495
                  %v497 = vld [vmem:[%s445 + $0x190] sm:$0xff]
                  %498 = vst [vmem:[%s446 + $0xc8] sm:$0xff] %v497
                  %v499 = vld [vmem:[%s445 + $0x1a0] sm:$0xff]
                  %500 = vst [vmem:[%s446 + $0xd0] sm:$0xff] %v499
                  %v501 = vld [vmem:[%s445 + $0x1b0] sm:$0xff]
                  %502 = vst [vmem:[%s446 + $0xd8] sm:$0xff] %v501
                  %v503 = vld [vmem:[%s445 + $0x1c0] sm:$0xff]
                  %504 = vst [vmem:[%s446 + $0xe0] sm:$0xff] %v503
                  %v505 = vld [vmem:[%s445 + $0x1d0] sm:$0xff]
                  %506 = vst [vmem:[%s446 + $0xe8] sm:$0xff] %v505
                  %v507 = vld [vmem:[%s445 + $0x1e0] sm:$0xff]
                  %508 = vst [vmem:[%s446 + $0xf0] sm:$0xff] %v507
                  %v509 = vld [vmem:[%s445 + $0x1f0] sm:$0xff]
                  %510 = vst [vmem:[%s446 + $0xf8] sm:$0xff] %v509
                  %v511 = vld [vmem:[%s445 + $0x200] sm:$0xff]
                  %512 = vst [vmem:[%s446 + $0x100] sm:$0xff] %v511
                  %v513 = vld [vmem:[%s445 + $0x210] sm:$0xff]
                  %514 = vst [vmem:[%s446 + $0x108] sm:$0xff] %v513
                  %v515 = vld [vmem:[%s445 + $0x220] sm:$0xff]
                  %516 = vst [vmem:[%s446 + $0x110] sm:$0xff] %v515
                  %v517 = vld [vmem:[%s445 + $0x230] sm:$0xff]
                  %518 = vst [vmem:[%s446 + $0x118] sm:$0xff] %v517
                  %v519 = vld [vmem:[%s445 + $0x240] sm:$0xff]
                  %520 = vst [vmem:[%s446 + $0x120] sm:$0xff] %v519
                  %v521 = vld [vmem:[%s445 + $0x250] sm:$0xff]
                  %522 = vst [vmem:[%s446 + $0x128] sm:$0xff] %v521
                  %v523 = vld [vmem:[%s445 + $0x260] sm:$0xff]
                  %524 = vst [vmem:[%s446 + $0x130] sm:$0xff] %v523
                  %v525 = vld [vmem:[%s445 + $0x270] sm:$0xff]
                  %526 = vst [vmem:[%s446 + $0x138] sm:$0xff] %v525
                  %v527 = vld [vmem:[%s445 + $0x280] sm:$0xff]
                  %528 = vst [vmem:[%s446 + $0x140] sm:$0xff] %v527
                  %v529 = vld [vmem:[%s445 + $0x290] sm:$0xff]
                  %530 = vst [vmem:[%s446 + $0x148] sm:$0xff] %v529
                  %v531 = vld [vmem:[%s445 + $0x2a0] sm:$0xff]
                  %532 = vst [vmem:[%s446 + $0x150] sm:$0xff] %v531
                  %v533 = vld [vmem:[%s445 + $0x2b0] sm:$0xff]
                  %534 = vst [vmem:[%s446 + $0x158] sm:$0xff] %v533
                  %v535 = vld [vmem:[%s445 + $0x2c0] sm:$0xff]
                  %536 = vst [vmem:[%s446 + $0x160] sm:$0xff] %v535
                  %v537 = vld [vmem:[%s445 + $0x2d0] sm:$0xff]
                  %538 = vst [vmem:[%s446 + $0x168] sm:$0xff] %v537
                  %v539 = vld [vmem:[%s445 + $0x2e0] sm:$0xff]
                  %540 = vst [vmem:[%s446 + $0x170] sm:$0xff] %v539
                  %v541 = vld [vmem:[%s445 + $0x2f0] sm:$0xff]
                  %542 = vst [vmem:[%s446 + $0x178] sm:$0xff] %v541
                  %v543 = vld [vmem:[%s445 + $0x300] sm:$0xff]
                  %544 = vst [vmem:[%s446 + $0x180] sm:$0xff] %v543
                  %v545 = vld [vmem:[%s445 + $0x310] sm:$0xff]
                  %546 = vst [vmem:[%s446 + $0x188] sm:$0xff] %v545
                  %v547 = vld [vmem:[%s445 + $0x320] sm:$0xff]
                  %548 = vst [vmem:[%s446 + $0x190] sm:$0xff] %v547
                  %v549 = vld [vmem:[%s445 + $0x330] sm:$0xff]
                  %550 = vst [vmem:[%s446 + $0x198] sm:$0xff] %v549
                  %v551 = vld [vmem:[%s445 + $0x340] sm:$0xff]
                  %552 = vst [vmem:[%s446 + $0x1a0] sm:$0xff] %v551
                  %v553 = vld [vmem:[%s445 + $0x350] sm:$0xff]
                  %554 = vst [vmem:[%s446 + $0x1a8] sm:$0xff] %v553
                  %v555 = vld [vmem:[%s445 + $0x360] sm:$0xff]
                  %556 = vst [vmem:[%s446 + $0x1b0] sm:$0xff] %v555
                  %v557 = vld [vmem:[%s445 + $0x370] sm:$0xff]
                  %558 = vst [vmem:[%s446 + $0x1b8] sm:$0xff] %v557
                  %v559 = vld [vmem:[%s445 + $0x380] sm:$0xff]
                  %560 = vst [vmem:[%s446 + $0x1c0] sm:$0xff] %v559
                  %v561 = vld [vmem:[%s445 + $0x390] sm:$0xff]
                  %562 = vst [vmem:[%s446 + $0x1c8] sm:$0xff] %v561
                  %v563 = vld [vmem:[%s445 + $0x3a0] sm:$0xff]
                  %564 = vst [vmem:[%s446 + $0x1d0] sm:$0xff] %v563
                  %v565 = vld [vmem:[%s445 + $0x3b0] sm:$0xff]
                  %566 = vst [vmem:[%s446 + $0x1d8] sm:$0xff] %v565
                  %v567 = vld [vmem:[%s445 + $0x3c0] sm:$0xff]
                  %568 = vst [vmem:[%s446 + $0x1e0] sm:$0xff] %v567
                  %v569 = vld [vmem:[%s445 + $0x3d0] sm:$0xff]
                  %570 = vst [vmem:[%s446 + $0x1e8] sm:$0xff] %v569
                  %v571 = vld [vmem:[%s445 + $0x3e0] sm:$0xff]
                  %572 = vst [vmem:[%s446 + $0x1f0] sm:$0xff] %v571
                  %v573 = vld [vmem:[%s445 + $0x3f0] sm:$0xff]
                  %574 = vst [vmem:[%s446 + $0x1f8] sm:$0xff] %v573
                  %v575 = vld [vmem:[%s445 + $0x400] sm:$0xff]
                  %576 = vst [vmem:[%s446 + $0x200] sm:$0xff] %v575
                  %v577 = vld [vmem:[%s445 + $0x410] sm:$0xff]
                  %578 = vst [vmem:[%s446 + $0x208] sm:$0xff] %v577
                  %v579 = vld [vmem:[%s445 + $0x420] sm:$0xff]
                  %580 = vst [vmem:[%s446 + $0x210] sm:$0xff] %v579
                  %v581 = vld [vmem:[%s445 + $0x430] sm:$0xff]
                  %582 = vst [vmem:[%s446 + $0x218] sm:$0xff] %v581
                  %v583 = vld [vmem:[%s445 + $0x440] sm:$0xff]
                  %584 = vst [vmem:[%s446 + $0x220] sm:$0xff] %v583
                  %v585 = vld [vmem:[%s445 + $0x450] sm:$0xff]
                  %586 = vst [vmem:[%s446 + $0x228] sm:$0xff] %v585
                  %v587 = vld [vmem:[%s445 + $0x460] sm:$0xff]
                  %588 = vst [vmem:[%s446 + $0x230] sm:$0xff] %v587
                  %v589 = vld [vmem:[%s445 + $0x470] sm:$0xff]
                  %590 = vst [vmem:[%s446 + $0x238] sm:$0xff] %v589
                  %v591 = vld [vmem:[%s445 + $0x480] sm:$0xff]
                  %592 = vst [vmem:[%s446 + $0x240] sm:$0xff] %v591
                  %v593 = vld [vmem:[%s445 + $0x490] sm:$0xff]
                  %594 = vst [vmem:[%s446 + $0x248] sm:$0xff] %v593
                  %v595 = vld [vmem:[%s445 + $0x4a0] sm:$0xff]
                  %596 = vst [vmem:[%s446 + $0x250] sm:$0xff] %v595
                  %v597 = vld [vmem:[%s445 + $0x4b0] sm:$0xff]
                  %598 = vst [vmem:[%s446 + $0x258] sm:$0xff] %v597
                  %v599 = vld [vmem:[%s445 + $0x4c0] sm:$0xff]
                  %600 = vst [vmem:[%s446 + $0x260] sm:$0xff] %v599
                  %v601 = vld [vmem:[%s445 + $0x4d0] sm:$0xff]
                  %602 = vst [vmem:[%s446 + $0x268] sm:$0xff] %v601
                  %v603 = vld [vmem:[%s445 + $0x4e0] sm:$0xff]
                  %604 = vst [vmem:[%s446 + $0x270] sm:$0xff] %v603
                  %v605 = vld [vmem:[%s445 + $0x4f0] sm:$0xff]
                  %606 = vst [vmem:[%s446 + $0x278] sm:$0xff] %v605
                  %v607 = vld [vmem:[%s445 + $0x500] sm:$0xff]
                  %608 = vst [vmem:[%s446 + $0x280] sm:$0xff] %v607
                  %v609 = vld [vmem:[%s445 + $0x510] sm:$0xff]
                  %610 = vst [vmem:[%s446 + $0x288] sm:$0xff] %v609
                  %v611 = vld [vmem:[%s445 + $0x520] sm:$0xff]
                  %612 = vst [vmem:[%s446 + $0x290] sm:$0xff] %v611
                  %v613 = vld [vmem:[%s445 + $0x530] sm:$0xff]
                  %614 = vst [vmem:[%s446 + $0x298] sm:$0xff] %v613
                  %v615 = vld [vmem:[%s445 + $0x540] sm:$0xff]
                  %616 = vst [vmem:[%s446 + $0x2a0] sm:$0xff] %v615
                  %v617 = vld [vmem:[%s445 + $0x550] sm:$0xff]
                  %618 = vst [vmem:[%s446 + $0x2a8] sm:$0xff] %v617
                  %v619 = vld [vmem:[%s445 + $0x560] sm:$0xff]
                  %620 = vst [vmem:[%s446 + $0x2b0] sm:$0xff] %v619
                  %v621 = vld [vmem:[%s445 + $0x570] sm:$0xff]
                  %622 = vst [vmem:[%s446 + $0x2b8] sm:$0xff] %v621
                  %v623 = vld [vmem:[%s445 + $0x580] sm:$0xff]
                  %624 = vst [vmem:[%s446 + $0x2c0] sm:$0xff] %v623
                  %v625 = vld [vmem:[%s445 + $0x590] sm:$0xff]
                  %626 = vst [vmem:[%s446 + $0x2c8] sm:$0xff] %v625
                  %v627 = vld [vmem:[%s445 + $0x5a0] sm:$0xff]
                  %628 = vst [vmem:[%s446 + $0x2d0] sm:$0xff] %v627
                  %v629 = vld [vmem:[%s445 + $0x5b0] sm:$0xff]
                  %630 = vst [vmem:[%s446 + $0x2d8] sm:$0xff] %v629
                  %v631 = vld [vmem:[%s445 + $0x5c0] sm:$0xff]
                  %632 = vst [vmem:[%s446 + $0x2e0] sm:$0xff] %v631
                  %v633 = vld [vmem:[%s445 + $0x5d0] sm:$0xff]
                  %634 = vst [vmem:[%s446 + $0x2e8] sm:$0xff] %v633
                  %v635 = vld [vmem:[%s445 + $0x5e0] sm:$0xff]
                  %636 = vst [vmem:[%s446 + $0x2f0] sm:$0xff] %v635
                  %v637 = vld [vmem:[%s445 + $0x5f0] sm:$0xff]
                  %638 = vst [vmem:[%s446 + $0x2f8] sm:$0xff] %v637
                  %v639 = vld [vmem:[%s445 + $0x600] sm:$0xff]
                  %640 = vst [vmem:[%s446 + $0x300] sm:$0xff] %v639
                  %v641 = vld [vmem:[%s445 + $0x610] sm:$0xff]
                  %642 = vst [vmem:[%s446 + $0x308] sm:$0xff] %v641
                  %v643 = vld [vmem:[%s445 + $0x620] sm:$0xff]
                  %644 = vst [vmem:[%s446 + $0x310] sm:$0xff] %v643
                  %v645 = vld [vmem:[%s445 + $0x630] sm:$0xff]
                  %646 = vst [vmem:[%s446 + $0x318] sm:$0xff] %v645
                  %v647 = vld [vmem:[%s445 + $0x640] sm:$0xff]
                  %648 = vst [vmem:[%s446 + $0x320] sm:$0xff] %v647
                  %v649 = vld [vmem:[%s445 + $0x650] sm:$0xff]
                  %650 = vst [vmem:[%s446 + $0x328] sm:$0xff] %v649
                  %v651 = vld [vmem:[%s445 + $0x660] sm:$0xff]
                  %652 = vst [vmem:[%s446 + $0x330] sm:$0xff] %v651
                  %v653 = vld [vmem:[%s445 + $0x670] sm:$0xff]
                  %654 = vst [vmem:[%s446 + $0x338] sm:$0xff] %v653
                  %v655 = vld [vmem:[%s445 + $0x680] sm:$0xff]
                  %656 = vst [vmem:[%s446 + $0x340] sm:$0xff] %v655
                  %v657 = vld [vmem:[%s445 + $0x690] sm:$0xff]
                  %658 = vst [vmem:[%s446 + $0x348] sm:$0xff] %v657
                  %v659 = vld [vmem:[%s445 + $0x6a0] sm:$0xff]
                  %660 = vst [vmem:[%s446 + $0x350] sm:$0xff] %v659
                  %v661 = vld [vmem:[%s445 + $0x6b0] sm:$0xff]
                  %662 = vst [vmem:[%s446 + $0x358] sm:$0xff] %v661
                  %v663 = vld [vmem:[%s445 + $0x6c0] sm:$0xff]
                  %664 = vst [vmem:[%s446 + $0x360] sm:$0xff] %v663
                  %v665 = vld [vmem:[%s445 + $0x6d0] sm:$0xff]
                  %666 = vst [vmem:[%s446 + $0x368] sm:$0xff] %v665
                  %v667 = vld [vmem:[%s445 + $0x6e0] sm:$0xff]
                  %668 = vst [vmem:[%s446 + $0x370] sm:$0xff] %v667
                  %v669 = vld [vmem:[%s445 + $0x6f0] sm:$0xff]
                  %670 = vst [vmem:[%s446 + $0x378] sm:$0xff] %v669
                  %v671 = vld [vmem:[%s445 + $0x700] sm:$0xff]
                  %672 = vst [vmem:[%s446 + $0x380] sm:$0xff] %v671
                  %v673 = vld [vmem:[%s445 + $0x710] sm:$0xff]
                  %674 = vst [vmem:[%s446 + $0x388] sm:$0xff] %v673
                  %v675 = vld [vmem:[%s445 + $0x720] sm:$0xff]
                  %676 = vst [vmem:[%s446 + $0x390] sm:$0xff] %v675
                  %v677 = vld [vmem:[%s445 + $0x730] sm:$0xff]
                  %678 = vst [vmem:[%s446 + $0x398] sm:$0xff] %v677
                  %v679 = vld [vmem:[%s445 + $0x740] sm:$0xff]
                  %680 = vst [vmem:[%s446 + $0x3a0] sm:$0xff] %v679
                  %v681 = vld [vmem:[%s445 + $0x750] sm:$0xff]
                  %682 = vst [vmem:[%s446 + $0x3a8] sm:$0xff] %v681
                  %v683 = vld [vmem:[%s445 + $0x760] sm:$0xff]
                  %684 = vst [vmem:[%s446 + $0x3b0] sm:$0xff] %v683
                  %v685 = vld [vmem:[%s445 + $0x770] sm:$0xff]
                  %686 = vst [vmem:[%s446 + $0x3b8] sm:$0xff] %v685
                  %v687 = vld [vmem:[%s445 + $0x780] sm:$0xff]
                  %688 = vst [vmem:[%s446 + $0x3c0] sm:$0xff] %v687
                  %v689 = vld [vmem:[%s445 + $0x790] sm:$0xff]
                  %690 = vst [vmem:[%s446 + $0x3c8] sm:$0xff] %v689
                  %v691 = vld [vmem:[%s445 + $0x7a0] sm:$0xff]
                  %692 = vst [vmem:[%s446 + $0x3d0] sm:$0xff] %v691
                  %v693 = vld [vmem:[%s445 + $0x7b0] sm:$0xff]
                  %694 = vst [vmem:[%s446 + $0x3d8] sm:$0xff] %v693
                  %v695 = vld [vmem:[%s445 + $0x7c0] sm:$0xff]
                  %696 = vst [vmem:[%s446 + $0x3e0] sm:$0xff] %v695
                  %v697 = vld [vmem:[%s445 + $0x7d0] sm:$0xff]
                  %698 = vst [vmem:[%s446 + $0x3e8] sm:$0xff] %v697
                  %v699 = vld [vmem:[%s445 + $0x7e0] sm:$0xff]
                  %700 = vst [vmem:[%s446 + $0x3f0] sm:$0xff] %v699
                  %v701 = vld [vmem:[%s445 + $0x7f0] sm:$0xff]
                  %702 = vst [vmem:[%s446 + $0x3f8] sm:$0xff] %v701
                $region52: #{enc_txt_forward.10} parent=46 // loop_footer
                  %s444 = sadd.s32 1, %s440
                $region53: #{enc_txt_forward.10} parent=46 // loop_footer_branch
                  %439 = sbr.rel target = $region49
                $region54: #{enc_txt_forward.10} parent=46 // loop_exit
                  _
              $region47: #{enc_txt_forward.10} parent=31 // pred_fallthru
                _
              // Predicated region
              $region55: #{enc_txt_forward.10} parent=31 // pred_check
                _
              $region56: #{enc_txt_forward.10} parent=31 // pred_check_branch
                %704 = sbr.rel target = $region58
              $region57: #{enc_txt_forward.10} parent=31 // pred_region
                _
              $region58: #{enc_txt_forward.10} parent=31 // pred_fallthru
                _
            $region32: #{enc_txt_forward.10} parent=27 // pred_fallthru
              _
            // Predicated region
            $region33: #{enc_txt_forward.10} parent=27 // pred_check
              _
            $region34: #{enc_txt_forward.10} parent=27 // pred_check_branch
              %171 = sbr.rel target = $region36
            $region35: #{enc_txt_forward.10} parent=27 // pred_region
              loop: start=0, step=1, limit=1
              $region37: #{enc_txt_forward.10} parent=35 // loop_pre_header
                _
              $region38: #{enc_txt_forward.10} parent=35 // loop_header
                %s174 = sphi 0, %s178
                %p175 = scmp.ge.s32.totalorder %s174, 1
                %s179 = sphi %s165, %s165
                %s180 = sphi %s162, %s162
              $region39: #{enc_txt_forward.10} parent=35 // loop_header_branch
                %177 = sbr.rel (%p175) target = $region43
              $region40: #{enc_txt_forward.10} parent=35 // loop_body
                %v181 = vld [vmem:[%s179] sm:$0xff]
                %182 = vst [vmem:[%s180] sm:$0xff] %v181
                %v183 = vld [vmem:[%s179 + $0x10] sm:$0xff]
                %184 = vst [vmem:[%s180 + $0x8] sm:$0xff] %v183
                %v185 = vld [vmem:[%s179 + $0x20] sm:$0xff]
                %186 = vst [vmem:[%s180 + $0x10] sm:$0xff] %v185
                %v187 = vld [vmem:[%s179 + $0x30] sm:$0xff]
                %188 = vst [vmem:[%s180 + $0x18] sm:$0xff] %v187
                %v189 = vld [vmem:[%s179 + $0x40] sm:$0xff]
                %190 = vst [vmem:[%s180 + $0x20] sm:$0xff] %v189
                %v191 = vld [vmem:[%s179 + $0x50] sm:$0xff]
                %192 = vst [vmem:[%s180 + $0x28] sm:$0xff] %v191
                %v193 = vld [vmem:[%s179 + $0x60] sm:$0xff]
                %194 = vst [vmem:[%s180 + $0x30] sm:$0xff] %v193
                %v195 = vld [vmem:[%s179 + $0x70] sm:$0xff]
                %196 = vst [vmem:[%s180 + $0x38] sm:$0xff] %v195
                %v197 = vld [vmem:[%s179 + $0x80] sm:$0xff]
                %198 = vst [vmem:[%s180 + $0x40] sm:$0xff] %v197
                %v199 = vld [vmem:[%s179 + $0x90] sm:$0xff]
                %200 = vst [vmem:[%s180 + $0x48] sm:$0xff] %v199
                %v201 = vld [vmem:[%s179 + $0xa0] sm:$0xff]
                %202 = vst [vmem:[%s180 + $0x50] sm:$0xff] %v201
                %v203 = vld [vmem:[%s179 + $0xb0] sm:$0xff]
                %204 = vst [vmem:[%s180 + $0x58] sm:$0xff] %v203
                %v205 = vld [vmem:[%s179 + $0xc0] sm:$0xff]
                %206 = vst [vmem:[%s180 + $0x60] sm:$0xff] %v205
                %v207 = vld [vmem:[%s179 + $0xd0] sm:$0xff]
                %208 = vst [vmem:[%s180 + $0x68] sm:$0xff] %v207
                %v209 = vld [vmem:[%s179 + $0xe0] sm:$0xff]
                %210 = vst [vmem:[%s180 + $0x70] sm:$0xff] %v209
                %v211 = vld [vmem:[%s179 + $0xf0] sm:$0xff]
                %212 = vst [vmem:[%s180 + $0x78] sm:$0xff] %v211
                %v213 = vld [vmem:[%s179 + $0x100] sm:$0xff]
                %214 = vst [vmem:[%s180 + $0x80] sm:$0xff] %v213
                %v215 = vld [vmem:[%s179 + $0x110] sm:$0xff]
                %216 = vst [vmem:[%s180 + $0x88] sm:$0xff] %v215
                %v217 = vld [vmem:[%s179 + $0x120] sm:$0xff]
                %218 = vst [vmem:[%s180 + $0x90] sm:$0xff] %v217
                %v219 = vld [vmem:[%s179 + $0x130] sm:$0xff]
                %220 = vst [vmem:[%s180 + $0x98] sm:$0xff] %v219
                %v221 = vld [vmem:[%s179 + $0x140] sm:$0xff]
                %222 = vst [vmem:[%s180 + $0xa0] sm:$0xff] %v221
                %v223 = vld [vmem:[%s179 + $0x150] sm:$0xff]
                %224 = vst [vmem:[%s180 + $0xa8] sm:$0xff] %v223
                %v225 = vld [vmem:[%s179 + $0x160] sm:$0xff]
                %226 = vst [vmem:[%s180 + $0xb0] sm:$0xff] %v225
                %v227 = vld [vmem:[%s179 + $0x170] sm:$0xff]
                %228 = vst [vmem:[%s180 + $0xb8] sm:$0xff] %v227
                %v229 = vld [vmem:[%s179 + $0x180] sm:$0xff]
                %230 = vst [vmem:[%s180 + $0xc0] sm:$0xff] %v229
                %v231 = vld [vmem:[%s179 + $0x190] sm:$0xff]
                %232 = vst [vmem:[%s180 + $0xc8] sm:$0xff] %v231
                %v233 = vld [vmem:[%s179 + $0x1a0] sm:$0xff]
                %234 = vst [vmem:[%s180 + $0xd0] sm:$0xff] %v233
                %v235 = vld [vmem:[%s179 + $0x1b0] sm:$0xff]
                %236 = vst [vmem:[%s180 + $0xd8] sm:$0xff] %v235
                %v237 = vld [vmem:[%s179 + $0x1c0] sm:$0xff]
                %238 = vst [vmem:[%s180 + $0xe0] sm:$0xff] %v237
                %v239 = vld [vmem:[%s179 + $0x1d0] sm:$0xff]
                %240 = vst [vmem:[%s180 + $0xe8] sm:$0xff] %v239
                %v241 = vld [vmem:[%s179 + $0x1e0] sm:$0xff]
                %242 = vst [vmem:[%s180 + $0xf0] sm:$0xff] %v241
                %v243 = vld [vmem:[%s179 + $0x1f0] sm:$0xff]
                %244 = vst [vmem:[%s180 + $0xf8] sm:$0xff] %v243
                %v245 = vld [vmem:[%s179 + $0x200] sm:$0xff]
                %246 = vst [vmem:[%s180 + $0x100] sm:$0xff] %v245
                %v247 = vld [vmem:[%s179 + $0x210] sm:$0xff]
                %248 = vst [vmem:[%s180 + $0x108] sm:$0xff] %v247
                %v249 = vld [vmem:[%s179 + $0x220] sm:$0xff]
                %250 = vst [vmem:[%s180 + $0x110] sm:$0xff] %v249
                %v251 = vld [vmem:[%s179 + $0x230] sm:$0xff]
                %252 = vst [vmem:[%s180 + $0x118] sm:$0xff] %v251
                %v253 = vld [vmem:[%s179 + $0x240] sm:$0xff]
                %254 = vst [vmem:[%s180 + $0x120] sm:$0xff] %v253
                %v255 = vld [vmem:[%s179 + $0x250] sm:$0xff]
                %256 = vst [vmem:[%s180 + $0x128] sm:$0xff] %v255
                %v257 = vld [vmem:[%s179 + $0x260] sm:$0xff]
                %258 = vst [vmem:[%s180 + $0x130] sm:$0xff] %v257
                %v259 = vld [vmem:[%s179 + $0x270] sm:$0xff]
                %260 = vst [vmem:[%s180 + $0x138] sm:$0xff] %v259
                %v261 = vld [vmem:[%s179 + $0x280] sm:$0xff]
                %262 = vst [vmem:[%s180 + $0x140] sm:$0xff] %v261
                %v263 = vld [vmem:[%s179 + $0x290] sm:$0xff]
                %264 = vst [vmem:[%s180 + $0x148] sm:$0xff] %v263
                %v265 = vld [vmem:[%s179 + $0x2a0] sm:$0xff]
                %266 = vst [vmem:[%s180 + $0x150] sm:$0xff] %v265
                %v267 = vld [vmem:[%s179 + $0x2b0] sm:$0xff]
                %268 = vst [vmem:[%s180 + $0x158] sm:$0xff] %v267
                %v269 = vld [vmem:[%s179 + $0x2c0] sm:$0xff]
                %270 = vst [vmem:[%s180 + $0x160] sm:$0xff] %v269
                %v271 = vld [vmem:[%s179 + $0x2d0] sm:$0xff]
                %272 = vst [vmem:[%s180 + $0x168] sm:$0xff] %v271
                %v273 = vld [vmem:[%s179 + $0x2e0] sm:$0xff]
                %274 = vst [vmem:[%s180 + $0x170] sm:$0xff] %v273
                %v275 = vld [vmem:[%s179 + $0x2f0] sm:$0xff]
                %276 = vst [vmem:[%s180 + $0x178] sm:$0xff] %v275
                %v277 = vld [vmem:[%s179 + $0x300] sm:$0xff]
                %278 = vst [vmem:[%s180 + $0x180] sm:$0xff] %v277
                %v279 = vld [vmem:[%s179 + $0x310] sm:$0xff]
                %280 = vst [vmem:[%s180 + $0x188] sm:$0xff] %v279
                %v281 = vld [vmem:[%s179 + $0x320] sm:$0xff]
                %282 = vst [vmem:[%s180 + $0x190] sm:$0xff] %v281
                %v283 = vld [vmem:[%s179 + $0x330] sm:$0xff]
                %284 = vst [vmem:[%s180 + $0x198] sm:$0xff] %v283
                %v285 = vld [vmem:[%s179 + $0x340] sm:$0xff]
                %286 = vst [vmem:[%s180 + $0x1a0] sm:$0xff] %v285
                %v287 = vld [vmem:[%s179 + $0x350] sm:$0xff]
                %288 = vst [vmem:[%s180 + $0x1a8] sm:$0xff] %v287
                %v289 = vld [vmem:[%s179 + $0x360] sm:$0xff]
                %290 = vst [vmem:[%s180 + $0x1b0] sm:$0xff] %v289
                %v291 = vld [vmem:[%s179 + $0x370] sm:$0xff]
                %292 = vst [vmem:[%s180 + $0x1b8] sm:$0xff] %v291
                %v293 = vld [vmem:[%s179 + $0x380] sm:$0xff]
                %294 = vst [vmem:[%s180 + $0x1c0] sm:$0xff] %v293
                %v295 = vld [vmem:[%s179 + $0x390] sm:$0xff]
                %296 = vst [vmem:[%s180 + $0x1c8] sm:$0xff] %v295
                %v297 = vld [vmem:[%s179 + $0x3a0] sm:$0xff]
                %298 = vst [vmem:[%s180 + $0x1d0] sm:$0xff] %v297
                %v299 = vld [vmem:[%s179 + $0x3b0] sm:$0xff]
                %300 = vst [vmem:[%s180 + $0x1d8] sm:$0xff] %v299
                %v301 = vld [vmem:[%s179 + $0x3c0] sm:$0xff]
                %302 = vst [vmem:[%s180 + $0x1e0] sm:$0xff] %v301
                %v303 = vld [vmem:[%s179 + $0x3d0] sm:$0xff]
                %304 = vst [vmem:[%s180 + $0x1e8] sm:$0xff] %v303
                %v305 = vld [vmem:[%s179 + $0x3e0] sm:$0xff]
                %306 = vst [vmem:[%s180 + $0x1f0] sm:$0xff] %v305
                %v307 = vld [vmem:[%s179 + $0x3f0] sm:$0xff]
                %308 = vst [vmem:[%s180 + $0x1f8] sm:$0xff] %v307
                %v309 = vld [vmem:[%s179 + $0x400] sm:$0xff]
                %310 = vst [vmem:[%s180 + $0x200] sm:$0xff] %v309
                %v311 = vld [vmem:[%s179 + $0x410] sm:$0xff]
                %312 = vst [vmem:[%s180 + $0x208] sm:$0xff] %v311
                %v313 = vld [vmem:[%s179 + $0x420] sm:$0xff]
                %314 = vst [vmem:[%s180 + $0x210] sm:$0xff] %v313
                %v315 = vld [vmem:[%s179 + $0x430] sm:$0xff]
                %316 = vst [vmem:[%s180 + $0x218] sm:$0xff] %v315
                %v317 = vld [vmem:[%s179 + $0x440] sm:$0xff]
                %318 = vst [vmem:[%s180 + $0x220] sm:$0xff] %v317
                %v319 = vld [vmem:[%s179 + $0x450] sm:$0xff]
                %320 = vst [vmem:[%s180 + $0x228] sm:$0xff] %v319
                %v321 = vld [vmem:[%s179 + $0x460] sm:$0xff]
                %322 = vst [vmem:[%s180 + $0x230] sm:$0xff] %v321
                %v323 = vld [vmem:[%s179 + $0x470] sm:$0xff]
                %324 = vst [vmem:[%s180 + $0x238] sm:$0xff] %v323
                %v325 = vld [vmem:[%s179 + $0x480] sm:$0xff]
                %326 = vst [vmem:[%s180 + $0x240] sm:$0xff] %v325
                %v327 = vld [vmem:[%s179 + $0x490] sm:$0xff]
                %328 = vst [vmem:[%s180 + $0x248] sm:$0xff] %v327
                %v329 = vld [vmem:[%s179 + $0x4a0] sm:$0xff]
                %330 = vst [vmem:[%s180 + $0x250] sm:$0xff] %v329
                %v331 = vld [vmem:[%s179 + $0x4b0] sm:$0xff]
                %332 = vst [vmem:[%s180 + $0x258] sm:$0xff] %v331
                %v333 = vld [vmem:[%s179 + $0x4c0] sm:$0xff]
                %334 = vst [vmem:[%s180 + $0x260] sm:$0xff] %v333
                %v335 = vld [vmem:[%s179 + $0x4d0] sm:$0xff]
                %336 = vst [vmem:[%s180 + $0x268] sm:$0xff] %v335
                %v337 = vld [vmem:[%s179 + $0x4e0] sm:$0xff]
                %338 = vst [vmem:[%s180 + $0x270] sm:$0xff] %v337
                %v339 = vld [vmem:[%s179 + $0x4f0] sm:$0xff]
                %340 = vst [vmem:[%s180 + $0x278] sm:$0xff] %v339
                %v341 = vld [vmem:[%s179 + $0x500] sm:$0xff]
                %342 = vst [vmem:[%s180 + $0x280] sm:$0xff] %v341
                %v343 = vld [vmem:[%s179 + $0x510] sm:$0xff]
                %344 = vst [vmem:[%s180 + $0x288] sm:$0xff] %v343
                %v345 = vld [vmem:[%s179 + $0x520] sm:$0xff]
                %346 = vst [vmem:[%s180 + $0x290] sm:$0xff] %v345
                %v347 = vld [vmem:[%s179 + $0x530] sm:$0xff]
                %348 = vst [vmem:[%s180 + $0x298] sm:$0xff] %v347
                %v349 = vld [vmem:[%s179 + $0x540] sm:$0xff]
                %350 = vst [vmem:[%s180 + $0x2a0] sm:$0xff] %v349
                %v351 = vld [vmem:[%s179 + $0x550] sm:$0xff]
                %352 = vst [vmem:[%s180 + $0x2a8] sm:$0xff] %v351
                %v353 = vld [vmem:[%s179 + $0x560] sm:$0xff]
                %354 = vst [vmem:[%s180 + $0x2b0] sm:$0xff] %v353
                %v355 = vld [vmem:[%s179 + $0x570] sm:$0xff]
                %356 = vst [vmem:[%s180 + $0x2b8] sm:$0xff] %v355
                %v357 = vld [vmem:[%s179 + $0x580] sm:$0xff]
                %358 = vst [vmem:[%s180 + $0x2c0] sm:$0xff] %v357
                %v359 = vld [vmem:[%s179 + $0x590] sm:$0xff]
                %360 = vst [vmem:[%s180 + $0x2c8] sm:$0xff] %v359
                %v361 = vld [vmem:[%s179 + $0x5a0] sm:$0xff]
                %362 = vst [vmem:[%s180 + $0x2d0] sm:$0xff] %v361
                %v363 = vld [vmem:[%s179 + $0x5b0] sm:$0xff]
                %364 = vst [vmem:[%s180 + $0x2d8] sm:$0xff] %v363
                %v365 = vld [vmem:[%s179 + $0x5c0] sm:$0xff]
                %366 = vst [vmem:[%s180 + $0x2e0] sm:$0xff] %v365
                %v367 = vld [vmem:[%s179 + $0x5d0] sm:$0xff]
                %368 = vst [vmem:[%s180 + $0x2e8] sm:$0xff] %v367
                %v369 = vld [vmem:[%s179 + $0x5e0] sm:$0xff]
                %370 = vst [vmem:[%s180 + $0x2f0] sm:$0xff] %v369
                %v371 = vld [vmem:[%s179 + $0x5f0] sm:$0xff]
                %372 = vst [vmem:[%s180 + $0x2f8] sm:$0xff] %v371
                %v373 = vld [vmem:[%s179 + $0x600] sm:$0xff]
                %374 = vst [vmem:[%s180 + $0x300] sm:$0xff] %v373
                %v375 = vld [vmem:[%s179 + $0x610] sm:$0xff]
                %376 = vst [vmem:[%s180 + $0x308] sm:$0xff] %v375
                %v377 = vld [vmem:[%s179 + $0x620] sm:$0xff]
                %378 = vst [vmem:[%s180 + $0x310] sm:$0xff] %v377
                %v379 = vld [vmem:[%s179 + $0x630] sm:$0xff]
                %380 = vst [vmem:[%s180 + $0x318] sm:$0xff] %v379
                %v381 = vld [vmem:[%s179 + $0x640] sm:$0xff]
                %382 = vst [vmem:[%s180 + $0x320] sm:$0xff] %v381
                %v383 = vld [vmem:[%s179 + $0x650] sm:$0xff]
                %384 = vst [vmem:[%s180 + $0x328] sm:$0xff] %v383
                %v385 = vld [vmem:[%s179 + $0x660] sm:$0xff]
                %386 = vst [vmem:[%s180 + $0x330] sm:$0xff] %v385
                %v387 = vld [vmem:[%s179 + $0x670] sm:$0xff]
                %388 = vst [vmem:[%s180 + $0x338] sm:$0xff] %v387
                %v389 = vld [vmem:[%s179 + $0x680] sm:$0xff]
                %390 = vst [vmem:[%s180 + $0x340] sm:$0xff] %v389
                %v391 = vld [vmem:[%s179 + $0x690] sm:$0xff]
                %392 = vst [vmem:[%s180 + $0x348] sm:$0xff] %v391
                %v393 = vld [vmem:[%s179 + $0x6a0] sm:$0xff]
                %394 = vst [vmem:[%s180 + $0x350] sm:$0xff] %v393
                %v395 = vld [vmem:[%s179 + $0x6b0] sm:$0xff]
                %396 = vst [vmem:[%s180 + $0x358] sm:$0xff] %v395
                %v397 = vld [vmem:[%s179 + $0x6c0] sm:$0xff]
                %398 = vst [vmem:[%s180 + $0x360] sm:$0xff] %v397
                %v399 = vld [vmem:[%s179 + $0x6d0] sm:$0xff]
                %400 = vst [vmem:[%s180 + $0x368] sm:$0xff] %v399
                %v401 = vld [vmem:[%s179 + $0x6e0] sm:$0xff]
                %402 = vst [vmem:[%s180 + $0x370] sm:$0xff] %v401
                %v403 = vld [vmem:[%s179 + $0x6f0] sm:$0xff]
                %404 = vst [vmem:[%s180 + $0x378] sm:$0xff] %v403
                %v405 = vld [vmem:[%s179 + $0x700] sm:$0xff]
                %406 = vst [vmem:[%s180 + $0x380] sm:$0xff] %v405
                %v407 = vld [vmem:[%s179 + $0x710] sm:$0xff]
                %408 = vst [vmem:[%s180 + $0x388] sm:$0xff] %v407
                %v409 = vld [vmem:[%s179 + $0x720] sm:$0xff]
                %410 = vst [vmem:[%s180 + $0x390] sm:$0xff] %v409
                %v411 = vld [vmem:[%s179 + $0x730] sm:$0xff]
                %412 = vst [vmem:[%s180 + $0x398] sm:$0xff] %v411
                %v413 = vld [vmem:[%s179 + $0x740] sm:$0xff]
                %414 = vst [vmem:[%s180 + $0x3a0] sm:$0xff] %v413
                %v415 = vld [vmem:[%s179 + $0x750] sm:$0xff]
                %416 = vst [vmem:[%s180 + $0x3a8] sm:$0xff] %v415
                %v417 = vld [vmem:[%s179 + $0x760] sm:$0xff]
                %418 = vst [vmem:[%s180 + $0x3b0] sm:$0xff] %v417
                %v419 = vld [vmem:[%s179 + $0x770] sm:$0xff]
                %420 = vst [vmem:[%s180 + $0x3b8] sm:$0xff] %v419
                %v421 = vld [vmem:[%s179 + $0x780] sm:$0xff]
                %422 = vst [vmem:[%s180 + $0x3c0] sm:$0xff] %v421
                %v423 = vld [vmem:[%s179 + $0x790] sm:$0xff]
                %424 = vst [vmem:[%s180 + $0x3c8] sm:$0xff] %v423
                %v425 = vld [vmem:[%s179 + $0x7a0] sm:$0xff]
                %426 = vst [vmem:[%s180 + $0x3d0] sm:$0xff] %v425
                %v427 = vld [vmem:[%s179 + $0x7b0] sm:$0xff]
                %428 = vst [vmem:[%s180 + $0x3d8] sm:$0xff] %v427
                %v429 = vld [vmem:[%s179 + $0x7c0] sm:$0xff]
                %430 = vst [vmem:[%s180 + $0x3e0] sm:$0xff] %v429
                %v431 = vld [vmem:[%s179 + $0x7d0] sm:$0xff]
                %432 = vst [vmem:[%s180 + $0x3e8] sm:$0xff] %v431
                %v433 = vld [vmem:[%s179 + $0x7e0] sm:$0xff]
                %434 = vst [vmem:[%s180 + $0x3f0] sm:$0xff] %v433
                %v435 = vld [vmem:[%s179 + $0x7f0] sm:$0xff]
                %436 = vst [vmem:[%s180 + $0x3f8] sm:$0xff] %v435
              $region41: #{enc_txt_forward.10} parent=35 // loop_footer
                %s178 = sadd.s32 1, %s174
              $region42: #{enc_txt_forward.10} parent=35 // loop_footer_branch
                %173 = sbr.rel target = $region38
              $region43: #{enc_txt_forward.10} parent=35 // loop_exit
                _
            $region36: #{enc_txt_forward.10} parent=27 // pred_fallthru
              _
          $region28: #{enc_txt_forward.10} parent=23 // pred_fallthru
            _
          %705 = vnop
        $region24: #{enc_txt_forward.10} parent=19 // pred_fallthru
          _
        // Predicated region
        $region59: #{enc_txt_forward.10} parent=19 // pred_check
          %p706 = pneg %p93
        $region60: #{enc_txt_forward.10} parent=19 // pred_check_branch
          %708 = sbr.rel (%p706) target = $region62
        $region61: #{enc_txt_forward.10} parent=19 // pred_region
          %s709 = smul.u32 2, %s17
          %p710 = scmp.lt.s32.totalorder %s709, 3
          %s711 = scalar_select %p710, %s709, 3
          %s712 = scalar_lea.vmem %s2, %s711
          %s713 = smul.u32 2, %s17
        $region62: #{enc_txt_forward.10} parent=19 // pred_fallthru
          _
      $region20: #{enc_txt_forward.10} parent=5 // pred_fallthru
        _
      %p714 = scmp.le.s32.totalorder 1, %s9
      %p715 = scmp.lt.s32.totalorder %s9, 3
      %p716 = pnand %p714, %p715
      %p717 = pneg %p716
      // Predicated region
      $region63: #{enc_txt_forward.10} parent=5 // pred_check
        _
      $region64: #{enc_txt_forward.10} parent=5 // pred_check_branch
        %719 = sbr.rel (%p716) target = $region66
      $region65: #{enc_txt_forward.10} parent=5 // pred_region
        %s720 = ssub.s32 %s9, 1
        %s721 = sand.u32 %s60, 1
        %s722 = sand.u32 %s60, 1
        %s723 = smul.addr %s722, 1024
        %s724 = scalar_lea.vmem [#allocation2], %s723
        // Predicated region
        $region67: #{enc_txt_forward.10} parent=65 // pred_check
          %p725 = pneg %p73
        $region68: #{enc_txt_forward.10} parent=65 // pred_check_branch
          %727 = sbr.rel (%p725) target = $region70
        $region69: #{enc_txt_forward.10} parent=65 // pred_region
          _
        $region70: #{enc_txt_forward.10} parent=65 // pred_fallthru
          _
        %s728 = smul.u32 4, %s18
        %p729 = scmp.lt.s32.totalorder %s728, 3
        %s730 = scalar_select %p729, %s728, 3
        %s731 = smul.addr %s730, 8
        %s732 = smul.addr %s731, 4
        %s733 = scalar_lea.vmem %s0, %s732
        %p734 = pneg %p47
        %p735 = pneg %p44
        %s736 = sand.u32 %s60, 1
        %s737 = sand.u32 %s60, 1
        %s738 = smul.addr %s737, 1024
        %s739 = scalar_lea.vmem [#allocation2], %s738
        %p740 = pneg %p73
        %p741 = pneg %p70
        %s742 = smul.u32 2, %s19
        %p743 = scmp.lt.s32.totalorder %s742, 3
        %s744 = scalar_select %p743, %s742, 3
        %s745 = scalar_lea.vmem %s2, %s744
        %p746 = pneg %p99
        %p747 = pneg %p96
        %p748 = pneg %p127
        %p749 = pneg %p124
        %s750 = sand.u32 %s114, 1
        %s751 = sand.u32 %s114, 1
        %s752 = smul.addr %s751, 32
        %s753 = scalar_lea.vmem [#allocation3], %s752
        %s754 = smul.u32 4, %s18
        %p755 = scmp.lt.s32.totalorder %s754, 3
        %s756 = scalar_select %p755, %s754, 3
        %s757 = smul.addr %s756, 8
        %s758 = smul.addr %s757, 4
        %s759 = scalar_lea.vmem %s0, %s758
        %s760 = smul.u32 4, %s18
        %s761 = smul.u32 2, %s19
        %s762 = smul.u32 2, %s19
        %p763 = scmp.lt.s32.totalorder %s762, 3
        %s764 = scalar_select %p763, %s762, 3
        %s765 = scalar_lea.vmem %s2, %s764
        %s766 = smul.u32 2, %s19
        %s767 = smul.u32 4, %s18
        %s768 = smul.u32 2, %s19
        %v769 = vld [vmem:[%s759] sm:$0xff]
        %v770 = vld [vmem:[%s759 + $0x8] sm:$0xff]
        %v771 = vld [vmem:[%s759 + $0x10] sm:$0xff]
        %v772 = vld [vmem:[%s759 + $0x18] sm:$0xff]
        %v773 = vld [vmem:[%s759 + $0x20] sm:$0xff]
        %v774 = vld [vmem:[%s759 + $0x28] sm:$0xff]
        %v775 = vld [vmem:[%s759 + $0x30] sm:$0xff]
        %v776 = vld [vmem:[%s759 + $0x38] sm:$0xff]
        %v777 = vld [vmem:[%s759 + $0x40] sm:$0xff]
        %v778 = vld [vmem:[%s759 + $0x48] sm:$0xff]
        %v779 = vld [vmem:[%s759 + $0x50] sm:$0xff]
        %v780 = vld [vmem:[%s759 + $0x58] sm:$0xff]
        %v781 = vld [vmem:[%s759 + $0x60] sm:$0xff]
        %v782 = vld [vmem:[%s759 + $0x68] sm:$0xff]
        %v783 = vld [vmem:[%s759 + $0x70] sm:$0xff]
        %v784 = vld [vmem:[%s759 + $0x78] sm:$0xff]
        %v785 = vld [vmem:[%s724] sm:$0xff]
        %v786 = vld [vmem:[%s724 + $0x8] sm:$0xff]
        %v787 = vld [vmem:[%s724 + $0x10] sm:$0xff]
        %v788 = vld [vmem:[%s724 + $0x18] sm:$0xff]
        %v789 = vld [vmem:[%s724 + $0x20] sm:$0xff]
        %v790 = vld [vmem:[%s724 + $0x28] sm:$0xff]
        %v791 = vld [vmem:[%s724 + $0x30] sm:$0xff]
        %v792 = vld [vmem:[%s724 + $0x38] sm:$0xff]
        %v793 = vld [vmem:[%s724 + $0x40] sm:$0xff]
        %v794 = vld [vmem:[%s724 + $0x48] sm:$0xff]
        %v795 = vld [vmem:[%s724 + $0x50] sm:$0xff]
        %v796 = vld [vmem:[%s724 + $0x58] sm:$0xff]
        %v797 = vld [vmem:[%s724 + $0x60] sm:$0xff]
        %v798 = vld [vmem:[%s724 + $0x68] sm:$0xff]
        %v799 = vld [vmem:[%s724 + $0x70] sm:$0xff]
        %v800 = vld [vmem:[%s724 + $0x78] sm:$0xff]
        %v801 = vld [vmem:[%s724 + $0x80] sm:$0xff]
        %v802 = vld [vmem:[%s724 + $0x88] sm:$0xff]
        %v803 = vld [vmem:[%s724 + $0x90] sm:$0xff]
        %v804 = vld [vmem:[%s724 + $0x98] sm:$0xff]
        %v805 = vld [vmem:[%s724 + $0xa0] sm:$0xff]
        %v806 = vld [vmem:[%s724 + $0xa8] sm:$0xff]
        %v807 = vld [vmem:[%s724 + $0xb0] sm:$0xff]
        %v808 = vld [vmem:[%s724 + $0xb8] sm:$0xff]
        %v809 = vld [vmem:[%s724 + $0xc0] sm:$0xff]
        %v810 = vld [vmem:[%s724 + $0xc8] sm:$0xff]
        %v811 = vld [vmem:[%s724 + $0xd0] sm:$0xff]
        %v812 = vld [vmem:[%s724 + $0xd8] sm:$0xff]
        %v813 = vld [vmem:[%s724 + $0xe0] sm:$0xff]
        %v814 = vld [vmem:[%s724 + $0xe8] sm:$0xff]
        %v815 = vld [vmem:[%s724 + $0xf0] sm:$0xff]
        %v816 = vld [vmem:[%s724 + $0xf8] sm:$0xff]
        %v817 = vld [vmem:[%s724 + $0x100] sm:$0xff]
        %v818 = vld [vmem:[%s724 + $0x108] sm:$0xff]
        %v819 = vld [vmem:[%s724 + $0x110] sm:$0xff]
        %v820 = vld [vmem:[%s724 + $0x118] sm:$0xff]
        %v821 = vld [vmem:[%s724 + $0x120] sm:$0xff]
        %v822 = vld [vmem:[%s724 + $0x128] sm:$0xff]
        %v823 = vld [vmem:[%s724 + $0x130] sm:$0xff]
        %v824 = vld [vmem:[%s724 + $0x138] sm:$0xff]
        %v825 = vld [vmem:[%s724 + $0x140] sm:$0xff]
        %v826 = vld [vmem:[%s724 + $0x148] sm:$0xff]
        %v827 = vld [vmem:[%s724 + $0x150] sm:$0xff]
        %v828 = vld [vmem:[%s724 + $0x158] sm:$0xff]
        %v829 = vld [vmem:[%s724 + $0x160] sm:$0xff]
        %v830 = vld [vmem:[%s724 + $0x168] sm:$0xff]
        %v831 = vld [vmem:[%s724 + $0x170] sm:$0xff]
        %v832 = vld [vmem:[%s724 + $0x178] sm:$0xff]
        %v833 = vld [vmem:[%s724 + $0x180] sm:$0xff]
        %v834 = vld [vmem:[%s724 + $0x188] sm:$0xff]
        %v835 = vld [vmem:[%s724 + $0x190] sm:$0xff]
        %v836 = vld [vmem:[%s724 + $0x198] sm:$0xff]
        %v837 = vld [vmem:[%s724 + $0x1a0] sm:$0xff]
        %v838 = vld [vmem:[%s724 + $0x1a8] sm:$0xff]
        %v839 = vld [vmem:[%s724 + $0x1b0] sm:$0xff]
        %v840 = vld [vmem:[%s724 + $0x1b8] sm:$0xff]
        %v841 = vld [vmem:[%s724 + $0x1c0] sm:$0xff]
        %v842 = vld [vmem:[%s724 + $0x1c8] sm:$0xff]
        %v843 = vld [vmem:[%s724 + $0x1d0] sm:$0xff]
        %v844 = vld [vmem:[%s724 + $0x1d8] sm:$0xff]
        %v845 = vld [vmem:[%s724 + $0x1e0] sm:$0xff]
        %v846 = vld [vmem:[%s724 + $0x1e8] sm:$0xff]
        %v847 = vld [vmem:[%s724 + $0x1f0] sm:$0xff]
        %v848 = vld [vmem:[%s724 + $0x1f8] sm:$0xff]
        %v849 = vld [vmem:[%s724 + $0x200] sm:$0xff]
        %v850 = vld [vmem:[%s724 + $0x208] sm:$0xff]
        %v851 = vld [vmem:[%s724 + $0x210] sm:$0xff]
        %v852 = vld [vmem:[%s724 + $0x218] sm:$0xff]
        %v853 = vld [vmem:[%s724 + $0x220] sm:$0xff]
        %v854 = vld [vmem:[%s724 + $0x228] sm:$0xff]
        %v855 = vld [vmem:[%s724 + $0x230] sm:$0xff]
        %v856 = vld [vmem:[%s724 + $0x238] sm:$0xff]
        %v857 = vld [vmem:[%s724 + $0x240] sm:$0xff]
        %v858 = vld [vmem:[%s724 + $0x248] sm:$0xff]
        %v859 = vld [vmem:[%s724 + $0x250] sm:$0xff]
        %v860 = vld [vmem:[%s724 + $0x258] sm:$0xff]
        %v861 = vld [vmem:[%s724 + $0x260] sm:$0xff]
        %v862 = vld [vmem:[%s724 + $0x268] sm:$0xff]
        %v863 = vld [vmem:[%s724 + $0x270] sm:$0xff]
        %v864 = vld [vmem:[%s724 + $0x278] sm:$0xff]
        %v865 = vld [vmem:[%s724 + $0x280] sm:$0xff]
        %v866 = vld [vmem:[%s724 + $0x288] sm:$0xff]
        %v867 = vld [vmem:[%s724 + $0x290] sm:$0xff]
        %v868 = vld [vmem:[%s724 + $0x298] sm:$0xff]
        %v869 = vld [vmem:[%s724 + $0x2a0] sm:$0xff]
        %v870 = vld [vmem:[%s724 + $0x2a8] sm:$0xff]
        %v871 = vld [vmem:[%s724 + $0x2b0] sm:$0xff]
        %v872 = vld [vmem:[%s724 + $0x2b8] sm:$0xff]
        %v873 = vld [vmem:[%s724 + $0x2c0] sm:$0xff]
        %v874 = vld [vmem:[%s724 + $0x2c8] sm:$0xff]
        %v875 = vld [vmem:[%s724 + $0x2d0] sm:$0xff]
        %v876 = vld [vmem:[%s724 + $0x2d8] sm:$0xff]
        %v877 = vld [vmem:[%s724 + $0x2e0] sm:$0xff]
        %v878 = vld [vmem:[%s724 + $0x2e8] sm:$0xff]
        %v879 = vld [vmem:[%s724 + $0x2f0] sm:$0xff]
        %v880 = vld [vmem:[%s724 + $0x2f8] sm:$0xff]
        %v881 = vld [vmem:[%s724 + $0x300] sm:$0xff]
        %v882 = vld [vmem:[%s724 + $0x308] sm:$0xff]
        %v883 = vld [vmem:[%s724 + $0x310] sm:$0xff]
        %v884 = vld [vmem:[%s724 + $0x318] sm:$0xff]
        %v885 = vld [vmem:[%s724 + $0x320] sm:$0xff]
        %v886 = vld [vmem:[%s724 + $0x328] sm:$0xff]
        %v887 = vld [vmem:[%s724 + $0x330] sm:$0xff]
        %v888 = vld [vmem:[%s724 + $0x338] sm:$0xff]
        %v889 = vld [vmem:[%s724 + $0x340] sm:$0xff]
        %v890 = vld [vmem:[%s724 + $0x348] sm:$0xff]
        %v891 = vld [vmem:[%s724 + $0x350] sm:$0xff]
        %v892 = vld [vmem:[%s724 + $0x358] sm:$0xff]
        %v893 = vld [vmem:[%s724 + $0x360] sm:$0xff]
        %v894 = vld [vmem:[%s724 + $0x368] sm:$0xff]
        %v895 = vld [vmem:[%s724 + $0x370] sm:$0xff]
        %v896 = vld [vmem:[%s724 + $0x378] sm:$0xff]
        %v897 = vld [vmem:[%s724 + $0x380] sm:$0xff]
        %v898 = vld [vmem:[%s724 + $0x388] sm:$0xff]
        %v899 = vld [vmem:[%s724 + $0x390] sm:$0xff]
        %v900 = vld [vmem:[%s724 + $0x398] sm:$0xff]
        %v901 = vld [vmem:[%s724 + $0x3a0] sm:$0xff]
        %v902 = vld [vmem:[%s724 + $0x3a8] sm:$0xff]
        %v903 = vld [vmem:[%s724 + $0x3b0] sm:$0xff]
        %v904 = vld [vmem:[%s724 + $0x3b8] sm:$0xff]
        %v905 = vld [vmem:[%s724 + $0x3c0] sm:$0xff]
        %v906 = vld [vmem:[%s724 + $0x3c8] sm:$0xff]
        %v907 = vld [vmem:[%s724 + $0x3d0] sm:$0xff]
        %v908 = vld [vmem:[%s724 + $0x3d8] sm:$0xff]
        %v909 = vld [vmem:[%s724 + $0x3e0] sm:$0xff]
        %v910 = vld [vmem:[%s724 + $0x3e8] sm:$0xff]
        %v911 = vld [vmem:[%s724 + $0x3f0] sm:$0xff]
        %v912 = vld [vmem:[%s724 + $0x3f8] sm:$0xff]
        %v913 = vld [vmem:[%s765] sm:$0x3]
        %v915 = vlaneseq
        %v916 = vshrl.u32 %v915, 7
        %v917 = vsub.s32 0, %v916
        %v918 = vrot.slane %v913, %v917
        %v919 = vlaneseq
        %v920 = vshrl.u32 %v919, 7
        %v921 = vsub.s32 1, %v920
        %v922 = vrot.slane %v913, %v921
        %v941 = vunpack.c.l.b16 %v769
        %v942 = vunpack.c.h.b16 %v769
        %v943 = vunpack.c.l.b16 %v770
        %v944 = vunpack.c.h.b16 %v770
        %v945 = vunpack.c.l.b16 %v771
        %v946 = vunpack.c.h.b16 %v771
        %v947 = vunpack.c.l.b16 %v772
        %v948 = vunpack.c.h.b16 %v772
        %v949 = vunpack.c.l.b16 %v773
        %v950 = vunpack.c.h.b16 %v773
        %v951 = vunpack.c.l.b16 %v774
        %v952 = vunpack.c.h.b16 %v774
        %v953 = vunpack.c.l.b16 %v775
        %v954 = vunpack.c.h.b16 %v775
        %v955 = vunpack.c.l.b16 %v776
        %v956 = vunpack.c.h.b16 %v776
        %v957 = vunpack.c.l.b16 %v777
        %v958 = vunpack.c.h.b16 %v777
        %v959 = vunpack.c.l.b16 %v778
        %v960 = vunpack.c.h.b16 %v778
        %v961 = vunpack.c.l.b16 %v779
        %v962 = vunpack.c.h.b16 %v779
        %v963 = vunpack.c.l.b16 %v780
        %v964 = vunpack.c.h.b16 %v780
        %v965 = vunpack.c.l.b16 %v781
        %v966 = vunpack.c.h.b16 %v781
        %v967 = vunpack.c.l.b16 %v782
        %v968 = vunpack.c.h.b16 %v782
        %v969 = vunpack.c.l.b16 %v783
        %v970 = vunpack.c.h.b16 %v783
        %v971 = vunpack.c.l.b16 %v784
        %v972 = vunpack.c.h.b16 %v784
        %v973 = vpack.c.b16 %v949, %v941
        %v974 = vpack.c.b16 %v950, %v942
        %v975 = vpack.c.b16 %v951, %v943
        %v976 = vpack.c.b16 %v952, %v944
        %v977 = vpack.c.b16 %v953, %v945
        %v978 = vpack.c.b16 %v954, %v946
        %v979 = vpack.c.b16 %v955, %v947
        %v980 = vpack.c.b16 %v956, %v948
        %v981 = vpack.c.b16 %v965, %v957
        %v982 = vpack.c.b16 %v966, %v958
        %v983 = vpack.c.b16 %v967, %v959
        %v984 = vpack.c.b16 %v968, %v960
        %v985 = vpack.c.b16 %v969, %v961
        %v986 = vpack.c.b16 %v970, %v962
        %v987 = vpack.c.b16 %v971, %v963
        %v988 = vpack.c.b16 %v972, %v964
        %v1133 = vunpack.c.l.b16 %v785
        %v1134 = vunpack.c.h.b16 %v785
        %v1135 = vunpack.c.l.b16 %v786
        %v1136 = vunpack.c.h.b16 %v786
        %v1137 = vunpack.c.l.b16 %v787
        %v1138 = vunpack.c.h.b16 %v787
        %v1139 = vunpack.c.l.b16 %v788
        %v1140 = vunpack.c.h.b16 %v788
        %v1141 = vunpack.c.l.b16 %v789
        %v1142 = vunpack.c.h.b16 %v789
        %v1143 = vunpack.c.l.b16 %v790
        %v1144 = vunpack.c.h.b16 %v790
        %v1145 = vunpack.c.l.b16 %v791
        %v1146 = vunpack.c.h.b16 %v791
        %v1147 = vunpack.c.l.b16 %v792
        %v1148 = vunpack.c.h.b16 %v792
        %v1149 = vunpack.c.l.b16 %v793
        %v1150 = vunpack.c.h.b16 %v793
        %v1151 = vunpack.c.l.b16 %v794
        %v1152 = vunpack.c.h.b16 %v794
        %v1153 = vunpack.c.l.b16 %v795
        %v1154 = vunpack.c.h.b16 %v795
        %v1155 = vunpack.c.l.b16 %v796
        %v1156 = vunpack.c.h.b16 %v796
        %v1157 = vunpack.c.l.b16 %v797
        %v1158 = vunpack.c.h.b16 %v797
        %v1159 = vunpack.c.l.b16 %v798
        %v1160 = vunpack.c.h.b16 %v798
        %v1161 = vunpack.c.l.b16 %v799
        %v1162 = vunpack.c.h.b16 %v799
        %v1163 = vunpack.c.l.b16 %v800
        %v1164 = vunpack.c.h.b16 %v800
        %v1165 = vunpack.c.l.b16 %v801
        %v1166 = vunpack.c.h.b16 %v801
        %v1167 = vunpack.c.l.b16 %v802
        %v1168 = vunpack.c.h.b16 %v802
        %v1169 = vunpack.c.l.b16 %v803
        %v1170 = vunpack.c.h.b16 %v803
        %v1171 = vunpack.c.l.b16 %v804
        %v1172 = vunpack.c.h.b16 %v804
        %v1173 = vunpack.c.l.b16 %v805
        %v1174 = vunpack.c.h.b16 %v805
        %v1175 = vunpack.c.l.b16 %v806
        %v1176 = vunpack.c.h.b16 %v806
        %v1177 = vunpack.c.l.b16 %v807
        %v1178 = vunpack.c.h.b16 %v807
        %v1179 = vunpack.c.l.b16 %v808
        %v1180 = vunpack.c.h.b16 %v808
        %v1181 = vunpack.c.l.b16 %v809
        %v1182 = vunpack.c.h.b16 %v809
        %v1183 = vunpack.c.l.b16 %v810
        %v1184 = vunpack.c.h.b16 %v810
        %v1185 = vunpack.c.l.b16 %v811
        %v1186 = vunpack.c.h.b16 %v811
        %v1187 = vunpack.c.l.b16 %v812
        %v1188 = vunpack.c.h.b16 %v812
        %v1189 = vunpack.c.l.b16 %v813
        %v1190 = vunpack.c.h.b16 %v813
        %v1191 = vunpack.c.l.b16 %v814
        %v1192 = vunpack.c.h.b16 %v814
        %v1193 = vunpack.c.l.b16 %v815
        %v1194 = vunpack.c.h.b16 %v815
        %v1195 = vunpack.c.l.b16 %v816
        %v1196 = vunpack.c.h.b16 %v816
        %v1197 = vunpack.c.l.b16 %v817
        %v1198 = vunpack.c.h.b16 %v817
        %v1199 = vunpack.c.l.b16 %v818
        %v1200 = vunpack.c.h.b16 %v818
        %v1201 = vunpack.c.l.b16 %v819
        %v1202 = vunpack.c.h.b16 %v819
        %v1203 = vunpack.c.l.b16 %v820
        %v1204 = vunpack.c.h.b16 %v820
        %v1205 = vunpack.c.l.b16 %v821
        %v1206 = vunpack.c.h.b16 %v821
        %v1207 = vunpack.c.l.b16 %v822
        %v1208 = vunpack.c.h.b16 %v822
        %v1209 = vunpack.c.l.b16 %v823
        %v1210 = vunpack.c.h.b16 %v823
        %v1211 = vunpack.c.l.b16 %v824
        %v1212 = vunpack.c.h.b16 %v824
        %v1213 = vunpack.c.l.b16 %v825
        %v1214 = vunpack.c.h.b16 %v825
        %v1215 = vunpack.c.l.b16 %v826
        %v1216 = vunpack.c.h.b16 %v826
        %v1217 = vunpack.c.l.b16 %v827
        %v1218 = vunpack.c.h.b16 %v827
        %v1219 = vunpack.c.l.b16 %v828
        %v1220 = vunpack.c.h.b16 %v828
        %v1221 = vunpack.c.l.b16 %v829
        %v1222 = vunpack.c.h.b16 %v829
        %v1223 = vunpack.c.l.b16 %v830
        %v1224 = vunpack.c.h.b16 %v830
        %v1225 = vunpack.c.l.b16 %v831
        %v1226 = vunpack.c.h.b16 %v831
        %v1227 = vunpack.c.l.b16 %v832
        %v1228 = vunpack.c.h.b16 %v832
        %v1229 = vunpack.c.l.b16 %v833
        %v1230 = vunpack.c.h.b16 %v833
        %v1231 = vunpack.c.l.b16 %v834
        %v1232 = vunpack.c.h.b16 %v834
        %v1233 = vunpack.c.l.b16 %v835
        %v1234 = vunpack.c.h.b16 %v835
        %v1235 = vunpack.c.l.b16 %v836
        %v1236 = vunpack.c.h.b16 %v836
        %v1237 = vunpack.c.l.b16 %v837
        %v1238 = vunpack.c.h.b16 %v837
        %v1239 = vunpack.c.l.b16 %v838
        %v1240 = vunpack.c.h.b16 %v838
        %v1241 = vunpack.c.l.b16 %v839
        %v1242 = vunpack.c.h.b16 %v839
        %v1243 = vunpack.c.l.b16 %v840
        %v1244 = vunpack.c.h.b16 %v840
        %v1245 = vunpack.c.l.b16 %v841
        %v1246 = vunpack.c.h.b16 %v841
        %v1247 = vunpack.c.l.b16 %v842
        %v1248 = vunpack.c.h.b16 %v842
        %v1249 = vunpack.c.l.b16 %v843
        %v1250 = vunpack.c.h.b16 %v843
        %v1251 = vunpack.c.l.b16 %v844
        %v1252 = vunpack.c.h.b16 %v844
        %v1253 = vunpack.c.l.b16 %v845
        %v1254 = vunpack.c.h.b16 %v845
        %v1255 = vunpack.c.l.b16 %v846
        %v1256 = vunpack.c.h.b16 %v846
        %v1257 = vunpack.c.l.b16 %v847
        %v1258 = vunpack.c.h.b16 %v847
        %v1259 = vunpack.c.l.b16 %v848
        %v1260 = vunpack.c.h.b16 %v848
        %v1261 = vunpack.c.l.b16 %v849
        %v1262 = vunpack.c.h.b16 %v849
        %v1263 = vunpack.c.l.b16 %v850
        %v1264 = vunpack.c.h.b16 %v850
        %v1265 = vunpack.c.l.b16 %v851
        %v1266 = vunpack.c.h.b16 %v851
        %v1267 = vunpack.c.l.b16 %v852
        %v1268 = vunpack.c.h.b16 %v852
        %v1269 = vunpack.c.l.b16 %v853
        %v1270 = vunpack.c.h.b16 %v853
        %v1271 = vunpack.c.l.b16 %v854
        %v1272 = vunpack.c.h.b16 %v854
        %v1273 = vunpack.c.l.b16 %v855
        %v1274 = vunpack.c.h.b16 %v855
        %v1275 = vunpack.c.l.b16 %v856
        %v1276 = vunpack.c.h.b16 %v856
        %v1277 = vunpack.c.l.b16 %v857
        %v1278 = vunpack.c.h.b16 %v857
        %v1279 = vunpack.c.l.b16 %v858
        %v1280 = vunpack.c.h.b16 %v858
        %v1281 = vunpack.c.l.b16 %v859
        %v1282 = vunpack.c.h.b16 %v859
        %v1283 = vunpack.c.l.b16 %v860
        %v1284 = vunpack.c.h.b16 %v860
        %v1285 = vunpack.c.l.b16 %v861
        %v1286 = vunpack.c.h.b16 %v861
        %v1287 = vunpack.c.l.b16 %v862
        %v1288 = vunpack.c.h.b16 %v862
        %v1289 = vunpack.c.l.b16 %v863
        %v1290 = vunpack.c.h.b16 %v863
        %v1291 = vunpack.c.l.b16 %v864
        %v1292 = vunpack.c.h.b16 %v864
        %v1293 = vunpack.c.l.b16 %v865
        %v1294 = vunpack.c.h.b16 %v865
        %v1295 = vunpack.c.l.b16 %v866
        %v1296 = vunpack.c.h.b16 %v866
        %v1297 = vunpack.c.l.b16 %v867
        %v1298 = vunpack.c.h.b16 %v867
        %v1299 = vunpack.c.l.b16 %v868
        %v1300 = vunpack.c.h.b16 %v868
        %v1301 = vunpack.c.l.b16 %v869
        %v1302 = vunpack.c.h.b16 %v869
        %v1303 = vunpack.c.l.b16 %v870
        %v1304 = vunpack.c.h.b16 %v870
        %v1305 = vunpack.c.l.b16 %v871
        %v1306 = vunpack.c.h.b16 %v871
        %v1307 = vunpack.c.l.b16 %v872
        %v1308 = vunpack.c.h.b16 %v872
        %v1309 = vunpack.c.l.b16 %v873
        %v1310 = vunpack.c.h.b16 %v873
        %v1311 = vunpack.c.l.b16 %v874
        %v1312 = vunpack.c.h.b16 %v874
        %v1313 = vunpack.c.l.b16 %v875
        %v1314 = vunpack.c.h.b16 %v875
        %v1315 = vunpack.c.l.b16 %v876
        %v1316 = vunpack.c.h.b16 %v876
        %v1317 = vunpack.c.l.b16 %v877
        %v1318 = vunpack.c.h.b16 %v877
        %v1319 = vunpack.c.l.b16 %v878
        %v1320 = vunpack.c.h.b16 %v878
        %v1321 = vunpack.c.l.b16 %v879
        %v1322 = vunpack.c.h.b16 %v879
        %v1323 = vunpack.c.l.b16 %v880
        %v1324 = vunpack.c.h.b16 %v880
        %v1325 = vunpack.c.l.b16 %v881
        %v1326 = vunpack.c.h.b16 %v881
        %v1327 = vunpack.c.l.b16 %v882
        %v1328 = vunpack.c.h.b16 %v882
        %v1329 = vunpack.c.l.b16 %v883
        %v1330 = vunpack.c.h.b16 %v883
        %v1331 = vunpack.c.l.b16 %v884
        %v1332 = vunpack.c.h.b16 %v884
        %v1333 = vunpack.c.l.b16 %v885
        %v1334 = vunpack.c.h.b16 %v885
        %v1335 = vunpack.c.l.b16 %v886
        %v1336 = vunpack.c.h.b16 %v886
        %v1337 = vunpack.c.l.b16 %v887
        %v1338 = vunpack.c.h.b16 %v887
        %v1339 = vunpack.c.l.b16 %v888
        %v1340 = vunpack.c.h.b16 %v888
        %v1341 = vunpack.c.l.b16 %v889
        %v1342 = vunpack.c.h.b16 %v889
        %v1343 = vunpack.c.l.b16 %v890
        %v1344 = vunpack.c.h.b16 %v890
        %v1345 = vunpack.c.l.b16 %v891
        %v1346 = vunpack.c.h.b16 %v891
        %v1347 = vunpack.c.l.b16 %v892
        %v1348 = vunpack.c.h.b16 %v892
        %v1349 = vunpack.c.l.b16 %v893
        %v1350 = vunpack.c.h.b16 %v893
        %v1351 = vunpack.c.l.b16 %v894
        %v1352 = vunpack.c.h.b16 %v894
        %v1353 = vunpack.c.l.b16 %v895
        %v1354 = vunpack.c.h.b16 %v895
        %v1355 = vunpack.c.l.b16 %v896
        %v1356 = vunpack.c.h.b16 %v896
        %v1357 = vunpack.c.l.b16 %v897
        %v1358 = vunpack.c.h.b16 %v897
        %v1359 = vunpack.c.l.b16 %v898
        %v1360 = vunpack.c.h.b16 %v898
        %v1361 = vunpack.c.l.b16 %v899
        %v1362 = vunpack.c.h.b16 %v899
        %v1363 = vunpack.c.l.b16 %v900
        %v1364 = vunpack.c.h.b16 %v900
        %v1365 = vunpack.c.l.b16 %v901
        %v1366 = vunpack.c.h.b16 %v901
        %v1367 = vunpack.c.l.b16 %v902
        %v1368 = vunpack.c.h.b16 %v902
        %v1369 = vunpack.c.l.b16 %v903
        %v1370 = vunpack.c.h.b16 %v903
        %v1371 = vunpack.c.l.b16 %v904
        %v1372 = vunpack.c.h.b16 %v904
        %v1373 = vunpack.c.l.b16 %v905
        %v1374 = vunpack.c.h.b16 %v905
        %v1375 = vunpack.c.l.b16 %v906
        %v1376 = vunpack.c.h.b16 %v906
        %v1377 = vunpack.c.l.b16 %v907
        %v1378 = vunpack.c.h.b16 %v907
        %v1379 = vunpack.c.l.b16 %v908
        %v1380 = vunpack.c.h.b16 %v908
        %v1381 = vunpack.c.l.b16 %v909
        %v1382 = vunpack.c.h.b16 %v909
        %v1383 = vunpack.c.l.b16 %v910
        %v1384 = vunpack.c.h.b16 %v910
        %v1385 = vunpack.c.l.b16 %v911
        %v1386 = vunpack.c.h.b16 %v911
        %v1387 = vunpack.c.l.b16 %v912
        %v1388 = vunpack.c.h.b16 %v912
        %v1389 = vpack.c.b16 %v1135, %v1133
        %v1390 = vpack.c.b16 %v1136, %v1134
        %v1391 = vpack.c.b16 %v1139, %v1137
        %v1392 = vpack.c.b16 %v1140, %v1138
        %v1393 = vpack.c.b16 %v1143, %v1141
        %v1394 = vpack.c.b16 %v1144, %v1142
        %v1395 = vpack.c.b16 %v1147, %v1145
        %v1396 = vpack.c.b16 %v1148, %v1146
        %v1397 = vpack.c.b16 %v1151, %v1149
        %v1398 = vpack.c.b16 %v1152, %v1150
        %v1399 = vpack.c.b16 %v1155, %v1153
        %v1400 = vpack.c.b16 %v1156, %v1154
        %v1401 = vpack.c.b16 %v1159, %v1157
        %v1402 = vpack.c.b16 %v1160, %v1158
        %v1403 = vpack.c.b16 %v1163, %v1161
        %v1404 = vpack.c.b16 %v1164, %v1162
        %v1405 = vpack.c.b16 %v1167, %v1165
        %v1406 = vpack.c.b16 %v1168, %v1166
        %v1407 = vpack.c.b16 %v1171, %v1169
        %v1408 = vpack.c.b16 %v1172, %v1170
        %v1409 = vpack.c.b16 %v1175, %v1173
        %v1410 = vpack.c.b16 %v1176, %v1174
        %v1411 = vpack.c.b16 %v1179, %v1177
        %v1412 = vpack.c.b16 %v1180, %v1178
        %v1413 = vpack.c.b16 %v1183, %v1181
        %v1414 = vpack.c.b16 %v1184, %v1182
        %v1415 = vpack.c.b16 %v1187, %v1185
        %v1416 = vpack.c.b16 %v1188, %v1186
        %v1417 = vpack.c.b16 %v1191, %v1189
        %v1418 = vpack.c.b16 %v1192, %v1190
        %v1419 = vpack.c.b16 %v1195, %v1193
        %v1420 = vpack.c.b16 %v1196, %v1194
        %v1421 = vpack.c.b16 %v1199, %v1197
        %v1422 = vpack.c.b16 %v1200, %v1198
        %v1423 = vpack.c.b16 %v1203, %v1201
        %v1424 = vpack.c.b16 %v1204, %v1202
        %v1425 = vpack.c.b16 %v1207, %v1205
        %v1426 = vpack.c.b16 %v1208, %v1206
        %v1427 = vpack.c.b16 %v1211, %v1209
        %v1428 = vpack.c.b16 %v1212, %v1210
        %v1429 = vpack.c.b16 %v1215, %v1213
        %v1430 = vpack.c.b16 %v1216, %v1214
        %v1431 = vpack.c.b16 %v1219, %v1217
        %v1432 = vpack.c.b16 %v1220, %v1218
        %v1433 = vpack.c.b16 %v1223, %v1221
        %v1434 = vpack.c.b16 %v1224, %v1222
        %v1435 = vpack.c.b16 %v1227, %v1225
        %v1436 = vpack.c.b16 %v1228, %v1226
        %v1437 = vpack.c.b16 %v1231, %v1229
        %v1438 = vpack.c.b16 %v1232, %v1230
        %v1439 = vpack.c.b16 %v1235, %v1233
        %v1440 = vpack.c.b16 %v1236, %v1234
        %v1441 = vpack.c.b16 %v1239, %v1237
        %v1442 = vpack.c.b16 %v1240, %v1238
        %v1443 = vpack.c.b16 %v1243, %v1241
        %v1444 = vpack.c.b16 %v1244, %v1242
        %v1445 = vpack.c.b16 %v1247, %v1245
        %v1446 = vpack.c.b16 %v1248, %v1246
        %v1447 = vpack.c.b16 %v1251, %v1249
        %v1448 = vpack.c.b16 %v1252, %v1250
        %v1449 = vpack.c.b16 %v1255, %v1253
        %v1450 = vpack.c.b16 %v1256, %v1254
        %v1451 = vpack.c.b16 %v1259, %v1257
        %v1452 = vpack.c.b16 %v1260, %v1258
        %v1453 = vpack.c.b16 %v1263, %v1261
        %v1454 = vpack.c.b16 %v1264, %v1262
        %v1455 = vpack.c.b16 %v1267, %v1265
        %v1456 = vpack.c.b16 %v1268, %v1266
        %v1457 = vpack.c.b16 %v1271, %v1269
        %v1458 = vpack.c.b16 %v1272, %v1270
        %v1459 = vpack.c.b16 %v1275, %v1273
        %v1460 = vpack.c.b16 %v1276, %v1274
        %v1461 = vpack.c.b16 %v1279, %v1277
        %v1462 = vpack.c.b16 %v1280, %v1278
        %v1463 = vpack.c.b16 %v1283, %v1281
        %v1464 = vpack.c.b16 %v1284, %v1282
        %v1465 = vpack.c.b16 %v1287, %v1285
        %v1466 = vpack.c.b16 %v1288, %v1286
        %v1467 = vpack.c.b16 %v1291, %v1289
        %v1468 = vpack.c.b16 %v1292, %v1290
        %v1469 = vpack.c.b16 %v1295, %v1293
        %v1470 = vpack.c.b16 %v1296, %v1294
        %v1471 = vpack.c.b16 %v1299, %v1297
        %v1472 = vpack.c.b16 %v1300, %v1298
        %v1473 = vpack.c.b16 %v1303, %v1301
        %v1474 = vpack.c.b16 %v1304, %v1302
        %v1475 = vpack.c.b16 %v1307, %v1305
        %v1476 = vpack.c.b16 %v1308, %v1306
        %v1477 = vpack.c.b16 %v1311, %v1309
        %v1478 = vpack.c.b16 %v1312, %v1310
        %v1479 = vpack.c.b16 %v1315, %v1313
        %v1480 = vpack.c.b16 %v1316, %v1314
        %v1481 = vpack.c.b16 %v1319, %v1317
        %v1482 = vpack.c.b16 %v1320, %v1318
        %v1483 = vpack.c.b16 %v1323, %v1321
        %v1484 = vpack.c.b16 %v1324, %v1322
        %v1485 = vpack.c.b16 %v1327, %v1325
        %v1486 = vpack.c.b16 %v1328, %v1326
        %v1487 = vpack.c.b16 %v1331, %v1329
        %v1488 = vpack.c.b16 %v1332, %v1330
        %v1489 = vpack.c.b16 %v1335, %v1333
        %v1490 = vpack.c.b16 %v1336, %v1334
        %v1491 = vpack.c.b16 %v1339, %v1337
        %v1492 = vpack.c.b16 %v1340, %v1338
        %v1493 = vpack.c.b16 %v1343, %v1341
        %v1494 = vpack.c.b16 %v1344, %v1342
        %v1495 = vpack.c.b16 %v1347, %v1345
        %v1496 = vpack.c.b16 %v1348, %v1346
        %v1497 = vpack.c.b16 %v1351, %v1349
        %v1498 = vpack.c.b16 %v1352, %v1350
        %v1499 = vpack.c.b16 %v1355, %v1353
        %v1500 = vpack.c.b16 %v1356, %v1354
        %v1501 = vpack.c.b16 %v1359, %v1357
        %v1502 = vpack.c.b16 %v1360, %v1358
        %v1503 = vpack.c.b16 %v1363, %v1361
        %v1504 = vpack.c.b16 %v1364, %v1362
        %v1505 = vpack.c.b16 %v1367, %v1365
        %v1506 = vpack.c.b16 %v1368, %v1366
        %v1507 = vpack.c.b16 %v1371, %v1369
        %v1508 = vpack.c.b16 %v1372, %v1370
        %v1509 = vpack.c.b16 %v1375, %v1373
        %v1510 = vpack.c.b16 %v1376, %v1374
        %v1511 = vpack.c.b16 %v1379, %v1377
        %v1512 = vpack.c.b16 %v1380, %v1378
        %v1513 = vpack.c.b16 %v1383, %v1381
        %v1514 = vpack.c.b16 %v1384, %v1382
        %v1515 = vpack.c.b16 %v1387, %v1385
        %v1516 = vpack.c.b16 %v1388, %v1386
        %1645 = vmatprep.subr.bf16.mxu0 %v1390
        %1646 = vmatpush1.bf16.msra.mxu0 %v1389
        %1647 = vmatprep.subr.bf16.mxu0 %v1392
        %1648 = vmatpush1.bf16.msra.mxu0 %v1391
        %1649 = vmatprep.subr.bf16.mxu0 %v1394
        %1650 = vmatpush1.bf16.msra.mxu0 %v1393
        %1651 = vmatprep.subr.bf16.mxu0 %v1396
        %1652 = vmatpush1.bf16.msra.mxu0 %v1395
        %1653 = vmatprep.subr.bf16.mxu0 %v1398
        %1654 = vmatpush1.bf16.msra.mxu0 %v1397
        %1655 = vmatprep.subr.bf16.mxu0 %v1400
        %1656 = vmatpush1.bf16.msra.mxu0 %v1399
        %1657 = vmatprep.subr.bf16.mxu0 %v1402
        %1658 = vmatpush1.bf16.msra.mxu0 %v1401
        %1659 = vmatprep.subr.bf16.mxu0 %v1404
        %1660 = vmatpush1.bf16.msra.mxu0 %v1403
        %1661 = vmatprep.subr.bf16.mxu0 %v1406
        %1662 = vmatpush1.bf16.msra.mxu0 %v1405
        %1663 = vmatprep.subr.bf16.mxu0 %v1408
        %1664 = vmatpush1.bf16.msra.mxu0 %v1407
        %1665 = vmatprep.subr.bf16.mxu0 %v1410
        %1666 = vmatpush1.bf16.msra.mxu0 %v1409
        %1667 = vmatprep.subr.bf16.mxu0 %v1412
        %1668 = vmatpush1.bf16.msra.mxu0 %v1411
        %1669 = vmatprep.subr.bf16.mxu0 %v1414
        %1670 = vmatpush1.bf16.msra.mxu0 %v1413
        %1671 = vmatprep.subr.bf16.mxu0 %v1416
        %1672 = vmatpush1.bf16.msra.mxu0 %v1415
        %1673 = vmatprep.subr.bf16.mxu0 %v1418
        %1674 = vmatpush1.bf16.msra.mxu0 %v1417
        %1675 = vmatprep.subr.bf16.mxu0 %v1420
        %1676 = vmatpush1.bf16.msra.mxu0 %v1419
        %1677 = vmatprep.mubr.bf16.mxu0 %v974
        %1678 = vmatmul.mubr.bf16.gmra.mrb[0].mxu0 %v973
        %v1679 = vpop.f32.mrb[0].mxu0
        %v1680 = vadd.f32 %v918, %v1679
        %v1681 = vpop.f32.mrb[0].mxu0
        %v1682 = vadd.f32 %v922, %v1681
        %v1683 = vpop.f32.mrb[0].mxu0
        %v1684 = vadd.f32 %v918, %v1683
        %v1685 = vpop.f32.mrb[0].mxu0
        %v1686 = vadd.f32 %v922, %v1685
        %1687 = vmatprep.mubr.bf16.mxu0 %v982
        %1688 = vmatmul.mubr.bf16.gmra.mrb[0].mxu0 %v981
        %v1689 = vpop.f32.mrb[0].mxu0
        %v1690 = vadd.f32 %v918, %v1689
        %v1691 = vpop.f32.mrb[0].mxu0
        %v1692 = vadd.f32 %v922, %v1691
        %v1693 = vpop.f32.mrb[0].mxu0
        %v1694 = vadd.f32 %v918, %v1693
        %v1695 = vpop.f32.mrb[0].mxu0
        %v1696 = vadd.f32 %v922, %v1695
        %1697 = vdwg.mxu0
        %1698 = vmatprep.subr.bf16.mxu0 %v1422
        %1699 = vmatpush1.bf16.msra.mxu0 %v1421
        %1700 = vmatprep.subr.bf16.mxu0 %v1424
        %1701 = vmatpush1.bf16.msra.mxu0 %v1423
        %1702 = vmatprep.subr.bf16.mxu0 %v1426
        %1703 = vmatpush1.bf16.msra.mxu0 %v1425
        %1704 = vmatprep.subr.bf16.mxu0 %v1428
        %1705 = vmatpush1.bf16.msra.mxu0 %v1427
        %1706 = vmatprep.subr.bf16.mxu0 %v1430
        %1707 = vmatpush1.bf16.msra.mxu0 %v1429
        %1708 = vmatprep.subr.bf16.mxu0 %v1432
        %1709 = vmatpush1.bf16.msra.mxu0 %v1431
        %1710 = vmatprep.subr.bf16.mxu0 %v1434
        %1711 = vmatpush1.bf16.msra.mxu0 %v1433
        %1712 = vmatprep.subr.bf16.mxu0 %v1436
        %1713 = vmatpush1.bf16.msra.mxu0 %v1435
        %1714 = vmatprep.subr.bf16.mxu0 %v1438
        %1715 = vmatpush1.bf16.msra.mxu0 %v1437
        %1716 = vmatprep.subr.bf16.mxu0 %v1440
        %1717 = vmatpush1.bf16.msra.mxu0 %v1439
        %1718 = vmatprep.subr.bf16.mxu0 %v1442
        %1719 = vmatpush1.bf16.msra.mxu0 %v1441
        %1720 = vmatprep.subr.bf16.mxu0 %v1444
        %1721 = vmatpush1.bf16.msra.mxu0 %v1443
        %1722 = vmatprep.subr.bf16.mxu0 %v1446
        %1723 = vmatpush1.bf16.msra.mxu0 %v1445
        %1724 = vmatprep.subr.bf16.mxu0 %v1448
        %1725 = vmatpush1.bf16.msra.mxu0 %v1447
        %1726 = vmatprep.subr.bf16.mxu0 %v1450
        %1727 = vmatpush1.bf16.msra.mxu0 %v1449
        %1728 = vmatprep.subr.bf16.mxu0 %v1452
        %1729 = vmatpush1.bf16.msra.mxu0 %v1451
        %1730 = vmatprep.mubr.bf16.mxu0 %v976
        %1731 = vmatmul.mubr.bf16.gmra.mrb[0].mxu0 %v975
        %v1732 = vpop.f32.mrb[0].mxu0
        %v1733 = vadd.f32 %v1680, %v1732
        %v1734 = vpop.f32.mrb[0].mxu0
        %v1735 = vadd.f32 %v1682, %v1734
        %v1736 = vpop.f32.mrb[0].mxu0
        %v1737 = vadd.f32 %v1684, %v1736
        %v1738 = vpop.f32.mrb[0].mxu0
        %v1739 = vadd.f32 %v1686, %v1738
        %1740 = vmatprep.mubr.bf16.mxu0 %v984
        %1741 = vmatmul.mubr.bf16.gmra.mrb[0].mxu0 %v983
        %v1742 = vpop.f32.mrb[0].mxu0
        %v1743 = vadd.f32 %v1690, %v1742
        %v1744 = vpop.f32.mrb[0].mxu0
        %v1745 = vadd.f32 %v1692, %v1744
        %v1746 = vpop.f32.mrb[0].mxu0
        %v1747 = vadd.f32 %v1694, %v1746
        %v1748 = vpop.f32.mrb[0].mxu0
        %v1749 = vadd.f32 %v1696, %v1748
        %1750 = vdwg.mxu0
        %1751 = vmatprep.subr.bf16.mxu0 %v1454
        %1752 = vmatpush1.bf16.msra.mxu0 %v1453
        %1753 = vmatprep.subr.bf16.mxu0 %v1456
        %1754 = vmatpush1.bf16.msra.mxu0 %v1455
        %1755 = vmatprep.subr.bf16.mxu0 %v1458
        %1756 = vmatpush1.bf16.msra.mxu0 %v1457
        %1757 = vmatprep.subr.bf16.mxu0 %v1460
        %1758 = vmatpush1.bf16.msra.mxu0 %v1459
        %1759 = vmatprep.subr.bf16.mxu0 %v1462
        %1760 = vmatpush1.bf16.msra.mxu0 %v1461
        %1761 = vmatprep.subr.bf16.mxu0 %v1464
        %1762 = vmatpush1.bf16.msra.mxu0 %v1463
        %1763 = vmatprep.subr.bf16.mxu0 %v1466
        %1764 = vmatpush1.bf16.msra.mxu0 %v1465
        %1765 = vmatprep.subr.bf16.mxu0 %v1468
        %1766 = vmatpush1.bf16.msra.mxu0 %v1467
        %1767 = vmatprep.subr.bf16.mxu0 %v1470
        %1768 = vmatpush1.bf16.msra.mxu0 %v1469
        %1769 = vmatprep.subr.bf16.mxu0 %v1472
        %1770 = vmatpush1.bf16.msra.mxu0 %v1471
        %1771 = vmatprep.subr.bf16.mxu0 %v1474
        %1772 = vmatpush1.bf16.msra.mxu0 %v1473
        %1773 = vmatprep.subr.bf16.mxu0 %v1476
        %1774 = vmatpush1.bf16.msra.mxu0 %v1475
        %1775 = vmatprep.subr.bf16.mxu0 %v1478
        %1776 = vmatpush1.bf16.msra.mxu0 %v1477
        %1777 = vmatprep.subr.bf16.mxu0 %v1480
        %1778 = vmatpush1.bf16.msra.mxu0 %v1479
        %1779 = vmatprep.subr.bf16.mxu0 %v1482
        %1780 = vmatpush1.bf16.msra.mxu0 %v1481
        %1781 = vmatprep.subr.bf16.mxu0 %v1484
        %1782 = vmatpush1.bf16.msra.mxu0 %v1483
        %1783 = vmatprep.mubr.bf16.mxu0 %v978
        %1784 = vmatmul.mubr.bf16.gmra.mrb[0].mxu0 %v977
        %v1785 = vpop.f32.mrb[0].mxu0
        %v1786 = vadd.f32 %v1733, %v1785
        %v1787 = vpop.f32.mrb[0].mxu0
        %v1788 = vadd.f32 %v1735, %v1787
        %v1789 = vpop.f32.mrb[0].mxu0
        %v1790 = vadd.f32 %v1737, %v1789
        %v1791 = vpop.f32.mrb[0].mxu0
        %v1792 = vadd.f32 %v1739, %v1791
        %1793 = vmatprep.mubr.bf16.mxu0 %v986
        %1794 = vmatmul.mubr.bf16.gmra.mrb[0].mxu0 %v985
        %v1795 = vpop.f32.mrb[0].mxu0
        %v1796 = vadd.f32 %v1743, %v1795
        %v1797 = vpop.f32.mrb[0].mxu0
        %v1798 = vadd.f32 %v1745, %v1797
        %v1799 = vpop.f32.mrb[0].mxu0
        %v1800 = vadd.f32 %v1747, %v1799
        %v1801 = vpop.f32.mrb[0].mxu0
        %v1802 = vadd.f32 %v1749, %v1801
        %1803 = vdwg.mxu0
        %1804 = vmatprep.subr.bf16.mxu0 %v1486
        %1805 = vmatpush1.bf16.msra.mxu0 %v1485
        %1806 = vmatprep.subr.bf16.mxu0 %v1488
        %1807 = vmatpush1.bf16.msra.mxu0 %v1487
        %1808 = vmatprep.subr.bf16.mxu0 %v1490
        %1809 = vmatpush1.bf16.msra.mxu0 %v1489
        %1810 = vmatprep.subr.bf16.mxu0 %v1492
        %1811 = vmatpush1.bf16.msra.mxu0 %v1491
        %1812 = vmatprep.subr.bf16.mxu0 %v1494
        %1813 = vmatpush1.bf16.msra.mxu0 %v1493
        %1814 = vmatprep.subr.bf16.mxu0 %v1496
        %1815 = vmatpush1.bf16.msra.mxu0 %v1495
        %1816 = vmatprep.subr.bf16.mxu0 %v1498
        %1817 = vmatpush1.bf16.msra.mxu0 %v1497
        %1818 = vmatprep.subr.bf16.mxu0 %v1500
        %1819 = vmatpush1.bf16.msra.mxu0 %v1499
        %1820 = vmatprep.subr.bf16.mxu0 %v1502
        %1821 = vmatpush1.bf16.msra.mxu0 %v1501
        %1822 = vmatprep.subr.bf16.mxu0 %v1504
        %1823 = vmatpush1.bf16.msra.mxu0 %v1503
        %1824 = vmatprep.subr.bf16.mxu0 %v1506
        %1825 = vmatpush1.bf16.msra.mxu0 %v1505
        %1826 = vmatprep.subr.bf16.mxu0 %v1508
        %1827 = vmatpush1.bf16.msra.mxu0 %v1507
        %1828 = vmatprep.subr.bf16.mxu0 %v1510
        %1829 = vmatpush1.bf16.msra.mxu0 %v1509
        %1830 = vmatprep.subr.bf16.mxu0 %v1512
        %1831 = vmatpush1.bf16.msra.mxu0 %v1511
        %1832 = vmatprep.subr.bf16.mxu0 %v1514
        %1833 = vmatpush1.bf16.msra.mxu0 %v1513
        %1834 = vmatprep.subr.bf16.mxu0 %v1516
        %1835 = vmatpush1.bf16.msra.mxu0 %v1515
        %1836 = vmatprep.mubr.bf16.mxu0 %v980
        %1837 = vmatmul.mubr.bf16.gmra.mrb[0].mxu0 %v979
        %v1838 = vpop.f32.mrb[0].mxu0
        %v1839 = vadd.f32 %v1786, %v1838
        %v1840 = vpop.f32.mrb[0].mxu0
        %v1841 = vadd.f32 %v1788, %v1840
        %v1842 = vpop.f32.mrb[0].mxu0
        %v1843 = vadd.f32 %v1790, %v1842
        %v1844 = vpop.f32.mrb[0].mxu0
        %v1845 = vadd.f32 %v1792, %v1844
        %1846 = vmatprep.mubr.bf16.mxu0 %v988
        %1847 = vmatmul.mubr.bf16.gmra.mrb[0].mxu0 %v987
        %v1848 = vpop.f32.mrb[0].mxu0
        %v1849 = vadd.f32 %v1796, %v1848
        %v1850 = vpop.f32.mrb[0].mxu0
        %v1851 = vadd.f32 %v1798, %v1850
        %v1852 = vpop.f32.mrb[0].mxu0
        %v1853 = vadd.f32 %v1800, %v1852
        %v1854 = vpop.f32.mrb[0].mxu0
        %v1855 = vadd.f32 %v1802, %v1854
        %1856 = vdwg.mxu0
        %v1857 = vmax.f32 %v1839, 0.0
        %v1858 = vmax.f32 %v1841, 0.0
        %v1859 = vmax.f32 %v1843, 0.0
        %v1860 = vmax.f32 %v1845, 0.0
        %v1861 = vmax.f32 %v1849, 0.0
        %v1862 = vmax.f32 %v1851, 0.0
        %v1863 = vmax.f32 %v1853, 0.0
        %v1864 = vmax.f32 %v1855, 0.0
        %v1865 = vpack.c.bf16 %v1859, %v1857
        %v1866 = vpack.c.bf16 %v1860, %v1858
        %v1867 = vpack.c.bf16 %v1863, %v1861
        %v1868 = vpack.c.bf16 %v1864, %v1862
        %v1873 = vunpack.c.l.b16 %v1865
        %v1874 = vunpack.c.l.b16 %v1866
        %v1875 = vunpack.c.h.b16 %v1865
        %v1876 = vunpack.c.h.b16 %v1866
        %v1877 = vunpack.c.l.b16 %v1867
        %v1878 = vunpack.c.l.b16 %v1868
        %v1879 = vunpack.c.h.b16 %v1867
        %v1880 = vunpack.c.h.b16 %v1868
        %v1881 = vpack.c.b16 %v1874, %v1873
        %v1882 = vpack.c.b16 %v1876, %v1875
        %v1883 = vpack.c.b16 %v1878, %v1877
        %v1884 = vpack.c.b16 %v1880, %v1879
        %1889 = vst [vmem:[%s753] sm:$0xff] %v1881
        %1890 = vst [vmem:[%s753 + $0x8] sm:$0xff] %v1882
        %1891 = vst [vmem:[%s753 + $0x10] sm:$0xff] %v1883
        %1892 = vst [vmem:[%s753 + $0x18] sm:$0xff] %v1884
        %s1893 = sand.u32 %s114, 1
        %s1894 = sand.u32 %s114, 1
        %s1895 = smul.addr %s1894, 32
        %s1896 = scalar_lea.vmem [#allocation3], %s1895
        // Predicated region
        $region71: #{enc_txt_forward.10} parent=65 // pred_check
          %p1897 = pneg %p124
        $region72: #{enc_txt_forward.10} parent=65 // pred_check_branch
          %1899 = sbr.rel (%p1897) target = $region74
        $region73: #{enc_txt_forward.10} parent=65 // pred_region
          %s1900 = smul.u32 4, %s18
          %s1901 = smul.u32 2, %s19
          %s1902 = smul.addr %s1900, 4
          %s1903 = sadd.s32 %s1901, %s1902
          %s1904 = smul.addr %s1903, 4
          %s1905 = scalar_lea.vmem %s3, %s1904
          // Predicated region
          $region75: #{enc_txt_forward.10} parent=73 // pred_check
            _
          $region76: #{enc_txt_forward.10} parent=73 // pred_check_branch
            %1907 = sbr.rel (0) target = $region78
          $region77: #{enc_txt_forward.10} parent=73 // pred_region
            // Predicated region
            $region79: #{enc_txt_forward.10} parent=77 // pred_check
              _
            $region80: #{enc_txt_forward.10} parent=77 // pred_check_branch
              %1909 = sbr.rel (0) target = $region82
            $region81: #{enc_txt_forward.10} parent=77 // pred_region
              // Predicated region
              $region94: #{enc_txt_forward.10} parent=81 // pred_check
                _
              $region95: #{enc_txt_forward.10} parent=81 // pred_check_branch
                %1930 = sbr.rel (0) target = $region97
              $region96: #{enc_txt_forward.10} parent=81 // pred_region
                loop: start=0, step=1, limit=1
                $region98: #{enc_txt_forward.10} parent=96 // loop_pre_header
                  _
                $region99: #{enc_txt_forward.10} parent=96 // loop_header
                  %s1932 = sphi 0, %s1936
                  %p1933 = scmp.ge.s32.totalorder %s1932, 1
                  %s1937 = sphi %s1896, %s1896
                  %s1938 = sphi %s1905, %s1905
                $region100: #{enc_txt_forward.10} parent=96 // loop_header_branch
                  %1935 = sbr.rel (%p1933) target = $region104
                $region101: #{enc_txt_forward.10} parent=96 // loop_body
                  %v1939 = vld [vmem:[%s1937] sm:$0xff]
                  %1940 = vst [vmem:[%s1938] sm:$0xff] %v1939
                  %v1941 = vld [vmem:[%s1937 + $0x8] sm:$0xff]
                  %1942 = vst [vmem:[%s1938 + $0x10] sm:$0xff] %v1941
                  %v1943 = vld [vmem:[%s1937 + $0x10] sm:$0xff]
                  %1944 = vst [vmem:[%s1938 + $0x20] sm:$0xff] %v1943
                  %v1945 = vld [vmem:[%s1937 + $0x18] sm:$0xff]
                  %1946 = vst [vmem:[%s1938 + $0x30] sm:$0xff] %v1945
                $region102: #{enc_txt_forward.10} parent=96 // loop_footer
                  %s1936 = sadd.s32 1, %s1932
                $region103: #{enc_txt_forward.10} parent=96 // loop_footer_branch
                  %1931 = sbr.rel target = $region99
                $region104: #{enc_txt_forward.10} parent=96 // loop_exit
                  _
              $region97: #{enc_txt_forward.10} parent=81 // pred_fallthru
                _
              // Predicated region
              $region105: #{enc_txt_forward.10} parent=81 // pred_check
                _
              $region106: #{enc_txt_forward.10} parent=81 // pred_check_branch
                %1948 = sbr.rel target = $region108
              $region107: #{enc_txt_forward.10} parent=81 // pred_region
                _
              $region108: #{enc_txt_forward.10} parent=81 // pred_fallthru
                _
            $region82: #{enc_txt_forward.10} parent=77 // pred_fallthru
              _
            // Predicated region
            $region83: #{enc_txt_forward.10} parent=77 // pred_check
              _
            $region84: #{enc_txt_forward.10} parent=77 // pred_check_branch
              %1911 = sbr.rel target = $region86
            $region85: #{enc_txt_forward.10} parent=77 // pred_region
              loop: start=0, step=1, limit=1
              $region87: #{enc_txt_forward.10} parent=85 // loop_pre_header
                _
              $region88: #{enc_txt_forward.10} parent=85 // loop_header
                %s1914 = sphi 0, %s1918
                %p1915 = scmp.ge.s32.totalorder %s1914, 1
                %s1919 = sphi %s1896, %s1896
                %s1920 = sphi %s1905, %s1905
              $region89: #{enc_txt_forward.10} parent=85 // loop_header_branch
                %1917 = sbr.rel (%p1915) target = $region93
              $region90: #{enc_txt_forward.10} parent=85 // loop_body
                %v1921 = vld [vmem:[%s1919] sm:$0xff]
                %1922 = vst [vmem:[%s1920] sm:$0xff] %v1921
                %v1923 = vld [vmem:[%s1919 + $0x8] sm:$0xff]
                %1924 = vst [vmem:[%s1920 + $0x10] sm:$0xff] %v1923
                %v1925 = vld [vmem:[%s1919 + $0x10] sm:$0xff]
                %1926 = vst [vmem:[%s1920 + $0x20] sm:$0xff] %v1925
                %v1927 = vld [vmem:[%s1919 + $0x18] sm:$0xff]
                %1928 = vst [vmem:[%s1920 + $0x30] sm:$0xff] %v1927
              $region91: #{enc_txt_forward.10} parent=85 // loop_footer
                %s1918 = sadd.s32 1, %s1914
              $region92: #{enc_txt_forward.10} parent=85 // loop_footer_branch
                %1913 = sbr.rel target = $region88
              $region93: #{enc_txt_forward.10} parent=85 // loop_exit
                _
            $region86: #{enc_txt_forward.10} parent=77 // pred_fallthru
              _
          $region78: #{enc_txt_forward.10} parent=73 // pred_fallthru
            _
          %1949 = vnop
        $region74: #{enc_txt_forward.10} parent=65 // pred_fallthru
          _
      $region66: #{enc_txt_forward.10} parent=5 // pred_fallthru
        _
      %p1950 = scmp.le.s32.totalorder 2, %s9
      // Predicated region
      $region109: #{enc_txt_forward.10} parent=5 // pred_check
        %p1951 = pneg %p1950
      $region110: #{enc_txt_forward.10} parent=5 // pred_check_branch
        %1953 = sbr.rel (%p1951) target = $region112
      $region111: #{enc_txt_forward.10} parent=5 // pred_region
        %s1954 = ssub.s32 %s9, 2
        // Predicated region
        $region113: #{enc_txt_forward.10} parent=111 // pred_check
          %p1955 = pneg %p130
        $region114: #{enc_txt_forward.10} parent=111 // pred_check_branch
          %1957 = sbr.rel (%p1955) target = $region116
        $region115: #{enc_txt_forward.10} parent=111 // pred_region
          %s1958 = sand.u32 %s115, 1
          %s1959 = sand.u32 %s115, 1
          %s1960 = smul.addr %s1959, 32
          %s1961 = scalar_lea.vmem [#allocation3], %s1960
        $region116: #{enc_txt_forward.10} parent=111 // pred_fallthru
          _
      $region112: #{enc_txt_forward.10} parent=5 // pred_fallthru
        _
    $region6: #{enc_txt_forward.10} parent=1 // loop_footer
      %s13 = sadd.s32 1, %s9
    $region7: #{enc_txt_forward.10} parent=1 // loop_footer_branch
      %8 = sbr.rel target = $region3
    $region8: #{enc_txt_forward.10} parent=1 // loop_exit
      _

// kernel: enc_txt_forward.11
$region0: #{enc_txt_forward.11}
  #allocation0 [shape = 'u32[]', space=smem, size = 0x4, offset = 0x4, fixed_abs, tag = 'smem constant byte address 0x4 - core index']
  #allocation1 [shape = 'u32[144,128]{1,0:T(1,128)}', space=vmem, size = 0x12000, scoped, tag = 'internal scratch']
  #allocation2 [shape = 'f32[2,32]{1,0:T(2,128)}', space=vmem, size = 0x400, scoped, tag = 'scratch operand']
  %s0 = inlined_call_operand.vmem [shape: bf16[2,8192], index: 0, kind: input, shape index: {}]
  %s1 = inlined_call_operand.vmem [shape: bf16[8192,32], index: 1, kind: input, shape index: {}]
  %s2 = inlined_call_operand.vmem [shape: f32[1,32], index: 2, kind: input, shape index: {}]
  %s3 = inlined_call_operand.vmem [shape: f32[2,32], index: 3, kind: output, shape index: {}]
  %s4 = sld [smem:[#allocation0]]
  $region53: #{enc_txt_forward.11} parent=0
    _
  %s6 = ssub.s32 1, %s4
  %s7 = scalar_select 0, %s6, %s4
  loop: start=0, step=1, limit=6
  $region2: #{enc_txt_forward.11} parent=0 // loop_pre_header
    _
  $region3: #{enc_txt_forward.11} parent=0 // loop_header
    %s9 = sphi 0, %s13
    %p10 = scmp.ge.s32.totalorder %s9, 6
    %s16 = sphi 0, %s35
    %s17 = sphi 0, %s31
    %s18 = sphi 0, %s27
    %s19 = sphi 0, %s16
    %s20 = sphi 0, %s17
    %s21 = sphi 0, %s18
    %s22 = sphi 0, %s19
    %s23 = sphi 0, %s20
    %s24 = sphi 0, %s21
    %s40 = sphi 0, %s42
    %s43 = sphi 0, %s40
    %s44 = sphi 0, %s43
    %s60 = sphi 0, %s44
    %s68 = sphi 0, %s70
    %s71 = sphi 0, %s68
    %s72 = sphi 0, %s71
    %s88 = sphi 0, %s72
    %s94 = sphi 0, %s96
    %s97 = sphi 0, %s94
    %s98 = sphi 0, %s97
    %s114 = sphi 0, %s98
    %s122 = sphi 0, %s124
    %s125 = sphi 0, %s122
    %s126 = sphi 0, %s125
    %s142 = sphi 0, %s126
  $region4: #{enc_txt_forward.11} parent=0 // loop_header_branch
    %12 = sbr.rel (%p10) target = $region8
  $region5: #{enc_txt_forward.11} parent=0 // loop_body
    %s14 = ssub.s32 %s9, 1
    %s15 = ssub.s32 %s9, 2
    %s25 = sadd.s32 1, %s18
    %p26 = scmp.ge.s32.totalorder %s25, 4
    %s27 = scalar_select %p26, 0, %s25
    %s28 = sadd.s32 1, %s17
    %s29 = scalar_select %p26, %s28, %s17
    %p30 = scmp.ge.s32.totalorder %s29, 1
    %s31 = scalar_select %p30, 0, %s29
    %s32 = sadd.s32 1, %s16
    %s33 = scalar_select %p30, %s32, %s16
    %p34 = scmp.ge.s32.totalorder %s33, 1
    %s35 = scalar_select %p34, 0, %s33
    %s36 = ssub.s32 %s16, %s35
    %s37 = ssub.s32 %s18, %s27
    %s38 = sor.u32 %s36, %s37
    %p39 = scmp.eq.s32.totalorder %s38, 0
    %s41 = sadd.s32 %s40, 1
    %s42 = scalar_select %p39, %s40, %s41
    %p45 = pneg %p39
    %p46 = scmp.eq.s32.totalorder %s9, 3
    %p47 = por %p45, %p46
    %p48 = scmp.ne.s32.totalorder %s40, %s43
    %p49 = scmp.eq.s32.totalorder %s9, 0
    %p50 = por %p48, %p49
    %p51 = scmp.ne.s32.totalorder %s40, %s43
    %p52 = scmp.eq.s32.totalorder %s14, 3
    %p53 = por %p51, %p52
    %p54 = scmp.ne.s32.totalorder %s43, %s44
    %p55 = scmp.eq.s32.totalorder %s14, 0
    %p56 = por %p54, %p55
    %p57 = scmp.ne.s32.totalorder %s43, %s44
    %p58 = scmp.eq.s32.totalorder %s15, 3
    %p59 = por %p57, %p58
    %p61 = scmp.ne.s32.totalorder %s44, %s60
    %p62 = scmp.eq.s32.totalorder %s15, 0
    %p63 = por %p61, %p62
    %s64 = ssub.s32 %s18, %s27
    %s65 = ssub.s32 %s17, %s31
    %s66 = sor.u32 %s64, %s65
    %p67 = scmp.eq.s32.totalorder %s66, 0
    %s69 = sadd.s32 %s68, 1
    %s70 = scalar_select %p67, %s68, %s69
    %p73 = pneg %p67
    %p74 = scmp.eq.s32.totalorder %s9, 3
    %p75 = por %p73, %p74
    %p76 = scmp.ne.s32.totalorder %s68, %s71
    %p77 = scmp.eq.s32.totalorder %s9, 0
    %p78 = por %p76, %p77
    %p79 = scmp.ne.s32.totalorder %s68, %s71
    %p80 = scmp.eq.s32.totalorder %s14, 3
    %p81 = por %p79, %p80
    %p82 = scmp.ne.s32.totalorder %s71, %s72
    %p83 = scmp.eq.s32.totalorder %s14, 0
    %p84 = por %p82, %p83
    %p85 = scmp.ne.s32.totalorder %s71, %s72
    %p86 = scmp.eq.s32.totalorder %s15, 3
    %p87 = por %p85, %p86
    %p89 = scmp.ne.s32.totalorder %s72, %s88
    %p90 = scmp.eq.s32.totalorder %s15, 0
    %p91 = por %p89, %p90
    %s92 = ssub.s32 %s17, %s31
    %p93 = scmp.eq.s32.totalorder %s92, 0
    %s95 = sadd.s32 %s94, 1
    %s96 = scalar_select %p93, %s94, %s95
    %p99 = pneg %p93
    %p100 = scmp.eq.s32.totalorder %s9, 3
    %p101 = por %p99, %p100
    %p102 = scmp.ne.s32.totalorder %s94, %s97
    %p103 = scmp.eq.s32.totalorder %s9, 0
    %p104 = por %p102, %p103
    %p105 = scmp.ne.s32.totalorder %s94, %s97
    %p106 = scmp.eq.s32.totalorder %s14, 3
    %p107 = por %p105, %p106
    %p108 = scmp.ne.s32.totalorder %s97, %s98
    %p109 = scmp.eq.s32.totalorder %s14, 0
    %p110 = por %p108, %p109
    %p111 = scmp.ne.s32.totalorder %s97, %s98
    %p112 = scmp.eq.s32.totalorder %s15, 3
    %p113 = por %p111, %p112
    %p115 = scmp.ne.s32.totalorder %s98, %s114
    %p116 = scmp.eq.s32.totalorder %s15, 0
    %p117 = por %p115, %p116
    %s118 = ssub.s32 %s16, %s35
    %s119 = ssub.s32 %s17, %s31
    %s120 = sor.u32 %s118, %s119
    %p121 = scmp.eq.s32.totalorder %s120, 0
    %s123 = sadd.s32 %s122, 1
    %s124 = scalar_select %p121, %s122, %s123
    %p127 = pneg %p121
    %p128 = scmp.eq.s32.totalorder %s9, 3
    %p129 = por %p127, %p128
    %p130 = scmp.ne.s32.totalorder %s122, %s125
    %p131 = scmp.eq.s32.totalorder %s9, 0
    %p132 = por %p130, %p131
    %p133 = scmp.ne.s32.totalorder %s122, %s125
    %p134 = scmp.eq.s32.totalorder %s14, 3
    %p135 = por %p133, %p134
    %p136 = scmp.ne.s32.totalorder %s125, %s126
    %p137 = scmp.eq.s32.totalorder %s14, 0
    %p138 = por %p136, %p137
    %p139 = scmp.ne.s32.totalorder %s125, %s126
    %p140 = scmp.eq.s32.totalorder %s15, 3
    %p141 = por %p139, %p140
    %p143 = scmp.ne.s32.totalorder %s126, %s142
    %p144 = scmp.eq.s32.totalorder %s15, 0
    %p145 = por %p143, %p144
    %p146 = scmp.le.s32.totalorder 1, %s9
    %p147 = scmp.lt.s32.totalorder %s9, 5
    %p148 = pnand %p146, %p147
    %p149 = pneg %p148
    // Predicated region
    $region9: #{enc_txt_forward.11} parent=5 // pred_check
      _
    $region10: #{enc_txt_forward.11} parent=5 // pred_check_branch
      %151 = sbr.rel (%p148) target = $region12
    $region11: #{enc_txt_forward.11} parent=5 // pred_region
      %s152 = ssub.s32 %s9, 1
      // Predicated region
      $region13: #{enc_txt_forward.11} parent=11 // pred_check
        %p153 = pneg %p110
      $region14: #{enc_txt_forward.11} parent=11 // pred_check_branch
        %155 = sbr.rel (%p153) target = $region16
      $region15: #{enc_txt_forward.11} parent=11 // pred_region
        %p156 = scmp.lt.s32.totalorder %s20, 0
        %s157 = scalar_select %p156, %s20, 0
        %s158 = scalar_lea.vmem %s2, %s157
      $region16: #{enc_txt_forward.11} parent=11 // pred_fallthru
        _
    $region12: #{enc_txt_forward.11} parent=5 // pred_fallthru
      _
    %p159 = scmp.lt.s32.totalorder %s9, 4
    // Predicated region
    $region17: #{enc_txt_forward.11} parent=5 // pred_check
      %p160 = pneg %p159
    $region18: #{enc_txt_forward.11} parent=5 // pred_check_branch
      %162 = sbr.rel (%p160) target = $region20
    $region19: #{enc_txt_forward.11} parent=5 // pred_region
      // Predicated region
      $region21: #{enc_txt_forward.11} parent=19 // pred_check
        %p163 = pneg %p50
      $region22: #{enc_txt_forward.11} parent=19 // pred_check_branch
        %165 = sbr.rel (%p163) target = $region24
      $region23: #{enc_txt_forward.11} parent=19 // pred_region
        %s166 = smul.u32 16, %s18
        %p167 = scmp.lt.s32.totalorder %s16, 0
        %s168 = scalar_select %p167, %s16, 0
        %p169 = scmp.lt.s32.totalorder %s166, 63
        %s170 = scalar_select %p169, %s166, 63
        %s171 = smul.addr %s168, 64
        %s172 = sadd.s32 %s170, %s171
        %s173 = scalar_lea.vmem %s0, %s172
        %s174 = smul.u32 16, %s18
      $region24: #{enc_txt_forward.11} parent=19 // pred_fallthru
        _
      // Predicated region
      $region25: #{enc_txt_forward.11} parent=19 // pred_check
        %p175 = pneg %p78
      $region26: #{enc_txt_forward.11} parent=19 // pred_check_branch
        %177 = sbr.rel (%p175) target = $region28
      $region27: #{enc_txt_forward.11} parent=19 // pred_region
        %s178 = smul.u32 256, %s18
        %p179 = scmp.lt.s32.totalorder %s178, 1023
        %s180 = scalar_select %p179, %s178, 1023
        %p181 = scmp.lt.s32.totalorder %s17, 0
        %s182 = scalar_select %p181, %s17, 0
        %s183 = sadd.s32 %s182, %s180
        %s184 = smul.addr %s183, 4
        %s185 = scalar_lea.vmem %s1, %s184
        %s186 = smul.u32 256, %s18
      $region28: #{enc_txt_forward.11} parent=19 // pred_fallthru
        _
    $region20: #{enc_txt_forward.11} parent=5 // pred_fallthru
      _
    %p187 = scmp.le.s32.totalorder 1, %s9
    %p188 = scmp.lt.s32.totalorder %s9, 5
    %p189 = pnand %p187, %p188
    %p190 = pneg %p189
    // Predicated region
    $region29: #{enc_txt_forward.11} parent=5 // pred_check
      _
    $region30: #{enc_txt_forward.11} parent=5 // pred_check_branch
      %192 = sbr.rel (%p189) target = $region32
    $region31: #{enc_txt_forward.11} parent=5 // pred_region
      %s193 = ssub.s32 %s9, 1
      %s194 = smul.u32 16, %s21
      %p195 = scmp.lt.s32.totalorder %s19, 0
      %s196 = scalar_select %p195, %s19, 0
      %p197 = scmp.lt.s32.totalorder %s194, 63
      %s198 = scalar_select %p197, %s194, 63
      %s199 = smul.addr %s196, 64
      %s200 = sadd.s32 %s198, %s199
      %s201 = scalar_lea.vmem %s0, %s200
      %p202 = pneg %p56
      %p203 = pneg %p53
      %s204 = smul.u32 256, %s21
      %p205 = scmp.lt.s32.totalorder %s204, 1023
      %s206 = scalar_select %p205, %s204, 1023
      %p207 = scmp.lt.s32.totalorder %s20, 0
      %s208 = scalar_select %p207, %s20, 0
      %s209 = sadd.s32 %s208, %s206
      %s210 = smul.addr %s209, 4
      %s211 = scalar_lea.vmem %s1, %s210
      %p212 = pneg %p84
      %p213 = pneg %p81
      %p214 = scmp.lt.s32.totalorder %s20, 0
      %s215 = scalar_select %p214, %s20, 0
      %s216 = scalar_lea.vmem %s2, %s215
      %p217 = pneg %p110
      %p218 = pneg %p107
      %p219 = pneg %p138
      %p220 = pneg %p135
      %p221 = scmp.lt.s32.totalorder %s19, 0
      %s222 = scalar_select %p221, %s19, 0
      %p223 = scmp.lt.s32.totalorder %s20, 0
      %s224 = scalar_select %p223, %s20, 0
      %s225 = sadd.s32 %s224, %s222
      %s226 = smul.addr %s225, 2
      %s227 = scalar_lea.vmem %s3, %s226
      %s228 = smul.u32 16, %s21
      %p229 = scmp.lt.s32.totalorder %s19, 0
      %s230 = scalar_select %p229, %s19, 0
      %p231 = scmp.lt.s32.totalorder %s228, 63
      %s232 = scalar_select %p231, %s228, 63
      %s233 = smul.addr %s230, 64
      %s234 = sadd.s32 %s232, %s233
      %s235 = scalar_lea.vmem %s0, %s234
      %s236 = smul.u32 16, %s21
      %s237 = smul.u32 256, %s21
      %p238 = scmp.lt.s32.totalorder %s237, 1023
      %s239 = scalar_select %p238, %s237, 1023
      %p240 = scmp.lt.s32.totalorder %s20, 0
      %s241 = scalar_select %p240, %s20, 0
      %s242 = sadd.s32 %s241, %s239
      %s243 = smul.addr %s242, 4
      %s244 = scalar_lea.vmem %s1, %s243
      %s245 = smul.u32 256, %s21
      %p246 = scmp.lt.s32.totalorder %s20, 0
      %s247 = scalar_select %p246, %s20, 0
      %s248 = scalar_lea.vmem %s2, %s247
      %p249 = scmp.lt.s32.totalorder %s19, 0
      %s250 = scalar_select %p249, %s19, 0
      %p251 = scmp.lt.s32.totalorder %s20, 0
      %s252 = scalar_select %p251, %s20, 0
      %s253 = sadd.s32 %s252, %s250
      %s254 = smul.addr %s253, 2
      %s255 = scalar_lea.vmem %s3, %s254
      %p257 = scmp.eq.s32.totalorder %s21, 0
      // Predicated region
      $region33: #{enc_txt_forward.11} parent=31 // pred_check
        %p258 = pneg %p257
      $region34: #{enc_txt_forward.11} parent=31 // pred_check_branch
        %260 = sbr.rel (%p258) target = $region36
      $region35: #{enc_txt_forward.11} parent=31 // pred_region
        %vm261 = vcmask 254976
        %262 = vst.msk [vmem:[#allocation2] sm:$0x3] %vm261, 0.0
      $region36: #{enc_txt_forward.11} parent=31 // pred_fallthru
        _
      %v263 = vld [vmem:[#allocation2] sm:$0x3]
      %v264 = vld [vmem:[%s235] sm:$0xff]
      %v265 = vld [vmem:[%s235 + $0x8] sm:$0xff]
      %v266 = vld [vmem:[%s244] sm:$0xf]
      %v267 = vld [vmem:[%s244 + $0x4] sm:$0xf]
      %v268 = vld [vmem:[%s244 + $0x8] sm:$0xf]
      %v269 = vld [vmem:[%s244 + $0xc] sm:$0xf]
      %v270 = vld [vmem:[%s244 + $0x10] sm:$0xf]
      %v271 = vld [vmem:[%s244 + $0x14] sm:$0xf]
      %v272 = vld [vmem:[%s244 + $0x18] sm:$0xf]
      %v273 = vld [vmem:[%s244 + $0x1c] sm:$0xf]
      %v274 = vld [vmem:[%s244 + $0x20] sm:$0xf]
      %v275 = vld [vmem:[%s244 + $0x24] sm:$0xf]
      %v276 = vld [vmem:[%s244 + $0x28] sm:$0xf]
      %v277 = vld [vmem:[%s244 + $0x2c] sm:$0xf]
      %v278 = vld [vmem:[%s244 + $0x30] sm:$0xf]
      %v279 = vld [vmem:[%s244 + $0x34] sm:$0xf]
      %v280 = vld [vmem:[%s244 + $0x38] sm:$0xf]
      %v281 = vld [vmem:[%s244 + $0x3c] sm:$0xf]
      %v282 = vld [vmem:[%s244 + $0x40] sm:$0xf]
      %v283 = vld [vmem:[%s244 + $0x44] sm:$0xf]
      %v284 = vld [vmem:[%s244 + $0x48] sm:$0xf]
      %v285 = vld [vmem:[%s244 + $0x4c] sm:$0xf]
      %v286 = vld [vmem:[%s244 + $0x50] sm:$0xf]
      %v287 = vld [vmem:[%s244 + $0x54] sm:$0xf]
      %v288 = vld [vmem:[%s244 + $0x58] sm:$0xf]
      %v289 = vld [vmem:[%s244 + $0x5c] sm:$0xf]
      %v290 = vld [vmem:[%s244 + $0x60] sm:$0xf]
      %v291 = vld [vmem:[%s244 + $0x64] sm:$0xf]
      %v292 = vld [vmem:[%s244 + $0x68] sm:$0xf]
      %v293 = vld [vmem:[%s244 + $0x6c] sm:$0xf]
      %v294 = vld [vmem:[%s244 + $0x70] sm:$0xf]
      %v295 = vld [vmem:[%s244 + $0x74] sm:$0xf]
      %v296 = vld [vmem:[%s244 + $0x78] sm:$0xf]
      %v297 = vld [vmem:[%s244 + $0x7c] sm:$0xf]
      %v298 = vld [vmem:[%s244 + $0x80] sm:$0xf]
      %v299 = vld [vmem:[%s244 + $0x84] sm:$0xf]
      %v300 = vld [vmem:[%s244 + $0x88] sm:$0xf]
      %v301 = vld [vmem:[%s244 + $0x8c] sm:$0xf]
      %v302 = vld [vmem:[%s244 + $0x90] sm:$0xf]
      %v303 = vld [vmem:[%s244 + $0x94] sm:$0xf]
      %v304 = vld [vmem:[%s244 + $0x98] sm:$0xf]
      %v305 = vld [vmem:[%s244 + $0x9c] sm:$0xf]
      %v306 = vld [vmem:[%s244 + $0xa0] sm:$0xf]
      %v307 = vld [vmem:[%s244 + $0xa4] sm:$0xf]
      %v308 = vld [vmem:[%s244 + $0xa8] sm:$0xf]
      %v309 = vld [vmem:[%s244 + $0xac] sm:$0xf]
      %v310 = vld [vmem:[%s244 + $0xb0] sm:$0xf]
      %v311 = vld [vmem:[%s244 + $0xb4] sm:$0xf]
      %v312 = vld [vmem:[%s244 + $0xb8] sm:$0xf]
      %v313 = vld [vmem:[%s244 + $0xbc] sm:$0xf]
      %v314 = vld [vmem:[%s244 + $0xc0] sm:$0xf]
      %v315 = vld [vmem:[%s244 + $0xc4] sm:$0xf]
      %v316 = vld [vmem:[%s244 + $0xc8] sm:$0xf]
      %v317 = vld [vmem:[%s244 + $0xcc] sm:$0xf]
      %v318 = vld [vmem:[%s244 + $0xd0] sm:$0xf]
      %v319 = vld [vmem:[%s244 + $0xd4] sm:$0xf]
      %v320 = vld [vmem:[%s244 + $0xd8] sm:$0xf]
      %v321 = vld [vmem:[%s244 + $0xdc] sm:$0xf]
      %v322 = vld [vmem:[%s244 + $0xe0] sm:$0xf]
      %v323 = vld [vmem:[%s244 + $0xe4] sm:$0xf]
      %v324 = vld [vmem:[%s244 + $0xe8] sm:$0xf]
      %v325 = vld [vmem:[%s244 + $0xec] sm:$0xf]
      %v326 = vld [vmem:[%s244 + $0xf0] sm:$0xf]
      %v327 = vld [vmem:[%s244 + $0xf4] sm:$0xf]
      %v328 = vld [vmem:[%s244 + $0xf8] sm:$0xf]
      %v329 = vld [vmem:[%s244 + $0xfc] sm:$0xf]
      %v330 = vld [vmem:[%s244 + $0x100] sm:$0xf]
      %v331 = vld [vmem:[%s244 + $0x104] sm:$0xf]
      %v332 = vld [vmem:[%s244 + $0x108] sm:$0xf]
      %v333 = vld [vmem:[%s244 + $0x10c] sm:$0xf]
      %v334 = vld [vmem:[%s244 + $0x110] sm:$0xf]
      %v335 = vld [vmem:[%s244 + $0x114] sm:$0xf]
      %v336 = vld [vmem:[%s244 + $0x118] sm:$0xf]
      %v337 = vld [vmem:[%s244 + $0x11c] sm:$0xf]
      %v338 = vld [vmem:[%s244 + $0x120] sm:$0xf]
      %v339 = vld [vmem:[%s244 + $0x124] sm:$0xf]
      %v340 = vld [vmem:[%s244 + $0x128] sm:$0xf]
      %v341 = vld [vmem:[%s244 + $0x12c] sm:$0xf]
      %v342 = vld [vmem:[%s244 + $0x130] sm:$0xf]
      %v343 = vld [vmem:[%s244 + $0x134] sm:$0xf]
      %v344 = vld [vmem:[%s244 + $0x138] sm:$0xf]
      %v345 = vld [vmem:[%s244 + $0x13c] sm:$0xf]
      %v346 = vld [vmem:[%s244 + $0x140] sm:$0xf]
      %v347 = vld [vmem:[%s244 + $0x144] sm:$0xf]
      %v348 = vld [vmem:[%s244 + $0x148] sm:$0xf]
      %v349 = vld [vmem:[%s244 + $0x14c] sm:$0xf]
      %v350 = vld [vmem:[%s244 + $0x150] sm:$0xf]
      %v351 = vld [vmem:[%s244 + $0x154] sm:$0xf]
      %v352 = vld [vmem:[%s244 + $0x158] sm:$0xf]
      %v353 = vld [vmem:[%s244 + $0x15c] sm:$0xf]
      %v354 = vld [vmem:[%s244 + $0x160] sm:$0xf]
      %v355 = vld [vmem:[%s244 + $0x164] sm:$0xf]
      %v356 = vld [vmem:[%s244 + $0x168] sm:$0xf]
      %v357 = vld [vmem:[%s244 + $0x16c] sm:$0xf]
      %v358 = vld [vmem:[%s244 + $0x170] sm:$0xf]
      %v359 = vld [vmem:[%s244 + $0x174] sm:$0xf]
      %v360 = vld [vmem:[%s244 + $0x178] sm:$0xf]
      %v361 = vld [vmem:[%s244 + $0x17c] sm:$0xf]
      %v362 = vld [vmem:[%s244 + $0x180] sm:$0xf]
      %v363 = vld [vmem:[%s244 + $0x184] sm:$0xf]
      %v364 = vld [vmem:[%s244 + $0x188] sm:$0xf]
      %v365 = vld [vmem:[%s244 + $0x18c] sm:$0xf]
      %v366 = vld [vmem:[%s244 + $0x190] sm:$0xf]
      %v367 = vld [vmem:[%s244 + $0x194] sm:$0xf]
      %v368 = vld [vmem:[%s244 + $0x198] sm:$0xf]
      %v369 = vld [vmem:[%s244 + $0x19c] sm:$0xf]
      %v370 = vld [vmem:[%s244 + $0x1a0] sm:$0xf]
      %v371 = vld [vmem:[%s244 + $0x1a4] sm:$0xf]
      %v372 = vld [vmem:[%s244 + $0x1a8] sm:$0xf]
      %v373 = vld [vmem:[%s244 + $0x1ac] sm:$0xf]
      %v374 = vld [vmem:[%s244 + $0x1b0] sm:$0xf]
      %v375 = vld [vmem:[%s244 + $0x1b4] sm:$0xf]
      %v376 = vld [vmem:[%s244 + $0x1b8] sm:$0xf]
      %v377 = vld [vmem:[%s244 + $0x1bc] sm:$0xf]
      %v378 = vld [vmem:[%s244 + $0x1c0] sm:$0xf]
      %v379 = vld [vmem:[%s244 + $0x1c4] sm:$0xf]
      %v380 = vld [vmem:[%s244 + $0x1c8] sm:$0xf]
      %v381 = vld [vmem:[%s244 + $0x1cc] sm:$0xf]
      %v382 = vld [vmem:[%s244 + $0x1d0] sm:$0xf]
      %v383 = vld [vmem:[%s244 + $0x1d4] sm:$0xf]
      %v384 = vld [vmem:[%s244 + $0x1d8] sm:$0xf]
      %v385 = vld [vmem:[%s244 + $0x1dc] sm:$0xf]
      %v386 = vld [vmem:[%s244 + $0x1e0] sm:$0xf]
      %v387 = vld [vmem:[%s244 + $0x1e4] sm:$0xf]
      %v388 = vld [vmem:[%s244 + $0x1e8] sm:$0xf]
      %v389 = vld [vmem:[%s244 + $0x1ec] sm:$0xf]
      %v390 = vld [vmem:[%s244 + $0x1f0] sm:$0xf]
      %v391 = vld [vmem:[%s244 + $0x1f4] sm:$0xf]
      %v392 = vld [vmem:[%s244 + $0x1f8] sm:$0xf]
      %v393 = vld [vmem:[%s244 + $0x1fc] sm:$0xf]
      %v394 = vld [vmem:[%s244 + $0x200] sm:$0xf]
      %v395 = vld [vmem:[%s244 + $0x204] sm:$0xf]
      %v396 = vld [vmem:[%s244 + $0x208] sm:$0xf]
      %v397 = vld [vmem:[%s244 + $0x20c] sm:$0xf]
      %v398 = vld [vmem:[%s244 + $0x210] sm:$0xf]
      %v399 = vld [vmem:[%s244 + $0x214] sm:$0xf]
      %v400 = vld [vmem:[%s244 + $0x218] sm:$0xf]
      %v401 = vld [vmem:[%s244 + $0x21c] sm:$0xf]
      %v402 = vld [vmem:[%s244 + $0x220] sm:$0xf]
      %v403 = vld [vmem:[%s244 + $0x224] sm:$0xf]
      %v404 = vld [vmem:[%s244 + $0x228] sm:$0xf]
      %v405 = vld [vmem:[%s244 + $0x22c] sm:$0xf]
      %v406 = vld [vmem:[%s244 + $0x230] sm:$0xf]
      %v407 = vld [vmem:[%s244 + $0x234] sm:$0xf]
      %v408 = vld [vmem:[%s244 + $0x238] sm:$0xf]
      %v409 = vld [vmem:[%s244 + $0x23c] sm:$0xf]
      %v410 = vld [vmem:[%s244 + $0x240] sm:$0xf]
      %v411 = vld [vmem:[%s244 + $0x244] sm:$0xf]
      %v412 = vld [vmem:[%s244 + $0x248] sm:$0xf]
      %v413 = vld [vmem:[%s244 + $0x24c] sm:$0xf]
      %v414 = vld [vmem:[%s244 + $0x250] sm:$0xf]
      %v415 = vld [vmem:[%s244 + $0x254] sm:$0xf]
      %v416 = vld [vmem:[%s244 + $0x258] sm:$0xf]
      %v417 = vld [vmem:[%s244 + $0x25c] sm:$0xf]
      %v418 = vld [vmem:[%s244 + $0x260] sm:$0xf]
      %v419 = vld [vmem:[%s244 + $0x264] sm:$0xf]
      %v420 = vld [vmem:[%s244 + $0x268] sm:$0xf]
      %v421 = vld [vmem:[%s244 + $0x26c] sm:$0xf]
      %v422 = vld [vmem:[%s244 + $0x270] sm:$0xf]
      %v423 = vld [vmem:[%s244 + $0x274] sm:$0xf]
      %v424 = vld [vmem:[%s244 + $0x278] sm:$0xf]
      %v425 = vld [vmem:[%s244 + $0x27c] sm:$0xf]
      %v426 = vld [vmem:[%s244 + $0x280] sm:$0xf]
      %v427 = vld [vmem:[%s244 + $0x284] sm:$0xf]
      %v428 = vld [vmem:[%s244 + $0x288] sm:$0xf]
      %v429 = vld [vmem:[%s244 + $0x28c] sm:$0xf]
      %v430 = vld [vmem:[%s244 + $0x290] sm:$0xf]
      %v431 = vld [vmem:[%s244 + $0x294] sm:$0xf]
      %v432 = vld [vmem:[%s244 + $0x298] sm:$0xf]
      %v433 = vld [vmem:[%s244 + $0x29c] sm:$0xf]
      %v434 = vld [vmem:[%s244 + $0x2a0] sm:$0xf]
      %v435 = vld [vmem:[%s244 + $0x2a4] sm:$0xf]
      %v436 = vld [vmem:[%s244 + $0x2a8] sm:$0xf]
      %v437 = vld [vmem:[%s244 + $0x2ac] sm:$0xf]
      %v438 = vld [vmem:[%s244 + $0x2b0] sm:$0xf]
      %v439 = vld [vmem:[%s244 + $0x2b4] sm:$0xf]
      %v440 = vld [vmem:[%s244 + $0x2b8] sm:$0xf]
      %v441 = vld [vmem:[%s244 + $0x2bc] sm:$0xf]
      %v442 = vld [vmem:[%s244 + $0x2c0] sm:$0xf]
      %v443 = vld [vmem:[%s244 + $0x2c4] sm:$0xf]
      %v444 = vld [vmem:[%s244 + $0x2c8] sm:$0xf]
      %v445 = vld [vmem:[%s244 + $0x2cc] sm:$0xf]
      %v446 = vld [vmem:[%s244 + $0x2d0] sm:$0xf]
      %v447 = vld [vmem:[%s244 + $0x2d4] sm:$0xf]
      %v448 = vld [vmem:[%s244 + $0x2d8] sm:$0xf]
      %v449 = vld [vmem:[%s244 + $0x2dc] sm:$0xf]
      %v450 = vld [vmem:[%s244 + $0x2e0] sm:$0xf]
      %v451 = vld [vmem:[%s244 + $0x2e4] sm:$0xf]
      %v452 = vld [vmem:[%s244 + $0x2e8] sm:$0xf]
      %v453 = vld [vmem:[%s244 + $0x2ec] sm:$0xf]
      %v454 = vld [vmem:[%s244 + $0x2f0] sm:$0xf]
      %v455 = vld [vmem:[%s244 + $0x2f4] sm:$0xf]
      %v456 = vld [vmem:[%s244 + $0x2f8] sm:$0xf]
      %v457 = vld [vmem:[%s244 + $0x2fc] sm:$0xf]
      %v458 = vld [vmem:[%s244 + $0x300] sm:$0xf]
      %v459 = vld [vmem:[%s244 + $0x304] sm:$0xf]
      %v460 = vld [vmem:[%s244 + $0x308] sm:$0xf]
      %v461 = vld [vmem:[%s244 + $0x30c] sm:$0xf]
      %v462 = vld [vmem:[%s244 + $0x310] sm:$0xf]
      %v463 = vld [vmem:[%s244 + $0x314] sm:$0xf]
      %v464 = vld [vmem:[%s244 + $0x318] sm:$0xf]
      %v465 = vld [vmem:[%s244 + $0x31c] sm:$0xf]
      %v466 = vld [vmem:[%s244 + $0x320] sm:$0xf]
      %v467 = vld [vmem:[%s244 + $0x324] sm:$0xf]
      %v468 = vld [vmem:[%s244 + $0x328] sm:$0xf]
      %v469 = vld [vmem:[%s244 + $0x32c] sm:$0xf]
      %v470 = vld [vmem:[%s244 + $0x330] sm:$0xf]
      %v471 = vld [vmem:[%s244 + $0x334] sm:$0xf]
      %v472 = vld [vmem:[%s244 + $0x338] sm:$0xf]
      %v473 = vld [vmem:[%s244 + $0x33c] sm:$0xf]
      %v474 = vld [vmem:[%s244 + $0x340] sm:$0xf]
      %v475 = vld [vmem:[%s244 + $0x344] sm:$0xf]
      %v476 = vld [vmem:[%s244 + $0x348] sm:$0xf]
      %v477 = vld [vmem:[%s244 + $0x34c] sm:$0xf]
      %v478 = vld [vmem:[%s244 + $0x350] sm:$0xf]
      %v479 = vld [vmem:[%s244 + $0x354] sm:$0xf]
      %v480 = vld [vmem:[%s244 + $0x358] sm:$0xf]
      %v481 = vld [vmem:[%s244 + $0x35c] sm:$0xf]
      %v482 = vld [vmem:[%s244 + $0x360] sm:$0xf]
      %v483 = vld [vmem:[%s244 + $0x364] sm:$0xf]
      %v484 = vld [vmem:[%s244 + $0x368] sm:$0xf]
      %v485 = vld [vmem:[%s244 + $0x36c] sm:$0xf]
      %v486 = vld [vmem:[%s244 + $0x370] sm:$0xf]
      %v487 = vld [vmem:[%s244 + $0x374] sm:$0xf]
      %v488 = vld [vmem:[%s244 + $0x378] sm:$0xf]
      %v489 = vld [vmem:[%s244 + $0x37c] sm:$0xf]
      %v490 = vld [vmem:[%s244 + $0x380] sm:$0xf]
      %v491 = vld [vmem:[%s244 + $0x384] sm:$0xf]
      %v492 = vld [vmem:[%s244 + $0x388] sm:$0xf]
      %v493 = vld [vmem:[%s244 + $0x38c] sm:$0xf]
      %v494 = vld [vmem:[%s244 + $0x390] sm:$0xf]
      %v495 = vld [vmem:[%s244 + $0x394] sm:$0xf]
      %v496 = vld [vmem:[%s244 + $0x398] sm:$0xf]
      %v497 = vld [vmem:[%s244 + $0x39c] sm:$0xf]
      %v498 = vld [vmem:[%s244 + $0x3a0] sm:$0xf]
      %v499 = vld [vmem:[%s244 + $0x3a4] sm:$0xf]
      %v500 = vld [vmem:[%s244 + $0x3a8] sm:$0xf]
      %v501 = vld [vmem:[%s244 + $0x3ac] sm:$0xf]
      %v502 = vld [vmem:[%s244 + $0x3b0] sm:$0xf]
      %v503 = vld [vmem:[%s244 + $0x3b4] sm:$0xf]
      %v504 = vld [vmem:[%s244 + $0x3b8] sm:$0xf]
      %v505 = vld [vmem:[%s244 + $0x3bc] sm:$0xf]
      %v506 = vld [vmem:[%s244 + $0x3c0] sm:$0xf]
      %v507 = vld [vmem:[%s244 + $0x3c4] sm:$0xf]
      %v508 = vld [vmem:[%s244 + $0x3c8] sm:$0xf]
      %v509 = vld [vmem:[%s244 + $0x3cc] sm:$0xf]
      %v510 = vld [vmem:[%s244 + $0x3d0] sm:$0xf]
      %v511 = vld [vmem:[%s244 + $0x3d4] sm:$0xf]
      %v512 = vld [vmem:[%s244 + $0x3d8] sm:$0xf]
      %v513 = vld [vmem:[%s244 + $0x3dc] sm:$0xf]
      %v514 = vld [vmem:[%s244 + $0x3e0] sm:$0xf]
      %v515 = vld [vmem:[%s244 + $0x3e4] sm:$0xf]
      %v516 = vld [vmem:[%s244 + $0x3e8] sm:$0xf]
      %v517 = vld [vmem:[%s244 + $0x3ec] sm:$0xf]
      %v518 = vld [vmem:[%s244 + $0x3f0] sm:$0xf]
      %v519 = vld [vmem:[%s244 + $0x3f4] sm:$0xf]
      %v520 = vld [vmem:[%s244 + $0x3f8] sm:$0xf]
      %v521 = vld [vmem:[%s244 + $0x3fc] sm:$0xf]
      %v524 = vcombine.high %v264, %v264
      %v526 = vunpack.c.l.s4 1966171168
      %v527 = vunpack.c.0.s8 %v526
      %v528 = vlaneseq
      %v529 = vshrl.u32 %v528, 7
      %v530 = vsub.s32 %v527, %v529
      %v531 = vrot.slane %v264, %v530
      %v533 = vunpack.c.l.s4 1966171168
      %v534 = vunpack.c.0.s8 %v533
      %v535 = vlaneseq
      %v536 = vshrl.u32 %v535, 7
      %v537 = vsub.s32 %v534, %v536
      %v538 = vrot.slane %v524, %v537
      %v539 = vcombine.high %v531, %v531
      %v540 = vcombine.high %v538, %v538
      %v542 = vunpack.c.l.s4 1966171168
      %v543 = vunpack.c.0.s8 %v542
      %v544 = vlaneseq
      %v545 = vshrl.u32 %v544, 7
      %v546 = vsub.s32 %v543, %v545
      %v547 = vrot.slane %v531, %v546
      %v549 = vunpack.c.l.s4 1966171168
      %v550 = vunpack.c.0.s8 %v549
      %v551 = vlaneseq
      %v552 = vshrl.u32 %v551, 7
      %v553 = vsub.s32 %v550, %v552
      %v554 = vrot.slane %v538, %v553
      %v556 = vunpack.c.l.s4 1966171168
      %v557 = vunpack.c.0.s8 %v556
      %v558 = vlaneseq
      %v559 = vshrl.u32 %v558, 7
      %v560 = vsub.s32 %v557, %v559
      %v561 = vrot.slane %v539, %v560
      %v563 = vunpack.c.l.s4 1966171168
      %v564 = vunpack.c.0.s8 %v563
      %v565 = vlaneseq
      %v566 = vshrl.u32 %v565, 7
      %v567 = vsub.s32 %v564, %v566
      %v568 = vrot.slane %v540, %v567
      %v569 = vcombine.high %v547, %v547
      %v570 = vcombine.high %v554, %v554
      %v571 = vcombine.high %v561, %v561
      %v572 = vcombine.high %v568, %v568
      %v573 = vcombine.high %v265, %v265
      %v575 = vunpack.c.l.s4 1966171168
      %v576 = vunpack.c.0.s8 %v575
      %v577 = vlaneseq
      %v578 = vshrl.u32 %v577, 7
      %v579 = vsub.s32 %v576, %v578
      %v580 = vrot.slane %v265, %v579
      %v582 = vunpack.c.l.s4 1966171168
      %v583 = vunpack.c.0.s8 %v582
      %v584 = vlaneseq
      %v585 = vshrl.u32 %v584, 7
      %v586 = vsub.s32 %v583, %v585
      %v587 = vrot.slane %v573, %v586
      %v588 = vcombine.high %v580, %v580
      %v589 = vcombine.high %v587, %v587
      %v591 = vunpack.c.l.s4 1966171168
      %v592 = vunpack.c.0.s8 %v591
      %v593 = vlaneseq
      %v594 = vshrl.u32 %v593, 7
      %v595 = vsub.s32 %v592, %v594
      %v596 = vrot.slane %v580, %v595
      %v598 = vunpack.c.l.s4 1966171168
      %v599 = vunpack.c.0.s8 %v598
      %v600 = vlaneseq
      %v601 = vshrl.u32 %v600, 7
      %v602 = vsub.s32 %v599, %v601
      %v603 = vrot.slane %v587, %v602
      %v605 = vunpack.c.l.s4 1966171168
      %v606 = vunpack.c.0.s8 %v605
      %v607 = vlaneseq
      %v608 = vshrl.u32 %v607, 7
      %v609 = vsub.s32 %v606, %v608
      %v610 = vrot.slane %v588, %v609
      %v612 = vunpack.c.l.s4 1966171168
      %v613 = vunpack.c.0.s8 %v612
      %v614 = vlaneseq
      %v615 = vshrl.u32 %v614, 7
      %v616 = vsub.s32 %v613, %v615
      %v617 = vrot.slane %v589, %v616
      %v618 = vcombine.high %v596, %v596
      %v619 = vcombine.high %v603, %v603
      %v620 = vcombine.high %v610, %v610
      %v621 = vcombine.high %v617, %v617
      %v894 = vunpack.c.l.b16 %v266
      %v895 = vunpack.c.l.b16 %v267
      %v896 = vunpack.c.l.b16 %v268
      %v897 = vunpack.c.l.b16 %v269
      %v898 = vunpack.c.l.b16 %v270
      %v899 = vunpack.c.l.b16 %v271
      %v900 = vunpack.c.l.b16 %v272
      %v901 = vunpack.c.l.b16 %v273
      %v902 = vunpack.c.l.b16 %v274
      %v903 = vunpack.c.l.b16 %v275
      %v904 = vunpack.c.l.b16 %v276
      %v905 = vunpack.c.l.b16 %v277
      %v906 = vunpack.c.l.b16 %v278
      %v907 = vunpack.c.l.b16 %v279
      %v908 = vunpack.c.l.b16 %v280
      %v909 = vunpack.c.l.b16 %v281
      %v910 = vunpack.c.l.b16 %v282
      %v911 = vunpack.c.l.b16 %v283
      %v912 = vunpack.c.l.b16 %v284
      %v913 = vunpack.c.l.b16 %v285
      %v914 = vunpack.c.l.b16 %v286
      %v915 = vunpack.c.l.b16 %v287
      %v916 = vunpack.c.l.b16 %v288
      %v917 = vunpack.c.l.b16 %v289
      %v918 = vunpack.c.l.b16 %v290
      %v919 = vunpack.c.l.b16 %v291
      %v920 = vunpack.c.l.b16 %v292
      %v921 = vunpack.c.l.b16 %v293
      %v922 = vunpack.c.l.b16 %v294
      %v923 = vunpack.c.l.b16 %v295
      %v924 = vunpack.c.l.b16 %v296
      %v925 = vunpack.c.l.b16 %v297
      %v926 = vunpack.c.l.b16 %v298
      %v927 = vunpack.c.l.b16 %v299
      %v928 = vunpack.c.l.b16 %v300
      %v929 = vunpack.c.l.b16 %v301
      %v930 = vunpack.c.l.b16 %v302
      %v931 = vunpack.c.l.b16 %v303
      %v932 = vunpack.c.l.b16 %v304
      %v933 = vunpack.c.l.b16 %v305
      %v934 = vunpack.c.l.b16 %v306
      %v935 = vunpack.c.l.b16 %v307
      %v936 = vunpack.c.l.b16 %v308
      %v937 = vunpack.c.l.b16 %v309
      %v938 = vunpack.c.l.b16 %v310
      %v939 = vunpack.c.l.b16 %v311
      %v940 = vunpack.c.l.b16 %v312
      %v941 = vunpack.c.l.b16 %v313
      %v942 = vunpack.c.l.b16 %v314
      %v943 = vunpack.c.l.b16 %v315
      %v944 = vunpack.c.l.b16 %v316
      %v945 = vunpack.c.l.b16 %v317
      %v946 = vunpack.c.l.b16 %v318
      %v947 = vunpack.c.l.b16 %v319
      %v948 = vunpack.c.l.b16 %v320
      %v949 = vunpack.c.l.b16 %v321
      %v950 = vunpack.c.l.b16 %v322
      %v951 = vunpack.c.l.b16 %v323
      %v952 = vunpack.c.l.b16 %v324
      %v953 = vunpack.c.l.b16 %v325
      %v954 = vunpack.c.l.b16 %v326
      %v955 = vunpack.c.l.b16 %v327
      %v956 = vunpack.c.l.b16 %v328
      %v957 = vunpack.c.l.b16 %v329
      %v958 = vunpack.c.l.b16 %v330
      %v959 = vunpack.c.l.b16 %v331
      %v960 = vunpack.c.l.b16 %v332
      %v961 = vunpack.c.l.b16 %v333
      %v962 = vunpack.c.l.b16 %v334
      %v963 = vunpack.c.l.b16 %v335
      %v964 = vunpack.c.l.b16 %v336
      %v965 = vunpack.c.l.b16 %v337
      %v966 = vunpack.c.l.b16 %v338
      %v967 = vunpack.c.l.b16 %v339
      %v968 = vunpack.c.l.b16 %v340
      %v969 = vunpack.c.l.b16 %v341
      %v970 = vunpack.c.l.b16 %v342
      %v971 = vunpack.c.l.b16 %v343
      %v972 = vunpack.c.l.b16 %v344
      %v973 = vunpack.c.l.b16 %v345
      %v974 = vunpack.c.l.b16 %v346
      %v975 = vunpack.c.l.b16 %v347
      %v976 = vunpack.c.l.b16 %v348
      %v977 = vunpack.c.l.b16 %v349
      %v978 = vunpack.c.l.b16 %v350
      %v979 = vunpack.c.l.b16 %v351
      %v980 = vunpack.c.l.b16 %v352
      %v981 = vunpack.c.l.b16 %v353
      %v982 = vunpack.c.l.b16 %v354
      %v983 = vunpack.c.l.b16 %v355
      %v984 = vunpack.c.l.b16 %v356
      %v985 = vunpack.c.l.b16 %v357
      %v986 = vunpack.c.l.b16 %v358
      %v987 = vunpack.c.l.b16 %v359
      %v988 = vunpack.c.l.b16 %v360
      %v989 = vunpack.c.l.b16 %v361
      %v990 = vunpack.c.l.b16 %v362
      %v991 = vunpack.c.l.b16 %v363
      %v992 = vunpack.c.l.b16 %v364
      %v993 = vunpack.c.l.b16 %v365
      %v994 = vunpack.c.l.b16 %v366
      %v995 = vunpack.c.l.b16 %v367
      %v996 = vunpack.c.l.b16 %v368
      %v997 = vunpack.c.l.b16 %v369
      %v998 = vunpack.c.l.b16 %v370
      %v999 = vunpack.c.l.b16 %v371
      %v1000 = vunpack.c.l.b16 %v372
      %v1001 = vunpack.c.l.b16 %v373
      %v1002 = vunpack.c.l.b16 %v374
      %v1003 = vunpack.c.l.b16 %v375
      %v1004 = vunpack.c.l.b16 %v376
      %v1005 = vunpack.c.l.b16 %v377
      %v1006 = vunpack.c.l.b16 %v378
      %v1007 = vunpack.c.l.b16 %v379
      %v1008 = vunpack.c.l.b16 %v380
      %v1009 = vunpack.c.l.b16 %v381
      %v1010 = vunpack.c.l.b16 %v382
      %v1011 = vunpack.c.l.b16 %v383
      %v1012 = vunpack.c.l.b16 %v384
      %v1013 = vunpack.c.l.b16 %v385
      %v1014 = vunpack.c.l.b16 %v386
      %v1015 = vunpack.c.l.b16 %v387
      %v1016 = vunpack.c.l.b16 %v388
      %v1017 = vunpack.c.l.b16 %v389
      %v1018 = vunpack.c.l.b16 %v390
      %v1019 = vunpack.c.l.b16 %v391
      %v1020 = vunpack.c.l.b16 %v392
      %v1021 = vunpack.c.l.b16 %v393
      %v1022 = vunpack.c.l.b16 %v394
      %v1023 = vunpack.c.l.b16 %v395
      %v1024 = vunpack.c.l.b16 %v396
      %v1025 = vunpack.c.l.b16 %v397
      %v1026 = vunpack.c.l.b16 %v398
      %v1027 = vunpack.c.l.b16 %v399
      %v1028 = vunpack.c.l.b16 %v400
      %v1029 = vunpack.c.l.b16 %v401
      %v1030 = vunpack.c.l.b16 %v402
      %v1031 = vunpack.c.l.b16 %v403
      %v1032 = vunpack.c.l.b16 %v404
      %v1033 = vunpack.c.l.b16 %v405
      %v1034 = vunpack.c.l.b16 %v406
      %v1035 = vunpack.c.l.b16 %v407
      %v1036 = vunpack.c.l.b16 %v408
      %v1037 = vunpack.c.l.b16 %v409
      %v1038 = vunpack.c.l.b16 %v410
      %v1039 = vunpack.c.l.b16 %v411
      %v1040 = vunpack.c.l.b16 %v412
      %v1041 = vunpack.c.l.b16 %v413
      %v1042 = vunpack.c.l.b16 %v414
      %v1043 = vunpack.c.l.b16 %v415
      %v1044 = vunpack.c.l.b16 %v416
      %v1045 = vunpack.c.l.b16 %v417
      %v1046 = vunpack.c.l.b16 %v418
      %v1047 = vunpack.c.l.b16 %v419
      %v1048 = vunpack.c.l.b16 %v420
      %v1049 = vunpack.c.l.b16 %v421
      %v1050 = vunpack.c.l.b16 %v422
      %v1051 = vunpack.c.l.b16 %v423
      %v1052 = vunpack.c.l.b16 %v424
      %v1053 = vunpack.c.l.b16 %v425
      %v1054 = vunpack.c.l.b16 %v426
      %v1055 = vunpack.c.l.b16 %v427
      %v1056 = vunpack.c.l.b16 %v428
      %v1057 = vunpack.c.l.b16 %v429
      %v1058 = vunpack.c.l.b16 %v430
      %v1059 = vunpack.c.l.b16 %v431
      %v1060 = vunpack.c.l.b16 %v432
      %v1061 = vunpack.c.l.b16 %v433
      %v1062 = vunpack.c.l.b16 %v434
      %v1063 = vunpack.c.l.b16 %v435
      %v1064 = vunpack.c.l.b16 %v436
      %v1065 = vunpack.c.l.b16 %v437
      %v1066 = vunpack.c.l.b16 %v438
      %v1067 = vunpack.c.l.b16 %v439
      %v1068 = vunpack.c.l.b16 %v440
      %v1069 = vunpack.c.l.b16 %v441
      %v1070 = vunpack.c.l.b16 %v442
      %v1071 = vunpack.c.l.b16 %v443
      %v1072 = vunpack.c.l.b16 %v444
      %v1073 = vunpack.c.l.b16 %v445
      %v1074 = vunpack.c.l.b16 %v446
      %v1075 = vunpack.c.l.b16 %v447
      %v1076 = vunpack.c.l.b16 %v448
      %v1077 = vunpack.c.l.b16 %v449
      %v1078 = vunpack.c.l.b16 %v450
      %v1079 = vunpack.c.l.b16 %v451
      %v1080 = vunpack.c.l.b16 %v452
      %v1081 = vunpack.c.l.b16 %v453
      %v1082 = vunpack.c.l.b16 %v454
      %v1083 = vunpack.c.l.b16 %v455
      %v1084 = vunpack.c.l.b16 %v456
      %v1085 = vunpack.c.l.b16 %v457
      %v1086 = vunpack.c.l.b16 %v458
      %v1087 = vunpack.c.l.b16 %v459
      %v1088 = vunpack.c.l.b16 %v460
      %v1089 = vunpack.c.l.b16 %v461
      %v1090 = vunpack.c.l.b16 %v462
      %v1091 = vunpack.c.l.b16 %v463
      %v1092 = vunpack.c.l.b16 %v464
      %v1093 = vunpack.c.l.b16 %v465
      %v1094 = vunpack.c.l.b16 %v466
      %v1095 = vunpack.c.l.b16 %v467
      %v1096 = vunpack.c.l.b16 %v468
      %v1097 = vunpack.c.l.b16 %v469
      %v1098 = vunpack.c.l.b16 %v470
      %v1099 = vunpack.c.l.b16 %v471
      %v1100 = vunpack.c.l.b16 %v472
      %v1101 = vunpack.c.l.b16 %v473
      %v1102 = vunpack.c.l.b16 %v474
      %v1103 = vunpack.c.l.b16 %v475
      %v1104 = vunpack.c.l.b16 %v476
      %v1105 = vunpack.c.l.b16 %v477
      %v1106 = vunpack.c.l.b16 %v478
      %v1107 = vunpack.c.l.b16 %v479
      %v1108 = vunpack.c.l.b16 %v480
      %v1109 = vunpack.c.l.b16 %v481
      %v1110 = vunpack.c.l.b16 %v482
      %v1111 = vunpack.c.l.b16 %v483
      %v1112 = vunpack.c.l.b16 %v484
      %v1113 = vunpack.c.l.b16 %v485
      %v1114 = vunpack.c.l.b16 %v486
      %v1115 = vunpack.c.l.b16 %v487
      %v1116 = vunpack.c.l.b16 %v488
      %v1117 = vunpack.c.l.b16 %v489
      %v1118 = vunpack.c.l.b16 %v490
      %v1119 = vunpack.c.l.b16 %v491
      %v1120 = vunpack.c.l.b16 %v492
      %v1121 = vunpack.c.l.b16 %v493
      %v1122 = vunpack.c.l.b16 %v494
      %v1123 = vunpack.c.l.b16 %v495
      %v1124 = vunpack.c.l.b16 %v496
      %v1125 = vunpack.c.l.b16 %v497
      %v1126 = vunpack.c.l.b16 %v498
      %v1127 = vunpack.c.l.b16 %v499
      %v1128 = vunpack.c.l.b16 %v500
      %v1129 = vunpack.c.l.b16 %v501
      %v1130 = vunpack.c.l.b16 %v502
      %v1131 = vunpack.c.l.b16 %v503
      %v1132 = vunpack.c.l.b16 %v504
      %v1133 = vunpack.c.l.b16 %v505
      %v1134 = vunpack.c.l.b16 %v506
      %v1135 = vunpack.c.l.b16 %v507
      %v1136 = vunpack.c.l.b16 %v508
      %v1137 = vunpack.c.l.b16 %v509
      %v1138 = vunpack.c.l.b16 %v510
      %v1139 = vunpack.c.l.b16 %v511
      %v1140 = vunpack.c.l.b16 %v512
      %v1141 = vunpack.c.l.b16 %v513
      %v1142 = vunpack.c.l.b16 %v514
      %v1143 = vunpack.c.l.b16 %v515
      %v1144 = vunpack.c.l.b16 %v516
      %v1145 = vunpack.c.l.b16 %v517
      %v1146 = vunpack.c.l.b16 %v518
      %v1147 = vunpack.c.l.b16 %v519
      %v1148 = vunpack.c.l.b16 %v520
      %v1149 = vunpack.c.l.b16 %v521
      %v1150 = vpack.c.b16 %v895, %v894
      %v1151 = vpack.c.b16 %v897, %v896
      %v1152 = vpack.c.b16 %v899, %v898
      %v1153 = vpack.c.b16 %v901, %v900
      %v1154 = vpack.c.b16 %v903, %v902
      %v1155 = vpack.c.b16 %v905, %v904
      %v1156 = vpack.c.b16 %v907, %v906
      %v1157 = vpack.c.b16 %v909, %v908
      %v1158 = vpack.c.b16 %v911, %v910
      %v1159 = vpack.c.b16 %v913, %v912
      %v1160 = vpack.c.b16 %v915, %v914
      %v1161 = vpack.c.b16 %v917, %v916
      %v1162 = vpack.c.b16 %v919, %v918
      %v1163 = vpack.c.b16 %v921, %v920
      %v1164 = vpack.c.b16 %v923, %v922
      %v1165 = vpack.c.b16 %v925, %v924
      %v1166 = vpack.c.b16 %v927, %v926
      %v1167 = vpack.c.b16 %v929, %v928
      %v1168 = vpack.c.b16 %v931, %v930
      %v1169 = vpack.c.b16 %v933, %v932
      %v1170 = vpack.c.b16 %v935, %v934
      %v1171 = vpack.c.b16 %v937, %v936
      %v1172 = vpack.c.b16 %v939, %v938
      %v1173 = vpack.c.b16 %v941, %v940
      %v1174 = vpack.c.b16 %v943, %v942
      %v1175 = vpack.c.b16 %v945, %v944
      %v1176 = vpack.c.b16 %v947, %v946
      %v1177 = vpack.c.b16 %v949, %v948
      %v1178 = vpack.c.b16 %v951, %v950
      %v1179 = vpack.c.b16 %v953, %v952
      %v1180 = vpack.c.b16 %v955, %v954
      %v1181 = vpack.c.b16 %v957, %v956
      %v1182 = vpack.c.b16 %v959, %v958
      %v1183 = vpack.c.b16 %v961, %v960
      %v1184 = vpack.c.b16 %v963, %v962
      %v1185 = vpack.c.b16 %v965, %v964
      %v1186 = vpack.c.b16 %v967, %v966
      %v1187 = vpack.c.b16 %v969, %v968
      %v1188 = vpack.c.b16 %v971, %v970
      %v1189 = vpack.c.b16 %v973, %v972
      %v1190 = vpack.c.b16 %v975, %v974
      %v1191 = vpack.c.b16 %v977, %v976
      %v1192 = vpack.c.b16 %v979, %v978
      %v1193 = vpack.c.b16 %v981, %v980
      %v1194 = vpack.c.b16 %v983, %v982
      %v1195 = vpack.c.b16 %v985, %v984
      %v1196 = vpack.c.b16 %v987, %v986
      %v1197 = vpack.c.b16 %v989, %v988
      %v1198 = vpack.c.b16 %v991, %v990
      %v1199 = vpack.c.b16 %v993, %v992
      %v1200 = vpack.c.b16 %v995, %v994
      %v1201 = vpack.c.b16 %v997, %v996
      %v1202 = vpack.c.b16 %v999, %v998
      %v1203 = vpack.c.b16 %v1001, %v1000
      %v1204 = vpack.c.b16 %v1003, %v1002
      %v1205 = vpack.c.b16 %v1005, %v1004
      %v1206 = vpack.c.b16 %v1007, %v1006
      %v1207 = vpack.c.b16 %v1009, %v1008
      %v1208 = vpack.c.b16 %v1011, %v1010
      %v1209 = vpack.c.b16 %v1013, %v1012
      %v1210 = vpack.c.b16 %v1015, %v1014
      %v1211 = vpack.c.b16 %v1017, %v1016
      %v1212 = vpack.c.b16 %v1019, %v1018
      %v1213 = vpack.c.b16 %v1021, %v1020
      %v1214 = vpack.c.b16 %v1023, %v1022
      %v1215 = vpack.c.b16 %v1025, %v1024
      %v1216 = vpack.c.b16 %v1027, %v1026
      %v1217 = vpack.c.b16 %v1029, %v1028
      %v1218 = vpack.c.b16 %v1031, %v1030
      %v1219 = vpack.c.b16 %v1033, %v1032
      %v1220 = vpack.c.b16 %v1035, %v1034
      %v1221 = vpack.c.b16 %v1037, %v1036
      %v1222 = vpack.c.b16 %v1039, %v1038
      %v1223 = vpack.c.b16 %v1041, %v1040
      %v1224 = vpack.c.b16 %v1043, %v1042
      %v1225 = vpack.c.b16 %v1045, %v1044
      %v1226 = vpack.c.b16 %v1047, %v1046
      %v1227 = vpack.c.b16 %v1049, %v1048
      %v1228 = vpack.c.b16 %v1051, %v1050
      %v1229 = vpack.c.b16 %v1053, %v1052
      %v1230 = vpack.c.b16 %v1055, %v1054
      %v1231 = vpack.c.b16 %v1057, %v1056
      %v1232 = vpack.c.b16 %v1059, %v1058
      %v1233 = vpack.c.b16 %v1061, %v1060
      %v1234 = vpack.c.b16 %v1063, %v1062
      %v1235 = vpack.c.b16 %v1065, %v1064
      %v1236 = vpack.c.b16 %v1067, %v1066
      %v1237 = vpack.c.b16 %v1069, %v1068
      %v1238 = vpack.c.b16 %v1071, %v1070
      %v1239 = vpack.c.b16 %v1073, %v1072
      %v1240 = vpack.c.b16 %v1075, %v1074
      %v1241 = vpack.c.b16 %v1077, %v1076
      %v1242 = vpack.c.b16 %v1079, %v1078
      %v1243 = vpack.c.b16 %v1081, %v1080
      %v1244 = vpack.c.b16 %v1083, %v1082
      %v1245 = vpack.c.b16 %v1085, %v1084
      %v1246 = vpack.c.b16 %v1087, %v1086
      %v1247 = vpack.c.b16 %v1089, %v1088
      %v1248 = vpack.c.b16 %v1091, %v1090
      %v1249 = vpack.c.b16 %v1093, %v1092
      %v1250 = vpack.c.b16 %v1095, %v1094
      %v1251 = vpack.c.b16 %v1097, %v1096
      %v1252 = vpack.c.b16 %v1099, %v1098
      %v1253 = vpack.c.b16 %v1101, %v1100
      %v1254 = vpack.c.b16 %v1103, %v1102
      %v1255 = vpack.c.b16 %v1105, %v1104
      %v1256 = vpack.c.b16 %v1107, %v1106
      %v1257 = vpack.c.b16 %v1109, %v1108
      %v1258 = vpack.c.b16 %v1111, %v1110
      %v1259 = vpack.c.b16 %v1113, %v1112
      %v1260 = vpack.c.b16 %v1115, %v1114
      %v1261 = vpack.c.b16 %v1117, %v1116
      %v1262 = vpack.c.b16 %v1119, %v1118
      %v1263 = vpack.c.b16 %v1121, %v1120
      %v1264 = vpack.c.b16 %v1123, %v1122
      %v1265 = vpack.c.b16 %v1125, %v1124
      %v1266 = vpack.c.b16 %v1127, %v1126
      %v1267 = vpack.c.b16 %v1129, %v1128
      %v1268 = vpack.c.b16 %v1131, %v1130
      %v1269 = vpack.c.b16 %v1133, %v1132
      %v1270 = vpack.c.b16 %v1135, %v1134
      %v1271 = vpack.c.b16 %v1137, %v1136
      %v1272 = vpack.c.b16 %v1139, %v1138
      %v1273 = vpack.c.b16 %v1141, %v1140
      %v1274 = vpack.c.b16 %v1143, %v1142
      %v1275 = vpack.c.b16 %v1145, %v1144
      %v1276 = vpack.c.b16 %v1147, %v1146
      %v1277 = vpack.c.b16 %v1149, %v1148
      %1406 = vmatprep.subr.bf16.mxu0 0
      %1407 = vmatpush1.bf16.msra.mxu0 %v1150
      %1408 = vmatprep.subr.bf16.mxu0 0
      %1409 = vmatpush1.bf16.msra.mxu0 %v1151
      %1410 = vmatprep.subr.bf16.mxu0 0
      %1411 = vmatpush1.bf16.msra.mxu0 %v1152
      %1412 = vmatprep.subr.bf16.mxu0 0
      %1413 = vmatpush1.bf16.msra.mxu0 %v1153
      %1414 = vmatprep.subr.bf16.mxu0 0
      %1415 = vmatpush1.bf16.msra.mxu0 %v1154
      %1416 = vmatprep.subr.bf16.mxu0 0
      %1417 = vmatpush1.bf16.msra.mxu0 %v1155
      %1418 = vmatprep.subr.bf16.mxu0 0
      %1419 = vmatpush1.bf16.msra.mxu0 %v1156
      %1420 = vmatprep.subr.bf16.mxu0 0
      %1421 = vmatpush1.bf16.msra.mxu0 %v1157
      %1422 = vmatprep.subr.bf16.mxu0 0
      %1423 = vmatpush1.bf16.msra.mxu0 %v1158
      %1424 = vmatprep.subr.bf16.mxu0 0
      %1425 = vmatpush1.bf16.msra.mxu0 %v1159
      %1426 = vmatprep.subr.bf16.mxu0 0
      %1427 = vmatpush1.bf16.msra.mxu0 %v1160
      %1428 = vmatprep.subr.bf16.mxu0 0
      %1429 = vmatpush1.bf16.msra.mxu0 %v1161
      %1430 = vmatprep.subr.bf16.mxu0 0
      %1431 = vmatpush1.bf16.msra.mxu0 %v1162
      %1432 = vmatprep.subr.bf16.mxu0 0
      %1433 = vmatpush1.bf16.msra.mxu0 %v1163
      %1434 = vmatprep.subr.bf16.mxu0 0
      %1435 = vmatpush1.bf16.msra.mxu0 %v1164
      %1436 = vmatprep.subr.bf16.mxu0 0
      %1437 = vmatpush1.bf16.msra.mxu0 %v1165
      %1438 = vmatprep.mubr.bf16.mxu0 %v561
      %1439 = vmatmul.mubr.bf16.gmra.mrb[0].mxu0 %v547
      %v1440 = vpop.f32.mrb[0].mxu0
      %v1441 = vadd.f32 0.0, %v1440
      %v1442 = vpop.f32.mrb[0].mxu0
      %v1443 = vpop.f32.mrb[0].mxu0
      %v1444 = vpop.f32.mrb[0].mxu0
      %1445 = vdwg.mxu0
      %1446 = vmatprep.subr.bf16.mxu0 0
      %1447 = vmatpush1.bf16.msra.mxu0 %v1166
      %1448 = vmatprep.subr.bf16.mxu0 0
      %1449 = vmatpush1.bf16.msra.mxu0 %v1167
      %1450 = vmatprep.subr.bf16.mxu0 0
      %1451 = vmatpush1.bf16.msra.mxu0 %v1168
      %1452 = vmatprep.subr.bf16.mxu0 0
      %1453 = vmatpush1.bf16.msra.mxu0 %v1169
      %1454 = vmatprep.subr.bf16.mxu0 0
      %1455 = vmatpush1.bf16.msra.mxu0 %v1170
      %1456 = vmatprep.subr.bf16.mxu0 0
      %1457 = vmatpush1.bf16.msra.mxu0 %v1171
      %1458 = vmatprep.subr.bf16.mxu0 0
      %1459 = vmatpush1.bf16.msra.mxu0 %v1172
      %1460 = vmatprep.subr.bf16.mxu0 0
      %1461 = vmatpush1.bf16.msra.mxu0 %v1173
      %1462 = vmatprep.subr.bf16.mxu0 0
      %1463 = vmatpush1.bf16.msra.mxu0 %v1174
      %1464 = vmatprep.subr.bf16.mxu0 0
      %1465 = vmatpush1.bf16.msra.mxu0 %v1175
      %1466 = vmatprep.subr.bf16.mxu0 0
      %1467 = vmatpush1.bf16.msra.mxu0 %v1176
      %1468 = vmatprep.subr.bf16.mxu0 0
      %1469 = vmatpush1.bf16.msra.mxu0 %v1177
      %1470 = vmatprep.subr.bf16.mxu0 0
      %1471 = vmatpush1.bf16.msra.mxu0 %v1178
      %1472 = vmatprep.subr.bf16.mxu0 0
      %1473 = vmatpush1.bf16.msra.mxu0 %v1179
      %1474 = vmatprep.subr.bf16.mxu0 0
      %1475 = vmatpush1.bf16.msra.mxu0 %v1180
      %1476 = vmatprep.subr.bf16.mxu0 0
      %1477 = vmatpush1.bf16.msra.mxu0 %v1181
      %1478 = vmatprep.mubr.bf16.mxu0 %v571
      %1479 = vmatmul.mubr.bf16.gmra.mrb[0].mxu0 %v569
      %v1480 = vpop.f32.mrb[0].mxu0
      %v1481 = vadd.f32 %v1441, %v1480
      %v1482 = vpop.f32.mrb[0].mxu0
      %v1483 = vpop.f32.mrb[0].mxu0
      %v1484 = vpop.f32.mrb[0].mxu0
      %1485 = vdwg.mxu0
      %1486 = vmatprep.subr.bf16.mxu0 0
      %1487 = vmatpush1.bf16.msra.mxu0 %v1182
      %1488 = vmatprep.subr.bf16.mxu0 0
      %1489 = vmatpush1.bf16.msra.mxu0 %v1183
      %1490 = vmatprep.subr.bf16.mxu0 0
      %1491 = vmatpush1.bf16.msra.mxu0 %v1184
      %1492 = vmatprep.subr.bf16.mxu0 0
      %1493 = vmatpush1.bf16.msra.mxu0 %v1185
      %1494 = vmatprep.subr.bf16.mxu0 0
      %1495 = vmatpush1.bf16.msra.mxu0 %v1186
      %1496 = vmatprep.subr.bf16.mxu0 0
      %1497 = vmatpush1.bf16.msra.mxu0 %v1187
      %1498 = vmatprep.subr.bf16.mxu0 0
      %1499 = vmatpush1.bf16.msra.mxu0 %v1188
      %1500 = vmatprep.subr.bf16.mxu0 0
      %1501 = vmatpush1.bf16.msra.mxu0 %v1189
      %1502 = vmatprep.subr.bf16.mxu0 0
      %1503 = vmatpush1.bf16.msra.mxu0 %v1190
      %1504 = vmatprep.subr.bf16.mxu0 0
      %1505 = vmatpush1.bf16.msra.mxu0 %v1191
      %1506 = vmatprep.subr.bf16.mxu0 0
      %1507 = vmatpush1.bf16.msra.mxu0 %v1192
      %1508 = vmatprep.subr.bf16.mxu0 0
      %1509 = vmatpush1.bf16.msra.mxu0 %v1193
      %1510 = vmatprep.subr.bf16.mxu0 0
      %1511 = vmatpush1.bf16.msra.mxu0 %v1194
      %1512 = vmatprep.subr.bf16.mxu0 0
      %1513 = vmatpush1.bf16.msra.mxu0 %v1195
      %1514 = vmatprep.subr.bf16.mxu0 0
      %1515 = vmatpush1.bf16.msra.mxu0 %v1196
      %1516 = vmatprep.subr.bf16.mxu0 0
      %1517 = vmatpush1.bf16.msra.mxu0 %v1197
      %1518 = vmatprep.mubr.bf16.mxu0 %v568
      %1519 = vmatmul.mubr.bf16.gmra.mrb[0].mxu0 %v554
      %v1520 = vpop.f32.mrb[0].mxu0
      %v1521 = vadd.f32 %v1481, %v1520
      %v1522 = vpop.f32.mrb[0].mxu0
      %v1523 = vpop.f32.mrb[0].mxu0
      %v1524 = vpop.f32.mrb[0].mxu0
      %1525 = vdwg.mxu0
      %1526 = vmatprep.subr.bf16.mxu0 0
      %1527 = vmatpush1.bf16.msra.mxu0 %v1198
      %1528 = vmatprep.subr.bf16.mxu0 0
      %1529 = vmatpush1.bf16.msra.mxu0 %v1199
      %1530 = vmatprep.subr.bf16.mxu0 0
      %1531 = vmatpush1.bf16.msra.mxu0 %v1200
      %1532 = vmatprep.subr.bf16.mxu0 0
      %1533 = vmatpush1.bf16.msra.mxu0 %v1201
      %1534 = vmatprep.subr.bf16.mxu0 0
      %1535 = vmatpush1.bf16.msra.mxu0 %v1202
      %1536 = vmatprep.subr.bf16.mxu0 0
      %1537 = vmatpush1.bf16.msra.mxu0 %v1203
      %1538 = vmatprep.subr.bf16.mxu0 0
      %1539 = vmatpush1.bf16.msra.mxu0 %v1204
      %1540 = vmatprep.subr.bf16.mxu0 0
      %1541 = vmatpush1.bf16.msra.mxu0 %v1205
      %1542 = vmatprep.subr.bf16.mxu0 0
      %1543 = vmatpush1.bf16.msra.mxu0 %v1206
      %1544 = vmatprep.subr.bf16.mxu0 0
      %1545 = vmatpush1.bf16.msra.mxu0 %v1207
      %1546 = vmatprep.subr.bf16.mxu0 0
      %1547 = vmatpush1.bf16.msra.mxu0 %v1208
      %1548 = vmatprep.subr.bf16.mxu0 0
      %1549 = vmatpush1.bf16.msra.mxu0 %v1209
      %1550 = vmatprep.subr.bf16.mxu0 0
      %1551 = vmatpush1.bf16.msra.mxu0 %v1210
      %1552 = vmatprep.subr.bf16.mxu0 0
      %1553 = vmatpush1.bf16.msra.mxu0 %v1211
      %1554 = vmatprep.subr.bf16.mxu0 0
      %1555 = vmatpush1.bf16.msra.mxu0 %v1212
      %1556 = vmatprep.subr.bf16.mxu0 0
      %1557 = vmatpush1.bf16.msra.mxu0 %v1213
      %1558 = vmatprep.mubr.bf16.mxu0 %v572
      %1559 = vmatmul.mubr.bf16.gmra.mrb[0].mxu0 %v570
      %v1560 = vpop.f32.mrb[0].mxu0
      %v1561 = vadd.f32 %v1521, %v1560
      %v1562 = vpop.f32.mrb[0].mxu0
      %v1563 = vpop.f32.mrb[0].mxu0
      %v1564 = vpop.f32.mrb[0].mxu0
      %1565 = vdwg.mxu0
      %1566 = vmatprep.subr.bf16.mxu0 0
      %1567 = vmatpush1.bf16.msra.mxu0 %v1214
      %1568 = vmatprep.subr.bf16.mxu0 0
      %1569 = vmatpush1.bf16.msra.mxu0 %v1215
      %1570 = vmatprep.subr.bf16.mxu0 0
      %1571 = vmatpush1.bf16.msra.mxu0 %v1216
      %1572 = vmatprep.subr.bf16.mxu0 0
      %1573 = vmatpush1.bf16.msra.mxu0 %v1217
      %1574 = vmatprep.subr.bf16.mxu0 0
      %1575 = vmatpush1.bf16.msra.mxu0 %v1218
      %1576 = vmatprep.subr.bf16.mxu0 0
      %1577 = vmatpush1.bf16.msra.mxu0 %v1219
      %1578 = vmatprep.subr.bf16.mxu0 0
      %1579 = vmatpush1.bf16.msra.mxu0 %v1220
      %1580 = vmatprep.subr.bf16.mxu0 0
      %1581 = vmatpush1.bf16.msra.mxu0 %v1221
      %1582 = vmatprep.subr.bf16.mxu0 0
      %1583 = vmatpush1.bf16.msra.mxu0 %v1222
      %1584 = vmatprep.subr.bf16.mxu0 0
      %1585 = vmatpush1.bf16.msra.mxu0 %v1223
      %1586 = vmatprep.subr.bf16.mxu0 0
      %1587 = vmatpush1.bf16.msra.mxu0 %v1224
      %1588 = vmatprep.subr.bf16.mxu0 0
      %1589 = vmatpush1.bf16.msra.mxu0 %v1225
      %1590 = vmatprep.subr.bf16.mxu0 0
      %1591 = vmatpush1.bf16.msra.mxu0 %v1226
      %1592 = vmatprep.subr.bf16.mxu0 0
      %1593 = vmatpush1.bf16.msra.mxu0 %v1227
      %1594 = vmatprep.subr.bf16.mxu0 0
      %1595 = vmatpush1.bf16.msra.mxu0 %v1228
      %1596 = vmatprep.subr.bf16.mxu0 0
      %1597 = vmatpush1.bf16.msra.mxu0 %v1229
      %1598 = vmatprep.mubr.bf16.mxu0 %v610
      %1599 = vmatmul.mubr.bf16.gmra.mrb[0].mxu0 %v596
      %v1600 = vpop.f32.mrb[0].mxu0
      %v1601 = vadd.f32 %v1561, %v1600
      %v1602 = vpop.f32.mrb[0].mxu0
      %v1603 = vpop.f32.mrb[0].mxu0
      %v1604 = vpop.f32.mrb[0].mxu0
      %1605 = vdwg.mxu0
      %1606 = vmatprep.subr.bf16.mxu0 0
      %1607 = vmatpush1.bf16.msra.mxu0 %v1230
      %1608 = vmatprep.subr.bf16.mxu0 0
      %1609 = vmatpush1.bf16.msra.mxu0 %v1231
      %1610 = vmatprep.subr.bf16.mxu0 0
      %1611 = vmatpush1.bf16.msra.mxu0 %v1232
      %1612 = vmatprep.subr.bf16.mxu0 0
      %1613 = vmatpush1.bf16.msra.mxu0 %v1233
      %1614 = vmatprep.subr.bf16.mxu0 0
      %1615 = vmatpush1.bf16.msra.mxu0 %v1234
      %1616 = vmatprep.subr.bf16.mxu0 0
      %1617 = vmatpush1.bf16.msra.mxu0 %v1235
      %1618 = vmatprep.subr.bf16.mxu0 0
      %1619 = vmatpush1.bf16.msra.mxu0 %v1236
      %1620 = vmatprep.subr.bf16.mxu0 0
      %1621 = vmatpush1.bf16.msra.mxu0 %v1237
      %1622 = vmatprep.subr.bf16.mxu0 0
      %1623 = vmatpush1.bf16.msra.mxu0 %v1238
      %1624 = vmatprep.subr.bf16.mxu0 0
      %1625 = vmatpush1.bf16.msra.mxu0 %v1239
      %1626 = vmatprep.subr.bf16.mxu0 0
      %1627 = vmatpush1.bf16.msra.mxu0 %v1240
      %1628 = vmatprep.subr.bf16.mxu0 0
      %1629 = vmatpush1.bf16.msra.mxu0 %v1241
      %1630 = vmatprep.subr.bf16.mxu0 0
      %1631 = vmatpush1.bf16.msra.mxu0 %v1242
      %1632 = vmatprep.subr.bf16.mxu0 0
      %1633 = vmatpush1.bf16.msra.mxu0 %v1243
      %1634 = vmatprep.subr.bf16.mxu0 0
      %1635 = vmatpush1.bf16.msra.mxu0 %v1244
      %1636 = vmatprep.subr.bf16.mxu0 0
      %1637 = vmatpush1.bf16.msra.mxu0 %v1245
      %1638 = vmatprep.mubr.bf16.mxu0 %v620
      %1639 = vmatmul.mubr.bf16.gmra.mrb[0].mxu0 %v618
      %v1640 = vpop.f32.mrb[0].mxu0
      %v1641 = vadd.f32 %v1601, %v1640
      %v1642 = vpop.f32.mrb[0].mxu0
      %v1643 = vpop.f32.mrb[0].mxu0
      %v1644 = vpop.f32.mrb[0].mxu0
      %1645 = vdwg.mxu0
      %1646 = vmatprep.subr.bf16.mxu0 0
      %1647 = vmatpush1.bf16.msra.mxu0 %v1246
      %1648 = vmatprep.subr.bf16.mxu0 0
      %1649 = vmatpush1.bf16.msra.mxu0 %v1247
      %1650 = vmatprep.subr.bf16.mxu0 0
      %1651 = vmatpush1.bf16.msra.mxu0 %v1248
      %1652 = vmatprep.subr.bf16.mxu0 0
      %1653 = vmatpush1.bf16.msra.mxu0 %v1249
      %1654 = vmatprep.subr.bf16.mxu0 0
      %1655 = vmatpush1.bf16.msra.mxu0 %v1250
      %1656 = vmatprep.subr.bf16.mxu0 0
      %1657 = vmatpush1.bf16.msra.mxu0 %v1251
      %1658 = vmatprep.subr.bf16.mxu0 0
      %1659 = vmatpush1.bf16.msra.mxu0 %v1252
      %1660 = vmatprep.subr.bf16.mxu0 0
      %1661 = vmatpush1.bf16.msra.mxu0 %v1253
      %1662 = vmatprep.subr.bf16.mxu0 0
      %1663 = vmatpush1.bf16.msra.mxu0 %v1254
      %1664 = vmatprep.subr.bf16.mxu0 0
      %1665 = vmatpush1.bf16.msra.mxu0 %v1255
      %1666 = vmatprep.subr.bf16.mxu0 0
      %1667 = vmatpush1.bf16.msra.mxu0 %v1256
      %1668 = vmatprep.subr.bf16.mxu0 0
      %1669 = vmatpush1.bf16.msra.mxu0 %v1257
      %1670 = vmatprep.subr.bf16.mxu0 0
      %1671 = vmatpush1.bf16.msra.mxu0 %v1258
      %1672 = vmatprep.subr.bf16.mxu0 0
      %1673 = vmatpush1.bf16.msra.mxu0 %v1259
      %1674 = vmatprep.subr.bf16.mxu0 0
      %1675 = vmatpush1.bf16.msra.mxu0 %v1260
      %1676 = vmatprep.subr.bf16.mxu0 0
      %1677 = vmatpush1.bf16.msra.mxu0 %v1261
      %1678 = vmatprep.mubr.bf16.mxu0 %v617
      %1679 = vmatmul.mubr.bf16.gmra.mrb[0].mxu0 %v603
      %v1680 = vpop.f32.mrb[0].mxu0
      %v1681 = vadd.f32 %v1641, %v1680
      %v1682 = vpop.f32.mrb[0].mxu0
      %v1683 = vpop.f32.mrb[0].mxu0
      %v1684 = vpop.f32.mrb[0].mxu0
      %1685 = vdwg.mxu0
      %1686 = vmatprep.subr.bf16.mxu0 0
      %1687 = vmatpush1.bf16.msra.mxu0 %v1262
      %1688 = vmatprep.subr.bf16.mxu0 0
      %1689 = vmatpush1.bf16.msra.mxu0 %v1263
      %1690 = vmatprep.subr.bf16.mxu0 0
      %1691 = vmatpush1.bf16.msra.mxu0 %v1264
      %1692 = vmatprep.subr.bf16.mxu0 0
      %1693 = vmatpush1.bf16.msra.mxu0 %v1265
      %1694 = vmatprep.subr.bf16.mxu0 0
      %1695 = vmatpush1.bf16.msra.mxu0 %v1266
      %1696 = vmatprep.subr.bf16.mxu0 0
      %1697 = vmatpush1.bf16.msra.mxu0 %v1267
      %1698 = vmatprep.subr.bf16.mxu0 0
      %1699 = vmatpush1.bf16.msra.mxu0 %v1268
      %1700 = vmatprep.subr.bf16.mxu0 0
      %1701 = vmatpush1.bf16.msra.mxu0 %v1269
      %1702 = vmatprep.subr.bf16.mxu0 0
      %1703 = vmatpush1.bf16.msra.mxu0 %v1270
      %1704 = vmatprep.subr.bf16.mxu0 0
      %1705 = vmatpush1.bf16.msra.mxu0 %v1271
      %1706 = vmatprep.subr.bf16.mxu0 0
      %1707 = vmatpush1.bf16.msra.mxu0 %v1272
      %1708 = vmatprep.subr.bf16.mxu0 0
      %1709 = vmatpush1.bf16.msra.mxu0 %v1273
      %1710 = vmatprep.subr.bf16.mxu0 0
      %1711 = vmatpush1.bf16.msra.mxu0 %v1274
      %1712 = vmatprep.subr.bf16.mxu0 0
      %1713 = vmatpush1.bf16.msra.mxu0 %v1275
      %1714 = vmatprep.subr.bf16.mxu0 0
      %1715 = vmatpush1.bf16.msra.mxu0 %v1276
      %1716 = vmatprep.subr.bf16.mxu0 0
      %1717 = vmatpush1.bf16.msra.mxu0 %v1277
      %1718 = vmatprep.mubr.bf16.mxu0 %v621
      %1719 = vmatmul.mubr.bf16.gmra.mrb[0].mxu0 %v619
      %v1720 = vpop.f32.mrb[0].mxu0
      %v1721 = vadd.f32 %v1681, %v1720
      %v1722 = vpop.f32.mrb[0].mxu0
      %v1723 = vpop.f32.mrb[0].mxu0
      %v1724 = vpop.f32.mrb[0].mxu0
      %1725 = vdwg.mxu0
      %v1726 = vadd.f32 %v263, %v1721
      %vm1727 = vcmask 254976
      %1728 = vst.msk [vmem:[#allocation2] sm:$0x3] %vm1727, %v1726
      %p1729 = scmp.eq.s32.totalorder %s21, 3
      // Predicated region
      $region37: #{enc_txt_forward.11} parent=31 // pred_check
        %p1730 = pneg %p1729
      $region38: #{enc_txt_forward.11} parent=31 // pred_check_branch
        %1732 = sbr.rel (%p1730) target = $region40
      $region39: #{enc_txt_forward.11} parent=31 // pred_region
        %v1733 = vld [vmem:[#allocation2] sm:$0x3]
        %v1734 = vld [vmem:[%s248] sm:$0x1]
        %v1736 = vlaneseq
        %v1737 = vshrl.u32 %v1736, 7
        %v1738 = vsub.s32 0, %v1737
        %v1739 = vrot.slane %v1734, %v1738
        %v1741 = vadd.f32 %v1733, %v1739
        %1742 = vst.msk [vmem:[%s255] sm:$0x3] %vm1727, %v1741
      $region40: #{enc_txt_forward.11} parent=31 // pred_fallthru
        _
      %p1743 = scmp.lt.s32.totalorder %s19, 0
      %s1744 = scalar_select %p1743, %s19, 0
      %p1745 = scmp.lt.s32.totalorder %s20, 0
      %s1746 = scalar_select %p1745, %s20, 0
      %s1747 = sadd.s32 %s1746, %s1744
      %s1748 = smul.addr %s1747, 2
      %s1749 = scalar_lea.vmem %s3, %s1748
      // Predicated region
      $region41: #{enc_txt_forward.11} parent=31 // pred_check
        %p1750 = pneg %p135
      $region42: #{enc_txt_forward.11} parent=31 // pred_check_branch
        %1752 = sbr.rel (%p1750) target = $region44
      $region43: #{enc_txt_forward.11} parent=31 // pred_region
        _
      $region44: #{enc_txt_forward.11} parent=31 // pred_fallthru
        _
      // Predicated region
      $region45: #{enc_txt_forward.11} parent=31 // pred_check
        %p1753 = pneg %p135
      $region46: #{enc_txt_forward.11} parent=31 // pred_check_branch
        %1755 = sbr.rel (%p1753) target = $region48
      $region47: #{enc_txt_forward.11} parent=31 // pred_region
        %p1756 = scmp.lt.s32.totalorder %s19, 0
        %s1757 = scalar_select %p1756, %s19, 0
        %p1758 = scmp.lt.s32.totalorder %s20, 0
        %s1759 = scalar_select %p1758, %s20, 0
        %s1760 = sadd.s32 %s1759, %s1757
        %s1761 = smul.addr %s1760, 2
        %s1762 = scalar_lea.vmem %s3, %s1761
      $region48: #{enc_txt_forward.11} parent=31 // pred_fallthru
        _
    $region32: #{enc_txt_forward.11} parent=5 // pred_fallthru
      _
    %p1763 = scmp.le.s32.totalorder 2, %s9
    // Predicated region
    $region49: #{enc_txt_forward.11} parent=5 // pred_check
      %p1764 = pneg %p1763
    $region50: #{enc_txt_forward.11} parent=5 // pred_check_branch
      %1766 = sbr.rel (%p1764) target = $region52
    $region51: #{enc_txt_forward.11} parent=5 // pred_region
      %s1767 = ssub.s32 %s9, 2
    $region52: #{enc_txt_forward.11} parent=5 // pred_fallthru
      _
  $region6: #{enc_txt_forward.11} parent=0 // loop_footer
    %s13 = sadd.s32 1, %s9
  $region7: #{enc_txt_forward.11} parent=0 // loop_footer_branch
    %8 = sbr.rel target = $region3
  $region8: #{enc_txt_forward.11} parent=0 // loop_exit
    _

</llo_original>
